<compile_context>
chip_gen: v7x
topology: tpu7x:2x2x1
jax: 0.10.0
libtpu: 0.0.40
codegen_flags: <defaults>
</compile_context>

<pallas_src>
import jax
import jax.numpy as jnp
from jax.experimental import pallas as pl
from jax.experimental.pallas import tpu as pltpu


# ----------------------------- padding helpers ------------------------------

def _round_up(x, m):
    return ((x + m - 1) // m) * m


def _pad_axis(x, axis, target):
    pad = target - x.shape[axis]
    if pad <= 0:
        return x
    widths = [(0, 0)] * x.ndim
    widths[axis] = (0, pad)
    return jnp.pad(x, widths)


def _pad_lstm_gates(w, H, Hp):
    """Pad the gate axis (last dim, size 4H, PyTorch order i|f|g|o) to 4Hp
    while keeping each gate block on an Hp boundary (lane-aligned slices)."""
    parts = [w[..., k * H:(k + 1) * H] for k in range(4)]
    parts = [_pad_axis(p, w.ndim - 1, Hp) for p in parts]
    return jnp.concatenate(parts, axis=-1)


# --------------------------------- kernel -----------------------------------

def seqmodel_kernel(
    # inputs (time-major, padded)
    src_emb_ref,    # [S, B, E]   f32
    tgt_emb_ref,    # [T, B, E]   f32
    srcmask_ref,    # [S, B, 1]   f32, 1.0 = real token
    enc_wih_ref, enc_whh_ref, enc_b_ref,        # [E,4Hs], [Hs,4Hs], [1,4Hs]
    ctxb_w_ref, ctxb_b_ref,                     # [Hs,Ht], [1,Ht]
    hb_w_ref, hb_b_ref, cb_w_ref, cb_b_ref,     # [Hs,Ht], [1,Ht] (x2)
    dec_wih_ref, dec_whh_ref, dec_b_ref,        # [E,4Ht], [Ht,4Ht], [1,4Ht]
    attn_in_wT_ref,                             # [Ht,Ht]  (attn_in_w transposed)
    attn_ctx_w_ref, attn_h_w_ref,               # [Ht,Ht] each (split attn_out_w)
    proj_w_ref, proj_b_ref,                     # [Ht,V], [1,V]
    # outputs
    logits_ref,     # [T*B, V]  f32  (lane-dense; probs computed outside)
    # scratch
    gx_enc_ref,     # VMEM [S, B, 4Hs]
    gx_dec_ref,     # VMEM [T, B, 4Ht]
    enc_out_ref,    # VMEM [S, B, Hs]
    ctx_ref,        # VMEM [S, B, Ht]
    ctxW_ref,       # VMEM [S, B, Ht]
    dec_out_ref,    # VMEM [T, B, Ht]
):
    S, B, E = src_emb_ref.shape
    T = tgt_emb_ref.shape[0]
    Hs = enc_whh_ref.shape[0]
    Ht = dec_whh_ref.shape[0]

    # ---- hoisted input-to-hidden projections: one large MXU matmul each ----
    gx_enc_ref[...] = (
        jnp.dot(src_emb_ref[...].reshape(S * B, E), enc_wih_ref[...],
                preferred_element_type=jnp.float32) + enc_b_ref[...]
    ).reshape(S, B, 4 * Hs)
    gx_dec_ref[...] = (
        jnp.dot(tgt_emb_ref[...].reshape(T * B, E), dec_wih_ref[...],
                preferred_element_type=jnp.float32) + dec_b_ref[...]
    ).reshape(T, B, 4 * Ht)

    enc_whh = enc_whh_ref[...]
    dec_whh = dec_whh_ref[...]
    attn_ctx_w = attn_ctx_w_ref[...]
    attn_h_w = attn_h_w_ref[...]

    def lstm_gates(g, c, H):
        # PyTorch LSTM gate order: i, f, g, o ; combined bias already in g.
        i = jax.nn.sigmoid(g[:, 0:H])
        f = jax.nn.sigmoid(g[:, H:2 * H])
        gg = jnp.tanh(g[:, 2 * H:3 * H])
        o = jax.nn.sigmoid(g[:, 3 * H:4 * H])
        c_new = f * c + i * gg
        h_new = o * jnp.tanh(c_new)
        return h_new, c_new

    # ---------- encoder: 1-layer LSTM with packed-sequence semantics ----------
    def enc_step(t, carry):
        h, c = carry
        g = gx_enc_ref[t] + jnp.dot(h, enc_whh, preferred_element_type=jnp.float32)
        h_new, c_new = lstm_gates(g, c, Hs)
        valid = srcmask_ref[t] > 0.5                    # [B, 1]
        h = jnp.where(valid, h_new, h)                  # hidden frozen past srclen
        c = jnp.where(valid, c_new, c)
        enc_out_ref[t] = jnp.where(valid, h_new, 0.0)   # pad_packed zeros
        return h, c

    zeros_s = jnp.zeros((B, Hs), jnp.float32)
    src_h, src_c = jax.lax.fori_loop(0, S, enc_step, (zeros_s, zeros_s),
                                     unroll=True)

    # ---------- ctx bridge + hoisted bilinear-attention input projection ------
    enc_flat = enc_out_ref[...].reshape(S * B, Hs)
    ctx_flat = (jnp.dot(enc_flat, ctxb_w_ref[...],
                        preferred_element_type=jnp.float32) + ctxb_b_ref[...])
    ctx_ref[...] = ctx_flat.reshape(S, B, Ht)
    ctxW_ref[...] = jnp.dot(ctx_flat, attn_in_wT_ref[...],
                            preferred_element_type=jnp.float32).reshape(S, B, Ht)

    # ---------- h / c bridges ----------
    h_t = (jnp.dot(src_h, hb_w_ref[...], preferred_element_type=jnp.float32)
           + hb_b_ref[...])
    c_t = (jnp.dot(src_c, cb_w_ref[...], preferred_element_type=jnp.float32)
           + cb_b_ref[...])

    # hoisted additive attention bias: 0 at real tokens, -1e30 at padding
    attn_bias = (srcmask_ref[...] - 1.0) * jnp.float32(1e30)     # [S, B, 1]

    # ---------- decoder: 1-layer attention LSTM (h_tilde fed back) ----------
    def dec_step(t, carry):
        h, c = carry                                    # h = previous h_tilde
        g = gx_dec_ref[t] + jnp.dot(h, dec_whh, preferred_element_type=jnp.float32)
        hy, cy = lstm_gates(g, c, Ht)
        # bilinear attention with hoisted projection: scores = <ctxW, hy>
        scores = jnp.sum(ctxW_ref[...] * hy[None, :, :], axis=-1,
                         keepdims=True)                 # [S, B, 1]
        scores = scores + attn_bias                     # additive pad mask
        m = jnp.max(scores, axis=0, keepdims=True)
        e = jnp.exp(scores - m)
        denom = jnp.sum(e, axis=0, keepdims=True)
        alpha = e * pl.reciprocal(denom, approx=True)   # [S, B, 1]
        weighted = jnp.sum(alpha * ctx_ref[...], axis=0)        # [B, Ht]
        h_tilde = jnp.tanh(
            jnp.dot(weighted, attn_ctx_w, preferred_element_type=jnp.float32)
            + jnp.dot(hy, attn_h_w, preferred_element_type=jnp.float32))
        dec_out_ref[t] = h_tilde
        return h_tilde, cy

    jax.lax.fori_loop(0, T, dec_step, (h_t, c_t), unroll=True)

    # ---------- output projection (softmax is computed outside in XLA) --------
    dec_flat = dec_out_ref[...].reshape(T * B, Ht)
    logits_ref[...] = (jnp.dot(dec_flat, proj_w_ref[...],
                               preferred_element_type=jnp.float32)
                       + proj_b_ref[...])


# --------------------------------- params -----------------------------------

def init_params(key, src_vocab, tgt_vocab, emb_dim, src_hidden, tgt_hidden,
                pad_id_src, pad_id_tgt):
    """Deterministic synthetic parameters. Linear weights stored as [in, out]."""
    ks = jax.random.split(key, 13)
    u = lambda k, shape, s=0.1: jax.random.uniform(k, shape, jnp.float32, -s, s)
    p = {}
    p["src_embedding"] = u(ks[0], (src_vocab, emb_dim)).at[pad_id_src].set(0.0)
    p["tgt_embedding"] = u(ks[1], (tgt_vocab, emb_dim)).at[pad_id_tgt].set(0.0)
    p["enc_wih"] = u(ks[2], (emb_dim, 4 * src_hidden))
    p["enc_whh"] = u(ks[3], (src_hidden, 4 * src_hidden))
    p["enc_b"] = jnp.zeros((1, 4 * src_hidden), jnp.float32)
    p["ctxb_w"] = u(ks[4], (src_hidden, tgt_hidden))
    p["ctxb_b"] = u(ks[5], (1, tgt_hidden))
    p["hb_w"] = u(ks[6], (src_hidden, tgt_hidden))
    p["hb_b"] = jnp.zeros((1, tgt_hidden), jnp.float32)   # init_weights(): bias = 0
    p["cb_w"] = u(ks[7], (src_hidden, tgt_hidden))
    p["cb_b"] = jnp.zeros((1, tgt_hidden), jnp.float32)   # init_weights(): bias = 0
    p["dec_wih"] = u(ks[8], (emb_dim, 4 * tgt_hidden))
    p["dec_whh"] = u(ks[9], (tgt_hidden, 4 * tgt_hidden))
    p["dec_b"] = jnp.zeros((1, 4 * tgt_hidden), jnp.float32)
    p["attn_in_w"] = u(ks[10], (tgt_hidden, tgt_hidden))
    p["attn_out_w"] = u(ks[11], (2 * tgt_hidden, tgt_hidden))
    p["proj_w"] = u(ks[12], (tgt_hidden, tgt_vocab))
    p["proj_b"] = jnp.zeros((1, tgt_vocab), jnp.float32)  # init_weights(): bias = 0
    return p


# -------------------------------- wrapper ------------------------------------

def seqmodel_forward(params, input_src, input_tgt, srcmask):
    """Returns (decoder_logit, probs), both [B, T, tgt_vocab] (PyTorch convention)."""
    # glue: embedding gathers + time-major layout + padding for the kernel
    src_emb = jnp.take(params["src_embedding"], input_src, axis=0)  # [B, S, E]
    tgt_emb = jnp.take(params["tgt_embedding"], input_tgt, axis=0)  # [B, T, E]
    B, S, E = src_emb.shape
    T = tgt_emb.shape[1]
    Hs = params["enc_whh"].shape[0]
    Ht = params["dec_whh"].shape[0]
    V = params["proj_w"].shape[1]

    # vreg/MXU-friendly padded sizes
    Bp = _round_up(B, 8)
    Ep = _round_up(E, 128)
    Hsp = _round_up(Hs, 128)
    Htp = _round_up(Ht, 128)
    Vp = _round_up(V, 128)

    f32 = jnp.float32
    src_tm = _pad_axis(_pad_axis(jnp.transpose(src_emb, (1, 0, 2)).astype(f32),
                                 1, Bp), 2, Ep)                    # [S, Bp, Ep]
    tgt_tm = _pad_axis(_pad_axis(jnp.transpose(tgt_emb, (1, 0, 2)).astype(f32),
                                 1, Bp), 2, Ep)                    # [T, Bp, Ep]
    mask_tm = _pad_axis(jnp.transpose(srcmask.astype(f32), (1, 0)),
                        1, Bp)[:, :, None]                         # [S, Bp, 1]

    # gate-block-aware LSTM weight padding (pad weights are zero -> padded lanes
    # of h / c stay exactly 0 through the recurrences)
    enc_wih = _pad_axis(_pad_lstm_gates(params["enc_wih"], Hs, Hsp), 0, Ep)
    enc_whh = _pad_axis(_pad_lstm_gates(params["enc_whh"], Hs, Hsp), 0, Hsp)
    enc_b = _pad_lstm_gates(params["enc_b"], Hs, Hsp)
    dec_wih = _pad_axis(_pad_lstm_gates(params["dec_wih"], Ht, Htp), 0, Ep)
    dec_whh = _pad_axis(_pad_lstm_gates(params["dec_whh"], Ht, Htp), 0, Htp)
    dec_b = _pad_lstm_gates(params["dec_b"], Ht, Htp)

    pad2 = lambda w, r, c: _pad_axis(_pad_axis(w, 0, r), 1, c)
    ctxb_w = pad2(params["ctxb_w"], Hsp, Htp)
    ctxb_b = _pad_axis(params["ctxb_b"], 1, Htp)
    hb_w = pad2(params["hb_w"], Hsp, Htp)
    hb_b = _pad_axis(params["hb_b"], 1, Htp)
    cb_w = pad2(params["cb_w"], Hsp, Htp)
    cb_b = _pad_axis(params["cb_b"], 1, Htp)
    attn_in_wT = pad2(params["attn_in_w"].T, Htp, Htp)
    attn_ctx_w = pad2(params["attn_out_w"][:Ht], Htp, Htp)   # concat split: ctx half
    attn_h_w = pad2(params["attn_out_w"][Ht:], Htp, Htp)     # concat split: h half
    proj_w = pad2(params["proj_w"], Htp, Vp)
    proj_b = _pad_axis(params["proj_b"], 1, Vp)

    args = [src_tm, tgt_tm, mask_tm,
            enc_wih, enc_whh, enc_b,
            ctxb_w, ctxb_b, hb_w, hb_b, cb_w, cb_b,
            dec_wih, dec_whh, dec_b,
            attn_in_wT, attn_ctx_w, attn_h_w,
            proj_w, proj_b]

    # advisory cost estimate for the XLA scheduler
    flops = 2 * (S * Bp * Ep * 4 * Hsp + T * Bp * Ep * 4 * Htp
                 + S * Bp * Hsp * 4 * Hsp + T * Bp * Htp * 4 * Htp
                 + S * Bp * Hsp * Htp + S * Bp * Htp * Htp
                 + 2 * Bp * Hsp * Htp + 2 * T * Bp * Htp * Htp
                 + T * Bp * Htp * Vp)
    transcendentals = (S * Bp * 5 * Hsp + T * Bp * 5 * Htp
                       + T * S * Bp + T * Bp * Htp)
    bytes_accessed = 4 * (sum(int(jnp.size(a)) for a in args) + T * Bp * Vp)

    vmem = pl.BlockSpec(memory_space=pltpu.MemorySpace.VMEM)
    logits_flat = pl.pallas_call(
        seqmodel_kernel,
        out_shape=jax.ShapeDtypeStruct((T * Bp, Vp), f32),   # lane-dense output
        in_specs=[vmem] * len(args),
        out_specs=vmem,
        scratch_shapes=[
            pltpu.VMEM((S, Bp, 4 * Hsp), f32),   # hoisted encoder x@W_ih gates
            pltpu.VMEM((T, Bp, 4 * Htp), f32),   # hoisted decoder x@W_ih gates
            pltpu.VMEM((S, Bp, Hsp), f32),       # encoder outputs
            pltpu.VMEM((S, Bp, Htp), f32),       # bridged ctx
            pltpu.VMEM((S, Bp, Htp), f32),       # ctx @ attn_in_w.T (hoisted)
            pltpu.VMEM((T, Bp, Htp), f32),       # decoder outputs (h_tilde)
        ],
        compiler_params=pltpu.CompilerParams(vmem_limit_bytes=32 * 1024 * 1024),
        cost_estimate=pl.CostEstimate(flops=flops,
                                      transcendentals=transcendentals,
                                      bytes_accessed=bytes_accessed),
    )(*args)

    # back to PyTorch batch-major (B, T, V); probs computed outside the kernel
    logits = jnp.transpose(logits_flat.reshape(T, Bp, Vp)[:, :B, :V], (1, 0, 2))
    probs = jax.nn.softmax(logits, axis=-1)
    return logits, probs


if __name__ == "__main__":
    key = jax.random.PRNGKey(0)
    B, S, T = 2, 8, 8
    SRC_VOCAB, TGT_VOCAB = 64, 128
    EMB_DIM, SRC_HID, TGT_HID = 32, 32, 32
    PAD_SRC, PAD_TGT = 0, 0

    kp, k1, k2 = jax.random.split(key, 3)
    params = init_params(kp, SRC_VOCAB, TGT_VOCAB, EMB_DIM, SRC_HID, TGT_HID,
                         PAD_SRC, PAD_TGT)

    input_src = jax.random.randint(k1, (B, S), 1, SRC_VOCAB, dtype=jnp.int32)
    input_tgt = jax.random.randint(k2, (B, T), 1, TGT_VOCAB, dtype=jnp.int32)
    srclens = jnp.array([S, 5], dtype=jnp.int32)
    # srcmask: 1 at real tokens, 0 at padding (forward inverts it into a pad mask)
    srcmask = (jnp.arange(S)[None, :] < srclens[:, None]).astype(jnp.float32)
    input_src = jnp.where(srcmask > 0.5, input_src, PAD_SRC)

    logits, probs = jax.jit(seqmodel_forward)(params, input_src, input_tgt, srcmask)
    jax.block_until_ready((logits, probs))

    assert logits.shape == (B, T, TGT_VOCAB)
    assert probs.shape == (B, T, TGT_VOCAB)
    assert bool(jnp.all(jnp.isfinite(logits)))
    assert bool(jnp.allclose(jnp.sum(probs, axis=-1), 1.0, atol=1e-4))
    print("KERNEL_OK")
</pallas_src>

<mosaic_0001>
module attributes {stable_mosaic.version = 11 : i64} {
  func.func @seqmodel_kernel(%arg0: memref<8x8x128xf32, #tpu.memory_space<vmem>>, %arg1: memref<8x8x128xf32, #tpu.memory_space<vmem>>, %arg2: memref<8x8x1xf32, #tpu.memory_space<vmem>>, %arg3: memref<128x512xf32, #tpu.memory_space<vmem>>, %arg4: memref<128x512xf32, #tpu.memory_space<vmem>>, %arg5: memref<1x512xf32, #tpu.memory_space<vmem>>, %arg6: memref<128x128xf32, #tpu.memory_space<vmem>>, %arg7: memref<1x128xf32, #tpu.memory_space<vmem>>, %arg8: memref<128x128xf32, #tpu.memory_space<vmem>>, %arg9: memref<1x128xf32, #tpu.memory_space<vmem>>, %arg10: memref<128x128xf32, #tpu.memory_space<vmem>>, %arg11: memref<1x128xf32, #tpu.memory_space<vmem>>, %arg12: memref<128x512xf32, #tpu.memory_space<vmem>>, %arg13: memref<128x512xf32, #tpu.memory_space<vmem>>, %arg14: memref<1x512xf32, #tpu.memory_space<vmem>>, %arg15: memref<128x128xf32, #tpu.memory_space<vmem>>, %arg16: memref<128x128xf32, #tpu.memory_space<vmem>>, %arg17: memref<128x128xf32, #tpu.memory_space<vmem>>, %arg18: memref<128x128xf32, #tpu.memory_space<vmem>>, %arg19: memref<1x128xf32, #tpu.memory_space<vmem>>, %arg20: memref<64x128xf32, #tpu.memory_space<vmem>>, %arg21: memref<8x8x512xf32, #tpu.memory_space<vmem>>, %arg22: memref<8x8x512xf32, #tpu.memory_space<vmem>>, %arg23: memref<8x8x128xf32, #tpu.memory_space<vmem>>, %arg24: memref<8x8x128xf32, #tpu.memory_space<vmem>>, %arg25: memref<8x8x128xf32, #tpu.memory_space<vmem>>, %arg26: memref<8x8x128xf32, #tpu.memory_space<vmem>>) attributes {dimension_semantics = [], scalar_prefetch = 0 : i64, scratch_operands = 6 : i64, tpu.core_type = #tpu.core_type<tc>} {
    %c0 = arith.constant 0 : index
    %c0_0 = arith.constant 0 : index
    %c0_1 = arith.constant 0 : index
    %0 = vector.load %arg0[%c0, %c0_0, %c0_1] : memref<8x8x128xf32, #tpu.memory_space<vmem>>, vector<8x8x128xf32>
    %1 = vector.shape_cast %0 : vector<8x8x128xf32> to vector<64x128xf32>
    %c0_2 = arith.constant 0 : index
    %c0_3 = arith.constant 0 : index
    %2 = vector.load %arg3[%c0_2, %c0_3] : memref<128x512xf32, #tpu.memory_space<vmem>>, vector<128x512xf32>
    %cst = arith.constant dense<0.000000e+00> : vector<64x512xf32>
    %3 = tpu.matmul %1, %2, %cst {dimension_numbers = #tpu.dot_dimension_numbers<[1], [0], [0], [1], [0, 0, 1, 1], [], []>} : vector<64x128xf32>, vector<128x512xf32>, vector<64x512xf32> -> vector<64x512xf32>
    %c0_4 = arith.constant 0 : index
    %c0_5 = arith.constant 0 : index
    %4 = vector.load %arg5[%c0_4, %c0_5] : memref<1x512xf32, #tpu.memory_space<vmem>>, vector<1x512xf32>
    %5 = vector.broadcast %4 : vector<1x512xf32> to vector<64x512xf32>
    %6 = arith.addf %3, %5 : vector<64x512xf32>
    %7 = vector.shape_cast %6 : vector<64x512xf32> to vector<8x8x512xf32>
    %c0_6 = arith.constant 0 : index
    %c0_7 = arith.constant 0 : index
    %c0_8 = arith.constant 0 : index
    %8 = vector.load %arg21[%c0_6, %c0_7, %c0_8] : memref<8x8x512xf32, #tpu.memory_space<vmem>>, vector<8x8x512xf32>
    tpu.vector_store %arg21[%c0_6, %c0_7, %c0_8], %7 {strides = array<i32>} : memref<8x8x512xf32, #tpu.memory_space<vmem>>, vector<8x8x512xf32>,
    %c0_9 = arith.constant 0 : index
    %c0_10 = arith.constant 0 : index
    %c0_11 = arith.constant 0 : index
    %9 = vector.load %arg1[%c0_9, %c0_10, %c0_11] : memref<8x8x128xf32, #tpu.memory_space<vmem>>, vector<8x8x128xf32>
    %10 = vector.shape_cast %9 : vector<8x8x128xf32> to vector<64x128xf32>
    %c0_12 = arith.constant 0 : index
    %c0_13 = arith.constant 0 : index
    %11 = vector.load %arg12[%c0_12, %c0_13] : memref<128x512xf32, #tpu.memory_space<vmem>>, vector<128x512xf32>
    %cst_14 = arith.constant dense<0.000000e+00> : vector<64x512xf32>
    %12 = tpu.matmul %10, %11, %cst_14 {dimension_numbers = #tpu.dot_dimension_numbers<[1], [0], [0], [1], [0, 0, 1, 1], [], []>} : vector<64x128xf32>, vector<128x512xf32>, vector<64x512xf32> -> vector<64x512xf32>
    %c0_15 = arith.constant 0 : index
    %c0_16 = arith.constant 0 : index
    %13 = vector.load %arg14[%c0_15, %c0_16] : memref<1x512xf32, #tpu.memory_space<vmem>>, vector<1x512xf32>
    %14 = vector.broadcast %13 : vector<1x512xf32> to vector<64x512xf32>
    %15 = arith.addf %12, %14 : vector<64x512xf32>
    %16 = vector.shape_cast %15 : vector<64x512xf32> to vector<8x8x512xf32>
    %c0_17 = arith.constant 0 : index
    %c0_18 = arith.constant 0 : index
    %c0_19 = arith.constant 0 : index
    %17 = vector.load %arg22[%c0_17, %c0_18, %c0_19] : memref<8x8x512xf32, #tpu.memory_space<vmem>>, vector<8x8x512xf32>
    tpu.vector_store %arg22[%c0_17, %c0_18, %c0_19], %16 {strides = array<i32>} : memref<8x8x512xf32, #tpu.memory_space<vmem>>, vector<8x8x512xf32>,
    %c0_20 = arith.constant 0 : index
    %c0_21 = arith.constant 0 : index
    %18 = vector.load %arg4[%c0_20, %c0_21] : memref<128x512xf32, #tpu.memory_space<vmem>>, vector<128x512xf32>
    %c0_22 = arith.constant 0 : index
    %c0_23 = arith.constant 0 : index
    %19 = vector.load %arg13[%c0_22, %c0_23] : memref<128x512xf32, #tpu.memory_space<vmem>>, vector<128x512xf32>
    %c0_24 = arith.constant 0 : index
    %c0_25 = arith.constant 0 : index
    %20 = vector.load %arg16[%c0_24, %c0_25] : memref<128x128xf32, #tpu.memory_space<vmem>>, vector<128x128xf32>
    %c0_26 = arith.constant 0 : index
    %c0_27 = arith.constant 0 : index
    %21 = vector.load %arg17[%c0_26, %c0_27] : memref<128x128xf32, #tpu.memory_space<vmem>>, vector<128x128xf32>
    %cst_28 = arith.constant 0.000000e+00 : f32
    %22 = vector.broadcast %cst_28 : f32 to vector<8x128xf32>
    %c0_i32 = arith.constant 0 : i32
    %23 = arith.index_cast %c0_i32 : i32 to index
    %c0_29 = arith.constant 0 : index
    %c0_30 = arith.constant 0 : index
    %24 = vector.load %arg21[%23, %c0_29, %c0_30] : memref<8x8x512xf32, #tpu.memory_space<vmem>>, vector<1x8x512xf32>
    %25 = vector.shape_cast %24 : vector<1x8x512xf32> to vector<8x512xf32>
    %cst_31 = arith.constant dense<0.000000e+00> : vector<8x512xf32>
    %26 = tpu.matmul %22, %18, %cst_31 {dimension_numbers = #tpu.dot_dimension_numbers<[1], [0], [0], [1], [0, 0, 1, 1], [], []>} : vector<8x128xf32>, vector<128x512xf32>, vector<8x512xf32> -> vector<8x512xf32>
    %27 = arith.addf %25, %26 : vector<8x512xf32>
    %28 = vector.extract_strided_slice %27 {offsets = [0, 0], sizes = [8, 128], strides = [1, 1]} : vector<8x512xf32> to vector<8x128xf32>
    %29 = arith.negf %28 : vector<8x128xf32>
    %30 = math.exp %29 : vector<8x128xf32>
    %cst_32 = arith.constant 1.000000e+00 : f32
    %31 = vector.broadcast %cst_32 : f32 to vector<8x128xf32>
    %32 = arith.addf %31, %30 : vector<8x128xf32>
    %33 = arith.divf %31, %32 : vector<8x128xf32>
    %34 = vector.extract_strided_slice %27 {offsets = [0, 128], sizes = [8, 128], strides = [1, 1]} : vector<8x512xf32> to vector<8x128xf32>
    %35 = arith.negf %34 : vector<8x128xf32>
    %36 = math.exp %35 : vector<8x128xf32>
    %cst_33 = arith.constant 1.000000e+00 : f32
    %37 = vector.broadcast %cst_33 : f32 to vector<8x128xf32>
    %38 = arith.addf %37, %36 : vector<8x128xf32>
    %39 = arith.divf %37, %38 : vector<8x128xf32>
    %40 = vector.extract_strided_slice %27 {offsets = [0, 256], sizes = [8, 128], strides = [1, 1]} : vector<8x512xf32> to vector<8x128xf32>
    %41 = math.tanh %40 : vector<8x128xf32>
    %42 = vector.extract_strided_slice %27 {offsets = [0, 384], sizes = [8, 128], strides = [1, 1]} : vector<8x512xf32> to vector<8x128xf32>
    %43 = arith.negf %42 : vector<8x128xf32>
    %44 = math.exp %43 : vector<8x128xf32>
    %cst_34 = arith.constant 1.000000e+00 : f32
    %45 = vector.broadcast %cst_34 : f32 to vector<8x128xf32>
    %46 = arith.addf %45, %44 : vector<8x128xf32>
    %47 = arith.divf %45, %46 : vector<8x128xf32>
    %48 = arith.mulf %39, %22 : vector<8x128xf32>
    %49 = arith.mulf %33, %41 : vector<8x128xf32>
    %50 = arith.addf %48, %49 : vector<8x128xf32>
    %51 = math.tanh %50 : vector<8x128xf32>
    %52 = arith.mulf %47, %51 : vector<8x128xf32>
    %53 = arith.index_cast %c0_i32 : i32 to index
    %c0_35 = arith.constant 0 : index
    %c0_36 = arith.constant 0 : index
    %54 = vector.load %arg2[%53, %c0_35, %c0_36] : memref<8x8x1xf32, #tpu.memory_space<vmem>>, vector<1x8x1xf32>
    %55 = vector.shape_cast %54 : vector<1x8x1xf32> to vector<8x1xf32>
    %cst_37 = arith.constant 5.000000e-01 : f32
    %56 = vector.broadcast %cst_37 : f32 to vector<8x1xf32>
    %57 = arith.cmpf ogt, %55, %56 : vector<8x1xf32>
    %58 = vector.shape_cast %57 : vector<8x1xi1> to vector<8x1xi1>
    %59 = vector.broadcast %58 : vector<8x1xi1> to vector<8x128xi1>
    %60 = arith.select %59, %52, %22 : vector<8x128xi1>, vector<8x128xf32>
    %61 = vector.shape_cast %57 : vector<8x1xi1> to vector<8x1xi1>
    %62 = vector.broadcast %61 : vector<8x1xi1> to vector<8x128xi1>
    %63 = arith.select %62, %50, %22 : vector<8x128xi1>, vector<8x128xf32>
    %cst_38 = arith.constant 0.000000e+00 : f32
    %64 = vector.shape_cast %57 : vector<8x1xi1> to vector<8x1xi1>
    %65 = vector.broadcast %64 : vector<8x1xi1> to vector<8x128xi1>
    %66 = vector.broadcast %cst_38 : f32 to vector<8x128xf32>
    %67 = arith.select %65, %52, %66 : vector<8x128xi1>, vector<8x128xf32>
    %68 = arith.index_cast %c0_i32 : i32 to index
    %c0_39 = arith.constant 0 : index
    %c0_40 = arith.constant 0 : index
    %69 = vector.load %arg23[%68, %c0_39, %c0_40] : memref<8x8x128xf32, #tpu.memory_space<vmem>>, vector<1x8x128xf32>
    %70 = vector.shape_cast %69 : vector<1x8x128xf32> to vector<8x128xf32>
    %71 = vector.shape_cast %67 : vector<8x128xf32> to vector<1x8x128xf32>
    tpu.vector_store %arg23[%68, %c0_39, %c0_40], %71 {strides = array<i32>} : memref<8x8x128xf32, #tpu.memory_space<vmem>>, vector<1x8x128xf32>,
    %c1_i32 = arith.constant 1 : i32
    %72 = arith.index_cast %c1_i32 : i32 to index
    %c0_41 = arith.constant 0 : index
    %c0_42 = arith.constant 0 : index
    %73 = vector.load %arg21[%72, %c0_41, %c0_42] : memref<8x8x512xf32, #tpu.memory_space<vmem>>, vector<1x8x512xf32>
    %74 = vector.shape_cast %73 : vector<1x8x512xf32> to vector<8x512xf32>
    %cst_43 = arith.constant dense<0.000000e+00> : vector<8x512xf32>
    %75 = tpu.matmul %60, %18, %cst_43 {dimension_numbers = #tpu.dot_dimension_numbers<[1], [0], [0], [1], [0, 0, 1, 1], [], []>} : vector<8x128xf32>, vector<128x512xf32>, vector<8x512xf32> -> vector<8x512xf32>
    %76 = arith.addf %74, %75 : vector<8x512xf32>
    %77 = vector.extract_strided_slice %76 {offsets = [0, 0], sizes = [8, 128], strides = [1, 1]} : vector<8x512xf32> to vector<8x128xf32>
    %78 = arith.negf %77 : vector<8x128xf32>
    %79 = math.exp %78 : vector<8x128xf32>
    %cst_44 = arith.constant 1.000000e+00 : f32
    %80 = vector.broadcast %cst_44 : f32 to vector<8x128xf32>
    %81 = arith.addf %80, %79 : vector<8x128xf32>
    %82 = arith.divf %80, %81 : vector<8x128xf32>
    %83 = vector.extract_strided_slice %76 {offsets = [0, 128], sizes = [8, 128], strides = [1, 1]} : vector<8x512xf32> to vector<8x128xf32>
    %84 = arith.negf %83 : vector<8x128xf32>
    %85 = math.exp %84 : vector<8x128xf32>
    %cst_45 = arith.constant 1.000000e+00 : f32
    %86 = vector.broadcast %cst_45 : f32 to vector<8x128xf32>
    %87 = arith.addf %86, %85 : vector<8x128xf32>
    %88 = arith.divf %86, %87 : vector<8x128xf32>
    %89 = vector.extract_strided_slice %76 {offsets = [0, 256], sizes = [8, 128], strides = [1, 1]} : vector<8x512xf32> to vector<8x128xf32>
    %90 = math.tanh %89 : vector<8x128xf32>
    %91 = vector.extract_strided_slice %76 {offsets = [0, 384], sizes = [8, 128], strides = [1, 1]} : vector<8x512xf32> to vector<8x128xf32>
    %92 = arith.negf %91 : vector<8x128xf32>
    %93 = math.exp %92 : vector<8x128xf32>
    %cst_46 = arith.constant 1.000000e+00 : f32
    %94 = vector.broadcast %cst_46 : f32 to vector<8x128xf32>
    %95 = arith.addf %94, %93 : vector<8x128xf32>
    %96 = arith.divf %94, %95 : vector<8x128xf32>
    %97 = arith.mulf %88, %63 : vector<8x128xf32>
    %98 = arith.mulf %82, %90 : vector<8x128xf32>
    %99 = arith.addf %97, %98 : vector<8x128xf32>
    %100 = math.tanh %99 : vector<8x128xf32>
    %101 = arith.mulf %96, %100 : vector<8x128xf32>
    %102 = arith.index_cast %c1_i32 : i32 to index
    %c0_47 = arith.constant 0 : index
    %c0_48 = arith.constant 0 : index
    %103 = vector.load %arg2[%102, %c0_47, %c0_48] : memref<8x8x1xf32, #tpu.memory_space<vmem>>, vector<1x8x1xf32>
    %104 = vector.shape_cast %103 : vector<1x8x1xf32> to vector<8x1xf32>
    %cst_49 = arith.constant 5.000000e-01 : f32
    %105 = vector.broadcast %cst_49 : f32 to vector<8x1xf32>
    %106 = arith.cmpf ogt, %104, %105 : vector<8x1xf32>
    %107 = vector.shape_cast %106 : vector<8x1xi1> to vector<8x1xi1>
    %108 = vector.broadcast %107 : vector<8x1xi1> to vector<8x128xi1>
    %109 = arith.select %108, %101, %60 : vector<8x128xi1>, vector<8x128xf32>
    %110 = vector.shape_cast %106 : vector<8x1xi1> to vector<8x1xi1>
    %111 = vector.broadcast %110 : vector<8x1xi1> to vector<8x128xi1>
    %112 = arith.select %111, %99, %63 : vector<8x128xi1>, vector<8x128xf32>
    %cst_50 = arith.constant 0.000000e+00 : f32
    %113 = vector.shape_cast %106 : vector<8x1xi1> to vector<8x1xi1>
    %114 = vector.broadcast %113 : vector<8x1xi1> to vector<8x128xi1>
    %115 = vector.broadcast %cst_50 : f32 to vector<8x128xf32>
    %116 = arith.select %114, %101, %115 : vector<8x128xi1>, vector<8x128xf32>
    %117 = arith.index_cast %c1_i32 : i32 to index
    %c0_51 = arith.constant 0 : index
    %c0_52 = arith.constant 0 : index
    %118 = vector.load %arg23[%117, %c0_51, %c0_52] : memref<8x8x128xf32, #tpu.memory_space<vmem>>, vector<1x8x128xf32>
    %119 = vector.shape_cast %118 : vector<1x8x128xf32> to vector<8x128xf32>
    %120 = vector.shape_cast %116 : vector<8x128xf32> to vector<1x8x128xf32>
    tpu.vector_store %arg23[%117, %c0_51, %c0_52], %120 {strides = array<i32>} : memref<8x8x128xf32, #tpu.memory_space<vmem>>, vector<1x8x128xf32>,
    %c2_i32 = arith.constant 2 : i32
    %121 = arith.index_cast %c2_i32 : i32 to index
    %c0_53 = arith.constant 0 : index
    %c0_54 = arith.constant 0 : index
    %122 = vector.load %arg21[%121, %c0_53, %c0_54] : memref<8x8x512xf32, #tpu.memory_space<vmem>>, vector<1x8x512xf32>
    %123 = vector.shape_cast %122 : vector<1x8x512xf32> to vector<8x512xf32>
    %cst_55 = arith.constant dense<0.000000e+00> : vector<8x512xf32>
    %124 = tpu.matmul %109, %18, %cst_55 {dimension_numbers = #tpu.dot_dimension_numbers<[1], [0], [0], [1], [0, 0, 1, 1], [], []>} : vector<8x128xf32>, vector<128x512xf32>, vector<8x512xf32> -> vector<8x512xf32>
    %125 = arith.addf %123, %124 : vector<8x512xf32>
    %126 = vector.extract_strided_slice %125 {offsets = [0, 0], sizes = [8, 128], strides = [1, 1]} : vector<8x512xf32> to vector<8x128xf32>
    %127 = arith.negf %126 : vector<8x128xf32>
    %128 = math.exp %127 : vector<8x128xf32>
    %cst_56 = arith.constant 1.000000e+00 : f32
    %129 = vector.broadcast %cst_56 : f32 to vector<8x128xf32>
    %130 = arith.addf %129, %128 : vector<8x128xf32>
    %131 = arith.divf %129, %130 : vector<8x128xf32>
    %132 = vector.extract_strided_slice %125 {offsets = [0, 128], sizes = [8, 128], strides = [1, 1]} : vector<8x512xf32> to vector<8x128xf32>
    %133 = arith.negf %132 : vector<8x128xf32>
    %134 = math.exp %133 : vector<8x128xf32>
    %cst_57 = arith.constant 1.000000e+00 : f32
    %135 = vector.broadcast %cst_57 : f32 to vector<8x128xf32>
    %136 = arith.addf %135, %134 : vector<8x128xf32>
    %137 = arith.divf %135, %136 : vector<8x128xf32>
    %138 = vector.extract_strided_slice %125 {offsets = [0, 256], sizes = [8, 128], strides = [1, 1]} : vector<8x512xf32> to vector<8x128xf32>
    %139 = math.tanh %138 : vector<8x128xf32>
    %140 = vector.extract_strided_slice %125 {offsets = [0, 384], sizes = [8, 128], strides = [1, 1]} : vector<8x512xf32> to vector<8x128xf32>
    %141 = arith.negf %140 : vector<8x128xf32>
    %142 = math.exp %141 : vector<8x128xf32>
    %cst_58 = arith.constant 1.000000e+00 : f32
    %143 = vector.broadcast %cst_58 : f32 to vector<8x128xf32>
    %144 = arith.addf %143, %142 : vector<8x128xf32>
    %145 = arith.divf %143, %144 : vector<8x128xf32>
    %146 = arith.mulf %137, %112 : vector<8x128xf32>
    %147 = arith.mulf %131, %139 : vector<8x128xf32>
    %148 = arith.addf %146, %147 : vector<8x128xf32>
    %149 = math.tanh %148 : vector<8x128xf32>
    %150 = arith.mulf %145, %149 : vector<8x128xf32>
    %151 = arith.index_cast %c2_i32 : i32 to index
    %c0_59 = arith.constant 0 : index
    %c0_60 = arith.constant 0 : index
    %152 = vector.load %arg2[%151, %c0_59, %c0_60] : memref<8x8x1xf32, #tpu.memory_space<vmem>>, vector<1x8x1xf32>
    %153 = vector.shape_cast %152 : vector<1x8x1xf32> to vector<8x1xf32>
    %cst_61 = arith.constant 5.000000e-01 : f32
    %154 = vector.broadcast %cst_61 : f32 to vector<8x1xf32>
    %155 = arith.cmpf ogt, %153, %154 : vector<8x1xf32>
    %156 = vector.shape_cast %155 : vector<8x1xi1> to vector<8x1xi1>
    %157 = vector.broadcast %156 : vector<8x1xi1> to vector<8x128xi1>
    %158 = arith.select %157, %150, %109 : vector<8x128xi1>, vector<8x128xf32>
    %159 = vector.shape_cast %155 : vector<8x1xi1> to vector<8x1xi1>
    %160 = vector.broadcast %159 : vector<8x1xi1> to vector<8x128xi1>
    %161 = arith.select %160, %148, %112 : vector<8x128xi1>, vector<8x128xf32>
    %cst_62 = arith.constant 0.000000e+00 : f32
    %162 = vector.shape_cast %155 : vector<8x1xi1> to vector<8x1xi1>
    %163 = vector.broadcast %162 : vector<8x1xi1> to vector<8x128xi1>
    %164 = vector.broadcast %cst_62 : f32 to vector<8x128xf32>
    %165 = arith.select %163, %150, %164 : vector<8x128xi1>, vector<8x128xf32>
    %166 = arith.index_cast %c2_i32 : i32 to index
    %c0_63 = arith.constant 0 : index
    %c0_64 = arith.constant 0 : index
    %167 = vector.load %arg23[%166, %c0_63, %c0_64] : memref<8x8x128xf32, #tpu.memory_space<vmem>>, vector<1x8x128xf32>
    %168 = vector.shape_cast %167 : vector<1x8x128xf32> to vector<8x128xf32>
    %169 = vector.shape_cast %165 : vector<8x128xf32> to vector<1x8x128xf32>
    tpu.vector_store %arg23[%166, %c0_63, %c0_64], %169 {strides = array<i32>} : memref<8x8x128xf32, #tpu.memory_space<vmem>>, vector<1x8x128xf32>,
    %c3_i32 = arith.constant 3 : i32
    %170 = arith.index_cast %c3_i32 : i32 to index
    %c0_65 = arith.constant 0 : index
    %c0_66 = arith.constant 0 : index
    %171 = vector.load %arg21[%170, %c0_65, %c0_66] : memref<8x8x512xf32, #tpu.memory_space<vmem>>, vector<1x8x512xf32>
    %172 = vector.shape_cast %171 : vector<1x8x512xf32> to vector<8x512xf32>
    %cst_67 = arith.constant dense<0.000000e+00> : vector<8x512xf32>
    %173 = tpu.matmul %158, %18, %cst_67 {dimension_numbers = #tpu.dot_dimension_numbers<[1], [0], [0], [1], [0, 0, 1, 1], [], []>} : vector<8x128xf32>, vector<128x512xf32>, vector<8x512xf32> -> vector<8x512xf32>
    %174 = arith.addf %172, %173 : vector<8x512xf32>
    %175 = vector.extract_strided_slice %174 {offsets = [0, 0], sizes = [8, 128], strides = [1, 1]} : vector<8x512xf32> to vector<8x128xf32>
    %176 = arith.negf %175 : vector<8x128xf32>
    %177 = math.exp %176 : vector<8x128xf32>
    %cst_68 = arith.constant 1.000000e+00 : f32
    %178 = vector.broadcast %cst_68 : f32 to vector<8x128xf32>
    %179 = arith.addf %178, %177 : vector<8x128xf32>
    %180 = arith.divf %178, %179 : vector<8x128xf32>
    %181 = vector.extract_strided_slice %174 {offsets = [0, 128], sizes = [8, 128], strides = [1, 1]} : vector<8x512xf32> to vector<8x128xf32>
    %182 = arith.negf %181 : vector<8x128xf32>
    %183 = math.exp %182 : vector<8x128xf32>
    %cst_69 = arith.constant 1.000000e+00 : f32
    %184 = vector.broadcast %cst_69 : f32 to vector<8x128xf32>
    %185 = arith.addf %184, %183 : vector<8x128xf32>
    %186 = arith.divf %184, %185 : vector<8x128xf32>
    %187 = vector.extract_strided_slice %174 {offsets = [0, 256], sizes = [8, 128], strides = [1, 1]} : vector<8x512xf32> to vector<8x128xf32>
    %188 = math.tanh %187 : vector<8x128xf32>
    %189 = vector.extract_strided_slice %174 {offsets = [0, 384], sizes = [8, 128], strides = [1, 1]} : vector<8x512xf32> to vector<8x128xf32>
    %190 = arith.negf %189 : vector<8x128xf32>
    %191 = math.exp %190 : vector<8x128xf32>
    %cst_70 = arith.constant 1.000000e+00 : f32
    %192 = vector.broadcast %cst_70 : f32 to vector<8x128xf32>
    %193 = arith.addf %192, %191 : vector<8x128xf32>
    %194 = arith.divf %192, %193 : vector<8x128xf32>
    %195 = arith.mulf %186, %161 : vector<8x128xf32>
    %196 = arith.mulf %180, %188 : vector<8x128xf32>
    %197 = arith.addf %195, %196 : vector<8x128xf32>
    %198 = math.tanh %197 : vector<8x128xf32>
    %199 = arith.mulf %194, %198 : vector<8x128xf32>
    %200 = arith.index_cast %c3_i32 : i32 to index
    %c0_71 = arith.constant 0 : index
    %c0_72 = arith.constant 0 : index
    %201 = vector.load %arg2[%200, %c0_71, %c0_72] : memref<8x8x1xf32, #tpu.memory_space<vmem>>, vector<1x8x1xf32>
    %202 = vector.shape_cast %201 : vector<1x8x1xf32> to vector<8x1xf32>
    %cst_73 = arith.constant 5.000000e-01 : f32
    %203 = vector.broadcast %cst_73 : f32 to vector<8x1xf32>
    %204 = arith.cmpf ogt, %202, %203 : vector<8x1xf32>
    %205 = vector.shape_cast %204 : vector<8x1xi1> to vector<8x1xi1>
    %206 = vector.broadcast %205 : vector<8x1xi1> to vector<8x128xi1>
    %207 = arith.select %206, %199, %158 : vector<8x128xi1>, vector<8x128xf32>
    %208 = vector.shape_cast %204 : vector<8x1xi1> to vector<8x1xi1>
    %209 = vector.broadcast %208 : vector<8x1xi1> to vector<8x128xi1>
    %210 = arith.select %209, %197, %161 : vector<8x128xi1>, vector<8x128xf32>
    %cst_74 = arith.constant 0.000000e+00 : f32
    %211 = vector.shape_cast %204 : vector<8x1xi1> to vector<8x1xi1>
    %212 = vector.broadcast %211 : vector<8x1xi1> to vector<8x128xi1>
    %213 = vector.broadcast %cst_74 : f32 to vector<8x128xf32>
    %214 = arith.select %212, %199, %213 : vector<8x128xi1>, vector<8x128xf32>
    %215 = arith.index_cast %c3_i32 : i32 to index
    %c0_75 = arith.constant 0 : index
    %c0_76 = arith.constant 0 : index
    %216 = vector.load %arg23[%215, %c0_75, %c0_76] : memref<8x8x128xf32, #tpu.memory_space<vmem>>, vector<1x8x128xf32>
    %217 = vector.shape_cast %216 : vector<1x8x128xf32> to vector<8x128xf32>
    %218 = vector.shape_cast %214 : vector<8x128xf32> to vector<1x8x128xf32>
    tpu.vector_store %arg23[%215, %c0_75, %c0_76], %218 {strides = array<i32>} : memref<8x8x128xf32, #tpu.memory_space<vmem>>, vector<1x8x128xf32>,
    %c4_i32 = arith.constant 4 : i32
    %219 = arith.index_cast %c4_i32 : i32 to index
    %c0_77 = arith.constant 0 : index
    %c0_78 = arith.constant 0 : index
    %220 = vector.load %arg21[%219, %c0_77, %c0_78] : memref<8x8x512xf32, #tpu.memory_space<vmem>>, vector<1x8x512xf32>
    %221 = vector.shape_cast %220 : vector<1x8x512xf32> to vector<8x512xf32>
    %cst_79 = arith.constant dense<0.000000e+00> : vector<8x512xf32>
    %222 = tpu.matmul %207, %18, %cst_79 {dimension_numbers = #tpu.dot_dimension_numbers<[1], [0], [0], [1], [0, 0, 1, 1], [], []>} : vector<8x128xf32>, vector<128x512xf32>, vector<8x512xf32> -> vector<8x512xf32>
    %223 = arith.addf %221, %222 : vector<8x512xf32>
    %224 = vector.extract_strided_slice %223 {offsets = [0, 0], sizes = [8, 128], strides = [1, 1]} : vector<8x512xf32> to vector<8x128xf32>
    %225 = arith.negf %224 : vector<8x128xf32>
    %226 = math.exp %225 : vector<8x128xf32>
    %cst_80 = arith.constant 1.000000e+00 : f32
    %227 = vector.broadcast %cst_80 : f32 to vector<8x128xf32>
    %228 = arith.addf %227, %226 : vector<8x128xf32>
    %229 = arith.divf %227, %228 : vector<8x128xf32>
    %230 = vector.extract_strided_slice %223 {offsets = [0, 128], sizes = [8, 128], strides = [1, 1]} : vector<8x512xf32> to vector<8x128xf32>
    %231 = arith.negf %230 : vector<8x128xf32>
    %232 = math.exp %231 : vector<8x128xf32>
    %cst_81 = arith.constant 1.000000e+00 : f32
    %233 = vector.broadcast %cst_81 : f32 to vector<8x128xf32>
    %234 = arith.addf %233, %232 : vector<8x128xf32>
    %235 = arith.divf %233, %234 : vector<8x128xf32>
    %236 = vector.extract_strided_slice %223 {offsets = [0, 256], sizes = [8, 128], strides = [1, 1]} : vector<8x512xf32> to vector<8x128xf32>
    %237 = math.tanh %236 : vector<8x128xf32>
    %238 = vector.extract_strided_slice %223 {offsets = [0, 384], sizes = [8, 128], strides = [1, 1]} : vector<8x512xf32> to vector<8x128xf32>
    %239 = arith.negf %238 : vector<8x128xf32>
    %240 = math.exp %239 : vector<8x128xf32>
    %cst_82 = arith.constant 1.000000e+00 : f32
    %241 = vector.broadcast %cst_82 : f32 to vector<8x128xf32>
    %242 = arith.addf %241, %240 : vector<8x128xf32>
    %243 = arith.divf %241, %242 : vector<8x128xf32>
    %244 = arith.mulf %235, %210 : vector<8x128xf32>
    %245 = arith.mulf %229, %237 : vector<8x128xf32>
    %246 = arith.addf %244, %245 : vector<8x128xf32>
    %247 = math.tanh %246 : vector<8x128xf32>
    %248 = arith.mulf %243, %247 : vector<8x128xf32>
    %249 = arith.index_cast %c4_i32 : i32 to index
    %c0_83 = arith.constant 0 : index
    %c0_84 = arith.constant 0 : index
    %250 = vector.load %arg2[%249, %c0_83, %c0_84] : memref<8x8x1xf32, #tpu.memory_space<vmem>>, vector<1x8x1xf32>
    %251 = vector.shape_cast %250 : vector<1x8x1xf32> to vector<8x1xf32>
    %cst_85 = arith.constant 5.000000e-01 : f32
    %252 = vector.broadcast %cst_85 : f32 to vector<8x1xf32>
    %253 = arith.cmpf ogt, %251, %252 : vector<8x1xf32>
    %254 = vector.shape_cast %253 : vector<8x1xi1> to vector<8x1xi1>
    %255 = vector.broadcast %254 : vector<8x1xi1> to vector<8x128xi1>
    %256 = arith.select %255, %248, %207 : vector<8x128xi1>, vector<8x128xf32>
    %257 = vector.shape_cast %253 : vector<8x1xi1> to vector<8x1xi1>
    %258 = vector.broadcast %257 : vector<8x1xi1> to vector<8x128xi1>
    %259 = arith.select %258, %246, %210 : vector<8x128xi1>, vector<8x128xf32>
    %cst_86 = arith.constant 0.000000e+00 : f32
    %260 = vector.shape_cast %253 : vector<8x1xi1> to vector<8x1xi1>
    %261 = vector.broadcast %260 : vector<8x1xi1> to vector<8x128xi1>
    %262 = vector.broadcast %cst_86 : f32 to vector<8x128xf32>
    %263 = arith.select %261, %248, %262 : vector<8x128xi1>, vector<8x128xf32>
    %264 = arith.index_cast %c4_i32 : i32 to index
    %c0_87 = arith.constant 0 : index
    %c0_88 = arith.constant 0 : index
    %265 = vector.load %arg23[%264, %c0_87, %c0_88] : memref<8x8x128xf32, #tpu.memory_space<vmem>>, vector<1x8x128xf32>
    %266 = vector.shape_cast %265 : vector<1x8x128xf32> to vector<8x128xf32>
    %267 = vector.shape_cast %263 : vector<8x128xf32> to vector<1x8x128xf32>
    tpu.vector_store %arg23[%264, %c0_87, %c0_88], %267 {strides = array<i32>} : memref<8x8x128xf32, #tpu.memory_space<vmem>>, vector<1x8x128xf32>,
    %c5_i32 = arith.constant 5 : i32
    %268 = arith.index_cast %c5_i32 : i32 to index
    %c0_89 = arith.constant 0 : index
    %c0_90 = arith.constant 0 : index
    %269 = vector.load %arg21[%268, %c0_89, %c0_90] : memref<8x8x512xf32, #tpu.memory_space<vmem>>, vector<1x8x512xf32>
    %270 = vector.shape_cast %269 : vector<1x8x512xf32> to vector<8x512xf32>
    %cst_91 = arith.constant dense<0.000000e+00> : vector<8x512xf32>
    %271 = tpu.matmul %256, %18, %cst_91 {dimension_numbers = #tpu.dot_dimension_numbers<[1], [0], [0], [1], [0, 0, 1, 1], [], []>} : vector<8x128xf32>, vector<128x512xf32>, vector<8x512xf32> -> vector<8x512xf32>
    %272 = arith.addf %270, %271 : vector<8x512xf32>
    %273 = vector.extract_strided_slice %272 {offsets = [0, 0], sizes = [8, 128], strides = [1, 1]} : vector<8x512xf32> to vector<8x128xf32>
    %274 = arith.negf %273 : vector<8x128xf32>
    %275 = math.exp %274 : vector<8x128xf32>
    %cst_92 = arith.constant 1.000000e+00 : f32
    %276 = vector.broadcast %cst_92 : f32 to vector<8x128xf32>
    %277 = arith.addf %276, %275 : vector<8x128xf32>
    %278 = arith.divf %276, %277 : vector<8x128xf32>
    %279 = vector.extract_strided_slice %272 {offsets = [0, 128], sizes = [8, 128], strides = [1, 1]} : vector<8x512xf32> to vector<8x128xf32>
    %280 = arith.negf %279 : vector<8x128xf32>
    %281 = math.exp %280 : vector<8x128xf32>
    %cst_93 = arith.constant 1.000000e+00 : f32
    %282 = vector.broadcast %cst_93 : f32 to vector<8x128xf32>
    %283 = arith.addf %282, %281 : vector<8x128xf32>
    %284 = arith.divf %282, %283 : vector<8x128xf32>
    %285 = vector.extract_strided_slice %272 {offsets = [0, 256], sizes = [8, 128], strides = [1, 1]} : vector<8x512xf32> to vector<8x128xf32>
    %286 = math.tanh %285 : vector<8x128xf32>
    %287 = vector.extract_strided_slice %272 {offsets = [0, 384], sizes = [8, 128], strides = [1, 1]} : vector<8x512xf32> to vector<8x128xf32>
    %288 = arith.negf %287 : vector<8x128xf32>
    %289 = math.exp %288 : vector<8x128xf32>
    %cst_94 = arith.constant 1.000000e+00 : f32
    %290 = vector.broadcast %cst_94 : f32 to vector<8x128xf32>
    %291 = arith.addf %290, %289 : vector<8x128xf32>
    %292 = arith.divf %290, %291 : vector<8x128xf32>
    %293 = arith.mulf %284, %259 : vector<8x128xf32>
    %294 = arith.mulf %278, %286 : vector<8x128xf32>
    %295 = arith.addf %293, %294 : vector<8x128xf32>
    %296 = math.tanh %295 : vector<8x128xf32>
    %297 = arith.mulf %292, %296 : vector<8x128xf32>
    %298 = arith.index_cast %c5_i32 : i32 to index
    %c0_95 = arith.constant 0 : index
    %c0_96 = arith.constant 0 : index
    %299 = vector.load %arg2[%298, %c0_95, %c0_96] : memref<8x8x1xf32, #tpu.memory_space<vmem>>, vector<1x8x1xf32>
    %300 = vector.shape_cast %299 : vector<1x8x1xf32> to vector<8x1xf32>
    %cst_97 = arith.constant 5.000000e-01 : f32
    %301 = vector.broadcast %cst_97 : f32 to vector<8x1xf32>
    %302 = arith.cmpf ogt, %300, %301 : vector<8x1xf32>
    %303 = vector.shape_cast %302 : vector<8x1xi1> to vector<8x1xi1>
    %304 = vector.broadcast %303 : vector<8x1xi1> to vector<8x128xi1>
    %305 = arith.select %304, %297, %256 : vector<8x128xi1>, vector<8x128xf32>
    %306 = vector.shape_cast %302 : vector<8x1xi1> to vector<8x1xi1>
    %307 = vector.broadcast %306 : vector<8x1xi1> to vector<8x128xi1>
    %308 = arith.select %307, %295, %259 : vector<8x128xi1>, vector<8x128xf32>
    %cst_98 = arith.constant 0.000000e+00 : f32
    %309 = vector.shape_cast %302 : vector<8x1xi1> to vector<8x1xi1>
    %310 = vector.broadcast %309 : vector<8x1xi1> to vector<8x128xi1>
    %311 = vector.broadcast %cst_98 : f32 to vector<8x128xf32>
    %312 = arith.select %310, %297, %311 : vector<8x128xi1>, vector<8x128xf32>
    %313 = arith.index_cast %c5_i32 : i32 to index
    %c0_99 = arith.constant 0 : index
    %c0_100 = arith.constant 0 : index
    %314 = vector.load %arg23[%313, %c0_99, %c0_100] : memref<8x8x128xf32, #tpu.memory_space<vmem>>, vector<1x8x128xf32>
    %315 = vector.shape_cast %314 : vector<1x8x128xf32> to vector<8x128xf32>
    %316 = vector.shape_cast %312 : vector<8x128xf32> to vector<1x8x128xf32>
    tpu.vector_store %arg23[%313, %c0_99, %c0_100], %316 {strides = array<i32>} : memref<8x8x128xf32, #tpu.memory_space<vmem>>, vector<1x8x128xf32>,
    %c6_i32 = arith.constant 6 : i32
    %317 = arith.index_cast %c6_i32 : i32 to index
    %c0_101 = arith.constant 0 : index
    %c0_102 = arith.constant 0 : index
    %318 = vector.load %arg21[%317, %c0_101, %c0_102] : memref<8x8x512xf32, #tpu.memory_space<vmem>>, vector<1x8x512xf32>
    %319 = vector.shape_cast %318 : vector<1x8x512xf32> to vector<8x512xf32>
    %cst_103 = arith.constant dense<0.000000e+00> : vector<8x512xf32>
    %320 = tpu.matmul %305, %18, %cst_103 {dimension_numbers = #tpu.dot_dimension_numbers<[1], [0], [0], [1], [0, 0, 1, 1], [], []>} : vector<8x128xf32>, vector<128x512xf32>, vector<8x512xf32> -> vector<8x512xf32>
    %321 = arith.addf %319, %320 : vector<8x512xf32>
    %322 = vector.extract_strided_slice %321 {offsets = [0, 0], sizes = [8, 128], strides = [1, 1]} : vector<8x512xf32> to vector<8x128xf32>
    %323 = arith.negf %322 : vector<8x128xf32>
    %324 = math.exp %323 : vector<8x128xf32>
    %cst_104 = arith.constant 1.000000e+00 : f32
    %325 = vector.broadcast %cst_104 : f32 to vector<8x128xf32>
    %326 = arith.addf %325, %324 : vector<8x128xf32>
    %327 = arith.divf %325, %326 : vector<8x128xf32>
    %328 = vector.extract_strided_slice %321 {offsets = [0, 128], sizes = [8, 128], strides = [1, 1]} : vector<8x512xf32> to vector<8x128xf32>
    %329 = arith.negf %328 : vector<8x128xf32>
    %330 = math.exp %329 : vector<8x128xf32>
    %cst_105 = arith.constant 1.000000e+00 : f32
    %331 = vector.broadcast %cst_105 : f32 to vector<8x128xf32>
    %332 = arith.addf %331, %330 : vector<8x128xf32>
    %333 = arith.divf %331, %332 : vector<8x128xf32>
    %334 = vector.extract_strided_slice %321 {offsets = [0, 256], sizes = [8, 128], strides = [1, 1]} : vector<8x512xf32> to vector<8x128xf32>
    %335 = math.tanh %334 : vector<8x128xf32>
    %336 = vector.extract_strided_slice %321 {offsets = [0, 384], sizes = [8, 128], strides = [1, 1]} : vector<8x512xf32> to vector<8x128xf32>
    %337 = arith.negf %336 : vector<8x128xf32>
    %338 = math.exp %337 : vector<8x128xf32>
    %cst_106 = arith.constant 1.000000e+00 : f32
    %339 = vector.broadcast %cst_106 : f32 to vector<8x128xf32>
    %340 = arith.addf %339, %338 : vector<8x128xf32>
    %341 = arith.divf %339, %340 : vector<8x128xf32>
    %342 = arith.mulf %333, %308 : vector<8x128xf32>
    %343 = arith.mulf %327, %335 : vector<8x128xf32>
    %344 = arith.addf %342, %343 : vector<8x128xf32>
    %345 = math.tanh %344 : vector<8x128xf32>
    %346 = arith.mulf %341, %345 : vector<8x128xf32>
    %347 = arith.index_cast %c6_i32 : i32 to index
    %c0_107 = arith.constant 0 : index
    %c0_108 = arith.constant 0 : index
    %348 = vector.load %arg2[%347, %c0_107, %c0_108] : memref<8x8x1xf32, #tpu.memory_space<vmem>>, vector<1x8x1xf32>
    %349 = vector.shape_cast %348 : vector<1x8x1xf32> to vector<8x1xf32>
    %cst_109 = arith.constant 5.000000e-01 : f32
    %350 = vector.broadcast %cst_109 : f32 to vector<8x1xf32>
    %351 = arith.cmpf ogt, %349, %350 : vector<8x1xf32>
    %352 = vector.shape_cast %351 : vector<8x1xi1> to vector<8x1xi1>
    %353 = vector.broadcast %352 : vector<8x1xi1> to vector<8x128xi1>
    %354 = arith.select %353, %346, %305 : vector<8x128xi1>, vector<8x128xf32>
    %355 = vector.shape_cast %351 : vector<8x1xi1> to vector<8x1xi1>
    %356 = vector.broadcast %355 : vector<8x1xi1> to vector<8x128xi1>
    %357 = arith.select %356, %344, %308 : vector<8x128xi1>, vector<8x128xf32>
    %cst_110 = arith.constant 0.000000e+00 : f32
    %358 = vector.shape_cast %351 : vector<8x1xi1> to vector<8x1xi1>
    %359 = vector.broadcast %358 : vector<8x1xi1> to vector<8x128xi1>
    %360 = vector.broadcast %cst_110 : f32 to vector<8x128xf32>
    %361 = arith.select %359, %346, %360 : vector<8x128xi1>, vector<8x128xf32>
    %362 = arith.index_cast %c6_i32 : i32 to index
    %c0_111 = arith.constant 0 : index
    %c0_112 = arith.constant 0 : index
    %363 = vector.load %arg23[%362, %c0_111, %c0_112] : memref<8x8x128xf32, #tpu.memory_space<vmem>>, vector<1x8x128xf32>
    %364 = vector.shape_cast %363 : vector<1x8x128xf32> to vector<8x128xf32>
    %365 = vector.shape_cast %361 : vector<8x128xf32> to vector<1x8x128xf32>
    tpu.vector_store %arg23[%362, %c0_111, %c0_112], %365 {strides = array<i32>} : memref<8x8x128xf32, #tpu.memory_space<vmem>>, vector<1x8x128xf32>,
    %c7_i32 = arith.constant 7 : i32
    %366 = arith.index_cast %c7_i32 : i32 to index
    %c0_113 = arith.constant 0 : index
    %c0_114 = arith.constant 0 : index
    %367 = vector.load %arg21[%366, %c0_113, %c0_114] : memref<8x8x512xf32, #tpu.memory_space<vmem>>, vector<1x8x512xf32>
    %368 = vector.shape_cast %367 : vector<1x8x512xf32> to vector<8x512xf32>
    %cst_115 = arith.constant dense<0.000000e+00> : vector<8x512xf32>
    %369 = tpu.matmul %354, %18, %cst_115 {dimension_numbers = #tpu.dot_dimension_numbers<[1], [0], [0], [1], [0, 0, 1, 1], [], []>} : vector<8x128xf32>, vector<128x512xf32>, vector<8x512xf32> -> vector<8x512xf32>
    %370 = arith.addf %368, %369 : vector<8x512xf32>
    %371 = vector.extract_strided_slice %370 {offsets = [0, 0], sizes = [8, 128], strides = [1, 1]} : vector<8x512xf32> to vector<8x128xf32>
    %372 = arith.negf %371 : vector<8x128xf32>
    %373 = math.exp %372 : vector<8x128xf32>
    %cst_116 = arith.constant 1.000000e+00 : f32
    %374 = vector.broadcast %cst_116 : f32 to vector<8x128xf32>
    %375 = arith.addf %374, %373 : vector<8x128xf32>
    %376 = arith.divf %374, %375 : vector<8x128xf32>
    %377 = vector.extract_strided_slice %370 {offsets = [0, 128], sizes = [8, 128], strides = [1, 1]} : vector<8x512xf32> to vector<8x128xf32>
    %378 = arith.negf %377 : vector<8x128xf32>
    %379 = math.exp %378 : vector<8x128xf32>
    %cst_117 = arith.constant 1.000000e+00 : f32
    %380 = vector.broadcast %cst_117 : f32 to vector<8x128xf32>
    %381 = arith.addf %380, %379 : vector<8x128xf32>
    %382 = arith.divf %380, %381 : vector<8x128xf32>
    %383 = vector.extract_strided_slice %370 {offsets = [0, 256], sizes = [8, 128], strides = [1, 1]} : vector<8x512xf32> to vector<8x128xf32>
    %384 = math.tanh %383 : vector<8x128xf32>
    %385 = vector.extract_strided_slice %370 {offsets = [0, 384], sizes = [8, 128], strides = [1, 1]} : vector<8x512xf32> to vector<8x128xf32>
    %386 = arith.negf %385 : vector<8x128xf32>
    %387 = math.exp %386 : vector<8x128xf32>
    %cst_118 = arith.constant 1.000000e+00 : f32
    %388 = vector.broadcast %cst_118 : f32 to vector<8x128xf32>
    %389 = arith.addf %388, %387 : vector<8x128xf32>
    %390 = arith.divf %388, %389 : vector<8x128xf32>
    %391 = arith.mulf %382, %357 : vector<8x128xf32>
    %392 = arith.mulf %376, %384 : vector<8x128xf32>
    %393 = arith.addf %391, %392 : vector<8x128xf32>
    %394 = math.tanh %393 : vector<8x128xf32>
    %395 = arith.mulf %390, %394 : vector<8x128xf32>
    %396 = arith.index_cast %c7_i32 : i32 to index
    %c0_119 = arith.constant 0 : index
    %c0_120 = arith.constant 0 : index
    %397 = vector.load %arg2[%396, %c0_119, %c0_120] : memref<8x8x1xf32, #tpu.memory_space<vmem>>, vector<1x8x1xf32>
    %398 = vector.shape_cast %397 : vector<1x8x1xf32> to vector<8x1xf32>
    %cst_121 = arith.constant 5.000000e-01 : f32
    %399 = vector.broadcast %cst_121 : f32 to vector<8x1xf32>
    %400 = arith.cmpf ogt, %398, %399 : vector<8x1xf32>
    %401 = vector.shape_cast %400 : vector<8x1xi1> to vector<8x1xi1>
    %402 = vector.broadcast %401 : vector<8x1xi1> to vector<8x128xi1>
    %403 = arith.select %402, %395, %354 : vector<8x128xi1>, vector<8x128xf32>
    %404 = vector.shape_cast %400 : vector<8x1xi1> to vector<8x1xi1>
    %405 = vector.broadcast %404 : vector<8x1xi1> to vector<8x128xi1>
    %406 = arith.select %405, %393, %357 : vector<8x128xi1>, vector<8x128xf32>
    %cst_122 = arith.constant 0.000000e+00 : f32
    %407 = vector.shape_cast %400 : vector<8x1xi1> to vector<8x1xi1>
    %408 = vector.broadcast %407 : vector<8x1xi1> to vector<8x128xi1>
    %409 = vector.broadcast %cst_122 : f32 to vector<8x128xf32>
    %410 = arith.select %408, %395, %409 : vector<8x128xi1>, vector<8x128xf32>
    %411 = arith.index_cast %c7_i32 : i32 to index
    %c0_123 = arith.constant 0 : index
    %c0_124 = arith.constant 0 : index
    %412 = vector.load %arg23[%411, %c0_123, %c0_124] : memref<8x8x128xf32, #tpu.memory_space<vmem>>, vector<1x8x128xf32>
    %413 = vector.shape_cast %412 : vector<1x8x128xf32> to vector<8x128xf32>
    %414 = vector.shape_cast %410 : vector<8x128xf32> to vector<1x8x128xf32>
    tpu.vector_store %arg23[%411, %c0_123, %c0_124], %414 {strides = array<i32>} : memref<8x8x128xf32, #tpu.memory_space<vmem>>, vector<1x8x128xf32>,
    %c8_i32 = arith.constant 8 : i32
    %c0_125 = arith.constant 0 : index
    %c0_126 = arith.constant 0 : index
    %c0_127 = arith.constant 0 : index
    %415 = vector.load %arg23[%c0_125, %c0_126, %c0_127] : memref<8x8x128xf32, #tpu.memory_space<vmem>>, vector<8x8x128xf32>
    %416 = vector.shape_cast %415 : vector<8x8x128xf32> to vector<64x128xf32>
    %c0_128 = arith.constant 0 : index
    %c0_129 = arith.constant 0 : index
    %417 = vector.load %arg6[%c0_128, %c0_129] : memref<128x128xf32, #tpu.memory_space<vmem>>, vector<128x128xf32>
    %cst_130 = arith.constant dense<0.000000e+00> : vector<64x128xf32>
    %418 = tpu.matmul %416, %417, %cst_130 {dimension_numbers = #tpu.dot_dimension_numbers<[1], [0], [0], [1], [0, 0, 1, 1], [], []>} : vector<64x128xf32>, vector<128x128xf32>, vector<64x128xf32> -> vector<64x128xf32>
    %c0_131 = arith.constant 0 : index
    %c0_132 = arith.constant 0 : index
    %419 = vector.load %arg7[%c0_131, %c0_132] : memref<1x128xf32, #tpu.memory_space<vmem>>, vector<1x128xf32>
    %420 = vector.broadcast %419 : vector<1x128xf32> to vector<64x128xf32>
    %421 = arith.addf %418, %420 : vector<64x128xf32>
    %422 = vector.shape_cast %421 : vector<64x128xf32> to vector<8x8x128xf32>
    %c0_133 = arith.constant 0 : index
    %c0_134 = arith.constant 0 : index
    %c0_135 = arith.constant 0 : index
    %423 = vector.load %arg24[%c0_133, %c0_134, %c0_135] : memref<8x8x128xf32, #tpu.memory_space<vmem>>, vector<8x8x128xf32>
    tpu.vector_store %arg24[%c0_133, %c0_134, %c0_135], %422 {strides = array<i32>} : memref<8x8x128xf32, #tpu.memory_space<vmem>>, vector<8x8x128xf32>,
    %c0_136 = arith.constant 0 : index
    %c0_137 = arith.constant 0 : index
    %424 = vector.load %arg15[%c0_136, %c0_137] : memref<128x128xf32, #tpu.memory_space<vmem>>, vector<128x128xf32>
    %cst_138 = arith.constant dense<0.000000e+00> : vector<64x128xf32>
    %425 = tpu.matmul %421, %424, %cst_138 {dimension_numbers = #tpu.dot_dimension_numbers<[1], [0], [0], [1], [0, 0, 1, 1], [], []>} : vector<64x128xf32>, vector<128x128xf32>, vector<64x128xf32> -> vector<64x128xf32>
    %426 = vector.shape_cast %425 : vector<64x128xf32> to vector<8x8x128xf32>
    %c0_139 = arith.constant 0 : index
    %c0_140 = arith.constant 0 : index
    %c0_141 = arith.constant 0 : index
    %427 = vector.load %arg25[%c0_139, %c0_140, %c0_141] : memref<8x8x128xf32, #tpu.memory_space<vmem>>, vector<8x8x128xf32>
    tpu.vector_store %arg25[%c0_139, %c0_140, %c0_141], %426 {strides = array<i32>} : memref<8x8x128xf32, #tpu.memory_space<vmem>>, vector<8x8x128xf32>,
    %c0_142 = arith.constant 0 : index
    %c0_143 = arith.constant 0 : index
    %428 = vector.load %arg8[%c0_142, %c0_143] : memref<128x128xf32, #tpu.memory_space<vmem>>, vector<128x128xf32>
    %cst_144 = arith.constant dense<0.000000e+00> : vector<8x128xf32>
    %429 = tpu.matmul %403, %428, %cst_144 {dimension_numbers = #tpu.dot_dimension_numbers<[1], [0], [0], [1], [0, 0, 1, 1], [], []>} : vector<8x128xf32>, vector<128x128xf32>, vector<8x128xf32> -> vector<8x128xf32>
    %c0_145 = arith.constant 0 : index
    %c0_146 = arith.constant 0 : index
    %430 = vector.load %arg9[%c0_145, %c0_146] : memref<1x128xf32, #tpu.memory_space<vmem>>, vector<1x128xf32>
    %431 = vector.broadcast %430 : vector<1x128xf32> to vector<8x128xf32>
    %432 = arith.addf %429, %431 : vector<8x128xf32>
    %c0_147 = arith.constant 0 : index
    %c0_148 = arith.constant 0 : index
    %433 = vector.load %arg10[%c0_147, %c0_148] : memref<128x128xf32, #tpu.memory_space<vmem>>, vector<128x128xf32>
    %cst_149 = arith.constant dense<0.000000e+00> : vector<8x128xf32>
    %434 = tpu.matmul %406, %433, %cst_149 {dimension_numbers = #tpu.dot_dimension_numbers<[1], [0], [0], [1], [0, 0, 1, 1], [], []>} : vector<8x128xf32>, vector<128x128xf32>, vector<8x128xf32> -> vector<8x128xf32>
    %c0_150 = arith.constant 0 : index
    %c0_151 = arith.constant 0 : index
    %435 = vector.load %arg11[%c0_150, %c0_151] : memref<1x128xf32, #tpu.memory_space<vmem>>, vector<1x128xf32>
    %436 = vector.broadcast %435 : vector<1x128xf32> to vector<8x128xf32>
    %437 = arith.addf %434, %436 : vector<8x128xf32>
    %c0_152 = arith.constant 0 : index
    %c0_153 = arith.constant 0 : index
    %c0_154 = arith.constant 0 : index
    %438 = vector.load %arg2[%c0_152, %c0_153, %c0_154] : memref<8x8x1xf32, #tpu.memory_space<vmem>>, vector<8x8x1xf32>
    %cst_155 = arith.constant 1.000000e+00 : f32
    %439 = vector.broadcast %cst_155 : f32 to vector<8x8x1xf32>
    %440 = arith.subf %438, %439 : vector<8x8x1xf32>
    %cst_156 = arith.constant 1.000000e+30 : f32
    %441 = vector.broadcast %cst_156 : f32 to vector<8x8x1xf32>
    %442 = arith.mulf %440, %441 : vector<8x8x1xf32>
    %c0_i32_157 = arith.constant 0 : i32
    %443 = arith.index_cast %c0_i32_157 : i32 to index
    %c0_158 = arith.constant 0 : index
    %c0_159 = arith.constant 0 : index
    %444 = vector.load %arg22[%443, %c0_158, %c0_159] : memref<8x8x512xf32, #tpu.memory_space<vmem>>, vector<1x8x512xf32>
    %445 = vector.shape_cast %444 : vector<1x8x512xf32> to vector<8x512xf32>
    %cst_160 = arith.constant dense<0.000000e+00> : vector<8x512xf32>
    %446 = tpu.matmul %432, %19, %cst_160 {dimension_numbers = #tpu.dot_dimension_numbers<[1], [0], [0], [1], [0, 0, 1, 1], [], []>} : vector<8x128xf32>, vector<128x512xf32>, vector<8x512xf32> -> vector<8x512xf32>
    %447 = arith.addf %445, %446 : vector<8x512xf32>
    %448 = vector.extract_strided_slice %447 {offsets = [0, 0], sizes = [8, 128], strides = [1, 1]} : vector<8x512xf32> to vector<8x128xf32>
    %449 = arith.negf %448 : vector<8x128xf32>
    %450 = math.exp %449 : vector<8x128xf32>
    %cst_161 = arith.constant 1.000000e+00 : f32
    %451 = vector.broadcast %cst_161 : f32 to vector<8x128xf32>
    %452 = arith.addf %451, %450 : vector<8x128xf32>
    %453 = arith.divf %451, %452 : vector<8x128xf32>
    %454 = vector.extract_strided_slice %447 {offsets = [0, 128], sizes = [8, 128], strides = [1, 1]} : vector<8x512xf32> to vector<8x128xf32>
    %455 = arith.negf %454 : vector<8x128xf32>
    %456 = math.exp %455 : vector<8x128xf32>
    %cst_162 = arith.constant 1.000000e+00 : f32
    %457 = vector.broadcast %cst_162 : f32 to vector<8x128xf32>
    %458 = arith.addf %457, %456 : vector<8x128xf32>
    %459 = arith.divf %457, %458 : vector<8x128xf32>
    %460 = vector.extract_strided_slice %447 {offsets = [0, 256], sizes = [8, 128], strides = [1, 1]} : vector<8x512xf32> to vector<8x128xf32>
    %461 = math.tanh %460 : vector<8x128xf32>
    %462 = vector.extract_strided_slice %447 {offsets = [0, 384], sizes = [8, 128], strides = [1, 1]} : vector<8x512xf32> to vector<8x128xf32>
    %463 = arith.negf %462 : vector<8x128xf32>
    %464 = math.exp %463 : vector<8x128xf32>
    %cst_163 = arith.constant 1.000000e+00 : f32
    %465 = vector.broadcast %cst_163 : f32 to vector<8x128xf32>
    %466 = arith.addf %465, %464 : vector<8x128xf32>
    %467 = arith.divf %465, %466 : vector<8x128xf32>
    %468 = arith.mulf %459, %437 : vector<8x128xf32>
    %469 = arith.mulf %453, %461 : vector<8x128xf32>
    %470 = arith.addf %468, %469 : vector<8x128xf32>
    %471 = math.tanh %470 : vector<8x128xf32>
    %472 = arith.mulf %467, %471 : vector<8x128xf32>
    %c0_164 = arith.constant 0 : index
    %c0_165 = arith.constant 0 : index
    %c0_166 = arith.constant 0 : index
    %473 = vector.load %arg25[%c0_164, %c0_165, %c0_166] : memref<8x8x128xf32, #tpu.memory_space<vmem>>, vector<8x8x128xf32>
    %474 = vector.shape_cast %472 : vector<8x128xf32> to vector<1x8x128xf32>
    %475 = vector.broadcast %474 : vector<1x8x128xf32> to vector<8x8x128xf32>
    %476 = arith.mulf %473, %475 : vector<8x8x128xf32>
    %cst_167 = arith.constant dense<0.000000e+00> : vector<8x8xf32>
    %477 = vector.multi_reduction <add>, %476, %cst_167 [2] : vector<8x8x128xf32> to vector<8x8xf32>
    %478 = vector.shape_cast %477 : vector<8x8xf32> to vector<8x8x1xf32>
    %479 = arith.addf %478, %442 : vector<8x8x1xf32>
    %cst_168 = arith.constant dense<0xFF800000> : vector<8x1xf32>
    %480 = vector.multi_reduction <maximumf>, %479, %cst_168 [0] : vector<8x8x1xf32> to vector<8x1xf32>
    %481 = vector.shape_cast %480 : vector<8x1xf32> to vector<1x8x1xf32>
    %482 = vector.broadcast %481 : vector<1x8x1xf32> to vector<8x8x1xf32>
    %483 = arith.subf %479, %482 : vector<8x8x1xf32>
    %484 = math.exp %483 : vector<8x8x1xf32>
    %cst_169 = arith.constant dense<0.000000e+00> : vector<8x1xf32>
    %485 = vector.multi_reduction <add>, %484, %cst_169 [0] : vector<8x8x1xf32> to vector<8x1xf32>
    %486 = vector.shape_cast %485 : vector<8x1xf32> to vector<1x8x1xf32>
    %487 = tpu.reciprocal %486 {approx = true} : vector<1x8x1xf32> -> vector<1x8x1xf32>
    %488 = vector.broadcast %487 : vector<1x8x1xf32> to vector<8x8x1xf32>
    %489 = arith.mulf %484, %488 : vector<8x8x1xf32>
    %c0_170 = arith.constant 0 : index
    %c0_171 = arith.constant 0 : index
    %c0_172 = arith.constant 0 : index
    %490 = vector.load %arg24[%c0_170, %c0_171, %c0_172] : memref<8x8x128xf32, #tpu.memory_space<vmem>>, vector<8x8x128xf32>
    %491 = vector.broadcast %489 : vector<8x8x1xf32> to vector<8x8x128xf32>
    %492 = arith.mulf %491, %490 : vector<8x8x128xf32>
    %cst_173 = arith.constant dense<0.000000e+00> : vector<8x128xf32>
    %493 = vector.multi_reduction <add>, %492, %cst_173 [0] : vector<8x8x128xf32> to vector<8x128xf32>
    %cst_174 = arith.constant dense<0.000000e+00> : vector<8x128xf32>
    %494 = tpu.matmul %493, %20, %cst_174 {dimension_numbers = #tpu.dot_dimension_numbers<[1], [0], [0], [1], [0, 0, 1, 1], [], []>} : vector<8x128xf32>, vector<128x128xf32>, vector<8x128xf32> -> vector<8x128xf32>
    %cst_175 = arith.constant dense<0.000000e+00> : vector<8x128xf32>
    %495 = tpu.matmul %472, %21, %cst_175 {dimension_numbers = #tpu.dot_dimension_numbers<[1], [0], [0], [1], [0, 0, 1, 1], [], []>} : vector<8x128xf32>, vector<128x128xf32>, vector<8x128xf32> -> vector<8x128xf32>
    %496 = arith.addf %494, %495 : vector<8x128xf32>
    %497 = math.tanh %496 : vector<8x128xf32>
    %498 = arith.index_cast %c0_i32_157 : i32 to index
    %c0_176 = arith.constant 0 : index
    %c0_177 = arith.constant 0 : index
    %499 = vector.load %arg26[%498, %c0_176, %c0_177] : memref<8x8x128xf32, #tpu.memory_space<vmem>>, vector<1x8x128xf32>
    %500 = vector.shape_cast %499 : vector<1x8x128xf32> to vector<8x128xf32>
    %501 = vector.shape_cast %497 : vector<8x128xf32> to vector<1x8x128xf32>
    tpu.vector_store %arg26[%498, %c0_176, %c0_177], %501 {strides = array<i32>} : memref<8x8x128xf32, #tpu.memory_space<vmem>>, vector<1x8x128xf32>,
    %c1_i32_178 = arith.constant 1 : i32
    %502 = arith.index_cast %c1_i32_178 : i32 to index
    %c0_179 = arith.constant 0 : index
    %c0_180 = arith.constant 0 : index
    %503 = vector.load %arg22[%502, %c0_179, %c0_180] : memref<8x8x512xf32, #tpu.memory_space<vmem>>, vector<1x8x512xf32>
    %504 = vector.shape_cast %503 : vector<1x8x512xf32> to vector<8x512xf32>
    %cst_181 = arith.constant dense<0.000000e+00> : vector<8x512xf32>
    %505 = tpu.matmul %497, %19, %cst_181 {dimension_numbers = #tpu.dot_dimension_numbers<[1], [0], [0], [1], [0, 0, 1, 1], [], []>} : vector<8x128xf32>, vector<128x512xf32>, vector<8x512xf32> -> vector<8x512xf32>
    %506 = arith.addf %504, %505 : vector<8x512xf32>
    %507 = vector.extract_strided_slice %506 {offsets = [0, 0], sizes = [8, 128], strides = [1, 1]} : vector<8x512xf32> to vector<8x128xf32>
    %508 = arith.negf %507 : vector<8x128xf32>
    %509 = math.exp %508 : vector<8x128xf32>
    %cst_182 = arith.constant 1.000000e+00 : f32
    %510 = vector.broadcast %cst_182 : f32 to vector<8x128xf32>
    %511 = arith.addf %510, %509 : vector<8x128xf32>
    %512 = arith.divf %510, %511 : vector<8x128xf32>
    %513 = vector.extract_strided_slice %506 {offsets = [0, 128], sizes = [8, 128], strides = [1, 1]} : vector<8x512xf32> to vector<8x128xf32>
    %514 = arith.negf %513 : vector<8x128xf32>
    %515 = math.exp %514 : vector<8x128xf32>
    %cst_183 = arith.constant 1.000000e+00 : f32
    %516 = vector.broadcast %cst_183 : f32 to vector<8x128xf32>
    %517 = arith.addf %516, %515 : vector<8x128xf32>
    %518 = arith.divf %516, %517 : vector<8x128xf32>
    %519 = vector.extract_strided_slice %506 {offsets = [0, 256], sizes = [8, 128], strides = [1, 1]} : vector<8x512xf32> to vector<8x128xf32>
    %520 = math.tanh %519 : vector<8x128xf32>
    %521 = vector.extract_strided_slice %506 {offsets = [0, 384], sizes = [8, 128], strides = [1, 1]} : vector<8x512xf32> to vector<8x128xf32>
    %522 = arith.negf %521 : vector<8x128xf32>
    %523 = math.exp %522 : vector<8x128xf32>
    %cst_184 = arith.constant 1.000000e+00 : f32
    %524 = vector.broadcast %cst_184 : f32 to vector<8x128xf32>
    %525 = arith.addf %524, %523 : vector<8x128xf32>
    %526 = arith.divf %524, %525 : vector<8x128xf32>
    %527 = arith.mulf %518, %470 : vector<8x128xf32>
    %528 = arith.mulf %512, %520 : vector<8x128xf32>
    %529 = arith.addf %527, %528 : vector<8x128xf32>
    %530 = math.tanh %529 : vector<8x128xf32>
    %531 = arith.mulf %526, %530 : vector<8x128xf32>
    %c0_185 = arith.constant 0 : index
    %c0_186 = arith.constant 0 : index
    %c0_187 = arith.constant 0 : index
    %532 = vector.load %arg25[%c0_185, %c0_186, %c0_187] : memref<8x8x128xf32, #tpu.memory_space<vmem>>, vector<8x8x128xf32>
    %533 = vector.shape_cast %531 : vector<8x128xf32> to vector<1x8x128xf32>
    %534 = vector.broadcast %533 : vector<1x8x128xf32> to vector<8x8x128xf32>
    %535 = arith.mulf %532, %534 : vector<8x8x128xf32>
    %cst_188 = arith.constant dense<0.000000e+00> : vector<8x8xf32>
    %536 = vector.multi_reduction <add>, %535, %cst_188 [2] : vector<8x8x128xf32> to vector<8x8xf32>
    %537 = vector.shape_cast %536 : vector<8x8xf32> to vector<8x8x1xf32>
    %538 = arith.addf %537, %442 : vector<8x8x1xf32>
    %cst_189 = arith.constant dense<0xFF800000> : vector<8x1xf32>
    %539 = vector.multi_reduction <maximumf>, %538, %cst_189 [0] : vector<8x8x1xf32> to vector<8x1xf32>
    %540 = vector.shape_cast %539 : vector<8x1xf32> to vector<1x8x1xf32>
    %541 = vector.broadcast %540 : vector<1x8x1xf32> to vector<8x8x1xf32>
    %542 = arith.subf %538, %541 : vector<8x8x1xf32>
    %543 = math.exp %542 : vector<8x8x1xf32>
    %cst_190 = arith.constant dense<0.000000e+00> : vector<8x1xf32>
    %544 = vector.multi_reduction <add>, %543, %cst_190 [0] : vector<8x8x1xf32> to vector<8x1xf32>
    %545 = vector.shape_cast %544 : vector<8x1xf32> to vector<1x8x1xf32>
    %546 = tpu.reciprocal %545 {approx = true} : vector<1x8x1xf32> -> vector<1x8x1xf32>
    %547 = vector.broadcast %546 : vector<1x8x1xf32> to vector<8x8x1xf32>
    %548 = arith.mulf %543, %547 : vector<8x8x1xf32>
    %c0_191 = arith.constant 0 : index
    %c0_192 = arith.constant 0 : index
    %c0_193 = arith.constant 0 : index
    %549 = vector.load %arg24[%c0_191, %c0_192, %c0_193] : memref<8x8x128xf32, #tpu.memory_space<vmem>>, vector<8x8x128xf32>
    %550 = vector.broadcast %548 : vector<8x8x1xf32> to vector<8x8x128xf32>
    %551 = arith.mulf %550, %549 : vector<8x8x128xf32>
    %cst_194 = arith.constant dense<0.000000e+00> : vector<8x128xf32>
    %552 = vector.multi_reduction <add>, %551, %cst_194 [0] : vector<8x8x128xf32> to vector<8x128xf32>
    %cst_195 = arith.constant dense<0.000000e+00> : vector<8x128xf32>
    %553 = tpu.matmul %552, %20, %cst_195 {dimension_numbers = #tpu.dot_dimension_numbers<[1], [0], [0], [1], [0, 0, 1, 1], [], []>} : vector<8x128xf32>, vector<128x128xf32>, vector<8x128xf32> -> vector<8x128xf32>
    %cst_196 = arith.constant dense<0.000000e+00> : vector<8x128xf32>
    %554 = tpu.matmul %531, %21, %cst_196 {dimension_numbers = #tpu.dot_dimension_numbers<[1], [0], [0], [1], [0, 0, 1, 1], [], []>} : vector<8x128xf32>, vector<128x128xf32>, vector<8x128xf32> -> vector<8x128xf32>
    %555 = arith.addf %553, %554 : vector<8x128xf32>
    %556 = math.tanh %555 : vector<8x128xf32>
    %557 = arith.index_cast %c1_i32_178 : i32 to index
    %c0_197 = arith.constant 0 : index
    %c0_198 = arith.constant 0 : index
    %558 = vector.load %arg26[%557, %c0_197, %c0_198] : memref<8x8x128xf32, #tpu.memory_space<vmem>>, vector<1x8x128xf32>
    %559 = vector.shape_cast %558 : vector<1x8x128xf32> to vector<8x128xf32>
    %560 = vector.shape_cast %556 : vector<8x128xf32> to vector<1x8x128xf32>
    tpu.vector_store %arg26[%557, %c0_197, %c0_198], %560 {strides = array<i32>} : memref<8x8x128xf32, #tpu.memory_space<vmem>>, vector<1x8x128xf32>,
    %c2_i32_199 = arith.constant 2 : i32
    %561 = arith.index_cast %c2_i32_199 : i32 to index
    %c0_200 = arith.constant 0 : index
    %c0_201 = arith.constant 0 : index
    %562 = vector.load %arg22[%561, %c0_200, %c0_201] : memref<8x8x512xf32, #tpu.memory_space<vmem>>, vector<1x8x512xf32>
    %563 = vector.shape_cast %562 : vector<1x8x512xf32> to vector<8x512xf32>
    %cst_202 = arith.constant dense<0.000000e+00> : vector<8x512xf32>
    %564 = tpu.matmul %556, %19, %cst_202 {dimension_numbers = #tpu.dot_dimension_numbers<[1], [0], [0], [1], [0, 0, 1, 1], [], []>} : vector<8x128xf32>, vector<128x512xf32>, vector<8x512xf32> -> vector<8x512xf32>
    %565 = arith.addf %563, %564 : vector<8x512xf32>
    %566 = vector.extract_strided_slice %565 {offsets = [0, 0], sizes = [8, 128], strides = [1, 1]} : vector<8x512xf32> to vector<8x128xf32>
    %567 = arith.negf %566 : vector<8x128xf32>
    %568 = math.exp %567 : vector<8x128xf32>
    %cst_203 = arith.constant 1.000000e+00 : f32
    %569 = vector.broadcast %cst_203 : f32 to vector<8x128xf32>
    %570 = arith.addf %569, %568 : vector<8x128xf32>
    %571 = arith.divf %569, %570 : vector<8x128xf32>
    %572 = vector.extract_strided_slice %565 {offsets = [0, 128], sizes = [8, 128], strides = [1, 1]} : vector<8x512xf32> to vector<8x128xf32>
    %573 = arith.negf %572 : vector<8x128xf32>
    %574 = math.exp %573 : vector<8x128xf32>
    %cst_204 = arith.constant 1.000000e+00 : f32
    %575 = vector.broadcast %cst_204 : f32 to vector<8x128xf32>
    %576 = arith.addf %575, %574 : vector<8x128xf32>
    %577 = arith.divf %575, %576 : vector<8x128xf32>
    %578 = vector.extract_strided_slice %565 {offsets = [0, 256], sizes = [8, 128], strides = [1, 1]} : vector<8x512xf32> to vector<8x128xf32>
    %579 = math.tanh %578 : vector<8x128xf32>
    %580 = vector.extract_strided_slice %565 {offsets = [0, 384], sizes = [8, 128], strides = [1, 1]} : vector<8x512xf32> to vector<8x128xf32>
    %581 = arith.negf %580 : vector<8x128xf32>
    %582 = math.exp %581 : vector<8x128xf32>
    %cst_205 = arith.constant 1.000000e+00 : f32
    %583 = vector.broadcast %cst_205 : f32 to vector<8x128xf32>
    %584 = arith.addf %583, %582 : vector<8x128xf32>
    %585 = arith.divf %583, %584 : vector<8x128xf32>
    %586 = arith.mulf %577, %529 : vector<8x128xf32>
    %587 = arith.mulf %571, %579 : vector<8x128xf32>
    %588 = arith.addf %586, %587 : vector<8x128xf32>
    %589 = math.tanh %588 : vector<8x128xf32>
    %590 = arith.mulf %585, %589 : vector<8x128xf32>
    %c0_206 = arith.constant 0 : index
    %c0_207 = arith.constant 0 : index
    %c0_208 = arith.constant 0 : index
    %591 = vector.load %arg25[%c0_206, %c0_207, %c0_208] : memref<8x8x128xf32, #tpu.memory_space<vmem>>, vector<8x8x128xf32>
    %592 = vector.shape_cast %590 : vector<8x128xf32> to vector<1x8x128xf32>
    %593 = vector.broadcast %592 : vector<1x8x128xf32> to vector<8x8x128xf32>
    %594 = arith.mulf %591, %593 : vector<8x8x128xf32>
    %cst_209 = arith.constant dense<0.000000e+00> : vector<8x8xf32>
    %595 = vector.multi_reduction <add>, %594, %cst_209 [2] : vector<8x8x128xf32> to vector<8x8xf32>
    %596 = vector.shape_cast %595 : vector<8x8xf32> to vector<8x8x1xf32>
    %597 = arith.addf %596, %442 : vector<8x8x1xf32>
    %cst_210 = arith.constant dense<0xFF800000> : vector<8x1xf32>
    %598 = vector.multi_reduction <maximumf>, %597, %cst_210 [0] : vector<8x8x1xf32> to vector<8x1xf32>
    %599 = vector.shape_cast %598 : vector<8x1xf32> to vector<1x8x1xf32>
    %600 = vector.broadcast %599 : vector<1x8x1xf32> to vector<8x8x1xf32>
    %601 = arith.subf %597, %600 : vector<8x8x1xf32>
    %602 = math.exp %601 : vector<8x8x1xf32>
    %cst_211 = arith.constant dense<0.000000e+00> : vector<8x1xf32>
    %603 = vector.multi_reduction <add>, %602, %cst_211 [0] : vector<8x8x1xf32> to vector<8x1xf32>
    %604 = vector.shape_cast %603 : vector<8x1xf32> to vector<1x8x1xf32>
    %605 = tpu.reciprocal %604 {approx = true} : vector<1x8x1xf32> -> vector<1x8x1xf32>
    %606 = vector.broadcast %605 : vector<1x8x1xf32> to vector<8x8x1xf32>
    %607 = arith.mulf %602, %606 : vector<8x8x1xf32>
    %c0_212 = arith.constant 0 : index
    %c0_213 = arith.constant 0 : index
    %c0_214 = arith.constant 0 : index
    %608 = vector.load %arg24[%c0_212, %c0_213, %c0_214] : memref<8x8x128xf32, #tpu.memory_space<vmem>>, vector<8x8x128xf32>
    %609 = vector.broadcast %607 : vector<8x8x1xf32> to vector<8x8x128xf32>
    %610 = arith.mulf %609, %608 : vector<8x8x128xf32>
    %cst_215 = arith.constant dense<0.000000e+00> : vector<8x128xf32>
    %611 = vector.multi_reduction <add>, %610, %cst_215 [0] : vector<8x8x128xf32> to vector<8x128xf32>
    %cst_216 = arith.constant dense<0.000000e+00> : vector<8x128xf32>
    %612 = tpu.matmul %611, %20, %cst_216 {dimension_numbers = #tpu.dot_dimension_numbers<[1], [0], [0], [1], [0, 0, 1, 1], [], []>} : vector<8x128xf32>, vector<128x128xf32>, vector<8x128xf32> -> vector<8x128xf32>
    %cst_217 = arith.constant dense<0.000000e+00> : vector<8x128xf32>
    %613 = tpu.matmul %590, %21, %cst_217 {dimension_numbers = #tpu.dot_dimension_numbers<[1], [0], [0], [1], [0, 0, 1, 1], [], []>} : vector<8x128xf32>, vector<128x128xf32>, vector<8x128xf32> -> vector<8x128xf32>
    %614 = arith.addf %612, %613 : vector<8x128xf32>
    %615 = math.tanh %614 : vector<8x128xf32>
    %616 = arith.index_cast %c2_i32_199 : i32 to index
    %c0_218 = arith.constant 0 : index
    %c0_219 = arith.constant 0 : index
    %617 = vector.load %arg26[%616, %c0_218, %c0_219] : memref<8x8x128xf32, #tpu.memory_space<vmem>>, vector<1x8x128xf32>
    %618 = vector.shape_cast %617 : vector<1x8x128xf32> to vector<8x128xf32>
    %619 = vector.shape_cast %615 : vector<8x128xf32> to vector<1x8x128xf32>
    tpu.vector_store %arg26[%616, %c0_218, %c0_219], %619 {strides = array<i32>} : memref<8x8x128xf32, #tpu.memory_space<vmem>>, vector<1x8x128xf32>,
    %c3_i32_220 = arith.constant 3 : i32
    %620 = arith.index_cast %c3_i32_220 : i32 to index
    %c0_221 = arith.constant 0 : index
    %c0_222 = arith.constant 0 : index
    %621 = vector.load %arg22[%620, %c0_221, %c0_222] : memref<8x8x512xf32, #tpu.memory_space<vmem>>, vector<1x8x512xf32>
    %622 = vector.shape_cast %621 : vector<1x8x512xf32> to vector<8x512xf32>
    %cst_223 = arith.constant dense<0.000000e+00> : vector<8x512xf32>
    %623 = tpu.matmul %615, %19, %cst_223 {dimension_numbers = #tpu.dot_dimension_numbers<[1], [0], [0], [1], [0, 0, 1, 1], [], []>} : vector<8x128xf32>, vector<128x512xf32>, vector<8x512xf32> -> vector<8x512xf32>
    %624 = arith.addf %622, %623 : vector<8x512xf32>
    %625 = vector.extract_strided_slice %624 {offsets = [0, 0], sizes = [8, 128], strides = [1, 1]} : vector<8x512xf32> to vector<8x128xf32>
    %626 = arith.negf %625 : vector<8x128xf32>
    %627 = math.exp %626 : vector<8x128xf32>
    %cst_224 = arith.constant 1.000000e+00 : f32
    %628 = vector.broadcast %cst_224 : f32 to vector<8x128xf32>
    %629 = arith.addf %628, %627 : vector<8x128xf32>
    %630 = arith.divf %628, %629 : vector<8x128xf32>
    %631 = vector.extract_strided_slice %624 {offsets = [0, 128], sizes = [8, 128], strides = [1, 1]} : vector<8x512xf32> to vector<8x128xf32>
    %632 = arith.negf %631 : vector<8x128xf32>
    %633 = math.exp %632 : vector<8x128xf32>
    %cst_225 = arith.constant 1.000000e+00 : f32
    %634 = vector.broadcast %cst_225 : f32 to vector<8x128xf32>
    %635 = arith.addf %634, %633 : vector<8x128xf32>
    %636 = arith.divf %634, %635 : vector<8x128xf32>
    %637 = vector.extract_strided_slice %624 {offsets = [0, 256], sizes = [8, 128], strides = [1, 1]} : vector<8x512xf32> to vector<8x128xf32>
    %638 = math.tanh %637 : vector<8x128xf32>
    %639 = vector.extract_strided_slice %624 {offsets = [0, 384], sizes = [8, 128], strides = [1, 1]} : vector<8x512xf32> to vector<8x128xf32>
    %640 = arith.negf %639 : vector<8x128xf32>
    %641 = math.exp %640 : vector<8x128xf32>
    %cst_226 = arith.constant 1.000000e+00 : f32
    %642 = vector.broadcast %cst_226 : f32 to vector<8x128xf32>
    %643 = arith.addf %642, %641 : vector<8x128xf32>
    %644 = arith.divf %642, %643 : vector<8x128xf32>
    %645 = arith.mulf %636, %588 : vector<8x128xf32>
    %646 = arith.mulf %630, %638 : vector<8x128xf32>
    %647 = arith.addf %645, %646 : vector<8x128xf32>
    %648 = math.tanh %647 : vector<8x128xf32>
    %649 = arith.mulf %644, %648 : vector<8x128xf32>
    %c0_227 = arith.constant 0 : index
    %c0_228 = arith.constant 0 : index
    %c0_229 = arith.constant 0 : index
    %650 = vector.load %arg25[%c0_227, %c0_228, %c0_229] : memref<8x8x128xf32, #tpu.memory_space<vmem>>, vector<8x8x128xf32>
    %651 = vector.shape_cast %649 : vector<8x128xf32> to vector<1x8x128xf32>
    %652 = vector.broadcast %651 : vector<1x8x128xf32> to vector<8x8x128xf32>
    %653 = arith.mulf %650, %652 : vector<8x8x128xf32>
    %cst_230 = arith.constant dense<0.000000e+00> : vector<8x8xf32>
    %654 = vector.multi_reduction <add>, %653, %cst_230 [2] : vector<8x8x128xf32> to vector<8x8xf32>
    %655 = vector.shape_cast %654 : vector<8x8xf32> to vector<8x8x1xf32>
    %656 = arith.addf %655, %442 : vector<8x8x1xf32>
    %cst_231 = arith.constant dense<0xFF800000> : vector<8x1xf32>
    %657 = vector.multi_reduction <maximumf>, %656, %cst_231 [0] : vector<8x8x1xf32> to vector<8x1xf32>
    %658 = vector.shape_cast %657 : vector<8x1xf32> to vector<1x8x1xf32>
    %659 = vector.broadcast %658 : vector<1x8x1xf32> to vector<8x8x1xf32>
    %660 = arith.subf %656, %659 : vector<8x8x1xf32>
    %661 = math.exp %660 : vector<8x8x1xf32>
    %cst_232 = arith.constant dense<0.000000e+00> : vector<8x1xf32>
    %662 = vector.multi_reduction <add>, %661, %cst_232 [0] : vector<8x8x1xf32> to vector<8x1xf32>
    %663 = vector.shape_cast %662 : vector<8x1xf32> to vector<1x8x1xf32>
    %664 = tpu.reciprocal %663 {approx = true} : vector<1x8x1xf32> -> vector<1x8x1xf32>
    %665 = vector.broadcast %664 : vector<1x8x1xf32> to vector<8x8x1xf32>
    %666 = arith.mulf %661, %665 : vector<8x8x1xf32>
    %c0_233 = arith.constant 0 : index
    %c0_234 = arith.constant 0 : index
    %c0_235 = arith.constant 0 : index
    %667 = vector.load %arg24[%c0_233, %c0_234, %c0_235] : memref<8x8x128xf32, #tpu.memory_space<vmem>>, vector<8x8x128xf32>
    %668 = vector.broadcast %666 : vector<8x8x1xf32> to vector<8x8x128xf32>
    %669 = arith.mulf %668, %667 : vector<8x8x128xf32>
    %cst_236 = arith.constant dense<0.000000e+00> : vector<8x128xf32>
    %670 = vector.multi_reduction <add>, %669, %cst_236 [0] : vector<8x8x128xf32> to vector<8x128xf32>
    %cst_237 = arith.constant dense<0.000000e+00> : vector<8x128xf32>
    %671 = tpu.matmul %670, %20, %cst_237 {dimension_numbers = #tpu.dot_dimension_numbers<[1], [0], [0], [1], [0, 0, 1, 1], [], []>} : vector<8x128xf32>, vector<128x128xf32>, vector<8x128xf32> -> vector<8x128xf32>
    %cst_238 = arith.constant dense<0.000000e+00> : vector<8x128xf32>
    %672 = tpu.matmul %649, %21, %cst_238 {dimension_numbers = #tpu.dot_dimension_numbers<[1], [0], [0], [1], [0, 0, 1, 1], [], []>} : vector<8x128xf32>, vector<128x128xf32>, vector<8x128xf32> -> vector<8x128xf32>
    %673 = arith.addf %671, %672 : vector<8x128xf32>
    %674 = math.tanh %673 : vector<8x128xf32>
    %675 = arith.index_cast %c3_i32_220 : i32 to index
    %c0_239 = arith.constant 0 : index
    %c0_240 = arith.constant 0 : index
    %676 = vector.load %arg26[%675, %c0_239, %c0_240] : memref<8x8x128xf32, #tpu.memory_space<vmem>>, vector<1x8x128xf32>
    %677 = vector.shape_cast %676 : vector<1x8x128xf32> to vector<8x128xf32>
    %678 = vector.shape_cast %674 : vector<8x128xf32> to vector<1x8x128xf32>
    tpu.vector_store %arg26[%675, %c0_239, %c0_240], %678 {strides = array<i32>} : memref<8x8x128xf32, #tpu.memory_space<vmem>>, vector<1x8x128xf32>,
    %c4_i32_241 = arith.constant 4 : i32
    %679 = arith.index_cast %c4_i32_241 : i32 to index
    %c0_242 = arith.constant 0 : index
    %c0_243 = arith.constant 0 : index
    %680 = vector.load %arg22[%679, %c0_242, %c0_243] : memref<8x8x512xf32, #tpu.memory_space<vmem>>, vector<1x8x512xf32>
    %681 = vector.shape_cast %680 : vector<1x8x512xf32> to vector<8x512xf32>
    %cst_244 = arith.constant dense<0.000000e+00> : vector<8x512xf32>
    %682 = tpu.matmul %674, %19, %cst_244 {dimension_numbers = #tpu.dot_dimension_numbers<[1], [0], [0], [1], [0, 0, 1, 1], [], []>} : vector<8x128xf32>, vector<128x512xf32>, vector<8x512xf32> -> vector<8x512xf32>
    %683 = arith.addf %681, %682 : vector<8x512xf32>
    %684 = vector.extract_strided_slice %683 {offsets = [0, 0], sizes = [8, 128], strides = [1, 1]} : vector<8x512xf32> to vector<8x128xf32>
    %685 = arith.negf %684 : vector<8x128xf32>
    %686 = math.exp %685 : vector<8x128xf32>
    %cst_245 = arith.constant 1.000000e+00 : f32
    %687 = vector.broadcast %cst_245 : f32 to vector<8x128xf32>
    %688 = arith.addf %687, %686 : vector<8x128xf32>
    %689 = arith.divf %687, %688 : vector<8x128xf32>
    %690 = vector.extract_strided_slice %683 {offsets = [0, 128], sizes = [8, 128], strides = [1, 1]} : vector<8x512xf32> to vector<8x128xf32>
    %691 = arith.negf %690 : vector<8x128xf32>
    %692 = math.exp %691 : vector<8x128xf32>
    %cst_246 = arith.constant 1.000000e+00 : f32
    %693 = vector.broadcast %cst_246 : f32 to vector<8x128xf32>
    %694 = arith.addf %693, %692 : vector<8x128xf32>
    %695 = arith.divf %693, %694 : vector<8x128xf32>
    %696 = vector.extract_strided_slice %683 {offsets = [0, 256], sizes = [8, 128], strides = [1, 1]} : vector<8x512xf32> to vector<8x128xf32>
    %697 = math.tanh %696 : vector<8x128xf32>
    %698 = vector.extract_strided_slice %683 {offsets = [0, 384], sizes = [8, 128], strides = [1, 1]} : vector<8x512xf32> to vector<8x128xf32>
    %699 = arith.negf %698 : vector<8x128xf32>
    %700 = math.exp %699 : vector<8x128xf32>
    %cst_247 = arith.constant 1.000000e+00 : f32
    %701 = vector.broadcast %cst_247 : f32 to vector<8x128xf32>
    %702 = arith.addf %701, %700 : vector<8x128xf32>
    %703 = arith.divf %701, %702 : vector<8x128xf32>
    %704 = arith.mulf %695, %647 : vector<8x128xf32>
    %705 = arith.mulf %689, %697 : vector<8x128xf32>
    %706 = arith.addf %704, %705 : vector<8x128xf32>
    %707 = math.tanh %706 : vector<8x128xf32>
    %708 = arith.mulf %703, %707 : vector<8x128xf32>
    %c0_248 = arith.constant 0 : index
    %c0_249 = arith.constant 0 : index
    %c0_250 = arith.constant 0 : index
    %709 = vector.load %arg25[%c0_248, %c0_249, %c0_250] : memref<8x8x128xf32, #tpu.memory_space<vmem>>, vector<8x8x128xf32>
    %710 = vector.shape_cast %708 : vector<8x128xf32> to vector<1x8x128xf32>
    %711 = vector.broadcast %710 : vector<1x8x128xf32> to vector<8x8x128xf32>
    %712 = arith.mulf %709, %711 : vector<8x8x128xf32>
    %cst_251 = arith.constant dense<0.000000e+00> : vector<8x8xf32>
    %713 = vector.multi_reduction <add>, %712, %cst_251 [2] : vector<8x8x128xf32> to vector<8x8xf32>
    %714 = vector.shape_cast %713 : vector<8x8xf32> to vector<8x8x1xf32>
    %715 = arith.addf %714, %442 : vector<8x8x1xf32>
    %cst_252 = arith.constant dense<0xFF800000> : vector<8x1xf32>
    %716 = vector.multi_reduction <maximumf>, %715, %cst_252 [0] : vector<8x8x1xf32> to vector<8x1xf32>
    %717 = vector.shape_cast %716 : vector<8x1xf32> to vector<1x8x1xf32>
    %718 = vector.broadcast %717 : vector<1x8x1xf32> to vector<8x8x1xf32>
    %719 = arith.subf %715, %718 : vector<8x8x1xf32>
    %720 = math.exp %719 : vector<8x8x1xf32>
    %cst_253 = arith.constant dense<0.000000e+00> : vector<8x1xf32>
    %721 = vector.multi_reduction <add>, %720, %cst_253 [0] : vector<8x8x1xf32> to vector<8x1xf32>
    %722 = vector.shape_cast %721 : vector<8x1xf32> to vector<1x8x1xf32>
    %723 = tpu.reciprocal %722 {approx = true} : vector<1x8x1xf32> -> vector<1x8x1xf32>
    %724 = vector.broadcast %723 : vector<1x8x1xf32> to vector<8x8x1xf32>
    %725 = arith.mulf %720, %724 : vector<8x8x1xf32>
    %c0_254 = arith.constant 0 : index
    %c0_255 = arith.constant 0 : index
    %c0_256 = arith.constant 0 : index
    %726 = vector.load %arg24[%c0_254, %c0_255, %c0_256] : memref<8x8x128xf32, #tpu.memory_space<vmem>>, vector<8x8x128xf32>
    %727 = vector.broadcast %725 : vector<8x8x1xf32> to vector<8x8x128xf32>
    %728 = arith.mulf %727, %726 : vector<8x8x128xf32>
    %cst_257 = arith.constant dense<0.000000e+00> : vector<8x128xf32>
    %729 = vector.multi_reduction <add>, %728, %cst_257 [0] : vector<8x8x128xf32> to vector<8x128xf32>
    %cst_258 = arith.constant dense<0.000000e+00> : vector<8x128xf32>
    %730 = tpu.matmul %729, %20, %cst_258 {dimension_numbers = #tpu.dot_dimension_numbers<[1], [0], [0], [1], [0, 0, 1, 1], [], []>} : vector<8x128xf32>, vector<128x128xf32>, vector<8x128xf32> -> vector<8x128xf32>
    %cst_259 = arith.constant dense<0.000000e+00> : vector<8x128xf32>
    %731 = tpu.matmul %708, %21, %cst_259 {dimension_numbers = #tpu.dot_dimension_numbers<[1], [0], [0], [1], [0, 0, 1, 1], [], []>} : vector<8x128xf32>, vector<128x128xf32>, vector<8x128xf32> -> vector<8x128xf32>
    %732 = arith.addf %730, %731 : vector<8x128xf32>
    %733 = math.tanh %732 : vector<8x128xf32>
    %734 = arith.index_cast %c4_i32_241 : i32 to index
    %c0_260 = arith.constant 0 : index
    %c0_261 = arith.constant 0 : index
    %735 = vector.load %arg26[%734, %c0_260, %c0_261] : memref<8x8x128xf32, #tpu.memory_space<vmem>>, vector<1x8x128xf32>
    %736 = vector.shape_cast %735 : vector<1x8x128xf32> to vector<8x128xf32>
    %737 = vector.shape_cast %733 : vector<8x128xf32> to vector<1x8x128xf32>
    tpu.vector_store %arg26[%734, %c0_260, %c0_261], %737 {strides = array<i32>} : memref<8x8x128xf32, #tpu.memory_space<vmem>>, vector<1x8x128xf32>,
    %c5_i32_262 = arith.constant 5 : i32
    %738 = arith.index_cast %c5_i32_262 : i32 to index
    %c0_263 = arith.constant 0 : index
    %c0_264 = arith.constant 0 : index
    %739 = vector.load %arg22[%738, %c0_263, %c0_264] : memref<8x8x512xf32, #tpu.memory_space<vmem>>, vector<1x8x512xf32>
    %740 = vector.shape_cast %739 : vector<1x8x512xf32> to vector<8x512xf32>
    %cst_265 = arith.constant dense<0.000000e+00> : vector<8x512xf32>
    %741 = tpu.matmul %733, %19, %cst_265 {dimension_numbers = #tpu.dot_dimension_numbers<[1], [0], [0], [1], [0, 0, 1, 1], [], []>} : vector<8x128xf32>, vector<128x512xf32>, vector<8x512xf32> -> vector<8x512xf32>
    %742 = arith.addf %740, %741 : vector<8x512xf32>
    %743 = vector.extract_strided_slice %742 {offsets = [0, 0], sizes = [8, 128], strides = [1, 1]} : vector<8x512xf32> to vector<8x128xf32>
    %744 = arith.negf %743 : vector<8x128xf32>
    %745 = math.exp %744 : vector<8x128xf32>
    %cst_266 = arith.constant 1.000000e+00 : f32
    %746 = vector.broadcast %cst_266 : f32 to vector<8x128xf32>
    %747 = arith.addf %746, %745 : vector<8x128xf32>
    %748 = arith.divf %746, %747 : vector<8x128xf32>
    %749 = vector.extract_strided_slice %742 {offsets = [0, 128], sizes = [8, 128], strides = [1, 1]} : vector<8x512xf32> to vector<8x128xf32>
    %750 = arith.negf %749 : vector<8x128xf32>
    %751 = math.exp %750 : vector<8x128xf32>
    %cst_267 = arith.constant 1.000000e+00 : f32
    %752 = vector.broadcast %cst_267 : f32 to vector<8x128xf32>
    %753 = arith.addf %752, %751 : vector<8x128xf32>
    %754 = arith.divf %752, %753 : vector<8x128xf32>
    %755 = vector.extract_strided_slice %742 {offsets = [0, 256], sizes = [8, 128], strides = [1, 1]} : vector<8x512xf32> to vector<8x128xf32>
    %756 = math.tanh %755 : vector<8x128xf32>
    %757 = vector.extract_strided_slice %742 {offsets = [0, 384], sizes = [8, 128], strides = [1, 1]} : vector<8x512xf32> to vector<8x128xf32>
    %758 = arith.negf %757 : vector<8x128xf32>
    %759 = math.exp %758 : vector<8x128xf32>
    %cst_268 = arith.constant 1.000000e+00 : f32
    %760 = vector.broadcast %cst_268 : f32 to vector<8x128xf32>
    %761 = arith.addf %760, %759 : vector<8x128xf32>
    %762 = arith.divf %760, %761 : vector<8x128xf32>
    %763 = arith.mulf %754, %706 : vector<8x128xf32>
    %764 = arith.mulf %748, %756 : vector<8x128xf32>
    %765 = arith.addf %763, %764 : vector<8x128xf32>
    %766 = math.tanh %765 : vector<8x128xf32>
    %767 = arith.mulf %762, %766 : vector<8x128xf32>
    %c0_269 = arith.constant 0 : index
    %c0_270 = arith.constant 0 : index
    %c0_271 = arith.constant 0 : index
    %768 = vector.load %arg25[%c0_269, %c0_270, %c0_271] : memref<8x8x128xf32, #tpu.memory_space<vmem>>, vector<8x8x128xf32>
    %769 = vector.shape_cast %767 : vector<8x128xf32> to vector<1x8x128xf32>
    %770 = vector.broadcast %769 : vector<1x8x128xf32> to vector<8x8x128xf32>
    %771 = arith.mulf %768, %770 : vector<8x8x128xf32>
    %cst_272 = arith.constant dense<0.000000e+00> : vector<8x8xf32>
    %772 = vector.multi_reduction <add>, %771, %cst_272 [2] : vector<8x8x128xf32> to vector<8x8xf32>
    %773 = vector.shape_cast %772 : vector<8x8xf32> to vector<8x8x1xf32>
    %774 = arith.addf %773, %442 : vector<8x8x1xf32>
    %cst_273 = arith.constant dense<0xFF800000> : vector<8x1xf32>
    %775 = vector.multi_reduction <maximumf>, %774, %cst_273 [0] : vector<8x8x1xf32> to vector<8x1xf32>
    %776 = vector.shape_cast %775 : vector<8x1xf32> to vector<1x8x1xf32>
    %777 = vector.broadcast %776 : vector<1x8x1xf32> to vector<8x8x1xf32>
    %778 = arith.subf %774, %777 : vector<8x8x1xf32>
    %779 = math.exp %778 : vector<8x8x1xf32>
    %cst_274 = arith.constant dense<0.000000e+00> : vector<8x1xf32>
    %780 = vector.multi_reduction <add>, %779, %cst_274 [0] : vector<8x8x1xf32> to vector<8x1xf32>
    %781 = vector.shape_cast %780 : vector<8x1xf32> to vector<1x8x1xf32>
    %782 = tpu.reciprocal %781 {approx = true} : vector<1x8x1xf32> -> vector<1x8x1xf32>
    %783 = vector.broadcast %782 : vector<1x8x1xf32> to vector<8x8x1xf32>
    %784 = arith.mulf %779, %783 : vector<8x8x1xf32>
    %c0_275 = arith.constant 0 : index
    %c0_276 = arith.constant 0 : index
    %c0_277 = arith.constant 0 : index
    %785 = vector.load %arg24[%c0_275, %c0_276, %c0_277] : memref<8x8x128xf32, #tpu.memory_space<vmem>>, vector<8x8x128xf32>
    %786 = vector.broadcast %784 : vector<8x8x1xf32> to vector<8x8x128xf32>
    %787 = arith.mulf %786, %785 : vector<8x8x128xf32>
    %cst_278 = arith.constant dense<0.000000e+00> : vector<8x128xf32>
    %788 = vector.multi_reduction <add>, %787, %cst_278 [0] : vector<8x8x128xf32> to vector<8x128xf32>
    %cst_279 = arith.constant dense<0.000000e+00> : vector<8x128xf32>
    %789 = tpu.matmul %788, %20, %cst_279 {dimension_numbers = #tpu.dot_dimension_numbers<[1], [0], [0], [1], [0, 0, 1, 1], [], []>} : vector<8x128xf32>, vector<128x128xf32>, vector<8x128xf32> -> vector<8x128xf32>
    %cst_280 = arith.constant dense<0.000000e+00> : vector<8x128xf32>
    %790 = tpu.matmul %767, %21, %cst_280 {dimension_numbers = #tpu.dot_dimension_numbers<[1], [0], [0], [1], [0, 0, 1, 1], [], []>} : vector<8x128xf32>, vector<128x128xf32>, vector<8x128xf32> -> vector<8x128xf32>
    %791 = arith.addf %789, %790 : vector<8x128xf32>
    %792 = math.tanh %791 : vector<8x128xf32>
    %793 = arith.index_cast %c5_i32_262 : i32 to index
    %c0_281 = arith.constant 0 : index
    %c0_282 = arith.constant 0 : index
    %794 = vector.load %arg26[%793, %c0_281, %c0_282] : memref<8x8x128xf32, #tpu.memory_space<vmem>>, vector<1x8x128xf32>
    %795 = vector.shape_cast %794 : vector<1x8x128xf32> to vector<8x128xf32>
    %796 = vector.shape_cast %792 : vector<8x128xf32> to vector<1x8x128xf32>
    tpu.vector_store %arg26[%793, %c0_281, %c0_282], %796 {strides = array<i32>} : memref<8x8x128xf32, #tpu.memory_space<vmem>>, vector<1x8x128xf32>,
    %c6_i32_283 = arith.constant 6 : i32
    %797 = arith.index_cast %c6_i32_283 : i32 to index
    %c0_284 = arith.constant 0 : index
    %c0_285 = arith.constant 0 : index
    %798 = vector.load %arg22[%797, %c0_284, %c0_285] : memref<8x8x512xf32, #tpu.memory_space<vmem>>, vector<1x8x512xf32>
    %799 = vector.shape_cast %798 : vector<1x8x512xf32> to vector<8x512xf32>
    %cst_286 = arith.constant dense<0.000000e+00> : vector<8x512xf32>
    %800 = tpu.matmul %792, %19, %cst_286 {dimension_numbers = #tpu.dot_dimension_numbers<[1], [0], [0], [1], [0, 0, 1, 1], [], []>} : vector<8x128xf32>, vector<128x512xf32>, vector<8x512xf32> -> vector<8x512xf32>
    %801 = arith.addf %799, %800 : vector<8x512xf32>
    %802 = vector.extract_strided_slice %801 {offsets = [0, 0], sizes = [8, 128], strides = [1, 1]} : vector<8x512xf32> to vector<8x128xf32>
    %803 = arith.negf %802 : vector<8x128xf32>
    %804 = math.exp %803 : vector<8x128xf32>
    %cst_287 = arith.constant 1.000000e+00 : f32
    %805 = vector.broadcast %cst_287 : f32 to vector<8x128xf32>
    %806 = arith.addf %805, %804 : vector<8x128xf32>
    %807 = arith.divf %805, %806 : vector<8x128xf32>
    %808 = vector.extract_strided_slice %801 {offsets = [0, 128], sizes = [8, 128], strides = [1, 1]} : vector<8x512xf32> to vector<8x128xf32>
    %809 = arith.negf %808 : vector<8x128xf32>
    %810 = math.exp %809 : vector<8x128xf32>
    %cst_288 = arith.constant 1.000000e+00 : f32
    %811 = vector.broadcast %cst_288 : f32 to vector<8x128xf32>
    %812 = arith.addf %811, %810 : vector<8x128xf32>
    %813 = arith.divf %811, %812 : vector<8x128xf32>
    %814 = vector.extract_strided_slice %801 {offsets = [0, 256], sizes = [8, 128], strides = [1, 1]} : vector<8x512xf32> to vector<8x128xf32>
    %815 = math.tanh %814 : vector<8x128xf32>
    %816 = vector.extract_strided_slice %801 {offsets = [0, 384], sizes = [8, 128], strides = [1, 1]} : vector<8x512xf32> to vector<8x128xf32>
    %817 = arith.negf %816 : vector<8x128xf32>
    %818 = math.exp %817 : vector<8x128xf32>
    %cst_289 = arith.constant 1.000000e+00 : f32
    %819 = vector.broadcast %cst_289 : f32 to vector<8x128xf32>
    %820 = arith.addf %819, %818 : vector<8x128xf32>
    %821 = arith.divf %819, %820 : vector<8x128xf32>
    %822 = arith.mulf %813, %765 : vector<8x128xf32>
    %823 = arith.mulf %807, %815 : vector<8x128xf32>
    %824 = arith.addf %822, %823 : vector<8x128xf32>
    %825 = math.tanh %824 : vector<8x128xf32>
    %826 = arith.mulf %821, %825 : vector<8x128xf32>
    %c0_290 = arith.constant 0 : index
    %c0_291 = arith.constant 0 : index
    %c0_292 = arith.constant 0 : index
    %827 = vector.load %arg25[%c0_290, %c0_291, %c0_292] : memref<8x8x128xf32, #tpu.memory_space<vmem>>, vector<8x8x128xf32>
    %828 = vector.shape_cast %826 : vector<8x128xf32> to vector<1x8x128xf32>
    %829 = vector.broadcast %828 : vector<1x8x128xf32> to vector<8x8x128xf32>
    %830 = arith.mulf %827, %829 : vector<8x8x128xf32>
    %cst_293 = arith.constant dense<0.000000e+00> : vector<8x8xf32>
    %831 = vector.multi_reduction <add>, %830, %cst_293 [2] : vector<8x8x128xf32> to vector<8x8xf32>
    %832 = vector.shape_cast %831 : vector<8x8xf32> to vector<8x8x1xf32>
    %833 = arith.addf %832, %442 : vector<8x8x1xf32>
    %cst_294 = arith.constant dense<0xFF800000> : vector<8x1xf32>
    %834 = vector.multi_reduction <maximumf>, %833, %cst_294 [0] : vector<8x8x1xf32> to vector<8x1xf32>
    %835 = vector.shape_cast %834 : vector<8x1xf32> to vector<1x8x1xf32>
    %836 = vector.broadcast %835 : vector<1x8x1xf32> to vector<8x8x1xf32>
    %837 = arith.subf %833, %836 : vector<8x8x1xf32>
    %838 = math.exp %837 : vector<8x8x1xf32>
    %cst_295 = arith.constant dense<0.000000e+00> : vector<8x1xf32>
    %839 = vector.multi_reduction <add>, %838, %cst_295 [0] : vector<8x8x1xf32> to vector<8x1xf32>
    %840 = vector.shape_cast %839 : vector<8x1xf32> to vector<1x8x1xf32>
    %841 = tpu.reciprocal %840 {approx = true} : vector<1x8x1xf32> -> vector<1x8x1xf32>
    %842 = vector.broadcast %841 : vector<1x8x1xf32> to vector<8x8x1xf32>
    %843 = arith.mulf %838, %842 : vector<8x8x1xf32>
    %c0_296 = arith.constant 0 : index
    %c0_297 = arith.constant 0 : index
    %c0_298 = arith.constant 0 : index
    %844 = vector.load %arg24[%c0_296, %c0_297, %c0_298] : memref<8x8x128xf32, #tpu.memory_space<vmem>>, vector<8x8x128xf32>
    %845 = vector.broadcast %843 : vector<8x8x1xf32> to vector<8x8x128xf32>
    %846 = arith.mulf %845, %844 : vector<8x8x128xf32>
    %cst_299 = arith.constant dense<0.000000e+00> : vector<8x128xf32>
    %847 = vector.multi_reduction <add>, %846, %cst_299 [0] : vector<8x8x128xf32> to vector<8x128xf32>
    %cst_300 = arith.constant dense<0.000000e+00> : vector<8x128xf32>
    %848 = tpu.matmul %847, %20, %cst_300 {dimension_numbers = #tpu.dot_dimension_numbers<[1], [0], [0], [1], [0, 0, 1, 1], [], []>} : vector<8x128xf32>, vector<128x128xf32>, vector<8x128xf32> -> vector<8x128xf32>
    %cst_301 = arith.constant dense<0.000000e+00> : vector<8x128xf32>
    %849 = tpu.matmul %826, %21, %cst_301 {dimension_numbers = #tpu.dot_dimension_numbers<[1], [0], [0], [1], [0, 0, 1, 1], [], []>} : vector<8x128xf32>, vector<128x128xf32>, vector<8x128xf32> -> vector<8x128xf32>
    %850 = arith.addf %848, %849 : vector<8x128xf32>
    %851 = math.tanh %850 : vector<8x128xf32>
    %852 = arith.index_cast %c6_i32_283 : i32 to index
    %c0_302 = arith.constant 0 : index
    %c0_303 = arith.constant 0 : index
    %853 = vector.load %arg26[%852, %c0_302, %c0_303] : memref<8x8x128xf32, #tpu.memory_space<vmem>>, vector<1x8x128xf32>
    %854 = vector.shape_cast %853 : vector<1x8x128xf32> to vector<8x128xf32>
    %855 = vector.shape_cast %851 : vector<8x128xf32> to vector<1x8x128xf32>
    tpu.vector_store %arg26[%852, %c0_302, %c0_303], %855 {strides = array<i32>} : memref<8x8x128xf32, #tpu.memory_space<vmem>>, vector<1x8x128xf32>,
    %c7_i32_304 = arith.constant 7 : i32
    %856 = arith.index_cast %c7_i32_304 : i32 to index
    %c0_305 = arith.constant 0 : index
    %c0_306 = arith.constant 0 : index
    %857 = vector.load %arg22[%856, %c0_305, %c0_306] : memref<8x8x512xf32, #tpu.memory_space<vmem>>, vector<1x8x512xf32>
    %858 = vector.shape_cast %857 : vector<1x8x512xf32> to vector<8x512xf32>
    %cst_307 = arith.constant dense<0.000000e+00> : vector<8x512xf32>
    %859 = tpu.matmul %851, %19, %cst_307 {dimension_numbers = #tpu.dot_dimension_numbers<[1], [0], [0], [1], [0, 0, 1, 1], [], []>} : vector<8x128xf32>, vector<128x512xf32>, vector<8x512xf32> -> vector<8x512xf32>
    %860 = arith.addf %858, %859 : vector<8x512xf32>
    %861 = vector.extract_strided_slice %860 {offsets = [0, 0], sizes = [8, 128], strides = [1, 1]} : vector<8x512xf32> to vector<8x128xf32>
    %862 = arith.negf %861 : vector<8x128xf32>
    %863 = math.exp %862 : vector<8x128xf32>
    %cst_308 = arith.constant 1.000000e+00 : f32
    %864 = vector.broadcast %cst_308 : f32 to vector<8x128xf32>
    %865 = arith.addf %864, %863 : vector<8x128xf32>
    %866 = arith.divf %864, %865 : vector<8x128xf32>
    %867 = vector.extract_strided_slice %860 {offsets = [0, 128], sizes = [8, 128], strides = [1, 1]} : vector<8x512xf32> to vector<8x128xf32>
    %868 = arith.negf %867 : vector<8x128xf32>
    %869 = math.exp %868 : vector<8x128xf32>
    %cst_309 = arith.constant 1.000000e+00 : f32
    %870 = vector.broadcast %cst_309 : f32 to vector<8x128xf32>
    %871 = arith.addf %870, %869 : vector<8x128xf32>
    %872 = arith.divf %870, %871 : vector<8x128xf32>
    %873 = vector.extract_strided_slice %860 {offsets = [0, 256], sizes = [8, 128], strides = [1, 1]} : vector<8x512xf32> to vector<8x128xf32>
    %874 = math.tanh %873 : vector<8x128xf32>
    %875 = vector.extract_strided_slice %860 {offsets = [0, 384], sizes = [8, 128], strides = [1, 1]} : vector<8x512xf32> to vector<8x128xf32>
    %876 = arith.negf %875 : vector<8x128xf32>
    %877 = math.exp %876 : vector<8x128xf32>
    %cst_310 = arith.constant 1.000000e+00 : f32
    %878 = vector.broadcast %cst_310 : f32 to vector<8x128xf32>
    %879 = arith.addf %878, %877 : vector<8x128xf32>
    %880 = arith.divf %878, %879 : vector<8x128xf32>
    %881 = arith.mulf %872, %824 : vector<8x128xf32>
    %882 = arith.mulf %866, %874 : vector<8x128xf32>
    %883 = arith.addf %881, %882 : vector<8x128xf32>
    %884 = math.tanh %883 : vector<8x128xf32>
    %885 = arith.mulf %880, %884 : vector<8x128xf32>
    %c0_311 = arith.constant 0 : index
    %c0_312 = arith.constant 0 : index
    %c0_313 = arith.constant 0 : index
    %886 = vector.load %arg25[%c0_311, %c0_312, %c0_313] : memref<8x8x128xf32, #tpu.memory_space<vmem>>, vector<8x8x128xf32>
    %887 = vector.shape_cast %885 : vector<8x128xf32> to vector<1x8x128xf32>
    %888 = vector.broadcast %887 : vector<1x8x128xf32> to vector<8x8x128xf32>
    %889 = arith.mulf %886, %888 : vector<8x8x128xf32>
    %cst_314 = arith.constant dense<0.000000e+00> : vector<8x8xf32>
    %890 = vector.multi_reduction <add>, %889, %cst_314 [2] : vector<8x8x128xf32> to vector<8x8xf32>
    %891 = vector.shape_cast %890 : vector<8x8xf32> to vector<8x8x1xf32>
    %892 = arith.addf %891, %442 : vector<8x8x1xf32>
    %cst_315 = arith.constant dense<0xFF800000> : vector<8x1xf32>
    %893 = vector.multi_reduction <maximumf>, %892, %cst_315 [0] : vector<8x8x1xf32> to vector<8x1xf32>
    %894 = vector.shape_cast %893 : vector<8x1xf32> to vector<1x8x1xf32>
    %895 = vector.broadcast %894 : vector<1x8x1xf32> to vector<8x8x1xf32>
    %896 = arith.subf %892, %895 : vector<8x8x1xf32>
    %897 = math.exp %896 : vector<8x8x1xf32>
    %cst_316 = arith.constant dense<0.000000e+00> : vector<8x1xf32>
    %898 = vector.multi_reduction <add>, %897, %cst_316 [0] : vector<8x8x1xf32> to vector<8x1xf32>
    %899 = vector.shape_cast %898 : vector<8x1xf32> to vector<1x8x1xf32>
    %900 = tpu.reciprocal %899 {approx = true} : vector<1x8x1xf32> -> vector<1x8x1xf32>
    %901 = vector.broadcast %900 : vector<1x8x1xf32> to vector<8x8x1xf32>
    %902 = arith.mulf %897, %901 : vector<8x8x1xf32>
    %c0_317 = arith.constant 0 : index
    %c0_318 = arith.constant 0 : index
    %c0_319 = arith.constant 0 : index
    %903 = vector.load %arg24[%c0_317, %c0_318, %c0_319] : memref<8x8x128xf32, #tpu.memory_space<vmem>>, vector<8x8x128xf32>
    %904 = vector.broadcast %902 : vector<8x8x1xf32> to vector<8x8x128xf32>
    %905 = arith.mulf %904, %903 : vector<8x8x128xf32>
    %cst_320 = arith.constant dense<0.000000e+00> : vector<8x128xf32>
    %906 = vector.multi_reduction <add>, %905, %cst_320 [0] : vector<8x8x128xf32> to vector<8x128xf32>
    %cst_321 = arith.constant dense<0.000000e+00> : vector<8x128xf32>
    %907 = tpu.matmul %906, %20, %cst_321 {dimension_numbers = #tpu.dot_dimension_numbers<[1], [0], [0], [1], [0, 0, 1, 1], [], []>} : vector<8x128xf32>, vector<128x128xf32>, vector<8x128xf32> -> vector<8x128xf32>
    %cst_322 = arith.constant dense<0.000000e+00> : vector<8x128xf32>
    %908 = tpu.matmul %885, %21, %cst_322 {dimension_numbers = #tpu.dot_dimension_numbers<[1], [0], [0], [1], [0, 0, 1, 1], [], []>} : vector<8x128xf32>, vector<128x128xf32>, vector<8x128xf32> -> vector<8x128xf32>
    %909 = arith.addf %907, %908 : vector<8x128xf32>
    %910 = math.tanh %909 : vector<8x128xf32>
    %911 = arith.index_cast %c7_i32_304 : i32 to index
    %c0_323 = arith.constant 0 : index
    %c0_324 = arith.constant 0 : index
    %912 = vector.load %arg26[%911, %c0_323, %c0_324] : memref<8x8x128xf32, #tpu.memory_space<vmem>>, vector<1x8x128xf32>
    %913 = vector.shape_cast %912 : vector<1x8x128xf32> to vector<8x128xf32>
    %914 = vector.shape_cast %910 : vector<8x128xf32> to vector<1x8x128xf32>
    tpu.vector_store %arg26[%911, %c0_323, %c0_324], %914 {strides = array<i32>} : memref<8x8x128xf32, #tpu.memory_space<vmem>>, vector<1x8x128xf32>,
    %c8_i32_325 = arith.constant 8 : i32
    %c0_326 = arith.constant 0 : index
    %c0_327 = arith.constant 0 : index
    %c0_328 = arith.constant 0 : index
    %915 = vector.load %arg26[%c0_326, %c0_327, %c0_328] : memref<8x8x128xf32, #tpu.memory_space<vmem>>, vector<8x8x128xf32>
    %916 = vector.shape_cast %915 : vector<8x8x128xf32> to vector<64x128xf32>
    %c0_329 = arith.constant 0 : index
    %c0_330 = arith.constant 0 : index
    %917 = vector.load %arg18[%c0_329, %c0_330] : memref<128x128xf32, #tpu.memory_space<vmem>>, vector<128x128xf32>
    %cst_331 = arith.constant dense<0.000000e+00> : vector<64x128xf32>
    %918 = tpu.matmul %916, %917, %cst_331 {dimension_numbers = #tpu.dot_dimension_numbers<[1], [0], [0], [1], [0, 0, 1, 1], [], []>} : vector<64x128xf32>, vector<128x128xf32>, vector<64x128xf32> -> vector<64x128xf32>
    %c0_332 = arith.constant 0 : index
    %c0_333 = arith.constant 0 : index
    %919 = vector.load %arg19[%c0_332, %c0_333] : memref<1x128xf32, #tpu.memory_space<vmem>>, vector<1x128xf32>
    %920 = vector.broadcast %919 : vector<1x128xf32> to vector<64x128xf32>
    %921 = arith.addf %918, %920 : vector<64x128xf32>
    %c0_334 = arith.constant 0 : index
    %c0_335 = arith.constant 0 : index
    %922 = vector.load %arg20[%c0_334, %c0_335] : memref<64x128xf32, #tpu.memory_space<vmem>>, vector<64x128xf32>
    tpu.vector_store %arg20[%c0_334, %c0_335], %921 {strides = array<i32>} : memref<64x128xf32, #tpu.memory_space<vmem>>, vector<64x128xf32>,
    return
  }
}

</mosaic_0001>

<llo_original>
// kernel: seqmodel_forward.1
$region0: #{seqmodel_forward.1}
  #allocation0 [shape = 'u32[]', space=smem, size = 0x4, offset = 0x4, fixed_abs, tag = 'smem constant byte address 0x4 - core index']
  #allocation1 [shape = 'u32[144,128]{1,0:T(1,128)}', space=vmem, size = 0x12000, scoped, tag = 'internal scratch']
  #allocation2 [shape = 'f32[8,8,512]{2,1,0:T(8,128)}', space=vmem, size = 0x20000, scoped, tag = 'scratch operand']
  #allocation3 [shape = 'f32[8,8,512]{2,1,0:T(8,128)}', space=vmem, size = 0x20000, scoped, tag = 'scratch operand']
  #allocation4 [shape = 'f32[8,8,128]{2,1,0:T(8,128)}', space=vmem, size = 0x8000, scoped, tag = 'scratch operand']
  #allocation5 [shape = 'f32[8,8,128]{2,1,0:T(8,128)}', space=vmem, size = 0x8000, scoped, tag = 'scratch operand']
  #allocation6 [shape = 'f32[8,8,128]{2,1,0:T(8,128)}', space=vmem, size = 0x8000, scoped, tag = 'scratch operand']
  #allocation7 [shape = 'f32[8,8,128]{2,1,0:T(8,128)}', space=vmem, size = 0x8000, scoped, tag = 'scratch operand']
  %s0 = inlined_call_operand.vmem [shape: f32[8,8,128], index: 0, kind: input, shape index: {}]
  %s1 = inlined_call_operand.vmem [shape: f32[8,8,128], index: 1, kind: input, shape index: {}]
  %s2 = inlined_call_operand.vmem [shape: f32[8,8,1], index: 2, kind: input, shape index: {}]
  %s3 = inlined_call_operand.vmem [shape: f32[128,512], index: 3, kind: input, shape index: {}]
  %s4 = inlined_call_operand.vmem [shape: f32[128,512], index: 4, kind: input, shape index: {}]
  %s5 = inlined_call_operand.vmem [shape: f32[1,512], index: 5, kind: input, shape index: {}]
  %s6 = inlined_call_operand.vmem [shape: f32[128,128], index: 6, kind: input, shape index: {}]
  %s7 = inlined_call_operand.vmem [shape: f32[1,128], index: 7, kind: input, shape index: {}]
  %s8 = inlined_call_operand.vmem [shape: f32[128,128], index: 8, kind: input, shape index: {}]
  %s9 = inlined_call_operand.vmem [shape: f32[1,128], index: 9, kind: input, shape index: {}]
  %s10 = inlined_call_operand.vmem [shape: f32[128,128], index: 10, kind: input, shape index: {}]
  %s11 = inlined_call_operand.vmem [shape: f32[1,128], index: 11, kind: input, shape index: {}]
  %s12 = inlined_call_operand.vmem [shape: f32[128,512], index: 12, kind: input, shape index: {}]
  %s13 = inlined_call_operand.vmem [shape: f32[128,512], index: 13, kind: input, shape index: {}]
  %s14 = inlined_call_operand.vmem [shape: f32[1,512], index: 14, kind: input, shape index: {}]
  %s15 = inlined_call_operand.vmem [shape: f32[128,128], index: 15, kind: input, shape index: {}]
  %s16 = inlined_call_operand.vmem [shape: f32[128,128], index: 16, kind: input, shape index: {}]
  %s17 = inlined_call_operand.vmem [shape: f32[128,128], index: 17, kind: input, shape index: {}]
  %s18 = inlined_call_operand.vmem [shape: f32[128,128], index: 18, kind: input, shape index: {}]
  %s19 = inlined_call_operand.vmem [shape: f32[1,128], index: 19, kind: input, shape index: {}]
  %s20 = inlined_call_operand.vmem [shape: f32[64,128], index: 20, kind: output, shape index: {}]
  %s21 = sld [smem:[#allocation0]]
  $region90: #{seqmodel_forward.1} parent=0
    _
  %s23 = ssub.s32 1, %s21
  %s24 = scalar_select 0, %s23, %s21
  // Predicated region
  $region2: #{seqmodel_forward.1} parent=0 // pred_check
    _
  $region3: #{seqmodel_forward.1} parent=0 // pred_check_branch
    %26 = sbr.rel (0) target = $region5
  $region4: #{seqmodel_forward.1} parent=0 // pred_region
    _
  $region5: #{seqmodel_forward.1} parent=0 // pred_fallthru
    _
  // Predicated region
  $region6: #{seqmodel_forward.1} parent=0 // pred_check
    _
  $region7: #{seqmodel_forward.1} parent=0 // pred_check_branch
    %28 = sbr.rel (0) target = $region9
  $region8: #{seqmodel_forward.1} parent=0 // pred_region
    _
  $region9: #{seqmodel_forward.1} parent=0 // pred_fallthru
    _
  // Predicated region
  $region10: #{seqmodel_forward.1} parent=0 // pred_check
    _
  $region11: #{seqmodel_forward.1} parent=0 // pred_check_branch
    %30 = sbr.rel (0) target = $region13
  $region12: #{seqmodel_forward.1} parent=0 // pred_region
    _
  $region13: #{seqmodel_forward.1} parent=0 // pred_fallthru
    _
  // Predicated region
  $region14: #{seqmodel_forward.1} parent=0 // pred_check
    _
  $region15: #{seqmodel_forward.1} parent=0 // pred_check_branch
    %32 = sbr.rel (0) target = $region17
  $region16: #{seqmodel_forward.1} parent=0 // pred_region
    _
  $region17: #{seqmodel_forward.1} parent=0 // pred_fallthru
    _
  // Predicated region
  $region18: #{seqmodel_forward.1} parent=0 // pred_check
    _
  $region19: #{seqmodel_forward.1} parent=0 // pred_check_branch
    %34 = sbr.rel (0) target = $region21
  $region20: #{seqmodel_forward.1} parent=0 // pred_region
    _
  $region21: #{seqmodel_forward.1} parent=0 // pred_fallthru
    _
  // Predicated region
  $region22: #{seqmodel_forward.1} parent=0 // pred_check
    _
  $region23: #{seqmodel_forward.1} parent=0 // pred_check_branch
    %36 = sbr.rel (0) target = $region25
  $region24: #{seqmodel_forward.1} parent=0 // pred_region
    _
  $region25: #{seqmodel_forward.1} parent=0 // pred_fallthru
    _
  // Predicated region
  $region26: #{seqmodel_forward.1} parent=0 // pred_check
    _
  $region27: #{seqmodel_forward.1} parent=0 // pred_check_branch
    %38 = sbr.rel (0) target = $region29
  $region28: #{seqmodel_forward.1} parent=0 // pred_region
    _
  $region29: #{seqmodel_forward.1} parent=0 // pred_fallthru
    _
  // Predicated region
  $region30: #{seqmodel_forward.1} parent=0 // pred_check
    _
  $region31: #{seqmodel_forward.1} parent=0 // pred_check_branch
    %40 = sbr.rel (0) target = $region33
  $region32: #{seqmodel_forward.1} parent=0 // pred_region
    _
  $region33: #{seqmodel_forward.1} parent=0 // pred_fallthru
    _
  // Predicated region
  $region34: #{seqmodel_forward.1} parent=0 // pred_check
    _
  $region35: #{seqmodel_forward.1} parent=0 // pred_check_branch
    %42 = sbr.rel (0) target = $region37
  $region36: #{seqmodel_forward.1} parent=0 // pred_region
    _
  $region37: #{seqmodel_forward.1} parent=0 // pred_fallthru
    _
  // Predicated region
  $region38: #{seqmodel_forward.1} parent=0 // pred_check
    _
  $region39: #{seqmodel_forward.1} parent=0 // pred_check_branch
    %44 = sbr.rel (0) target = $region41
  $region40: #{seqmodel_forward.1} parent=0 // pred_region
    _
  $region41: #{seqmodel_forward.1} parent=0 // pred_fallthru
    _
  // Predicated region
  $region42: #{seqmodel_forward.1} parent=0 // pred_check
    _
  $region43: #{seqmodel_forward.1} parent=0 // pred_check_branch
    %46 = sbr.rel (0) target = $region45
  $region44: #{seqmodel_forward.1} parent=0 // pred_region
    _
  $region45: #{seqmodel_forward.1} parent=0 // pred_fallthru
    _
  // Predicated region
  $region46: #{seqmodel_forward.1} parent=0 // pred_check
    _
  $region47: #{seqmodel_forward.1} parent=0 // pred_check_branch
    %48 = sbr.rel (0) target = $region49
  $region48: #{seqmodel_forward.1} parent=0 // pred_region
    _
  $region49: #{seqmodel_forward.1} parent=0 // pred_fallthru
    _
  // Predicated region
  $region50: #{seqmodel_forward.1} parent=0 // pred_check
    _
  $region51: #{seqmodel_forward.1} parent=0 // pred_check_branch
    %50 = sbr.rel (0) target = $region53
  $region52: #{seqmodel_forward.1} parent=0 // pred_region
    _
  $region53: #{seqmodel_forward.1} parent=0 // pred_fallthru
    _
  // Predicated region
  $region54: #{seqmodel_forward.1} parent=0 // pred_check
    _
  $region55: #{seqmodel_forward.1} parent=0 // pred_check_branch
    %52 = sbr.rel (0) target = $region57
  $region56: #{seqmodel_forward.1} parent=0 // pred_region
    _
  $region57: #{seqmodel_forward.1} parent=0 // pred_fallthru
    _
  // Predicated region
  $region58: #{seqmodel_forward.1} parent=0 // pred_check
    _
  $region59: #{seqmodel_forward.1} parent=0 // pred_check_branch
    %54 = sbr.rel (0) target = $region61
  $region60: #{seqmodel_forward.1} parent=0 // pred_region
    _
  $region61: #{seqmodel_forward.1} parent=0 // pred_fallthru
    _
  // Predicated region
  $region62: #{seqmodel_forward.1} parent=0 // pred_check
    _
  $region63: #{seqmodel_forward.1} parent=0 // pred_check_branch
    %56 = sbr.rel (0) target = $region65
  $region64: #{seqmodel_forward.1} parent=0 // pred_region
    _
  $region65: #{seqmodel_forward.1} parent=0 // pred_fallthru
    _
  // Predicated region
  $region66: #{seqmodel_forward.1} parent=0 // pred_check
    _
  $region67: #{seqmodel_forward.1} parent=0 // pred_check_branch
    %58 = sbr.rel (0) target = $region69
  $region68: #{seqmodel_forward.1} parent=0 // pred_region
    _
  $region69: #{seqmodel_forward.1} parent=0 // pred_fallthru
    _
  // Predicated region
  $region70: #{seqmodel_forward.1} parent=0 // pred_check
    _
  $region71: #{seqmodel_forward.1} parent=0 // pred_check_branch
    %60 = sbr.rel (0) target = $region73
  $region72: #{seqmodel_forward.1} parent=0 // pred_region
    _
  $region73: #{seqmodel_forward.1} parent=0 // pred_fallthru
    _
  // Predicated region
  $region74: #{seqmodel_forward.1} parent=0 // pred_check
    _
  $region75: #{seqmodel_forward.1} parent=0 // pred_check_branch
    %62 = sbr.rel (0) target = $region77
  $region76: #{seqmodel_forward.1} parent=0 // pred_region
    _
  $region77: #{seqmodel_forward.1} parent=0 // pred_fallthru
    _
  // Predicated region
  $region78: #{seqmodel_forward.1} parent=0 // pred_check
    _
  $region79: #{seqmodel_forward.1} parent=0 // pred_check_branch
    %64 = sbr.rel (0) target = $region81
  $region80: #{seqmodel_forward.1} parent=0 // pred_region
    _
  $region81: #{seqmodel_forward.1} parent=0 // pred_fallthru
    _
  %v65 = vld [vmem:[%s0] sm:$0xff]
  %v66 = vld [vmem:[%s0 + $0x8] sm:$0xff]
  %v67 = vld [vmem:[%s0 + $0x10] sm:$0xff]
  %v68 = vld [vmem:[%s0 + $0x18] sm:$0xff]
  %v69 = vld [vmem:[%s0 + $0x20] sm:$0xff]
  %v70 = vld [vmem:[%s0 + $0x28] sm:$0xff]
  %v71 = vld [vmem:[%s0 + $0x30] sm:$0xff]
  %v72 = vld [vmem:[%s0 + $0x38] sm:$0xff]
  %v73 = vld [vmem:[%s3] sm:$0xff]
  %v74 = vld [vmem:[%s3 + $0x8] sm:$0xff]
  %v75 = vld [vmem:[%s3 + $0x10] sm:$0xff]
  %v76 = vld [vmem:[%s3 + $0x18] sm:$0xff]
  %v77 = vld [vmem:[%s3 + $0x20] sm:$0xff]
  %v78 = vld [vmem:[%s3 + $0x28] sm:$0xff]
  %v79 = vld [vmem:[%s3 + $0x30] sm:$0xff]
  %v80 = vld [vmem:[%s3 + $0x38] sm:$0xff]
  %v81 = vld [vmem:[%s3 + $0x40] sm:$0xff]
  %v82 = vld [vmem:[%s3 + $0x48] sm:$0xff]
  %v83 = vld [vmem:[%s3 + $0x50] sm:$0xff]
  %v84 = vld [vmem:[%s3 + $0x58] sm:$0xff]
  %v85 = vld [vmem:[%s3 + $0x60] sm:$0xff]
  %v86 = vld [vmem:[%s3 + $0x68] sm:$0xff]
  %v87 = vld [vmem:[%s3 + $0x70] sm:$0xff]
  %v88 = vld [vmem:[%s3 + $0x78] sm:$0xff]
  %v89 = vld [vmem:[%s3 + $0x80] sm:$0xff]
  %v90 = vld [vmem:[%s3 + $0x88] sm:$0xff]
  %v91 = vld [vmem:[%s3 + $0x90] sm:$0xff]
  %v92 = vld [vmem:[%s3 + $0x98] sm:$0xff]
  %v93 = vld [vmem:[%s3 + $0xa0] sm:$0xff]
  %v94 = vld [vmem:[%s3 + $0xa8] sm:$0xff]
  %v95 = vld [vmem:[%s3 + $0xb0] sm:$0xff]
  %v96 = vld [vmem:[%s3 + $0xb8] sm:$0xff]
  %v97 = vld [vmem:[%s3 + $0xc0] sm:$0xff]
  %v98 = vld [vmem:[%s3 + $0xc8] sm:$0xff]
  %v99 = vld [vmem:[%s3 + $0xd0] sm:$0xff]
  %v100 = vld [vmem:[%s3 + $0xd8] sm:$0xff]
  %v101 = vld [vmem:[%s3 + $0xe0] sm:$0xff]
  %v102 = vld [vmem:[%s3 + $0xe8] sm:$0xff]
  %v103 = vld [vmem:[%s3 + $0xf0] sm:$0xff]
  %v104 = vld [vmem:[%s3 + $0xf8] sm:$0xff]
  %v105 = vld [vmem:[%s3 + $0x100] sm:$0xff]
  %v106 = vld [vmem:[%s3 + $0x108] sm:$0xff]
  %v107 = vld [vmem:[%s3 + $0x110] sm:$0xff]
  %v108 = vld [vmem:[%s3 + $0x118] sm:$0xff]
  %v109 = vld [vmem:[%s3 + $0x120] sm:$0xff]
  %v110 = vld [vmem:[%s3 + $0x128] sm:$0xff]
  %v111 = vld [vmem:[%s3 + $0x130] sm:$0xff]
  %v112 = vld [vmem:[%s3 + $0x138] sm:$0xff]
  %v113 = vld [vmem:[%s3 + $0x140] sm:$0xff]
  %v114 = vld [vmem:[%s3 + $0x148] sm:$0xff]
  %v115 = vld [vmem:[%s3 + $0x150] sm:$0xff]
  %v116 = vld [vmem:[%s3 + $0x158] sm:$0xff]
  %v117 = vld [vmem:[%s3 + $0x160] sm:$0xff]
  %v118 = vld [vmem:[%s3 + $0x168] sm:$0xff]
  %v119 = vld [vmem:[%s3 + $0x170] sm:$0xff]
  %v120 = vld [vmem:[%s3 + $0x178] sm:$0xff]
  %v121 = vld [vmem:[%s3 + $0x180] sm:$0xff]
  %v122 = vld [vmem:[%s3 + $0x188] sm:$0xff]
  %v123 = vld [vmem:[%s3 + $0x190] sm:$0xff]
  %v124 = vld [vmem:[%s3 + $0x198] sm:$0xff]
  %v125 = vld [vmem:[%s3 + $0x1a0] sm:$0xff]
  %v126 = vld [vmem:[%s3 + $0x1a8] sm:$0xff]
  %v127 = vld [vmem:[%s3 + $0x1b0] sm:$0xff]
  %v128 = vld [vmem:[%s3 + $0x1b8] sm:$0xff]
  %v129 = vld [vmem:[%s3 + $0x1c0] sm:$0xff]
  %v130 = vld [vmem:[%s3 + $0x1c8] sm:$0xff]
  %v131 = vld [vmem:[%s3 + $0x1d0] sm:$0xff]
  %v132 = vld [vmem:[%s3 + $0x1d8] sm:$0xff]
  %v133 = vld [vmem:[%s3 + $0x1e0] sm:$0xff]
  %v134 = vld [vmem:[%s3 + $0x1e8] sm:$0xff]
  %v135 = vld [vmem:[%s3 + $0x1f0] sm:$0xff]
  %v136 = vld [vmem:[%s3 + $0x1f8] sm:$0xff]
  %v137 = vld [vmem:[%s5] sm:$0xf]
  %v139 = vlaneseq
  %v140 = vshrl.u32 %v139, 7
  %v141 = vsub.s32 0, %v140
  %v142 = vrot.slane %v137, %v141
  %v143 = vlaneseq
  %v144 = vshrl.u32 %v143, 7
  %v145 = vsub.s32 1, %v144
  %v146 = vrot.slane %v137, %v145
  %v147 = vlaneseq
  %v148 = vshrl.u32 %v147, 7
  %v149 = vsub.s32 2, %v148
  %v150 = vrot.slane %v137, %v149
  %v151 = vlaneseq
  %v152 = vshrl.u32 %v151, 7
  %v153 = vsub.s32 3, %v152
  %v154 = vrot.slane %v137, %v153
  %159 = vmatprep.subr.mxu0 %v74
  %160 = vmatpush1.msra.mxu0 %v73
  %161 = vmatprep.subr.mxu0 %v78
  %162 = vmatpush1.msra.mxu0 %v77
  %163 = vmatprep.subr.mxu0 %v82
  %164 = vmatpush1.msra.mxu0 %v81
  %165 = vmatprep.subr.mxu0 %v86
  %166 = vmatpush1.msra.mxu0 %v85
  %167 = vmatprep.subr.mxu0 %v90
  %168 = vmatpush1.msra.mxu0 %v89
  %169 = vmatprep.subr.mxu0 %v94
  %170 = vmatpush1.msra.mxu0 %v93
  %171 = vmatprep.subr.mxu0 %v98
  %172 = vmatpush1.msra.mxu0 %v97
  %173 = vmatprep.subr.mxu0 %v102
  %174 = vmatpush1.msra.mxu0 %v101
  %175 = vmatprep.subr.mxu0 %v106
  %176 = vmatpush1.msra.mxu0 %v105
  %177 = vmatprep.subr.mxu0 %v110
  %178 = vmatpush1.msra.mxu0 %v109
  %179 = vmatprep.subr.mxu0 %v114
  %180 = vmatpush1.msra.mxu0 %v113
  %181 = vmatprep.subr.mxu0 %v118
  %182 = vmatpush1.msra.mxu0 %v117
  %183 = vmatprep.subr.mxu0 %v122
  %184 = vmatpush1.msra.mxu0 %v121
  %185 = vmatprep.subr.mxu0 %v126
  %186 = vmatpush1.msra.mxu0 %v125
  %187 = vmatprep.subr.mxu0 %v130
  %188 = vmatpush1.msra.mxu0 %v129
  %189 = vmatprep.subr.mxu0 %v134
  %190 = vmatpush1.msra.mxu0 %v133
  %191 = vmatprep.subr.mxu0 0.0
  %192 = vmatpush1.msra.mxu0 0.0
  %193 = vmatprep.subr.mxu0 0.0
  %194 = vmatpush1.msra.mxu0 0.0
  %195 = vmatprep.subr.mxu0 0.0
  %196 = vmatpush1.msra.mxu0 0.0
  %197 = vmatprep.subr.mxu0 0.0
  %198 = vmatpush1.msra.mxu0 0.0
  %199 = vmatprep.subr.mxu0 0.0
  %200 = vmatpush1.msra.mxu0 0.0
  %201 = vmatprep.subr.mxu0 0.0
  %202 = vmatpush1.msra.mxu0 0.0
  %203 = vmatprep.subr.mxu0 0.0
  %204 = vmatpush1.msra.mxu0 0.0
  %205 = vmatprep.subr.mxu0 0.0
  %206 = vmatpush1.msra.mxu0 0.0
  %207 = vmatprep.subr.mxu0 0.0
  %208 = vmatpush1.msra.mxu0 0.0
  %209 = vmatprep.subr.mxu0 0.0
  %210 = vmatpush1.msra.mxu0 0.0
  %211 = vmatprep.subr.mxu0 0.0
  %212 = vmatpush1.msra.mxu0 0.0
  %213 = vmatprep.subr.mxu0 0.0
  %214 = vmatpush1.msra.mxu0 0.0
  %215 = vmatprep.subr.mxu0 0.0
  %216 = vmatpush1.msra.mxu0 0.0
  %217 = vmatprep.subr.mxu0 0.0
  %218 = vmatpush1.msra.mxu0 0.0
  %219 = vmatprep.subr.mxu0 0.0
  %220 = vmatpush1.msra.mxu0 0.0
  %221 = vmatprep.subr.mxu0 0.0
  %222 = vmatpush1.msra.mxu0 0.0
  %223 = vmatprep.mubr.f32.mxu0 0.0
  %224 = vmatmul.mubr.f32.gmra.mrb[0].mxu0 %v65
  %v225 = vpop.f32.mrb[0].mxu0
  %v226 = vadd.f32 %v142, %v225
  %v227 = vpop.f32.mrb[0].mxu0
  %v228 = vadd.f32 %v146, %v227
  %229 = vmatprep.mubr.f32.mxu0 0.0
  %230 = vmatmul.mubr.f32.gmra.mrb[0].mxu0 %v66
  %v231 = vpop.f32.mrb[0].mxu0
  %v232 = vadd.f32 %v142, %v231
  %v233 = vpop.f32.mrb[0].mxu0
  %v234 = vadd.f32 %v146, %v233
  %235 = vmatprep.mubr.f32.mxu0 0.0
  %236 = vmatmul.mubr.f32.gmra.mrb[0].mxu0 %v67
  %v237 = vpop.f32.mrb[0].mxu0
  %v238 = vadd.f32 %v142, %v237
  %v239 = vpop.f32.mrb[0].mxu0
  %v240 = vadd.f32 %v146, %v239
  %241 = vmatprep.mubr.f32.mxu0 0.0
  %242 = vmatmul.mubr.f32.gmra.mrb[0].mxu0 %v68
  %v243 = vpop.f32.mrb[0].mxu0
  %v244 = vadd.f32 %v142, %v243
  %v245 = vpop.f32.mrb[0].mxu0
  %v246 = vadd.f32 %v146, %v245
  %247 = vmatprep.mubr.f32.mxu0 0.0
  %248 = vmatmul.mubr.f32.gmra.mrb[0].mxu0 %v69
  %v249 = vpop.f32.mrb[0].mxu0
  %v250 = vadd.f32 %v142, %v249
  %v251 = vpop.f32.mrb[0].mxu0
  %v252 = vadd.f32 %v146, %v251
  %253 = vmatprep.mubr.f32.mxu0 0.0
  %254 = vmatmul.mubr.f32.gmra.mrb[0].mxu0 %v70
  %v255 = vpop.f32.mrb[0].mxu0
  %v256 = vadd.f32 %v142, %v255
  %v257 = vpop.f32.mrb[0].mxu0
  %v258 = vadd.f32 %v146, %v257
  %259 = vmatprep.mubr.f32.mxu0 0.0
  %260 = vmatmul.mubr.f32.gmra.mrb[0].mxu0 %v71
  %v261 = vpop.f32.mrb[0].mxu0
  %v262 = vadd.f32 %v142, %v261
  %v263 = vpop.f32.mrb[0].mxu0
  %v264 = vadd.f32 %v146, %v263
  %265 = vmatprep.mubr.f32.mxu0 0.0
  %266 = vmatmul.mubr.f32.gmra.mrb[0].mxu0 %v72
  %v267 = vpop.f32.mrb[0].mxu0
  %v268 = vadd.f32 %v142, %v267
  %v269 = vpop.f32.mrb[0].mxu0
  %v270 = vadd.f32 %v146, %v269
  %271 = vdwg.mxu0
  %272 = vmatprep.subr.mxu0 %v76
  %273 = vmatpush1.msra.mxu0 %v75
  %274 = vmatprep.subr.mxu0 %v80
  %275 = vmatpush1.msra.mxu0 %v79
  %276 = vmatprep.subr.mxu0 %v84
  %277 = vmatpush1.msra.mxu0 %v83
  %278 = vmatprep.subr.mxu0 %v88
  %279 = vmatpush1.msra.mxu0 %v87
  %280 = vmatprep.subr.mxu0 %v92
  %281 = vmatpush1.msra.mxu0 %v91
  %282 = vmatprep.subr.mxu0 %v96
  %283 = vmatpush1.msra.mxu0 %v95
  %284 = vmatprep.subr.mxu0 %v100
  %285 = vmatpush1.msra.mxu0 %v99
  %286 = vmatprep.subr.mxu0 %v104
  %287 = vmatpush1.msra.mxu0 %v103
  %288 = vmatprep.subr.mxu0 %v108
  %289 = vmatpush1.msra.mxu0 %v107
  %290 = vmatprep.subr.mxu0 %v112
  %291 = vmatpush1.msra.mxu0 %v111
  %292 = vmatprep.subr.mxu0 %v116
  %293 = vmatpush1.msra.mxu0 %v115
  %294 = vmatprep.subr.mxu0 %v120
  %295 = vmatpush1.msra.mxu0 %v119
  %296 = vmatprep.subr.mxu0 %v124
  %297 = vmatpush1.msra.mxu0 %v123
  %298 = vmatprep.subr.mxu0 %v128
  %299 = vmatpush1.msra.mxu0 %v127
  %300 = vmatprep.subr.mxu0 %v132
  %301 = vmatpush1.msra.mxu0 %v131
  %302 = vmatprep.subr.mxu0 %v136
  %303 = vmatpush1.msra.mxu0 %v135
  %304 = vmatprep.subr.mxu0 0.0
  %305 = vmatpush1.msra.mxu0 0.0
  %306 = vmatprep.subr.mxu0 0.0
  %307 = vmatpush1.msra.mxu0 0.0
  %308 = vmatprep.subr.mxu0 0.0
  %309 = vmatpush1.msra.mxu0 0.0
  %310 = vmatprep.subr.mxu0 0.0
  %311 = vmatpush1.msra.mxu0 0.0
  %312 = vmatprep.subr.mxu0 0.0
  %313 = vmatpush1.msra.mxu0 0.0
  %314 = vmatprep.subr.mxu0 0.0
  %315 = vmatpush1.msra.mxu0 0.0
  %316 = vmatprep.subr.mxu0 0.0
  %317 = vmatpush1.msra.mxu0 0.0
  %318 = vmatprep.subr.mxu0 0.0
  %319 = vmatpush1.msra.mxu0 0.0
  %320 = vmatprep.subr.mxu0 0.0
  %321 = vmatpush1.msra.mxu0 0.0
  %322 = vmatprep.subr.mxu0 0.0
  %323 = vmatpush1.msra.mxu0 0.0
  %324 = vmatprep.subr.mxu0 0.0
  %325 = vmatpush1.msra.mxu0 0.0
  %326 = vmatprep.subr.mxu0 0.0
  %327 = vmatpush1.msra.mxu0 0.0
  %328 = vmatprep.subr.mxu0 0.0
  %329 = vmatpush1.msra.mxu0 0.0
  %330 = vmatprep.subr.mxu0 0.0
  %331 = vmatpush1.msra.mxu0 0.0
  %332 = vmatprep.subr.mxu0 0.0
  %333 = vmatpush1.msra.mxu0 0.0
  %334 = vmatprep.subr.mxu0 0.0
  %335 = vmatpush1.msra.mxu0 0.0
  %336 = vmatprep.mubr.f32.mxu0 0.0
  %337 = vmatmul.mubr.f32.gmra.mrb[0].mxu0 %v65
  %v338 = vpop.f32.mrb[0].mxu0
  %v339 = vadd.f32 %v150, %v338
  %v340 = vpop.f32.mrb[0].mxu0
  %v341 = vadd.f32 %v154, %v340
  %342 = vmatprep.mubr.f32.mxu0 0.0
  %343 = vmatmul.mubr.f32.gmra.mrb[0].mxu0 %v66
  %v344 = vpop.f32.mrb[0].mxu0
  %v345 = vadd.f32 %v150, %v344
  %v346 = vpop.f32.mrb[0].mxu0
  %v347 = vadd.f32 %v154, %v346
  %348 = vmatprep.mubr.f32.mxu0 0.0
  %349 = vmatmul.mubr.f32.gmra.mrb[0].mxu0 %v67
  %v350 = vpop.f32.mrb[0].mxu0
  %v351 = vadd.f32 %v150, %v350
  %v352 = vpop.f32.mrb[0].mxu0
  %v353 = vadd.f32 %v154, %v352
  %354 = vmatprep.mubr.f32.mxu0 0.0
  %355 = vmatmul.mubr.f32.gmra.mrb[0].mxu0 %v68
  %v356 = vpop.f32.mrb[0].mxu0
  %v357 = vadd.f32 %v150, %v356
  %v358 = vpop.f32.mrb[0].mxu0
  %v359 = vadd.f32 %v154, %v358
  %360 = vmatprep.mubr.f32.mxu0 0.0
  %361 = vmatmul.mubr.f32.gmra.mrb[0].mxu0 %v69
  %v362 = vpop.f32.mrb[0].mxu0
  %v363 = vadd.f32 %v150, %v362
  %v364 = vpop.f32.mrb[0].mxu0
  %v365 = vadd.f32 %v154, %v364
  %366 = vmatprep.mubr.f32.mxu0 0.0
  %367 = vmatmul.mubr.f32.gmra.mrb[0].mxu0 %v70
  %v368 = vpop.f32.mrb[0].mxu0
  %v369 = vadd.f32 %v150, %v368
  %v370 = vpop.f32.mrb[0].mxu0
  %v371 = vadd.f32 %v154, %v370
  %372 = vmatprep.mubr.f32.mxu0 0.0
  %373 = vmatmul.mubr.f32.gmra.mrb[0].mxu0 %v71
  %v374 = vpop.f32.mrb[0].mxu0
  %v375 = vadd.f32 %v150, %v374
  %v376 = vpop.f32.mrb[0].mxu0
  %v377 = vadd.f32 %v154, %v376
  %378 = vmatprep.mubr.f32.mxu0 0.0
  %379 = vmatmul.mubr.f32.gmra.mrb[0].mxu0 %v72
  %v380 = vpop.f32.mrb[0].mxu0
  %v381 = vadd.f32 %v150, %v380
  %v382 = vpop.f32.mrb[0].mxu0
  %v383 = vadd.f32 %v154, %v382
  %384 = vdwg.mxu0
  %385 = vst [vmem:[#allocation2] sm:$0xff] %v226
  %386 = vst [vmem:[#allocation2 + $0x8] sm:$0xff] %v228
  %387 = vst [vmem:[#allocation2 + $0x10] sm:$0xff] %v339
  %388 = vst [vmem:[#allocation2 + $0x18] sm:$0xff] %v341
  %389 = vst [vmem:[#allocation2 + $0x20] sm:$0xff] %v232
  %390 = vst [vmem:[#allocation2 + $0x28] sm:$0xff] %v234
  %391 = vst [vmem:[#allocation2 + $0x30] sm:$0xff] %v345
  %392 = vst [vmem:[#allocation2 + $0x38] sm:$0xff] %v347
  %393 = vst [vmem:[#allocation2 + $0x40] sm:$0xff] %v238
  %394 = vst [vmem:[#allocation2 + $0x48] sm:$0xff] %v240
  %395 = vst [vmem:[#allocation2 + $0x50] sm:$0xff] %v351
  %396 = vst [vmem:[#allocation2 + $0x58] sm:$0xff] %v353
  %397 = vst [vmem:[#allocation2 + $0x60] sm:$0xff] %v244
  %398 = vst [vmem:[#allocation2 + $0x68] sm:$0xff] %v246
  %399 = vst [vmem:[#allocation2 + $0x70] sm:$0xff] %v357
  %400 = vst [vmem:[#allocation2 + $0x78] sm:$0xff] %v359
  %401 = vst [vmem:[#allocation2 + $0x80] sm:$0xff] %v250
  %402 = vst [vmem:[#allocation2 + $0x88] sm:$0xff] %v252
  %403 = vst [vmem:[#allocation2 + $0x90] sm:$0xff] %v363
  %404 = vst [vmem:[#allocation2 + $0x98] sm:$0xff] %v365
  %405 = vst [vmem:[#allocation2 + $0xa0] sm:$0xff] %v256
  %406 = vst [vmem:[#allocation2 + $0xa8] sm:$0xff] %v258
  %407 = vst [vmem:[#allocation2 + $0xb0] sm:$0xff] %v369
  %408 = vst [vmem:[#allocation2 + $0xb8] sm:$0xff] %v371
  %409 = vst [vmem:[#allocation2 + $0xc0] sm:$0xff] %v262
  %410 = vst [vmem:[#allocation2 + $0xc8] sm:$0xff] %v264
  %411 = vst [vmem:[#allocation2 + $0xd0] sm:$0xff] %v375
  %412 = vst [vmem:[#allocation2 + $0xd8] sm:$0xff] %v377
  %413 = vst [vmem:[#allocation2 + $0xe0] sm:$0xff] %v268
  %414 = vst [vmem:[#allocation2 + $0xe8] sm:$0xff] %v270
  %415 = vst [vmem:[#allocation2 + $0xf0] sm:$0xff] %v381
  %416 = vst [vmem:[#allocation2 + $0xf8] sm:$0xff] %v383
  %v417 = vld [vmem:[%s1] sm:$0xff]
  %v418 = vld [vmem:[%s1 + $0x8] sm:$0xff]
  %v419 = vld [vmem:[%s1 + $0x10] sm:$0xff]
  %v420 = vld [vmem:[%s1 + $0x18] sm:$0xff]
  %v421 = vld [vmem:[%s1 + $0x20] sm:$0xff]
  %v422 = vld [vmem:[%s1 + $0x28] sm:$0xff]
  %v423 = vld [vmem:[%s1 + $0x30] sm:$0xff]
  %v424 = vld [vmem:[%s1 + $0x38] sm:$0xff]
  %v425 = vld [vmem:[%s12] sm:$0xff]
  %v426 = vld [vmem:[%s12 + $0x8] sm:$0xff]
  %v427 = vld [vmem:[%s12 + $0x10] sm:$0xff]
  %v428 = vld [vmem:[%s12 + $0x18] sm:$0xff]
  %v429 = vld [vmem:[%s12 + $0x20] sm:$0xff]
  %v430 = vld [vmem:[%s12 + $0x28] sm:$0xff]
  %v431 = vld [vmem:[%s12 + $0x30] sm:$0xff]
  %v432 = vld [vmem:[%s12 + $0x38] sm:$0xff]
  %v433 = vld [vmem:[%s12 + $0x40] sm:$0xff]
  %v434 = vld [vmem:[%s12 + $0x48] sm:$0xff]
  %v435 = vld [vmem:[%s12 + $0x50] sm:$0xff]
  %v436 = vld [vmem:[%s12 + $0x58] sm:$0xff]
  %v437 = vld [vmem:[%s12 + $0x60] sm:$0xff]
  %v438 = vld [vmem:[%s12 + $0x68] sm:$0xff]
  %v439 = vld [vmem:[%s12 + $0x70] sm:$0xff]
  %v440 = vld [vmem:[%s12 + $0x78] sm:$0xff]
  %v441 = vld [vmem:[%s12 + $0x80] sm:$0xff]
  %v442 = vld [vmem:[%s12 + $0x88] sm:$0xff]
  %v443 = vld [vmem:[%s12 + $0x90] sm:$0xff]
  %v444 = vld [vmem:[%s12 + $0x98] sm:$0xff]
  %v445 = vld [vmem:[%s12 + $0xa0] sm:$0xff]
  %v446 = vld [vmem:[%s12 + $0xa8] sm:$0xff]
  %v447 = vld [vmem:[%s12 + $0xb0] sm:$0xff]
  %v448 = vld [vmem:[%s12 + $0xb8] sm:$0xff]
  %v449 = vld [vmem:[%s12 + $0xc0] sm:$0xff]
  %v450 = vld [vmem:[%s12 + $0xc8] sm:$0xff]
  %v451 = vld [vmem:[%s12 + $0xd0] sm:$0xff]
  %v452 = vld [vmem:[%s12 + $0xd8] sm:$0xff]
  %v453 = vld [vmem:[%s12 + $0xe0] sm:$0xff]
  %v454 = vld [vmem:[%s12 + $0xe8] sm:$0xff]
  %v455 = vld [vmem:[%s12 + $0xf0] sm:$0xff]
  %v456 = vld [vmem:[%s12 + $0xf8] sm:$0xff]
  %v457 = vld [vmem:[%s12 + $0x100] sm:$0xff]
  %v458 = vld [vmem:[%s12 + $0x108] sm:$0xff]
  %v459 = vld [vmem:[%s12 + $0x110] sm:$0xff]
  %v460 = vld [vmem:[%s12 + $0x118] sm:$0xff]
  %v461 = vld [vmem:[%s12 + $0x120] sm:$0xff]
  %v462 = vld [vmem:[%s12 + $0x128] sm:$0xff]
  %v463 = vld [vmem:[%s12 + $0x130] sm:$0xff]
  %v464 = vld [vmem:[%s12 + $0x138] sm:$0xff]
  %v465 = vld [vmem:[%s12 + $0x140] sm:$0xff]
  %v466 = vld [vmem:[%s12 + $0x148] sm:$0xff]
  %v467 = vld [vmem:[%s12 + $0x150] sm:$0xff]
  %v468 = vld [vmem:[%s12 + $0x158] sm:$0xff]
  %v469 = vld [vmem:[%s12 + $0x160] sm:$0xff]
  %v470 = vld [vmem:[%s12 + $0x168] sm:$0xff]
  %v471 = vld [vmem:[%s12 + $0x170] sm:$0xff]
  %v472 = vld [vmem:[%s12 + $0x178] sm:$0xff]
  %v473 = vld [vmem:[%s12 + $0x180] sm:$0xff]
  %v474 = vld [vmem:[%s12 + $0x188] sm:$0xff]
  %v475 = vld [vmem:[%s12 + $0x190] sm:$0xff]
  %v476 = vld [vmem:[%s12 + $0x198] sm:$0xff]
  %v477 = vld [vmem:[%s12 + $0x1a0] sm:$0xff]
  %v478 = vld [vmem:[%s12 + $0x1a8] sm:$0xff]
  %v479 = vld [vmem:[%s12 + $0x1b0] sm:$0xff]
  %v480 = vld [vmem:[%s12 + $0x1b8] sm:$0xff]
  %v481 = vld [vmem:[%s12 + $0x1c0] sm:$0xff]
  %v482 = vld [vmem:[%s12 + $0x1c8] sm:$0xff]
  %v483 = vld [vmem:[%s12 + $0x1d0] sm:$0xff]
  %v484 = vld [vmem:[%s12 + $0x1d8] sm:$0xff]
  %v485 = vld [vmem:[%s12 + $0x1e0] sm:$0xff]
  %v486 = vld [vmem:[%s12 + $0x1e8] sm:$0xff]
  %v487 = vld [vmem:[%s12 + $0x1f0] sm:$0xff]
  %v488 = vld [vmem:[%s12 + $0x1f8] sm:$0xff]
  %v489 = vld [vmem:[%s14] sm:$0xf]
  %v491 = vlaneseq
  %v492 = vshrl.u32 %v491, 7
  %v493 = vsub.s32 0, %v492
  %v494 = vrot.slane %v489, %v493
  %v495 = vlaneseq
  %v496 = vshrl.u32 %v495, 7
  %v497 = vsub.s32 1, %v496
  %v498 = vrot.slane %v489, %v497
  %v499 = vlaneseq
  %v500 = vshrl.u32 %v499, 7
  %v501 = vsub.s32 2, %v500
  %v502 = vrot.slane %v489, %v501
  %v503 = vlaneseq
  %v504 = vshrl.u32 %v503, 7
  %v505 = vsub.s32 3, %v504
  %v506 = vrot.slane %v489, %v505
  %511 = vmatprep.subr.mxu0 %v426
  %512 = vmatpush1.msra.mxu0 %v425
  %513 = vmatprep.subr.mxu0 %v430
  %514 = vmatpush1.msra.mxu0 %v429
  %515 = vmatprep.subr.mxu0 %v434
  %516 = vmatpush1.msra.mxu0 %v433
  %517 = vmatprep.subr.mxu0 %v438
  %518 = vmatpush1.msra.mxu0 %v437
  %519 = vmatprep.subr.mxu0 %v442
  %520 = vmatpush1.msra.mxu0 %v441
  %521 = vmatprep.subr.mxu0 %v446
  %522 = vmatpush1.msra.mxu0 %v445
  %523 = vmatprep.subr.mxu0 %v450
  %524 = vmatpush1.msra.mxu0 %v449
  %525 = vmatprep.subr.mxu0 %v454
  %526 = vmatpush1.msra.mxu0 %v453
  %527 = vmatprep.subr.mxu0 %v458
  %528 = vmatpush1.msra.mxu0 %v457
  %529 = vmatprep.subr.mxu0 %v462
  %530 = vmatpush1.msra.mxu0 %v461
  %531 = vmatprep.subr.mxu0 %v466
  %532 = vmatpush1.msra.mxu0 %v465
  %533 = vmatprep.subr.mxu0 %v470
  %534 = vmatpush1.msra.mxu0 %v469
  %535 = vmatprep.subr.mxu0 %v474
  %536 = vmatpush1.msra.mxu0 %v473
  %537 = vmatprep.subr.mxu0 %v478
  %538 = vmatpush1.msra.mxu0 %v477
  %539 = vmatprep.subr.mxu0 %v482
  %540 = vmatpush1.msra.mxu0 %v481
  %541 = vmatprep.subr.mxu0 %v486
  %542 = vmatpush1.msra.mxu0 %v485
  %543 = vmatprep.subr.mxu0 0.0
  %544 = vmatpush1.msra.mxu0 0.0
  %545 = vmatprep.subr.mxu0 0.0
  %546 = vmatpush1.msra.mxu0 0.0
  %547 = vmatprep.subr.mxu0 0.0
  %548 = vmatpush1.msra.mxu0 0.0
  %549 = vmatprep.subr.mxu0 0.0
  %550 = vmatpush1.msra.mxu0 0.0
  %551 = vmatprep.subr.mxu0 0.0
  %552 = vmatpush1.msra.mxu0 0.0
  %553 = vmatprep.subr.mxu0 0.0
  %554 = vmatpush1.msra.mxu0 0.0
  %555 = vmatprep.subr.mxu0 0.0
  %556 = vmatpush1.msra.mxu0 0.0
  %557 = vmatprep.subr.mxu0 0.0
  %558 = vmatpush1.msra.mxu0 0.0
  %559 = vmatprep.subr.mxu0 0.0
  %560 = vmatpush1.msra.mxu0 0.0
  %561 = vmatprep.subr.mxu0 0.0
  %562 = vmatpush1.msra.mxu0 0.0
  %563 = vmatprep.subr.mxu0 0.0
  %564 = vmatpush1.msra.mxu0 0.0
  %565 = vmatprep.subr.mxu0 0.0
  %566 = vmatpush1.msra.mxu0 0.0
  %567 = vmatprep.subr.mxu0 0.0
  %568 = vmatpush1.msra.mxu0 0.0
  %569 = vmatprep.subr.mxu0 0.0
  %570 = vmatpush1.msra.mxu0 0.0
  %571 = vmatprep.subr.mxu0 0.0
  %572 = vmatpush1.msra.mxu0 0.0
  %573 = vmatprep.subr.mxu0 0.0
  %574 = vmatpush1.msra.mxu0 0.0
  %575 = vmatprep.mubr.f32.mxu0 0.0
  %576 = vmatmul.mubr.f32.gmra.mrb[0].mxu0 %v417
  %v577 = vpop.f32.mrb[0].mxu0
  %v578 = vadd.f32 %v494, %v577
  %v579 = vpop.f32.mrb[0].mxu0
  %v580 = vadd.f32 %v498, %v579
  %581 = vmatprep.mubr.f32.mxu0 0.0
  %582 = vmatmul.mubr.f32.gmra.mrb[0].mxu0 %v418
  %v583 = vpop.f32.mrb[0].mxu0
  %v584 = vadd.f32 %v494, %v583
  %v585 = vpop.f32.mrb[0].mxu0
  %v586 = vadd.f32 %v498, %v585
  %587 = vmatprep.mubr.f32.mxu0 0.0
  %588 = vmatmul.mubr.f32.gmra.mrb[0].mxu0 %v419
  %v589 = vpop.f32.mrb[0].mxu0
  %v590 = vadd.f32 %v494, %v589
  %v591 = vpop.f32.mrb[0].mxu0
  %v592 = vadd.f32 %v498, %v591
  %593 = vmatprep.mubr.f32.mxu0 0.0
  %594 = vmatmul.mubr.f32.gmra.mrb[0].mxu0 %v420
  %v595 = vpop.f32.mrb[0].mxu0
  %v596 = vadd.f32 %v494, %v595
  %v597 = vpop.f32.mrb[0].mxu0
  %v598 = vadd.f32 %v498, %v597
  %599 = vmatprep.mubr.f32.mxu0 0.0
  %600 = vmatmul.mubr.f32.gmra.mrb[0].mxu0 %v421
  %v601 = vpop.f32.mrb[0].mxu0
  %v602 = vadd.f32 %v494, %v601
  %v603 = vpop.f32.mrb[0].mxu0
  %v604 = vadd.f32 %v498, %v603
  %605 = vmatprep.mubr.f32.mxu0 0.0
  %606 = vmatmul.mubr.f32.gmra.mrb[0].mxu0 %v422
  %v607 = vpop.f32.mrb[0].mxu0
  %v608 = vadd.f32 %v494, %v607
  %v609 = vpop.f32.mrb[0].mxu0
  %v610 = vadd.f32 %v498, %v609
  %611 = vmatprep.mubr.f32.mxu0 0.0
  %612 = vmatmul.mubr.f32.gmra.mrb[0].mxu0 %v423
  %v613 = vpop.f32.mrb[0].mxu0
  %v614 = vadd.f32 %v494, %v613
  %v615 = vpop.f32.mrb[0].mxu0
  %v616 = vadd.f32 %v498, %v615
  %617 = vmatprep.mubr.f32.mxu0 0.0
  %618 = vmatmul.mubr.f32.gmra.mrb[0].mxu0 %v424
  %v619 = vpop.f32.mrb[0].mxu0
  %v620 = vadd.f32 %v494, %v619
  %v621 = vpop.f32.mrb[0].mxu0
  %v622 = vadd.f32 %v498, %v621
  %623 = vdwg.mxu0
  %624 = vmatprep.subr.mxu0 %v428
  %625 = vmatpush1.msra.mxu0 %v427
  %626 = vmatprep.subr.mxu0 %v432
  %627 = vmatpush1.msra.mxu0 %v431
  %628 = vmatprep.subr.mxu0 %v436
  %629 = vmatpush1.msra.mxu0 %v435
  %630 = vmatprep.subr.mxu0 %v440
  %631 = vmatpush1.msra.mxu0 %v439
  %632 = vmatprep.subr.mxu0 %v444
  %633 = vmatpush1.msra.mxu0 %v443
  %634 = vmatprep.subr.mxu0 %v448
  %635 = vmatpush1.msra.mxu0 %v447
  %636 = vmatprep.subr.mxu0 %v452
  %637 = vmatpush1.msra.mxu0 %v451
  %638 = vmatprep.subr.mxu0 %v456
  %639 = vmatpush1.msra.mxu0 %v455
  %640 = vmatprep.subr.mxu0 %v460
  %641 = vmatpush1.msra.mxu0 %v459
  %642 = vmatprep.subr.mxu0 %v464
  %643 = vmatpush1.msra.mxu0 %v463
  %644 = vmatprep.subr.mxu0 %v468
  %645 = vmatpush1.msra.mxu0 %v467
  %646 = vmatprep.subr.mxu0 %v472
  %647 = vmatpush1.msra.mxu0 %v471
  %648 = vmatprep.subr.mxu0 %v476
  %649 = vmatpush1.msra.mxu0 %v475
  %650 = vmatprep.subr.mxu0 %v480
  %651 = vmatpush1.msra.mxu0 %v479
  %652 = vmatprep.subr.mxu0 %v484
  %653 = vmatpush1.msra.mxu0 %v483
  %654 = vmatprep.subr.mxu0 %v488
  %655 = vmatpush1.msra.mxu0 %v487
  %656 = vmatprep.subr.mxu0 0.0
  %657 = vmatpush1.msra.mxu0 0.0
  %658 = vmatprep.subr.mxu0 0.0
  %659 = vmatpush1.msra.mxu0 0.0
  %660 = vmatprep.subr.mxu0 0.0
  %661 = vmatpush1.msra.mxu0 0.0
  %662 = vmatprep.subr.mxu0 0.0
  %663 = vmatpush1.msra.mxu0 0.0
  %664 = vmatprep.subr.mxu0 0.0
  %665 = vmatpush1.msra.mxu0 0.0
  %666 = vmatprep.subr.mxu0 0.0
  %667 = vmatpush1.msra.mxu0 0.0
  %668 = vmatprep.subr.mxu0 0.0
  %669 = vmatpush1.msra.mxu0 0.0
  %670 = vmatprep.subr.mxu0 0.0
  %671 = vmatpush1.msra.mxu0 0.0
  %672 = vmatprep.subr.mxu0 0.0
  %673 = vmatpush1.msra.mxu0 0.0
  %674 = vmatprep.subr.mxu0 0.0
  %675 = vmatpush1.msra.mxu0 0.0
  %676 = vmatprep.subr.mxu0 0.0
  %677 = vmatpush1.msra.mxu0 0.0
  %678 = vmatprep.subr.mxu0 0.0
  %679 = vmatpush1.msra.mxu0 0.0
  %680 = vmatprep.subr.mxu0 0.0
  %681 = vmatpush1.msra.mxu0 0.0
  %682 = vmatprep.subr.mxu0 0.0
  %683 = vmatpush1.msra.mxu0 0.0
  %684 = vmatprep.subr.mxu0 0.0
  %685 = vmatpush1.msra.mxu0 0.0
  %686 = vmatprep.subr.mxu0 0.0
  %687 = vmatpush1.msra.mxu0 0.0
  %688 = vmatprep.mubr.f32.mxu0 0.0
  %689 = vmatmul.mubr.f32.gmra.mrb[0].mxu0 %v417
  %v690 = vpop.f32.mrb[0].mxu0
  %v691 = vadd.f32 %v502, %v690
  %v692 = vpop.f32.mrb[0].mxu0
  %v693 = vadd.f32 %v506, %v692
  %694 = vmatprep.mubr.f32.mxu0 0.0
  %695 = vmatmul.mubr.f32.gmra.mrb[0].mxu0 %v418
  %v696 = vpop.f32.mrb[0].mxu0
  %v697 = vadd.f32 %v502, %v696
  %v698 = vpop.f32.mrb[0].mxu0
  %v699 = vadd.f32 %v506, %v698
  %700 = vmatprep.mubr.f32.mxu0 0.0
  %701 = vmatmul.mubr.f32.gmra.mrb[0].mxu0 %v419
  %v702 = vpop.f32.mrb[0].mxu0
  %v703 = vadd.f32 %v502, %v702
  %v704 = vpop.f32.mrb[0].mxu0
  %v705 = vadd.f32 %v506, %v704
  %706 = vmatprep.mubr.f32.mxu0 0.0
  %707 = vmatmul.mubr.f32.gmra.mrb[0].mxu0 %v420
  %v708 = vpop.f32.mrb[0].mxu0
  %v709 = vadd.f32 %v502, %v708
  %v710 = vpop.f32.mrb[0].mxu0
  %v711 = vadd.f32 %v506, %v710
  %712 = vmatprep.mubr.f32.mxu0 0.0
  %713 = vmatmul.mubr.f32.gmra.mrb[0].mxu0 %v421
  %v714 = vpop.f32.mrb[0].mxu0
  %v715 = vadd.f32 %v502, %v714
  %v716 = vpop.f32.mrb[0].mxu0
  %v717 = vadd.f32 %v506, %v716
  %718 = vmatprep.mubr.f32.mxu0 0.0
  %719 = vmatmul.mubr.f32.gmra.mrb[0].mxu0 %v422
  %v720 = vpop.f32.mrb[0].mxu0
  %v721 = vadd.f32 %v502, %v720
  %v722 = vpop.f32.mrb[0].mxu0
  %v723 = vadd.f32 %v506, %v722
  %724 = vmatprep.mubr.f32.mxu0 0.0
  %725 = vmatmul.mubr.f32.gmra.mrb[0].mxu0 %v423
  %v726 = vpop.f32.mrb[0].mxu0
  %v727 = vadd.f32 %v502, %v726
  %v728 = vpop.f32.mrb[0].mxu0
  %v729 = vadd.f32 %v506, %v728
  %730 = vmatprep.mubr.f32.mxu0 0.0
  %731 = vmatmul.mubr.f32.gmra.mrb[0].mxu0 %v424
  %v732 = vpop.f32.mrb[0].mxu0
  %v733 = vadd.f32 %v502, %v732
  %v734 = vpop.f32.mrb[0].mxu0
  %v735 = vadd.f32 %v506, %v734
  %736 = vdwg.mxu0
  %737 = vst [vmem:[#allocation3] sm:$0xff] %v578
  %738 = vst [vmem:[#allocation3 + $0x8] sm:$0xff] %v580
  %739 = vst [vmem:[#allocation3 + $0x10] sm:$0xff] %v691
  %740 = vst [vmem:[#allocation3 + $0x18] sm:$0xff] %v693
  %741 = vst [vmem:[#allocation3 + $0x20] sm:$0xff] %v584
  %742 = vst [vmem:[#allocation3 + $0x28] sm:$0xff] %v586
  %743 = vst [vmem:[#allocation3 + $0x30] sm:$0xff] %v697
  %744 = vst [vmem:[#allocation3 + $0x38] sm:$0xff] %v699
  %745 = vst [vmem:[#allocation3 + $0x40] sm:$0xff] %v590
  %746 = vst [vmem:[#allocation3 + $0x48] sm:$0xff] %v592
  %747 = vst [vmem:[#allocation3 + $0x50] sm:$0xff] %v703
  %748 = vst [vmem:[#allocation3 + $0x58] sm:$0xff] %v705
  %749 = vst [vmem:[#allocation3 + $0x60] sm:$0xff] %v596
  %750 = vst [vmem:[#allocation3 + $0x68] sm:$0xff] %v598
  %751 = vst [vmem:[#allocation3 + $0x70] sm:$0xff] %v709
  %752 = vst [vmem:[#allocation3 + $0x78] sm:$0xff] %v711
  %753 = vst [vmem:[#allocation3 + $0x80] sm:$0xff] %v602
  %754 = vst [vmem:[#allocation3 + $0x88] sm:$0xff] %v604
  %755 = vst [vmem:[#allocation3 + $0x90] sm:$0xff] %v715
  %756 = vst [vmem:[#allocation3 + $0x98] sm:$0xff] %v717
  %757 = vst [vmem:[#allocation3 + $0xa0] sm:$0xff] %v608
  %758 = vst [vmem:[#allocation3 + $0xa8] sm:$0xff] %v610
  %759 = vst [vmem:[#allocation3 + $0xb0] sm:$0xff] %v721
  %760 = vst [vmem:[#allocation3 + $0xb8] sm:$0xff] %v723
  %761 = vst [vmem:[#allocation3 + $0xc0] sm:$0xff] %v614
  %762 = vst [vmem:[#allocation3 + $0xc8] sm:$0xff] %v616
  %763 = vst [vmem:[#allocation3 + $0xd0] sm:$0xff] %v727
  %764 = vst [vmem:[#allocation3 + $0xd8] sm:$0xff] %v729
  %765 = vst [vmem:[#allocation3 + $0xe0] sm:$0xff] %v620
  %766 = vst [vmem:[#allocation3 + $0xe8] sm:$0xff] %v622
  %767 = vst [vmem:[#allocation3 + $0xf0] sm:$0xff] %v733
  %768 = vst [vmem:[#allocation3 + $0xf8] sm:$0xff] %v735
  %v769 = vld [vmem:[%s4] sm:$0xff]
  %v770 = vld [vmem:[%s4 + $0x8] sm:$0xff]
  %v771 = vld [vmem:[%s4 + $0x10] sm:$0xff]
  %v772 = vld [vmem:[%s4 + $0x18] sm:$0xff]
  %v773 = vld [vmem:[%s4 + $0x20] sm:$0xff]
  %v774 = vld [vmem:[%s4 + $0x28] sm:$0xff]
  %v775 = vld [vmem:[%s4 + $0x30] sm:$0xff]
  %v776 = vld [vmem:[%s4 + $0x38] sm:$0xff]
  %v777 = vld [vmem:[%s4 + $0x40] sm:$0xff]
  %v778 = vld [vmem:[%s4 + $0x48] sm:$0xff]
  %v779 = vld [vmem:[%s4 + $0x50] sm:$0xff]
  %v780 = vld [vmem:[%s4 + $0x58] sm:$0xff]
  %v781 = vld [vmem:[%s4 + $0x60] sm:$0xff]
  %v782 = vld [vmem:[%s4 + $0x68] sm:$0xff]
  %v783 = vld [vmem:[%s4 + $0x70] sm:$0xff]
  %v784 = vld [vmem:[%s4 + $0x78] sm:$0xff]
  %v785 = vld [vmem:[%s4 + $0x80] sm:$0xff]
  %v786 = vld [vmem:[%s4 + $0x88] sm:$0xff]
  %v787 = vld [vmem:[%s4 + $0x90] sm:$0xff]
  %v788 = vld [vmem:[%s4 + $0x98] sm:$0xff]
  %v789 = vld [vmem:[%s4 + $0xa0] sm:$0xff]
  %v790 = vld [vmem:[%s4 + $0xa8] sm:$0xff]
  %v791 = vld [vmem:[%s4 + $0xb0] sm:$0xff]
  %v792 = vld [vmem:[%s4 + $0xb8] sm:$0xff]
  %v793 = vld [vmem:[%s4 + $0xc0] sm:$0xff]
  %v794 = vld [vmem:[%s4 + $0xc8] sm:$0xff]
  %v795 = vld [vmem:[%s4 + $0xd0] sm:$0xff]
  %v796 = vld [vmem:[%s4 + $0xd8] sm:$0xff]
  %v797 = vld [vmem:[%s4 + $0xe0] sm:$0xff]
  %v798 = vld [vmem:[%s4 + $0xe8] sm:$0xff]
  %v799 = vld [vmem:[%s4 + $0xf0] sm:$0xff]
  %v800 = vld [vmem:[%s4 + $0xf8] sm:$0xff]
  %v801 = vld [vmem:[%s4 + $0x100] sm:$0xff]
  %v802 = vld [vmem:[%s4 + $0x108] sm:$0xff]
  %v803 = vld [vmem:[%s4 + $0x110] sm:$0xff]
  %v804 = vld [vmem:[%s4 + $0x118] sm:$0xff]
  %v805 = vld [vmem:[%s4 + $0x120] sm:$0xff]
  %v806 = vld [vmem:[%s4 + $0x128] sm:$0xff]
  %v807 = vld [vmem:[%s4 + $0x130] sm:$0xff]
  %v808 = vld [vmem:[%s4 + $0x138] sm:$0xff]
  %v809 = vld [vmem:[%s4 + $0x140] sm:$0xff]
  %v810 = vld [vmem:[%s4 + $0x148] sm:$0xff]
  %v811 = vld [vmem:[%s4 + $0x150] sm:$0xff]
  %v812 = vld [vmem:[%s4 + $0x158] sm:$0xff]
  %v813 = vld [vmem:[%s4 + $0x160] sm:$0xff]
  %v814 = vld [vmem:[%s4 + $0x168] sm:$0xff]
  %v815 = vld [vmem:[%s4 + $0x170] sm:$0xff]
  %v816 = vld [vmem:[%s4 + $0x178] sm:$0xff]
  %v817 = vld [vmem:[%s4 + $0x180] sm:$0xff]
  %v818 = vld [vmem:[%s4 + $0x188] sm:$0xff]
  %v819 = vld [vmem:[%s4 + $0x190] sm:$0xff]
  %v820 = vld [vmem:[%s4 + $0x198] sm:$0xff]
  %v821 = vld [vmem:[%s4 + $0x1a0] sm:$0xff]
  %v822 = vld [vmem:[%s4 + $0x1a8] sm:$0xff]
  %v823 = vld [vmem:[%s4 + $0x1b0] sm:$0xff]
  %v824 = vld [vmem:[%s4 + $0x1b8] sm:$0xff]
  %v825 = vld [vmem:[%s4 + $0x1c0] sm:$0xff]
  %v826 = vld [vmem:[%s4 + $0x1c8] sm:$0xff]
  %v827 = vld [vmem:[%s4 + $0x1d0] sm:$0xff]
  %v828 = vld [vmem:[%s4 + $0x1d8] sm:$0xff]
  %v829 = vld [vmem:[%s4 + $0x1e0] sm:$0xff]
  %v830 = vld [vmem:[%s4 + $0x1e8] sm:$0xff]
  %v831 = vld [vmem:[%s4 + $0x1f0] sm:$0xff]
  %v832 = vld [vmem:[%s4 + $0x1f8] sm:$0xff]
  %v833 = vld [vmem:[%s13] sm:$0xff]
  %v834 = vld [vmem:[%s13 + $0x8] sm:$0xff]
  %v835 = vld [vmem:[%s13 + $0x10] sm:$0xff]
  %v836 = vld [vmem:[%s13 + $0x18] sm:$0xff]
  %v837 = vld [vmem:[%s13 + $0x20] sm:$0xff]
  %v838 = vld [vmem:[%s13 + $0x28] sm:$0xff]
  %v839 = vld [vmem:[%s13 + $0x30] sm:$0xff]
  %v840 = vld [vmem:[%s13 + $0x38] sm:$0xff]
  %v841 = vld [vmem:[%s13 + $0x40] sm:$0xff]
  %v842 = vld [vmem:[%s13 + $0x48] sm:$0xff]
  %v843 = vld [vmem:[%s13 + $0x50] sm:$0xff]
  %v844 = vld [vmem:[%s13 + $0x58] sm:$0xff]
  %v845 = vld [vmem:[%s13 + $0x60] sm:$0xff]
  %v846 = vld [vmem:[%s13 + $0x68] sm:$0xff]
  %v847 = vld [vmem:[%s13 + $0x70] sm:$0xff]
  %v848 = vld [vmem:[%s13 + $0x78] sm:$0xff]
  %v849 = vld [vmem:[%s13 + $0x80] sm:$0xff]
  %v850 = vld [vmem:[%s13 + $0x88] sm:$0xff]
  %v851 = vld [vmem:[%s13 + $0x90] sm:$0xff]
  %v852 = vld [vmem:[%s13 + $0x98] sm:$0xff]
  %v853 = vld [vmem:[%s13 + $0xa0] sm:$0xff]
  %v854 = vld [vmem:[%s13 + $0xa8] sm:$0xff]
  %v855 = vld [vmem:[%s13 + $0xb0] sm:$0xff]
  %v856 = vld [vmem:[%s13 + $0xb8] sm:$0xff]
  %v857 = vld [vmem:[%s13 + $0xc0] sm:$0xff]
  %v858 = vld [vmem:[%s13 + $0xc8] sm:$0xff]
  %v859 = vld [vmem:[%s13 + $0xd0] sm:$0xff]
  %v860 = vld [vmem:[%s13 + $0xd8] sm:$0xff]
  %v861 = vld [vmem:[%s13 + $0xe0] sm:$0xff]
  %v862 = vld [vmem:[%s13 + $0xe8] sm:$0xff]
  %v863 = vld [vmem:[%s13 + $0xf0] sm:$0xff]
  %v864 = vld [vmem:[%s13 + $0xf8] sm:$0xff]
  %v865 = vld [vmem:[%s13 + $0x100] sm:$0xff]
  %v866 = vld [vmem:[%s13 + $0x108] sm:$0xff]
  %v867 = vld [vmem:[%s13 + $0x110] sm:$0xff]
  %v868 = vld [vmem:[%s13 + $0x118] sm:$0xff]
  %v869 = vld [vmem:[%s13 + $0x120] sm:$0xff]
  %v870 = vld [vmem:[%s13 + $0x128] sm:$0xff]
  %v871 = vld [vmem:[%s13 + $0x130] sm:$0xff]
  %v872 = vld [vmem:[%s13 + $0x138] sm:$0xff]
  %v873 = vld [vmem:[%s13 + $0x140] sm:$0xff]
  %v874 = vld [vmem:[%s13 + $0x148] sm:$0xff]
  %v875 = vld [vmem:[%s13 + $0x150] sm:$0xff]
  %v876 = vld [vmem:[%s13 + $0x158] sm:$0xff]
  %v877 = vld [vmem:[%s13 + $0x160] sm:$0xff]
  %v878 = vld [vmem:[%s13 + $0x168] sm:$0xff]
  %v879 = vld [vmem:[%s13 + $0x170] sm:$0xff]
  %v880 = vld [vmem:[%s13 + $0x178] sm:$0xff]
  %v881 = vld [vmem:[%s13 + $0x180] sm:$0xff]
  %v882 = vld [vmem:[%s13 + $0x188] sm:$0xff]
  %v883 = vld [vmem:[%s13 + $0x190] sm:$0xff]
  %v884 = vld [vmem:[%s13 + $0x198] sm:$0xff]
  %v885 = vld [vmem:[%s13 + $0x1a0] sm:$0xff]
  %v886 = vld [vmem:[%s13 + $0x1a8] sm:$0xff]
  %v887 = vld [vmem:[%s13 + $0x1b0] sm:$0xff]
  %v888 = vld [vmem:[%s13 + $0x1b8] sm:$0xff]
  %v889 = vld [vmem:[%s13 + $0x1c0] sm:$0xff]
  %v890 = vld [vmem:[%s13 + $0x1c8] sm:$0xff]
  %v891 = vld [vmem:[%s13 + $0x1d0] sm:$0xff]
  %v892 = vld [vmem:[%s13 + $0x1d8] sm:$0xff]
  %v893 = vld [vmem:[%s13 + $0x1e0] sm:$0xff]
  %v894 = vld [vmem:[%s13 + $0x1e8] sm:$0xff]
  %v895 = vld [vmem:[%s13 + $0x1f0] sm:$0xff]
  %v896 = vld [vmem:[%s13 + $0x1f8] sm:$0xff]
  %v897 = vld [vmem:[%s16] sm:$0xff]
  %v898 = vld [vmem:[%s16 + $0x8] sm:$0xff]
  %v899 = vld [vmem:[%s16 + $0x10] sm:$0xff]
  %v900 = vld [vmem:[%s16 + $0x18] sm:$0xff]
  %v901 = vld [vmem:[%s16 + $0x20] sm:$0xff]
  %v902 = vld [vmem:[%s16 + $0x28] sm:$0xff]
  %v903 = vld [vmem:[%s16 + $0x30] sm:$0xff]
  %v904 = vld [vmem:[%s16 + $0x38] sm:$0xff]
  %v905 = vld [vmem:[%s16 + $0x40] sm:$0xff]
  %v906 = vld [vmem:[%s16 + $0x48] sm:$0xff]
  %v907 = vld [vmem:[%s16 + $0x50] sm:$0xff]
  %v908 = vld [vmem:[%s16 + $0x58] sm:$0xff]
  %v909 = vld [vmem:[%s16 + $0x60] sm:$0xff]
  %v910 = vld [vmem:[%s16 + $0x68] sm:$0xff]
  %v911 = vld [vmem:[%s16 + $0x70] sm:$0xff]
  %v912 = vld [vmem:[%s16 + $0x78] sm:$0xff]
  %v913 = vld [vmem:[%s17] sm:$0xff]
  %v914 = vld [vmem:[%s17 + $0x8] sm:$0xff]
  %v915 = vld [vmem:[%s17 + $0x10] sm:$0xff]
  %v916 = vld [vmem:[%s17 + $0x18] sm:$0xff]
  %v917 = vld [vmem:[%s17 + $0x20] sm:$0xff]
  %v918 = vld [vmem:[%s17 + $0x28] sm:$0xff]
  %v919 = vld [vmem:[%s17 + $0x30] sm:$0xff]
  %v920 = vld [vmem:[%s17 + $0x38] sm:$0xff]
  %v921 = vld [vmem:[%s17 + $0x40] sm:$0xff]
  %v922 = vld [vmem:[%s17 + $0x48] sm:$0xff]
  %v923 = vld [vmem:[%s17 + $0x50] sm:$0xff]
  %v924 = vld [vmem:[%s17 + $0x58] sm:$0xff]
  %v925 = vld [vmem:[%s17 + $0x60] sm:$0xff]
  %v926 = vld [vmem:[%s17 + $0x68] sm:$0xff]
  %v927 = vld [vmem:[%s17 + $0x70] sm:$0xff]
  %v928 = vld [vmem:[%s17 + $0x78] sm:$0xff]
  %v929 = vld [vmem:[#allocation2] sm:$0xff]
  %v930 = vld [vmem:[#allocation2 + $0x8] sm:$0xff]
  %v931 = vld [vmem:[#allocation2 + $0x10] sm:$0xff]
  %v932 = vld [vmem:[#allocation2 + $0x18] sm:$0xff]
  %933 = vmatprep.subr.mxu0 %v770
  %934 = vmatpush1.msra.mxu0 %v769
  %935 = vmatprep.subr.mxu0 %v774
  %936 = vmatpush1.msra.mxu0 %v773
  %937 = vmatprep.subr.mxu0 %v778
  %938 = vmatpush1.msra.mxu0 %v777
  %939 = vmatprep.subr.mxu0 %v782
  %940 = vmatpush1.msra.mxu0 %v781
  %941 = vmatprep.subr.mxu0 %v786
  %942 = vmatpush1.msra.mxu0 %v785
  %943 = vmatprep.subr.mxu0 %v790
  %944 = vmatpush1.msra.mxu0 %v789
  %945 = vmatprep.subr.mxu0 %v794
  %946 = vmatpush1.msra.mxu0 %v793
  %947 = vmatprep.subr.mxu0 %v798
  %948 = vmatpush1.msra.mxu0 %v797
  %949 = vmatprep.subr.mxu0 %v802
  %950 = vmatpush1.msra.mxu0 %v801
  %951 = vmatprep.subr.mxu0 %v806
  %952 = vmatpush1.msra.mxu0 %v805
  %953 = vmatprep.subr.mxu0 %v810
  %954 = vmatpush1.msra.mxu0 %v809
  %955 = vmatprep.subr.mxu0 %v814
  %956 = vmatpush1.msra.mxu0 %v813
  %957 = vmatprep.subr.mxu0 %v818
  %958 = vmatpush1.msra.mxu0 %v817
  %959 = vmatprep.subr.mxu0 %v822
  %960 = vmatpush1.msra.mxu0 %v821
  %961 = vmatprep.subr.mxu0 %v826
  %962 = vmatpush1.msra.mxu0 %v825
  %963 = vmatprep.subr.mxu0 %v830
  %964 = vmatpush1.msra.mxu0 %v829
  %965 = vmatprep.subr.mxu0 0.0
  %966 = vmatpush1.msra.mxu0 0.0
  %967 = vmatprep.subr.mxu0 0.0
  %968 = vmatpush1.msra.mxu0 0.0
  %969 = vmatprep.subr.mxu0 0.0
  %970 = vmatpush1.msra.mxu0 0.0
  %971 = vmatprep.subr.mxu0 0.0
  %972 = vmatpush1.msra.mxu0 0.0
  %973 = vmatprep.subr.mxu0 0.0
  %974 = vmatpush1.msra.mxu0 0.0
  %975 = vmatprep.subr.mxu0 0.0
  %976 = vmatpush1.msra.mxu0 0.0
  %977 = vmatprep.subr.mxu0 0.0
  %978 = vmatpush1.msra.mxu0 0.0
  %979 = vmatprep.subr.mxu0 0.0
  %980 = vmatpush1.msra.mxu0 0.0
  %981 = vmatprep.subr.mxu0 0.0
  %982 = vmatpush1.msra.mxu0 0.0
  %983 = vmatprep.subr.mxu0 0.0
  %984 = vmatpush1.msra.mxu0 0.0
  %985 = vmatprep.subr.mxu0 0.0
  %986 = vmatpush1.msra.mxu0 0.0
  %987 = vmatprep.subr.mxu0 0.0
  %988 = vmatpush1.msra.mxu0 0.0
  %989 = vmatprep.subr.mxu0 0.0
  %990 = vmatpush1.msra.mxu0 0.0
  %991 = vmatprep.subr.mxu0 0.0
  %992 = vmatpush1.msra.mxu0 0.0
  %993 = vmatprep.subr.mxu0 0.0
  %994 = vmatpush1.msra.mxu0 0.0
  %995 = vmatprep.subr.mxu0 0.0
  %996 = vmatpush1.msra.mxu0 0.0
  %997 = vmatprep.mubr.f32.mxu0 0.0
  %998 = vmatmul.mubr.f32.gmra.mrb[0].mxu0 0.0
  %v999 = vpop.f32.mrb[0].mxu0
  %v1000 = vadd.f32 0.0, %v999
  %v1001 = vpop.f32.mrb[0].mxu0
  %v1002 = vadd.f32 0.0, %v1001
  %1003 = vdwg.mxu0
  %1004 = vmatprep.subr.mxu0 %v772
  %1005 = vmatpush1.msra.mxu0 %v771
  %1006 = vmatprep.subr.mxu0 %v776
  %1007 = vmatpush1.msra.mxu0 %v775
  %1008 = vmatprep.subr.mxu0 %v780
  %1009 = vmatpush1.msra.mxu0 %v779
  %1010 = vmatprep.subr.mxu0 %v784
  %1011 = vmatpush1.msra.mxu0 %v783
  %1012 = vmatprep.subr.mxu0 %v788
  %1013 = vmatpush1.msra.mxu0 %v787
  %1014 = vmatprep.subr.mxu0 %v792
  %1015 = vmatpush1.msra.mxu0 %v791
  %1016 = vmatprep.subr.mxu0 %v796
  %1017 = vmatpush1.msra.mxu0 %v795
  %1018 = vmatprep.subr.mxu0 %v800
  %1019 = vmatpush1.msra.mxu0 %v799
  %1020 = vmatprep.subr.mxu0 %v804
  %1021 = vmatpush1.msra.mxu0 %v803
  %1022 = vmatprep.subr.mxu0 %v808
  %1023 = vmatpush1.msra.mxu0 %v807
  %1024 = vmatprep.subr.mxu0 %v812
  %1025 = vmatpush1.msra.mxu0 %v811
  %1026 = vmatprep.subr.mxu0 %v816
  %1027 = vmatpush1.msra.mxu0 %v815
  %1028 = vmatprep.subr.mxu0 %v820
  %1029 = vmatpush1.msra.mxu0 %v819
  %1030 = vmatprep.subr.mxu0 %v824
  %1031 = vmatpush1.msra.mxu0 %v823
  %1032 = vmatprep.subr.mxu0 %v828
  %1033 = vmatpush1.msra.mxu0 %v827
  %1034 = vmatprep.subr.mxu0 %v832
  %1035 = vmatpush1.msra.mxu0 %v831
  %1036 = vmatprep.subr.mxu0 0.0
  %1037 = vmatpush1.msra.mxu0 0.0
  %1038 = vmatprep.subr.mxu0 0.0
  %1039 = vmatpush1.msra.mxu0 0.0
  %1040 = vmatprep.subr.mxu0 0.0
  %1041 = vmatpush1.msra.mxu0 0.0
  %1042 = vmatprep.subr.mxu0 0.0
  %1043 = vmatpush1.msra.mxu0 0.0
  %1044 = vmatprep.subr.mxu0 0.0
  %1045 = vmatpush1.msra.mxu0 0.0
  %1046 = vmatprep.subr.mxu0 0.0
  %1047 = vmatpush1.msra.mxu0 0.0
  %1048 = vmatprep.subr.mxu0 0.0
  %1049 = vmatpush1.msra.mxu0 0.0
  %1050 = vmatprep.subr.mxu0 0.0
  %1051 = vmatpush1.msra.mxu0 0.0
  %1052 = vmatprep.subr.mxu0 0.0
  %1053 = vmatpush1.msra.mxu0 0.0
  %1054 = vmatprep.subr.mxu0 0.0
  %1055 = vmatpush1.msra.mxu0 0.0
  %1056 = vmatprep.subr.mxu0 0.0
  %1057 = vmatpush1.msra.mxu0 0.0
  %1058 = vmatprep.subr.mxu0 0.0
  %1059 = vmatpush1.msra.mxu0 0.0
  %1060 = vmatprep.subr.mxu0 0.0
  %1061 = vmatpush1.msra.mxu0 0.0
  %1062 = vmatprep.subr.mxu0 0.0
  %1063 = vmatpush1.msra.mxu0 0.0
  %1064 = vmatprep.subr.mxu0 0.0
  %1065 = vmatpush1.msra.mxu0 0.0
  %1066 = vmatprep.subr.mxu0 0.0
  %1067 = vmatpush1.msra.mxu0 0.0
  %1068 = vmatprep.mubr.f32.mxu0 0.0
  %1069 = vmatmul.mubr.f32.gmra.mrb[0].mxu0 0.0
  %v1070 = vpop.f32.mrb[0].mxu0
  %v1071 = vadd.f32 0.0, %v1070
  %v1072 = vpop.f32.mrb[0].mxu0
  %v1073 = vadd.f32 0.0, %v1072
  %1074 = vdwg.mxu0
  %v1075 = vadd.f32 %v929, %v1000
  %v1076 = vadd.f32 %v930, %v1002
  %v1077 = vadd.f32 %v931, %v1071
  %v1078 = vadd.f32 %v932, %v1073
  %v1079 = vxor.u32 %v1075, 2147483648
  %v1080 = vmul.f32 %v1079, 1.442695
  %v1081 = vpow.pop %v1080
  %v1082 = vadd.f32 %v1081, 1.0
  %v1083 = vrcp.pop %v1082
  %v1084 = vmul.f32 1.0, %v1083
  %v1085 = vxor.u32 %v1076, 2147483648
  %v1086 = vmul.f32 %v1085, 1.442695
  %v1087 = vpow.pop %v1086
  %v1088 = vadd.f32 %v1087, 1.0
  %v1089 = vrcp.pop %v1088
  %v1090 = vmul.f32 1.0, %v1089
  %v1091 = vtanh.pop %v1077
  %v1092 = vxor.u32 %v1078, 2147483648
  %v1093 = vmul.f32 %v1092, 1.442695
  %v1094 = vpow.pop %v1093
  %v1095 = vadd.f32 %v1094, 1.0
  %v1096 = vrcp.pop %v1095
  %v1097 = vmul.f32 1.0, %v1096
  %v1098 = vmul.f32 %v1090, 0.0
  %v1099 = vmul.f32 %v1084, %v1091
  %v1100 = vadd.f32 %v1098, %v1099
  %v1101 = vtanh.pop %v1100
  %v1102 = vmul.f32 %v1097, %v1101
  %v1103 = vld [vmem:[%s2] sm:$0xff]
  %vm1104 = vcmp.gt.f32.partialorder %v1103, 0.5
  %v1105 = vsel %vm1104, 1, 0
  %1106 = vset.pattern.permute.xlu0 0
  %1107 = vperm.xlu0 %1106, %v1105
  %v1108 = vpop.permute.xlu0 %1107
  %vm1109 = vcmp.eq.s32.totalorder %v1108, 1
  %v1110 = vsel %vm1109, %v1102, 0.0
  %v1111 = vsel %vm1109, %v1100, 0.0
  %1112 = vst [vmem:[#allocation4] sm:$0xff] %v1110
  %s1113 = scalar_lea.vmem [#allocation2], 32
  %v1114 = vld [vmem:[%s1113] sm:$0xff]
  %v1115 = vld [vmem:[%s1113 + $0x8] sm:$0xff]
  %v1116 = vld [vmem:[%s1113 + $0x10] sm:$0xff]
  %v1117 = vld [vmem:[%s1113 + $0x18] sm:$0xff]
  %1118 = vmatprep.subr.mxu0 %v770
  %1119 = vmatpush1.msra.mxu0 %v769
  %1120 = vmatprep.subr.mxu0 %v774
  %1121 = vmatpush1.msra.mxu0 %v773
  %1122 = vmatprep.subr.mxu0 %v778
  %1123 = vmatpush1.msra.mxu0 %v777
  %1124 = vmatprep.subr.mxu0 %v782
  %1125 = vmatpush1.msra.mxu0 %v781
  %1126 = vmatprep.subr.mxu0 %v786
  %1127 = vmatpush1.msra.mxu0 %v785
  %1128 = vmatprep.subr.mxu0 %v790
  %1129 = vmatpush1.msra.mxu0 %v789
  %1130 = vmatprep.subr.mxu0 %v794
  %1131 = vmatpush1.msra.mxu0 %v793
  %1132 = vmatprep.subr.mxu0 %v798
  %1133 = vmatpush1.msra.mxu0 %v797
  %1134 = vmatprep.subr.mxu0 %v802
  %1135 = vmatpush1.msra.mxu0 %v801
  %1136 = vmatprep.subr.mxu0 %v806
  %1137 = vmatpush1.msra.mxu0 %v805
  %1138 = vmatprep.subr.mxu0 %v810
  %1139 = vmatpush1.msra.mxu0 %v809
  %1140 = vmatprep.subr.mxu0 %v814
  %1141 = vmatpush1.msra.mxu0 %v813
  %1142 = vmatprep.subr.mxu0 %v818
  %1143 = vmatpush1.msra.mxu0 %v817
  %1144 = vmatprep.subr.mxu0 %v822
  %1145 = vmatpush1.msra.mxu0 %v821
  %1146 = vmatprep.subr.mxu0 %v826
  %1147 = vmatpush1.msra.mxu0 %v825
  %1148 = vmatprep.subr.mxu0 %v830
  %1149 = vmatpush1.msra.mxu0 %v829
  %1150 = vmatprep.subr.mxu0 0.0
  %1151 = vmatpush1.msra.mxu0 0.0
  %1152 = vmatprep.subr.mxu0 0.0
  %1153 = vmatpush1.msra.mxu0 0.0
  %1154 = vmatprep.subr.mxu0 0.0
  %1155 = vmatpush1.msra.mxu0 0.0
  %1156 = vmatprep.subr.mxu0 0.0
  %1157 = vmatpush1.msra.mxu0 0.0
  %1158 = vmatprep.subr.mxu0 0.0
  %1159 = vmatpush1.msra.mxu0 0.0
  %1160 = vmatprep.subr.mxu0 0.0
  %1161 = vmatpush1.msra.mxu0 0.0
  %1162 = vmatprep.subr.mxu0 0.0
  %1163 = vmatpush1.msra.mxu0 0.0
  %1164 = vmatprep.subr.mxu0 0.0
  %1165 = vmatpush1.msra.mxu0 0.0
  %1166 = vmatprep.subr.mxu0 0.0
  %1167 = vmatpush1.msra.mxu0 0.0
  %1168 = vmatprep.subr.mxu0 0.0
  %1169 = vmatpush1.msra.mxu0 0.0
  %1170 = vmatprep.subr.mxu0 0.0
  %1171 = vmatpush1.msra.mxu0 0.0
  %1172 = vmatprep.subr.mxu0 0.0
  %1173 = vmatpush1.msra.mxu0 0.0
  %1174 = vmatprep.subr.mxu0 0.0
  %1175 = vmatpush1.msra.mxu0 0.0
  %1176 = vmatprep.subr.mxu0 0.0
  %1177 = vmatpush1.msra.mxu0 0.0
  %1178 = vmatprep.subr.mxu0 0.0
  %1179 = vmatpush1.msra.mxu0 0.0
  %1180 = vmatprep.subr.mxu0 0.0
  %1181 = vmatpush1.msra.mxu0 0.0
  %1182 = vmatprep.mubr.f32.mxu0 0.0
  %1183 = vmatmul.mubr.f32.gmra.mrb[0].mxu0 %v1110
  %v1184 = vpop.f32.mrb[0].mxu0
  %v1185 = vadd.f32 0.0, %v1184
  %v1186 = vpop.f32.mrb[0].mxu0
  %v1187 = vadd.f32 0.0, %v1186
  %1188 = vdwg.mxu0
  %1189 = vmatprep.subr.mxu0 %v772
  %1190 = vmatpush1.msra.mxu0 %v771
  %1191 = vmatprep.subr.mxu0 %v776
  %1192 = vmatpush1.msra.mxu0 %v775
  %1193 = vmatprep.subr.mxu0 %v780
  %1194 = vmatpush1.msra.mxu0 %v779
  %1195 = vmatprep.subr.mxu0 %v784
  %1196 = vmatpush1.msra.mxu0 %v783
  %1197 = vmatprep.subr.mxu0 %v788
  %1198 = vmatpush1.msra.mxu0 %v787
  %1199 = vmatprep.subr.mxu0 %v792
  %1200 = vmatpush1.msra.mxu0 %v791
  %1201 = vmatprep.subr.mxu0 %v796
  %1202 = vmatpush1.msra.mxu0 %v795
  %1203 = vmatprep.subr.mxu0 %v800
  %1204 = vmatpush1.msra.mxu0 %v799
  %1205 = vmatprep.subr.mxu0 %v804
  %1206 = vmatpush1.msra.mxu0 %v803
  %1207 = vmatprep.subr.mxu0 %v808
  %1208 = vmatpush1.msra.mxu0 %v807
  %1209 = vmatprep.subr.mxu0 %v812
  %1210 = vmatpush1.msra.mxu0 %v811
  %1211 = vmatprep.subr.mxu0 %v816
  %1212 = vmatpush1.msra.mxu0 %v815
  %1213 = vmatprep.subr.mxu0 %v820
  %1214 = vmatpush1.msra.mxu0 %v819
  %1215 = vmatprep.subr.mxu0 %v824
  %1216 = vmatpush1.msra.mxu0 %v823
  %1217 = vmatprep.subr.mxu0 %v828
  %1218 = vmatpush1.msra.mxu0 %v827
  %1219 = vmatprep.subr.mxu0 %v832
  %1220 = vmatpush1.msra.mxu0 %v831
  %1221 = vmatprep.subr.mxu0 0.0
  %1222 = vmatpush1.msra.mxu0 0.0
  %1223 = vmatprep.subr.mxu0 0.0
  %1224 = vmatpush1.msra.mxu0 0.0
  %1225 = vmatprep.subr.mxu0 0.0
  %1226 = vmatpush1.msra.mxu0 0.0
  %1227 = vmatprep.subr.mxu0 0.0
  %1228 = vmatpush1.msra.mxu0 0.0
  %1229 = vmatprep.subr.mxu0 0.0
  %1230 = vmatpush1.msra.mxu0 0.0
  %1231 = vmatprep.subr.mxu0 0.0
  %1232 = vmatpush1.msra.mxu0 0.0
  %1233 = vmatprep.subr.mxu0 0.0
  %1234 = vmatpush1.msra.mxu0 0.0
  %1235 = vmatprep.subr.mxu0 0.0
  %1236 = vmatpush1.msra.mxu0 0.0
  %1237 = vmatprep.subr.mxu0 0.0
  %1238 = vmatpush1.msra.mxu0 0.0
  %1239 = vmatprep.subr.mxu0 0.0
  %1240 = vmatpush1.msra.mxu0 0.0
  %1241 = vmatprep.subr.mxu0 0.0
  %1242 = vmatpush1.msra.mxu0 0.0
  %1243 = vmatprep.subr.mxu0 0.0
  %1244 = vmatpush1.msra.mxu0 0.0
  %1245 = vmatprep.subr.mxu0 0.0
  %1246 = vmatpush1.msra.mxu0 0.0
  %1247 = vmatprep.subr.mxu0 0.0
  %1248 = vmatpush1.msra.mxu0 0.0
  %1249 = vmatprep.subr.mxu0 0.0
  %1250 = vmatpush1.msra.mxu0 0.0
  %1251 = vmatprep.subr.mxu0 0.0
  %1252 = vmatpush1.msra.mxu0 0.0
  %1253 = vmatprep.mubr.f32.mxu0 0.0
  %1254 = vmatmul.mubr.f32.gmra.mrb[0].mxu0 %v1110
  %v1255 = vpop.f32.mrb[0].mxu0
  %v1256 = vadd.f32 0.0, %v1255
  %v1257 = vpop.f32.mrb[0].mxu0
  %v1258 = vadd.f32 0.0, %v1257
  %1259 = vdwg.mxu0
  %v1260 = vadd.f32 %v1114, %v1185
  %v1261 = vadd.f32 %v1115, %v1187
  %v1262 = vadd.f32 %v1116, %v1256
  %v1263 = vadd.f32 %v1117, %v1258
  %v1264 = vxor.u32 %v1260, 2147483648
  %v1265 = vmul.f32 %v1264, 1.442695
  %v1266 = vpow.pop %v1265
  %v1267 = vadd.f32 %v1266, 1.0
  %v1268 = vrcp.pop %v1267
  %v1269 = vmul.f32 1.0, %v1268
  %v1270 = vxor.u32 %v1261, 2147483648
  %v1271 = vmul.f32 %v1270, 1.442695
  %v1272 = vpow.pop %v1271
  %v1273 = vadd.f32 %v1272, 1.0
  %v1274 = vrcp.pop %v1273
  %v1275 = vmul.f32 1.0, %v1274
  %v1276 = vtanh.pop %v1262
  %v1277 = vxor.u32 %v1263, 2147483648
  %v1278 = vmul.f32 %v1277, 1.442695
  %v1279 = vpow.pop %v1278
  %v1280 = vadd.f32 %v1279, 1.0
  %v1281 = vrcp.pop %v1280
  %v1282 = vmul.f32 1.0, %v1281
  %v1283 = vmul.f32 %v1275, %v1111
  %v1284 = vmul.f32 %v1269, %v1276
  %v1285 = vadd.f32 %v1283, %v1284
  %v1286 = vtanh.pop %v1285
  %v1287 = vmul.f32 %v1282, %v1286
  %s1288 = scalar_lea.vmem %s2, 8
  %v1289 = vld [vmem:[%s1288] sm:$0xff]
  %vm1290 = vcmp.gt.f32.partialorder %v1289, 0.5
  %v1291 = vsel %vm1290, 1, 0
  %1292 = vset.pattern.permute.xlu0 0
  %1293 = vperm.xlu0 %1292, %v1291
  %v1294 = vpop.permute.xlu0 %1293
  %vm1295 = vcmp.eq.s32.totalorder %v1294, 1
  %v1296 = vsel %vm1295, %v1287, %v1110
  %v1297 = vsel %vm1295, %v1285, %v1111
  %v1298 = vsel %vm1295, %v1287, 0.0
  %s1299 = scalar_lea.vmem [#allocation4], 8
  %1300 = vst [vmem:[%s1299] sm:$0xff] %v1298
  %s1301 = scalar_lea.vmem [#allocation2], 64
  %v1302 = vld [vmem:[%s1301] sm:$0xff]
  %v1303 = vld [vmem:[%s1301 + $0x8] sm:$0xff]
  %v1304 = vld [vmem:[%s1301 + $0x10] sm:$0xff]
  %v1305 = vld [vmem:[%s1301 + $0x18] sm:$0xff]
  %1306 = vmatprep.subr.mxu0 %v770
  %1307 = vmatpush1.msra.mxu0 %v769
  %1308 = vmatprep.subr.mxu0 %v774
  %1309 = vmatpush1.msra.mxu0 %v773
  %1310 = vmatprep.subr.mxu0 %v778
  %1311 = vmatpush1.msra.mxu0 %v777
  %1312 = vmatprep.subr.mxu0 %v782
  %1313 = vmatpush1.msra.mxu0 %v781
  %1314 = vmatprep.subr.mxu0 %v786
  %1315 = vmatpush1.msra.mxu0 %v785
  %1316 = vmatprep.subr.mxu0 %v790
  %1317 = vmatpush1.msra.mxu0 %v789
  %1318 = vmatprep.subr.mxu0 %v794
  %1319 = vmatpush1.msra.mxu0 %v793
  %1320 = vmatprep.subr.mxu0 %v798
  %1321 = vmatpush1.msra.mxu0 %v797
  %1322 = vmatprep.subr.mxu0 %v802
  %1323 = vmatpush1.msra.mxu0 %v801
  %1324 = vmatprep.subr.mxu0 %v806
  %1325 = vmatpush1.msra.mxu0 %v805
  %1326 = vmatprep.subr.mxu0 %v810
  %1327 = vmatpush1.msra.mxu0 %v809
  %1328 = vmatprep.subr.mxu0 %v814
  %1329 = vmatpush1.msra.mxu0 %v813
  %1330 = vmatprep.subr.mxu0 %v818
  %1331 = vmatpush1.msra.mxu0 %v817
  %1332 = vmatprep.subr.mxu0 %v822
  %1333 = vmatpush1.msra.mxu0 %v821
  %1334 = vmatprep.subr.mxu0 %v826
  %1335 = vmatpush1.msra.mxu0 %v825
  %1336 = vmatprep.subr.mxu0 %v830
  %1337 = vmatpush1.msra.mxu0 %v829
  %1338 = vmatprep.subr.mxu0 0.0
  %1339 = vmatpush1.msra.mxu0 0.0
  %1340 = vmatprep.subr.mxu0 0.0
  %1341 = vmatpush1.msra.mxu0 0.0
  %1342 = vmatprep.subr.mxu0 0.0
  %1343 = vmatpush1.msra.mxu0 0.0
  %1344 = vmatprep.subr.mxu0 0.0
  %1345 = vmatpush1.msra.mxu0 0.0
  %1346 = vmatprep.subr.mxu0 0.0
  %1347 = vmatpush1.msra.mxu0 0.0
  %1348 = vmatprep.subr.mxu0 0.0
  %1349 = vmatpush1.msra.mxu0 0.0
  %1350 = vmatprep.subr.mxu0 0.0
  %1351 = vmatpush1.msra.mxu0 0.0
  %1352 = vmatprep.subr.mxu0 0.0
  %1353 = vmatpush1.msra.mxu0 0.0
  %1354 = vmatprep.subr.mxu0 0.0
  %1355 = vmatpush1.msra.mxu0 0.0
  %1356 = vmatprep.subr.mxu0 0.0
  %1357 = vmatpush1.msra.mxu0 0.0
  %1358 = vmatprep.subr.mxu0 0.0
  %1359 = vmatpush1.msra.mxu0 0.0
  %1360 = vmatprep.subr.mxu0 0.0
  %1361 = vmatpush1.msra.mxu0 0.0
  %1362 = vmatprep.subr.mxu0 0.0
  %1363 = vmatpush1.msra.mxu0 0.0
  %1364 = vmatprep.subr.mxu0 0.0
  %1365 = vmatpush1.msra.mxu0 0.0
  %1366 = vmatprep.subr.mxu0 0.0
  %1367 = vmatpush1.msra.mxu0 0.0
  %1368 = vmatprep.subr.mxu0 0.0
  %1369 = vmatpush1.msra.mxu0 0.0
  %1370 = vmatprep.mubr.f32.mxu0 0.0
  %1371 = vmatmul.mubr.f32.gmra.mrb[0].mxu0 %v1296
  %v1372 = vpop.f32.mrb[0].mxu0
  %v1373 = vadd.f32 0.0, %v1372
  %v1374 = vpop.f32.mrb[0].mxu0
  %v1375 = vadd.f32 0.0, %v1374
  %1376 = vdwg.mxu0
  %1377 = vmatprep.subr.mxu0 %v772
  %1378 = vmatpush1.msra.mxu0 %v771
  %1379 = vmatprep.subr.mxu0 %v776
  %1380 = vmatpush1.msra.mxu0 %v775
  %1381 = vmatprep.subr.mxu0 %v780
  %1382 = vmatpush1.msra.mxu0 %v779
  %1383 = vmatprep.subr.mxu0 %v784
  %1384 = vmatpush1.msra.mxu0 %v783
  %1385 = vmatprep.subr.mxu0 %v788
  %1386 = vmatpush1.msra.mxu0 %v787
  %1387 = vmatprep.subr.mxu0 %v792
  %1388 = vmatpush1.msra.mxu0 %v791
  %1389 = vmatprep.subr.mxu0 %v796
  %1390 = vmatpush1.msra.mxu0 %v795
  %1391 = vmatprep.subr.mxu0 %v800
  %1392 = vmatpush1.msra.mxu0 %v799
  %1393 = vmatprep.subr.mxu0 %v804
  %1394 = vmatpush1.msra.mxu0 %v803
  %1395 = vmatprep.subr.mxu0 %v808
  %1396 = vmatpush1.msra.mxu0 %v807
  %1397 = vmatprep.subr.mxu0 %v812
  %1398 = vmatpush1.msra.mxu0 %v811
  %1399 = vmatprep.subr.mxu0 %v816
  %1400 = vmatpush1.msra.mxu0 %v815
  %1401 = vmatprep.subr.mxu0 %v820
  %1402 = vmatpush1.msra.mxu0 %v819
  %1403 = vmatprep.subr.mxu0 %v824
  %1404 = vmatpush1.msra.mxu0 %v823
  %1405 = vmatprep.subr.mxu0 %v828
  %1406 = vmatpush1.msra.mxu0 %v827
  %1407 = vmatprep.subr.mxu0 %v832
  %1408 = vmatpush1.msra.mxu0 %v831
  %1409 = vmatprep.subr.mxu0 0.0
  %1410 = vmatpush1.msra.mxu0 0.0
  %1411 = vmatprep.subr.mxu0 0.0
  %1412 = vmatpush1.msra.mxu0 0.0
  %1413 = vmatprep.subr.mxu0 0.0
  %1414 = vmatpush1.msra.mxu0 0.0
  %1415 = vmatprep.subr.mxu0 0.0
  %1416 = vmatpush1.msra.mxu0 0.0
  %1417 = vmatprep.subr.mxu0 0.0
  %1418 = vmatpush1.msra.mxu0 0.0
  %1419 = vmatprep.subr.mxu0 0.0
  %1420 = vmatpush1.msra.mxu0 0.0
  %1421 = vmatprep.subr.mxu0 0.0
  %1422 = vmatpush1.msra.mxu0 0.0
  %1423 = vmatprep.subr.mxu0 0.0
  %1424 = vmatpush1.msra.mxu0 0.0
  %1425 = vmatprep.subr.mxu0 0.0
  %1426 = vmatpush1.msra.mxu0 0.0
  %1427 = vmatprep.subr.mxu0 0.0
  %1428 = vmatpush1.msra.mxu0 0.0
  %1429 = vmatprep.subr.mxu0 0.0
  %1430 = vmatpush1.msra.mxu0 0.0
  %1431 = vmatprep.subr.mxu0 0.0
  %1432 = vmatpush1.msra.mxu0 0.0
  %1433 = vmatprep.subr.mxu0 0.0
  %1434 = vmatpush1.msra.mxu0 0.0
  %1435 = vmatprep.subr.mxu0 0.0
  %1436 = vmatpush1.msra.mxu0 0.0
  %1437 = vmatprep.subr.mxu0 0.0
  %1438 = vmatpush1.msra.mxu0 0.0
  %1439 = vmatprep.subr.mxu0 0.0
  %1440 = vmatpush1.msra.mxu0 0.0
  %1441 = vmatprep.mubr.f32.mxu0 0.0
  %1442 = vmatmul.mubr.f32.gmra.mrb[0].mxu0 %v1296
  %v1443 = vpop.f32.mrb[0].mxu0
  %v1444 = vadd.f32 0.0, %v1443
  %v1445 = vpop.f32.mrb[0].mxu0
  %v1446 = vadd.f32 0.0, %v1445
  %1447 = vdwg.mxu0
  %v1448 = vadd.f32 %v1302, %v1373
  %v1449 = vadd.f32 %v1303, %v1375
  %v1450 = vadd.f32 %v1304, %v1444
  %v1451 = vadd.f32 %v1305, %v1446
  %v1452 = vxor.u32 %v1448, 2147483648
  %v1453 = vmul.f32 %v1452, 1.442695
  %v1454 = vpow.pop %v1453
  %v1455 = vadd.f32 %v1454, 1.0
  %v1456 = vrcp.pop %v1455
  %v1457 = vmul.f32 1.0, %v1456
  %v1458 = vxor.u32 %v1449, 2147483648
  %v1459 = vmul.f32 %v1458, 1.442695
  %v1460 = vpow.pop %v1459
  %v1461 = vadd.f32 %v1460, 1.0
  %v1462 = vrcp.pop %v1461
  %v1463 = vmul.f32 1.0, %v1462
  %v1464 = vtanh.pop %v1450
  %v1465 = vxor.u32 %v1451, 2147483648
  %v1466 = vmul.f32 %v1465, 1.442695
  %v1467 = vpow.pop %v1466
  %v1468 = vadd.f32 %v1467, 1.0
  %v1469 = vrcp.pop %v1468
  %v1470 = vmul.f32 1.0, %v1469
  %v1471 = vmul.f32 %v1463, %v1297
  %v1472 = vmul.f32 %v1457, %v1464
  %v1473 = vadd.f32 %v1471, %v1472
  %v1474 = vtanh.pop %v1473
  %v1475 = vmul.f32 %v1470, %v1474
  %s1476 = scalar_lea.vmem %s2, 16
  %v1477 = vld [vmem:[%s1476] sm:$0xff]
  %vm1478 = vcmp.gt.f32.partialorder %v1477, 0.5
  %v1479 = vsel %vm1478, 1, 0
  %1480 = vset.pattern.permute.xlu0 0
  %1481 = vperm.xlu0 %1480, %v1479
  %v1482 = vpop.permute.xlu0 %1481
  %vm1483 = vcmp.eq.s32.totalorder %v1482, 1
  %v1484 = vsel %vm1483, %v1475, %v1296
  %v1485 = vsel %vm1483, %v1473, %v1297
  %v1486 = vsel %vm1483, %v1475, 0.0
  %s1487 = scalar_lea.vmem [#allocation4], 16
  %1488 = vst [vmem:[%s1487] sm:$0xff] %v1486
  %s1489 = scalar_lea.vmem [#allocation2], 96
  %v1490 = vld [vmem:[%s1489] sm:$0xff]
  %v1491 = vld [vmem:[%s1489 + $0x8] sm:$0xff]
  %v1492 = vld [vmem:[%s1489 + $0x10] sm:$0xff]
  %v1493 = vld [vmem:[%s1489 + $0x18] sm:$0xff]
  %1494 = vmatprep.subr.mxu0 %v770
  %1495 = vmatpush1.msra.mxu0 %v769
  %1496 = vmatprep.subr.mxu0 %v774
  %1497 = vmatpush1.msra.mxu0 %v773
  %1498 = vmatprep.subr.mxu0 %v778
  %1499 = vmatpush1.msra.mxu0 %v777
  %1500 = vmatprep.subr.mxu0 %v782
  %1501 = vmatpush1.msra.mxu0 %v781
  %1502 = vmatprep.subr.mxu0 %v786
  %1503 = vmatpush1.msra.mxu0 %v785
  %1504 = vmatprep.subr.mxu0 %v790
  %1505 = vmatpush1.msra.mxu0 %v789
  %1506 = vmatprep.subr.mxu0 %v794
  %1507 = vmatpush1.msra.mxu0 %v793
  %1508 = vmatprep.subr.mxu0 %v798
  %1509 = vmatpush1.msra.mxu0 %v797
  %1510 = vmatprep.subr.mxu0 %v802
  %1511 = vmatpush1.msra.mxu0 %v801
  %1512 = vmatprep.subr.mxu0 %v806
  %1513 = vmatpush1.msra.mxu0 %v805
  %1514 = vmatprep.subr.mxu0 %v810
  %1515 = vmatpush1.msra.mxu0 %v809
  %1516 = vmatprep.subr.mxu0 %v814
  %1517 = vmatpush1.msra.mxu0 %v813
  %1518 = vmatprep.subr.mxu0 %v818
  %1519 = vmatpush1.msra.mxu0 %v817
  %1520 = vmatprep.subr.mxu0 %v822
  %1521 = vmatpush1.msra.mxu0 %v821
  %1522 = vmatprep.subr.mxu0 %v826
  %1523 = vmatpush1.msra.mxu0 %v825
  %1524 = vmatprep.subr.mxu0 %v830
  %1525 = vmatpush1.msra.mxu0 %v829
  %1526 = vmatprep.subr.mxu0 0.0
  %1527 = vmatpush1.msra.mxu0 0.0
  %1528 = vmatprep.subr.mxu0 0.0
  %1529 = vmatpush1.msra.mxu0 0.0
  %1530 = vmatprep.subr.mxu0 0.0
  %1531 = vmatpush1.msra.mxu0 0.0
  %1532 = vmatprep.subr.mxu0 0.0
  %1533 = vmatpush1.msra.mxu0 0.0
  %1534 = vmatprep.subr.mxu0 0.0
  %1535 = vmatpush1.msra.mxu0 0.0
  %1536 = vmatprep.subr.mxu0 0.0
  %1537 = vmatpush1.msra.mxu0 0.0
  %1538 = vmatprep.subr.mxu0 0.0
  %1539 = vmatpush1.msra.mxu0 0.0
  %1540 = vmatprep.subr.mxu0 0.0
  %1541 = vmatpush1.msra.mxu0 0.0
  %1542 = vmatprep.subr.mxu0 0.0
  %1543 = vmatpush1.msra.mxu0 0.0
  %1544 = vmatprep.subr.mxu0 0.0
  %1545 = vmatpush1.msra.mxu0 0.0
  %1546 = vmatprep.subr.mxu0 0.0
  %1547 = vmatpush1.msra.mxu0 0.0
  %1548 = vmatprep.subr.mxu0 0.0
  %1549 = vmatpush1.msra.mxu0 0.0
  %1550 = vmatprep.subr.mxu0 0.0
  %1551 = vmatpush1.msra.mxu0 0.0
  %1552 = vmatprep.subr.mxu0 0.0
  %1553 = vmatpush1.msra.mxu0 0.0
  %1554 = vmatprep.subr.mxu0 0.0
  %1555 = vmatpush1.msra.mxu0 0.0
  %1556 = vmatprep.subr.mxu0 0.0
  %1557 = vmatpush1.msra.mxu0 0.0
  %1558 = vmatprep.mubr.f32.mxu0 0.0
  %1559 = vmatmul.mubr.f32.gmra.mrb[0].mxu0 %v1484
  %v1560 = vpop.f32.mrb[0].mxu0
  %v1561 = vadd.f32 0.0, %v1560
  %v1562 = vpop.f32.mrb[0].mxu0
  %v1563 = vadd.f32 0.0, %v1562
  %1564 = vdwg.mxu0
  %1565 = vmatprep.subr.mxu0 %v772
  %1566 = vmatpush1.msra.mxu0 %v771
  %1567 = vmatprep.subr.mxu0 %v776
  %1568 = vmatpush1.msra.mxu0 %v775
  %1569 = vmatprep.subr.mxu0 %v780
  %1570 = vmatpush1.msra.mxu0 %v779
  %1571 = vmatprep.subr.mxu0 %v784
  %1572 = vmatpush1.msra.mxu0 %v783
  %1573 = vmatprep.subr.mxu0 %v788
  %1574 = vmatpush1.msra.mxu0 %v787
  %1575 = vmatprep.subr.mxu0 %v792
  %1576 = vmatpush1.msra.mxu0 %v791
  %1577 = vmatprep.subr.mxu0 %v796
  %1578 = vmatpush1.msra.mxu0 %v795
  %1579 = vmatprep.subr.mxu0 %v800
  %1580 = vmatpush1.msra.mxu0 %v799
  %1581 = vmatprep.subr.mxu0 %v804
  %1582 = vmatpush1.msra.mxu0 %v803
  %1583 = vmatprep.subr.mxu0 %v808
  %1584 = vmatpush1.msra.mxu0 %v807
  %1585 = vmatprep.subr.mxu0 %v812
  %1586 = vmatpush1.msra.mxu0 %v811
  %1587 = vmatprep.subr.mxu0 %v816
  %1588 = vmatpush1.msra.mxu0 %v815
  %1589 = vmatprep.subr.mxu0 %v820
  %1590 = vmatpush1.msra.mxu0 %v819
  %1591 = vmatprep.subr.mxu0 %v824
  %1592 = vmatpush1.msra.mxu0 %v823
  %1593 = vmatprep.subr.mxu0 %v828
  %1594 = vmatpush1.msra.mxu0 %v827
  %1595 = vmatprep.subr.mxu0 %v832
  %1596 = vmatpush1.msra.mxu0 %v831
  %1597 = vmatprep.subr.mxu0 0.0
  %1598 = vmatpush1.msra.mxu0 0.0
  %1599 = vmatprep.subr.mxu0 0.0
  %1600 = vmatpush1.msra.mxu0 0.0
  %1601 = vmatprep.subr.mxu0 0.0
  %1602 = vmatpush1.msra.mxu0 0.0
  %1603 = vmatprep.subr.mxu0 0.0
  %1604 = vmatpush1.msra.mxu0 0.0
  %1605 = vmatprep.subr.mxu0 0.0
  %1606 = vmatpush1.msra.mxu0 0.0
  %1607 = vmatprep.subr.mxu0 0.0
  %1608 = vmatpush1.msra.mxu0 0.0
  %1609 = vmatprep.subr.mxu0 0.0
  %1610 = vmatpush1.msra.mxu0 0.0
  %1611 = vmatprep.subr.mxu0 0.0
  %1612 = vmatpush1.msra.mxu0 0.0
  %1613 = vmatprep.subr.mxu0 0.0
  %1614 = vmatpush1.msra.mxu0 0.0
  %1615 = vmatprep.subr.mxu0 0.0
  %1616 = vmatpush1.msra.mxu0 0.0
  %1617 = vmatprep.subr.mxu0 0.0
  %1618 = vmatpush1.msra.mxu0 0.0
  %1619 = vmatprep.subr.mxu0 0.0
  %1620 = vmatpush1.msra.mxu0 0.0
  %1621 = vmatprep.subr.mxu0 0.0
  %1622 = vmatpush1.msra.mxu0 0.0
  %1623 = vmatprep.subr.mxu0 0.0
  %1624 = vmatpush1.msra.mxu0 0.0
  %1625 = vmatprep.subr.mxu0 0.0
  %1626 = vmatpush1.msra.mxu0 0.0
  %1627 = vmatprep.subr.mxu0 0.0
  %1628 = vmatpush1.msra.mxu0 0.0
  %1629 = vmatprep.mubr.f32.mxu0 0.0
  %1630 = vmatmul.mubr.f32.gmra.mrb[0].mxu0 %v1484
  %v1631 = vpop.f32.mrb[0].mxu0
  %v1632 = vadd.f32 0.0, %v1631
  %v1633 = vpop.f32.mrb[0].mxu0
  %v1634 = vadd.f32 0.0, %v1633
  %1635 = vdwg.mxu0
  %v1636 = vadd.f32 %v1490, %v1561
  %v1637 = vadd.f32 %v1491, %v1563
  %v1638 = vadd.f32 %v1492, %v1632
  %v1639 = vadd.f32 %v1493, %v1634
  %v1640 = vxor.u32 %v1636, 2147483648
  %v1641 = vmul.f32 %v1640, 1.442695
  %v1642 = vpow.pop %v1641
  %v1643 = vadd.f32 %v1642, 1.0
  %v1644 = vrcp.pop %v1643
  %v1645 = vmul.f32 1.0, %v1644
  %v1646 = vxor.u32 %v1637, 2147483648
  %v1647 = vmul.f32 %v1646, 1.442695
  %v1648 = vpow.pop %v1647
  %v1649 = vadd.f32 %v1648, 1.0
  %v1650 = vrcp.pop %v1649
  %v1651 = vmul.f32 1.0, %v1650
  %v1652 = vtanh.pop %v1638
  %v1653 = vxor.u32 %v1639, 2147483648
  %v1654 = vmul.f32 %v1653, 1.442695
  %v1655 = vpow.pop %v1654
  %v1656 = vadd.f32 %v1655, 1.0
  %v1657 = vrcp.pop %v1656
  %v1658 = vmul.f32 1.0, %v1657
  %v1659 = vmul.f32 %v1651, %v1485
  %v1660 = vmul.f32 %v1645, %v1652
  %v1661 = vadd.f32 %v1659, %v1660
  %v1662 = vtanh.pop %v1661
  %v1663 = vmul.f32 %v1658, %v1662
  %s1664 = scalar_lea.vmem %s2, 24
  %v1665 = vld [vmem:[%s1664] sm:$0xff]
  %vm1666 = vcmp.gt.f32.partialorder %v1665, 0.5
  %v1667 = vsel %vm1666, 1, 0
  %1668 = vset.pattern.permute.xlu0 0
  %1669 = vperm.xlu0 %1668, %v1667
  %v1670 = vpop.permute.xlu0 %1669
  %vm1671 = vcmp.eq.s32.totalorder %v1670, 1
  %v1672 = vsel %vm1671, %v1663, %v1484
  %v1673 = vsel %vm1671, %v1661, %v1485
  %v1674 = vsel %vm1671, %v1663, 0.0
  %s1675 = scalar_lea.vmem [#allocation4], 24
  %1676 = vst [vmem:[%s1675] sm:$0xff] %v1674
  %s1677 = scalar_lea.vmem [#allocation2], 128
  %v1678 = vld [vmem:[%s1677] sm:$0xff]
  %v1679 = vld [vmem:[%s1677 + $0x8] sm:$0xff]
  %v1680 = vld [vmem:[%s1677 + $0x10] sm:$0xff]
  %v1681 = vld [vmem:[%s1677 + $0x18] sm:$0xff]
  %1682 = vmatprep.subr.mxu0 %v770
  %1683 = vmatpush1.msra.mxu0 %v769
  %1684 = vmatprep.subr.mxu0 %v774
  %1685 = vmatpush1.msra.mxu0 %v773
  %1686 = vmatprep.subr.mxu0 %v778
  %1687 = vmatpush1.msra.mxu0 %v777
  %1688 = vmatprep.subr.mxu0 %v782
  %1689 = vmatpush1.msra.mxu0 %v781
  %1690 = vmatprep.subr.mxu0 %v786
  %1691 = vmatpush1.msra.mxu0 %v785
  %1692 = vmatprep.subr.mxu0 %v790
  %1693 = vmatpush1.msra.mxu0 %v789
  %1694 = vmatprep.subr.mxu0 %v794
  %1695 = vmatpush1.msra.mxu0 %v793
  %1696 = vmatprep.subr.mxu0 %v798
  %1697 = vmatpush1.msra.mxu0 %v797
  %1698 = vmatprep.subr.mxu0 %v802
  %1699 = vmatpush1.msra.mxu0 %v801
  %1700 = vmatprep.subr.mxu0 %v806
  %1701 = vmatpush1.msra.mxu0 %v805
  %1702 = vmatprep.subr.mxu0 %v810
  %1703 = vmatpush1.msra.mxu0 %v809
  %1704 = vmatprep.subr.mxu0 %v814
  %1705 = vmatpush1.msra.mxu0 %v813
  %1706 = vmatprep.subr.mxu0 %v818
  %1707 = vmatpush1.msra.mxu0 %v817
  %1708 = vmatprep.subr.mxu0 %v822
  %1709 = vmatpush1.msra.mxu0 %v821
  %1710 = vmatprep.subr.mxu0 %v826
  %1711 = vmatpush1.msra.mxu0 %v825
  %1712 = vmatprep.subr.mxu0 %v830
  %1713 = vmatpush1.msra.mxu0 %v829
  %1714 = vmatprep.subr.mxu0 0.0
  %1715 = vmatpush1.msra.mxu0 0.0
  %1716 = vmatprep.subr.mxu0 0.0
  %1717 = vmatpush1.msra.mxu0 0.0
  %1718 = vmatprep.subr.mxu0 0.0
  %1719 = vmatpush1.msra.mxu0 0.0
  %1720 = vmatprep.subr.mxu0 0.0
  %1721 = vmatpush1.msra.mxu0 0.0
  %1722 = vmatprep.subr.mxu0 0.0
  %1723 = vmatpush1.msra.mxu0 0.0
  %1724 = vmatprep.subr.mxu0 0.0
  %1725 = vmatpush1.msra.mxu0 0.0
  %1726 = vmatprep.subr.mxu0 0.0
  %1727 = vmatpush1.msra.mxu0 0.0
  %1728 = vmatprep.subr.mxu0 0.0
  %1729 = vmatpush1.msra.mxu0 0.0
  %1730 = vmatprep.subr.mxu0 0.0
  %1731 = vmatpush1.msra.mxu0 0.0
  %1732 = vmatprep.subr.mxu0 0.0
  %1733 = vmatpush1.msra.mxu0 0.0
  %1734 = vmatprep.subr.mxu0 0.0
  %1735 = vmatpush1.msra.mxu0 0.0
  %1736 = vmatprep.subr.mxu0 0.0
  %1737 = vmatpush1.msra.mxu0 0.0
  %1738 = vmatprep.subr.mxu0 0.0
  %1739 = vmatpush1.msra.mxu0 0.0
  %1740 = vmatprep.subr.mxu0 0.0
  %1741 = vmatpush1.msra.mxu0 0.0
  %1742 = vmatprep.subr.mxu0 0.0
  %1743 = vmatpush1.msra.mxu0 0.0
  %1744 = vmatprep.subr.mxu0 0.0
  %1745 = vmatpush1.msra.mxu0 0.0
  %1746 = vmatprep.mubr.f32.mxu0 0.0
  %1747 = vmatmul.mubr.f32.gmra.mrb[0].mxu0 %v1672
  %v1748 = vpop.f32.mrb[0].mxu0
  %v1749 = vadd.f32 0.0, %v1748
  %v1750 = vpop.f32.mrb[0].mxu0
  %v1751 = vadd.f32 0.0, %v1750
  %1752 = vdwg.mxu0
  %1753 = vmatprep.subr.mxu0 %v772
  %1754 = vmatpush1.msra.mxu0 %v771
  %1755 = vmatprep.subr.mxu0 %v776
  %1756 = vmatpush1.msra.mxu0 %v775
  %1757 = vmatprep.subr.mxu0 %v780
  %1758 = vmatpush1.msra.mxu0 %v779
  %1759 = vmatprep.subr.mxu0 %v784
  %1760 = vmatpush1.msra.mxu0 %v783
  %1761 = vmatprep.subr.mxu0 %v788
  %1762 = vmatpush1.msra.mxu0 %v787
  %1763 = vmatprep.subr.mxu0 %v792
  %1764 = vmatpush1.msra.mxu0 %v791
  %1765 = vmatprep.subr.mxu0 %v796
  %1766 = vmatpush1.msra.mxu0 %v795
  %1767 = vmatprep.subr.mxu0 %v800
  %1768 = vmatpush1.msra.mxu0 %v799
  %1769 = vmatprep.subr.mxu0 %v804
  %1770 = vmatpush1.msra.mxu0 %v803
  %1771 = vmatprep.subr.mxu0 %v808
  %1772 = vmatpush1.msra.mxu0 %v807
  %1773 = vmatprep.subr.mxu0 %v812
  %1774 = vmatpush1.msra.mxu0 %v811
  %1775 = vmatprep.subr.mxu0 %v816
  %1776 = vmatpush1.msra.mxu0 %v815
  %1777 = vmatprep.subr.mxu0 %v820
  %1778 = vmatpush1.msra.mxu0 %v819
  %1779 = vmatprep.subr.mxu0 %v824
  %1780 = vmatpush1.msra.mxu0 %v823
  %1781 = vmatprep.subr.mxu0 %v828
  %1782 = vmatpush1.msra.mxu0 %v827
  %1783 = vmatprep.subr.mxu0 %v832
  %1784 = vmatpush1.msra.mxu0 %v831
  %1785 = vmatprep.subr.mxu0 0.0
  %1786 = vmatpush1.msra.mxu0 0.0
  %1787 = vmatprep.subr.mxu0 0.0
  %1788 = vmatpush1.msra.mxu0 0.0
  %1789 = vmatprep.subr.mxu0 0.0
  %1790 = vmatpush1.msra.mxu0 0.0
  %1791 = vmatprep.subr.mxu0 0.0
  %1792 = vmatpush1.msra.mxu0 0.0
  %1793 = vmatprep.subr.mxu0 0.0
  %1794 = vmatpush1.msra.mxu0 0.0
  %1795 = vmatprep.subr.mxu0 0.0
  %1796 = vmatpush1.msra.mxu0 0.0
  %1797 = vmatprep.subr.mxu0 0.0
  %1798 = vmatpush1.msra.mxu0 0.0
  %1799 = vmatprep.subr.mxu0 0.0
  %1800 = vmatpush1.msra.mxu0 0.0
  %1801 = vmatprep.subr.mxu0 0.0
  %1802 = vmatpush1.msra.mxu0 0.0
  %1803 = vmatprep.subr.mxu0 0.0
  %1804 = vmatpush1.msra.mxu0 0.0
  %1805 = vmatprep.subr.mxu0 0.0
  %1806 = vmatpush1.msra.mxu0 0.0
  %1807 = vmatprep.subr.mxu0 0.0
  %1808 = vmatpush1.msra.mxu0 0.0
  %1809 = vmatprep.subr.mxu0 0.0
  %1810 = vmatpush1.msra.mxu0 0.0
  %1811 = vmatprep.subr.mxu0 0.0
  %1812 = vmatpush1.msra.mxu0 0.0
  %1813 = vmatprep.subr.mxu0 0.0
  %1814 = vmatpush1.msra.mxu0 0.0
  %1815 = vmatprep.subr.mxu0 0.0
  %1816 = vmatpush1.msra.mxu0 0.0
  %1817 = vmatprep.mubr.f32.mxu0 0.0
  %1818 = vmatmul.mubr.f32.gmra.mrb[0].mxu0 %v1672
  %v1819 = vpop.f32.mrb[0].mxu0
  %v1820 = vadd.f32 0.0, %v1819
  %v1821 = vpop.f32.mrb[0].mxu0
  %v1822 = vadd.f32 0.0, %v1821
  %1823 = vdwg.mxu0
  %v1824 = vadd.f32 %v1678, %v1749
  %v1825 = vadd.f32 %v1679, %v1751
  %v1826 = vadd.f32 %v1680, %v1820
  %v1827 = vadd.f32 %v1681, %v1822
  %v1828 = vxor.u32 %v1824, 2147483648
  %v1829 = vmul.f32 %v1828, 1.442695
  %v1830 = vpow.pop %v1829
  %v1831 = vadd.f32 %v1830, 1.0
  %v1832 = vrcp.pop %v1831
  %v1833 = vmul.f32 1.0, %v1832
  %v1834 = vxor.u32 %v1825, 2147483648
  %v1835 = vmul.f32 %v1834, 1.442695
  %v1836 = vpow.pop %v1835
  %v1837 = vadd.f32 %v1836, 1.0
  %v1838 = vrcp.pop %v1837
  %v1839 = vmul.f32 1.0, %v1838
  %v1840 = vtanh.pop %v1826
  %v1841 = vxor.u32 %v1827, 2147483648
  %v1842 = vmul.f32 %v1841, 1.442695
  %v1843 = vpow.pop %v1842
  %v1844 = vadd.f32 %v1843, 1.0
  %v1845 = vrcp.pop %v1844
  %v1846 = vmul.f32 1.0, %v1845
  %v1847 = vmul.f32 %v1839, %v1673
  %v1848 = vmul.f32 %v1833, %v1840
  %v1849 = vadd.f32 %v1847, %v1848
  %v1850 = vtanh.pop %v1849
  %v1851 = vmul.f32 %v1846, %v1850
  %s1852 = scalar_lea.vmem %s2, 32
  %v1853 = vld [vmem:[%s1852] sm:$0xff]
  %vm1854 = vcmp.gt.f32.partialorder %v1853, 0.5
  %v1855 = vsel %vm1854, 1, 0
  %1856 = vset.pattern.permute.xlu0 0
  %1857 = vperm.xlu0 %1856, %v1855
  %v1858 = vpop.permute.xlu0 %1857
  %vm1859 = vcmp.eq.s32.totalorder %v1858, 1
  %v1860 = vsel %vm1859, %v1851, %v1672
  %v1861 = vsel %vm1859, %v1849, %v1673
  %v1862 = vsel %vm1859, %v1851, 0.0
  %s1863 = scalar_lea.vmem [#allocation4], 32
  %1864 = vst [vmem:[%s1863] sm:$0xff] %v1862
  %s1865 = scalar_lea.vmem [#allocation2], 160
  %v1866 = vld [vmem:[%s1865] sm:$0xff]
  %v1867 = vld [vmem:[%s1865 + $0x8] sm:$0xff]
  %v1868 = vld [vmem:[%s1865 + $0x10] sm:$0xff]
  %v1869 = vld [vmem:[%s1865 + $0x18] sm:$0xff]
  %1870 = vmatprep.subr.mxu0 %v770
  %1871 = vmatpush1.msra.mxu0 %v769
  %1872 = vmatprep.subr.mxu0 %v774
  %1873 = vmatpush1.msra.mxu0 %v773
  %1874 = vmatprep.subr.mxu0 %v778
  %1875 = vmatpush1.msra.mxu0 %v777
  %1876 = vmatprep.subr.mxu0 %v782
  %1877 = vmatpush1.msra.mxu0 %v781
  %1878 = vmatprep.subr.mxu0 %v786
  %1879 = vmatpush1.msra.mxu0 %v785
  %1880 = vmatprep.subr.mxu0 %v790
  %1881 = vmatpush1.msra.mxu0 %v789
  %1882 = vmatprep.subr.mxu0 %v794
  %1883 = vmatpush1.msra.mxu0 %v793
  %1884 = vmatprep.subr.mxu0 %v798
  %1885 = vmatpush1.msra.mxu0 %v797
  %1886 = vmatprep.subr.mxu0 %v802
  %1887 = vmatpush1.msra.mxu0 %v801
  %1888 = vmatprep.subr.mxu0 %v806
  %1889 = vmatpush1.msra.mxu0 %v805
  %1890 = vmatprep.subr.mxu0 %v810
  %1891 = vmatpush1.msra.mxu0 %v809
  %1892 = vmatprep.subr.mxu0 %v814
  %1893 = vmatpush1.msra.mxu0 %v813
  %1894 = vmatprep.subr.mxu0 %v818
  %1895 = vmatpush1.msra.mxu0 %v817
  %1896 = vmatprep.subr.mxu0 %v822
  %1897 = vmatpush1.msra.mxu0 %v821
  %1898 = vmatprep.subr.mxu0 %v826
  %1899 = vmatpush1.msra.mxu0 %v825
  %1900 = vmatprep.subr.mxu0 %v830
  %1901 = vmatpush1.msra.mxu0 %v829
  %1902 = vmatprep.subr.mxu0 0.0
  %1903 = vmatpush1.msra.mxu0 0.0
  %1904 = vmatprep.subr.mxu0 0.0
  %1905 = vmatpush1.msra.mxu0 0.0
  %1906 = vmatprep.subr.mxu0 0.0
  %1907 = vmatpush1.msra.mxu0 0.0
  %1908 = vmatprep.subr.mxu0 0.0
  %1909 = vmatpush1.msra.mxu0 0.0
  %1910 = vmatprep.subr.mxu0 0.0
  %1911 = vmatpush1.msra.mxu0 0.0
  %1912 = vmatprep.subr.mxu0 0.0
  %1913 = vmatpush1.msra.mxu0 0.0
  %1914 = vmatprep.subr.mxu0 0.0
  %1915 = vmatpush1.msra.mxu0 0.0
  %1916 = vmatprep.subr.mxu0 0.0
  %1917 = vmatpush1.msra.mxu0 0.0
  %1918 = vmatprep.subr.mxu0 0.0
  %1919 = vmatpush1.msra.mxu0 0.0
  %1920 = vmatprep.subr.mxu0 0.0
  %1921 = vmatpush1.msra.mxu0 0.0
  %1922 = vmatprep.subr.mxu0 0.0
  %1923 = vmatpush1.msra.mxu0 0.0
  %1924 = vmatprep.subr.mxu0 0.0
  %1925 = vmatpush1.msra.mxu0 0.0
  %1926 = vmatprep.subr.mxu0 0.0
  %1927 = vmatpush1.msra.mxu0 0.0
  %1928 = vmatprep.subr.mxu0 0.0
  %1929 = vmatpush1.msra.mxu0 0.0
  %1930 = vmatprep.subr.mxu0 0.0
  %1931 = vmatpush1.msra.mxu0 0.0
  %1932 = vmatprep.subr.mxu0 0.0
  %1933 = vmatpush1.msra.mxu0 0.0
  %1934 = vmatprep.mubr.f32.mxu0 0.0
  %1935 = vmatmul.mubr.f32.gmra.mrb[0].mxu0 %v1860
  %v1936 = vpop.f32.mrb[0].mxu0
  %v1937 = vadd.f32 0.0, %v1936
  %v1938 = vpop.f32.mrb[0].mxu0
  %v1939 = vadd.f32 0.0, %v1938
  %1940 = vdwg.mxu0
  %1941 = vmatprep.subr.mxu0 %v772
  %1942 = vmatpush1.msra.mxu0 %v771
  %1943 = vmatprep.subr.mxu0 %v776
  %1944 = vmatpush1.msra.mxu0 %v775
  %1945 = vmatprep.subr.mxu0 %v780
  %1946 = vmatpush1.msra.mxu0 %v779
  %1947 = vmatprep.subr.mxu0 %v784
  %1948 = vmatpush1.msra.mxu0 %v783
  %1949 = vmatprep.subr.mxu0 %v788
  %1950 = vmatpush1.msra.mxu0 %v787
  %1951 = vmatprep.subr.mxu0 %v792
  %1952 = vmatpush1.msra.mxu0 %v791
  %1953 = vmatprep.subr.mxu0 %v796
  %1954 = vmatpush1.msra.mxu0 %v795
  %1955 = vmatprep.subr.mxu0 %v800
  %1956 = vmatpush1.msra.mxu0 %v799
  %1957 = vmatprep.subr.mxu0 %v804
  %1958 = vmatpush1.msra.mxu0 %v803
  %1959 = vmatprep.subr.mxu0 %v808
  %1960 = vmatpush1.msra.mxu0 %v807
  %1961 = vmatprep.subr.mxu0 %v812
  %1962 = vmatpush1.msra.mxu0 %v811
  %1963 = vmatprep.subr.mxu0 %v816
  %1964 = vmatpush1.msra.mxu0 %v815
  %1965 = vmatprep.subr.mxu0 %v820
  %1966 = vmatpush1.msra.mxu0 %v819
  %1967 = vmatprep.subr.mxu0 %v824
  %1968 = vmatpush1.msra.mxu0 %v823
  %1969 = vmatprep.subr.mxu0 %v828
  %1970 = vmatpush1.msra.mxu0 %v827
  %1971 = vmatprep.subr.mxu0 %v832
  %1972 = vmatpush1.msra.mxu0 %v831
  %1973 = vmatprep.subr.mxu0 0.0
  %1974 = vmatpush1.msra.mxu0 0.0
  %1975 = vmatprep.subr.mxu0 0.0
  %1976 = vmatpush1.msra.mxu0 0.0
  %1977 = vmatprep.subr.mxu0 0.0
  %1978 = vmatpush1.msra.mxu0 0.0
  %1979 = vmatprep.subr.mxu0 0.0
  %1980 = vmatpush1.msra.mxu0 0.0
  %1981 = vmatprep.subr.mxu0 0.0
  %1982 = vmatpush1.msra.mxu0 0.0
  %1983 = vmatprep.subr.mxu0 0.0
  %1984 = vmatpush1.msra.mxu0 0.0
  %1985 = vmatprep.subr.mxu0 0.0
  %1986 = vmatpush1.msra.mxu0 0.0
  %1987 = vmatprep.subr.mxu0 0.0
  %1988 = vmatpush1.msra.mxu0 0.0
  %1989 = vmatprep.subr.mxu0 0.0
  %1990 = vmatpush1.msra.mxu0 0.0
  %1991 = vmatprep.subr.mxu0 0.0
  %1992 = vmatpush1.msra.mxu0 0.0
  %1993 = vmatprep.subr.mxu0 0.0
  %1994 = vmatpush1.msra.mxu0 0.0
  %1995 = vmatprep.subr.mxu0 0.0
  %1996 = vmatpush1.msra.mxu0 0.0
  %1997 = vmatprep.subr.mxu0 0.0
  %1998 = vmatpush1.msra.mxu0 0.0
  %1999 = vmatprep.subr.mxu0 0.0
  %2000 = vmatpush1.msra.mxu0 0.0
  %2001 = vmatprep.subr.mxu0 0.0
  %2002 = vmatpush1.msra.mxu0 0.0
  %2003 = vmatprep.subr.mxu0 0.0
  %2004 = vmatpush1.msra.mxu0 0.0
  %2005 = vmatprep.mubr.f32.mxu0 0.0
  %2006 = vmatmul.mubr.f32.gmra.mrb[0].mxu0 %v1860
  %v2007 = vpop.f32.mrb[0].mxu0
  %v2008 = vadd.f32 0.0, %v2007
  %v2009 = vpop.f32.mrb[0].mxu0
  %v2010 = vadd.f32 0.0, %v2009
  %2011 = vdwg.mxu0
  %v2012 = vadd.f32 %v1866, %v1937
  %v2013 = vadd.f32 %v1867, %v1939
  %v2014 = vadd.f32 %v1868, %v2008
  %v2015 = vadd.f32 %v1869, %v2010
  %v2016 = vxor.u32 %v2012, 2147483648
  %v2017 = vmul.f32 %v2016, 1.442695
  %v2018 = vpow.pop %v2017
  %v2019 = vadd.f32 %v2018, 1.0
  %v2020 = vrcp.pop %v2019
  %v2021 = vmul.f32 1.0, %v2020
  %v2022 = vxor.u32 %v2013, 2147483648
  %v2023 = vmul.f32 %v2022, 1.442695
  %v2024 = vpow.pop %v2023
  %v2025 = vadd.f32 %v2024, 1.0
  %v2026 = vrcp.pop %v2025
  %v2027 = vmul.f32 1.0, %v2026
  %v2028 = vtanh.pop %v2014
  %v2029 = vxor.u32 %v2015, 2147483648
  %v2030 = vmul.f32 %v2029, 1.442695
  %v2031 = vpow.pop %v2030
  %v2032 = vadd.f32 %v2031, 1.0
  %v2033 = vrcp.pop %v2032
  %v2034 = vmul.f32 1.0, %v2033
  %v2035 = vmul.f32 %v2027, %v1861
  %v2036 = vmul.f32 %v2021, %v2028
  %v2037 = vadd.f32 %v2035, %v2036
  %v2038 = vtanh.pop %v2037
  %v2039 = vmul.f32 %v2034, %v2038
  %s2040 = scalar_lea.vmem %s2, 40
  %v2041 = vld [vmem:[%s2040] sm:$0xff]
  %vm2042 = vcmp.gt.f32.partialorder %v2041, 0.5
  %v2043 = vsel %vm2042, 1, 0
  %2044 = vset.pattern.permute.xlu0 0
  %2045 = vperm.xlu0 %2044, %v2043
  %v2046 = vpop.permute.xlu0 %2045
  %vm2047 = vcmp.eq.s32.totalorder %v2046, 1
  %v2048 = vsel %vm2047, %v2039, %v1860
  %v2049 = vsel %vm2047, %v2037, %v1861
  %v2050 = vsel %vm2047, %v2039, 0.0
  %s2051 = scalar_lea.vmem [#allocation4], 40
  %2052 = vst [vmem:[%s2051] sm:$0xff] %v2050
  %s2053 = scalar_lea.vmem [#allocation2], 192
  %v2054 = vld [vmem:[%s2053] sm:$0xff]
  %v2055 = vld [vmem:[%s2053 + $0x8] sm:$0xff]
  %v2056 = vld [vmem:[%s2053 + $0x10] sm:$0xff]
  %v2057 = vld [vmem:[%s2053 + $0x18] sm:$0xff]
  %2058 = vmatprep.subr.mxu0 %v770
  %2059 = vmatpush1.msra.mxu0 %v769
  %2060 = vmatprep.subr.mxu0 %v774
  %2061 = vmatpush1.msra.mxu0 %v773
  %2062 = vmatprep.subr.mxu0 %v778
  %2063 = vmatpush1.msra.mxu0 %v777
  %2064 = vmatprep.subr.mxu0 %v782
  %2065 = vmatpush1.msra.mxu0 %v781
  %2066 = vmatprep.subr.mxu0 %v786
  %2067 = vmatpush1.msra.mxu0 %v785
  %2068 = vmatprep.subr.mxu0 %v790
  %2069 = vmatpush1.msra.mxu0 %v789
  %2070 = vmatprep.subr.mxu0 %v794
  %2071 = vmatpush1.msra.mxu0 %v793
  %2072 = vmatprep.subr.mxu0 %v798
  %2073 = vmatpush1.msra.mxu0 %v797
  %2074 = vmatprep.subr.mxu0 %v802
  %2075 = vmatpush1.msra.mxu0 %v801
  %2076 = vmatprep.subr.mxu0 %v806
  %2077 = vmatpush1.msra.mxu0 %v805
  %2078 = vmatprep.subr.mxu0 %v810
  %2079 = vmatpush1.msra.mxu0 %v809
  %2080 = vmatprep.subr.mxu0 %v814
  %2081 = vmatpush1.msra.mxu0 %v813
  %2082 = vmatprep.subr.mxu0 %v818
  %2083 = vmatpush1.msra.mxu0 %v817
  %2084 = vmatprep.subr.mxu0 %v822
  %2085 = vmatpush1.msra.mxu0 %v821
  %2086 = vmatprep.subr.mxu0 %v826
  %2087 = vmatpush1.msra.mxu0 %v825
  %2088 = vmatprep.subr.mxu0 %v830
  %2089 = vmatpush1.msra.mxu0 %v829
  %2090 = vmatprep.subr.mxu0 0.0
  %2091 = vmatpush1.msra.mxu0 0.0
  %2092 = vmatprep.subr.mxu0 0.0
  %2093 = vmatpush1.msra.mxu0 0.0
  %2094 = vmatprep.subr.mxu0 0.0
  %2095 = vmatpush1.msra.mxu0 0.0
  %2096 = vmatprep.subr.mxu0 0.0
  %2097 = vmatpush1.msra.mxu0 0.0
  %2098 = vmatprep.subr.mxu0 0.0
  %2099 = vmatpush1.msra.mxu0 0.0
  %2100 = vmatprep.subr.mxu0 0.0
  %2101 = vmatpush1.msra.mxu0 0.0
  %2102 = vmatprep.subr.mxu0 0.0
  %2103 = vmatpush1.msra.mxu0 0.0
  %2104 = vmatprep.subr.mxu0 0.0
  %2105 = vmatpush1.msra.mxu0 0.0
  %2106 = vmatprep.subr.mxu0 0.0
  %2107 = vmatpush1.msra.mxu0 0.0
  %2108 = vmatprep.subr.mxu0 0.0
  %2109 = vmatpush1.msra.mxu0 0.0
  %2110 = vmatprep.subr.mxu0 0.0
  %2111 = vmatpush1.msra.mxu0 0.0
  %2112 = vmatprep.subr.mxu0 0.0
  %2113 = vmatpush1.msra.mxu0 0.0
  %2114 = vmatprep.subr.mxu0 0.0
  %2115 = vmatpush1.msra.mxu0 0.0
  %2116 = vmatprep.subr.mxu0 0.0
  %2117 = vmatpush1.msra.mxu0 0.0
  %2118 = vmatprep.subr.mxu0 0.0
  %2119 = vmatpush1.msra.mxu0 0.0
  %2120 = vmatprep.subr.mxu0 0.0
  %2121 = vmatpush1.msra.mxu0 0.0
  %2122 = vmatprep.mubr.f32.mxu0 0.0
  %2123 = vmatmul.mubr.f32.gmra.mrb[0].mxu0 %v2048
  %v2124 = vpop.f32.mrb[0].mxu0
  %v2125 = vadd.f32 0.0, %v2124
  %v2126 = vpop.f32.mrb[0].mxu0
  %v2127 = vadd.f32 0.0, %v2126
  %2128 = vdwg.mxu0
  %2129 = vmatprep.subr.mxu0 %v772
  %2130 = vmatpush1.msra.mxu0 %v771
  %2131 = vmatprep.subr.mxu0 %v776
  %2132 = vmatpush1.msra.mxu0 %v775
  %2133 = vmatprep.subr.mxu0 %v780
  %2134 = vmatpush1.msra.mxu0 %v779
  %2135 = vmatprep.subr.mxu0 %v784
  %2136 = vmatpush1.msra.mxu0 %v783
  %2137 = vmatprep.subr.mxu0 %v788
  %2138 = vmatpush1.msra.mxu0 %v787
  %2139 = vmatprep.subr.mxu0 %v792
  %2140 = vmatpush1.msra.mxu0 %v791
  %2141 = vmatprep.subr.mxu0 %v796
  %2142 = vmatpush1.msra.mxu0 %v795
  %2143 = vmatprep.subr.mxu0 %v800
  %2144 = vmatpush1.msra.mxu0 %v799
  %2145 = vmatprep.subr.mxu0 %v804
  %2146 = vmatpush1.msra.mxu0 %v803
  %2147 = vmatprep.subr.mxu0 %v808
  %2148 = vmatpush1.msra.mxu0 %v807
  %2149 = vmatprep.subr.mxu0 %v812
  %2150 = vmatpush1.msra.mxu0 %v811
  %2151 = vmatprep.subr.mxu0 %v816
  %2152 = vmatpush1.msra.mxu0 %v815
  %2153 = vmatprep.subr.mxu0 %v820
  %2154 = vmatpush1.msra.mxu0 %v819
  %2155 = vmatprep.subr.mxu0 %v824
  %2156 = vmatpush1.msra.mxu0 %v823
  %2157 = vmatprep.subr.mxu0 %v828
  %2158 = vmatpush1.msra.mxu0 %v827
  %2159 = vmatprep.subr.mxu0 %v832
  %2160 = vmatpush1.msra.mxu0 %v831
  %2161 = vmatprep.subr.mxu0 0.0
  %2162 = vmatpush1.msra.mxu0 0.0
  %2163 = vmatprep.subr.mxu0 0.0
  %2164 = vmatpush1.msra.mxu0 0.0
  %2165 = vmatprep.subr.mxu0 0.0
  %2166 = vmatpush1.msra.mxu0 0.0
  %2167 = vmatprep.subr.mxu0 0.0
  %2168 = vmatpush1.msra.mxu0 0.0
  %2169 = vmatprep.subr.mxu0 0.0
  %2170 = vmatpush1.msra.mxu0 0.0
  %2171 = vmatprep.subr.mxu0 0.0
  %2172 = vmatpush1.msra.mxu0 0.0
  %2173 = vmatprep.subr.mxu0 0.0
  %2174 = vmatpush1.msra.mxu0 0.0
  %2175 = vmatprep.subr.mxu0 0.0
  %2176 = vmatpush1.msra.mxu0 0.0
  %2177 = vmatprep.subr.mxu0 0.0
  %2178 = vmatpush1.msra.mxu0 0.0
  %2179 = vmatprep.subr.mxu0 0.0
  %2180 = vmatpush1.msra.mxu0 0.0
  %2181 = vmatprep.subr.mxu0 0.0
  %2182 = vmatpush1.msra.mxu0 0.0
  %2183 = vmatprep.subr.mxu0 0.0
  %2184 = vmatpush1.msra.mxu0 0.0
  %2185 = vmatprep.subr.mxu0 0.0
  %2186 = vmatpush1.msra.mxu0 0.0
  %2187 = vmatprep.subr.mxu0 0.0
  %2188 = vmatpush1.msra.mxu0 0.0
  %2189 = vmatprep.subr.mxu0 0.0
  %2190 = vmatpush1.msra.mxu0 0.0
  %2191 = vmatprep.subr.mxu0 0.0
  %2192 = vmatpush1.msra.mxu0 0.0
  %2193 = vmatprep.mubr.f32.mxu0 0.0
  %2194 = vmatmul.mubr.f32.gmra.mrb[0].mxu0 %v2048
  %v2195 = vpop.f32.mrb[0].mxu0
  %v2196 = vadd.f32 0.0, %v2195
  %v2197 = vpop.f32.mrb[0].mxu0
  %v2198 = vadd.f32 0.0, %v2197
  %2199 = vdwg.mxu0
  %v2200 = vadd.f32 %v2054, %v2125
  %v2201 = vadd.f32 %v2055, %v2127
  %v2202 = vadd.f32 %v2056, %v2196
  %v2203 = vadd.f32 %v2057, %v2198
  %v2204 = vxor.u32 %v2200, 2147483648
  %v2205 = vmul.f32 %v2204, 1.442695
  %v2206 = vpow.pop %v2205
  %v2207 = vadd.f32 %v2206, 1.0
  %v2208 = vrcp.pop %v2207
  %v2209 = vmul.f32 1.0, %v2208
  %v2210 = vxor.u32 %v2201, 2147483648
  %v2211 = vmul.f32 %v2210, 1.442695
  %v2212 = vpow.pop %v2211
  %v2213 = vadd.f32 %v2212, 1.0
  %v2214 = vrcp.pop %v2213
  %v2215 = vmul.f32 1.0, %v2214
  %v2216 = vtanh.pop %v2202
  %v2217 = vxor.u32 %v2203, 2147483648
  %v2218 = vmul.f32 %v2217, 1.442695
  %v2219 = vpow.pop %v2218
  %v2220 = vadd.f32 %v2219, 1.0
  %v2221 = vrcp.pop %v2220
  %v2222 = vmul.f32 1.0, %v2221
  %v2223 = vmul.f32 %v2215, %v2049
  %v2224 = vmul.f32 %v2209, %v2216
  %v2225 = vadd.f32 %v2223, %v2224
  %v2226 = vtanh.pop %v2225
  %v2227 = vmul.f32 %v2222, %v2226
  %s2228 = scalar_lea.vmem %s2, 48
  %v2229 = vld [vmem:[%s2228] sm:$0xff]
  %vm2230 = vcmp.gt.f32.partialorder %v2229, 0.5
  %v2231 = vsel %vm2230, 1, 0
  %2232 = vset.pattern.permute.xlu0 0
  %2233 = vperm.xlu0 %2232, %v2231
  %v2234 = vpop.permute.xlu0 %2233
  %vm2235 = vcmp.eq.s32.totalorder %v2234, 1
  %v2236 = vsel %vm2235, %v2227, %v2048
  %v2237 = vsel %vm2235, %v2225, %v2049
  %v2238 = vsel %vm2235, %v2227, 0.0
  %s2239 = scalar_lea.vmem [#allocation4], 48
  %2240 = vst [vmem:[%s2239] sm:$0xff] %v2238
  %s2241 = scalar_lea.vmem [#allocation2], 224
  %v2242 = vld [vmem:[%s2241] sm:$0xff]
  %v2243 = vld [vmem:[%s2241 + $0x8] sm:$0xff]
  %v2244 = vld [vmem:[%s2241 + $0x10] sm:$0xff]
  %v2245 = vld [vmem:[%s2241 + $0x18] sm:$0xff]
  %2246 = vmatprep.subr.mxu0 %v770
  %2247 = vmatpush1.msra.mxu0 %v769
  %2248 = vmatprep.subr.mxu0 %v774
  %2249 = vmatpush1.msra.mxu0 %v773
  %2250 = vmatprep.subr.mxu0 %v778
  %2251 = vmatpush1.msra.mxu0 %v777
  %2252 = vmatprep.subr.mxu0 %v782
  %2253 = vmatpush1.msra.mxu0 %v781
  %2254 = vmatprep.subr.mxu0 %v786
  %2255 = vmatpush1.msra.mxu0 %v785
  %2256 = vmatprep.subr.mxu0 %v790
  %2257 = vmatpush1.msra.mxu0 %v789
  %2258 = vmatprep.subr.mxu0 %v794
  %2259 = vmatpush1.msra.mxu0 %v793
  %2260 = vmatprep.subr.mxu0 %v798
  %2261 = vmatpush1.msra.mxu0 %v797
  %2262 = vmatprep.subr.mxu0 %v802
  %2263 = vmatpush1.msra.mxu0 %v801
  %2264 = vmatprep.subr.mxu0 %v806
  %2265 = vmatpush1.msra.mxu0 %v805
  %2266 = vmatprep.subr.mxu0 %v810
  %2267 = vmatpush1.msra.mxu0 %v809
  %2268 = vmatprep.subr.mxu0 %v814
  %2269 = vmatpush1.msra.mxu0 %v813
  %2270 = vmatprep.subr.mxu0 %v818
  %2271 = vmatpush1.msra.mxu0 %v817
  %2272 = vmatprep.subr.mxu0 %v822
  %2273 = vmatpush1.msra.mxu0 %v821
  %2274 = vmatprep.subr.mxu0 %v826
  %2275 = vmatpush1.msra.mxu0 %v825
  %2276 = vmatprep.subr.mxu0 %v830
  %2277 = vmatpush1.msra.mxu0 %v829
  %2278 = vmatprep.subr.mxu0 0.0
  %2279 = vmatpush1.msra.mxu0 0.0
  %2280 = vmatprep.subr.mxu0 0.0
  %2281 = vmatpush1.msra.mxu0 0.0
  %2282 = vmatprep.subr.mxu0 0.0
  %2283 = vmatpush1.msra.mxu0 0.0
  %2284 = vmatprep.subr.mxu0 0.0
  %2285 = vmatpush1.msra.mxu0 0.0
  %2286 = vmatprep.subr.mxu0 0.0
  %2287 = vmatpush1.msra.mxu0 0.0
  %2288 = vmatprep.subr.mxu0 0.0
  %2289 = vmatpush1.msra.mxu0 0.0
  %2290 = vmatprep.subr.mxu0 0.0
  %2291 = vmatpush1.msra.mxu0 0.0
  %2292 = vmatprep.subr.mxu0 0.0
  %2293 = vmatpush1.msra.mxu0 0.0
  %2294 = vmatprep.subr.mxu0 0.0
  %2295 = vmatpush1.msra.mxu0 0.0
  %2296 = vmatprep.subr.mxu0 0.0
  %2297 = vmatpush1.msra.mxu0 0.0
  %2298 = vmatprep.subr.mxu0 0.0
  %2299 = vmatpush1.msra.mxu0 0.0
  %2300 = vmatprep.subr.mxu0 0.0
  %2301 = vmatpush1.msra.mxu0 0.0
  %2302 = vmatprep.subr.mxu0 0.0
  %2303 = vmatpush1.msra.mxu0 0.0
  %2304 = vmatprep.subr.mxu0 0.0
  %2305 = vmatpush1.msra.mxu0 0.0
  %2306 = vmatprep.subr.mxu0 0.0
  %2307 = vmatpush1.msra.mxu0 0.0
  %2308 = vmatprep.subr.mxu0 0.0
  %2309 = vmatpush1.msra.mxu0 0.0
  %2310 = vmatprep.mubr.f32.mxu0 0.0
  %2311 = vmatmul.mubr.f32.gmra.mrb[0].mxu0 %v2236
  %v2312 = vpop.f32.mrb[0].mxu0
  %v2313 = vadd.f32 0.0, %v2312
  %v2314 = vpop.f32.mrb[0].mxu0
  %v2315 = vadd.f32 0.0, %v2314
  %2316 = vdwg.mxu0
  %2317 = vmatprep.subr.mxu0 %v772
  %2318 = vmatpush1.msra.mxu0 %v771
  %2319 = vmatprep.subr.mxu0 %v776
  %2320 = vmatpush1.msra.mxu0 %v775
  %2321 = vmatprep.subr.mxu0 %v780
  %2322 = vmatpush1.msra.mxu0 %v779
  %2323 = vmatprep.subr.mxu0 %v784
  %2324 = vmatpush1.msra.mxu0 %v783
  %2325 = vmatprep.subr.mxu0 %v788
  %2326 = vmatpush1.msra.mxu0 %v787
  %2327 = vmatprep.subr.mxu0 %v792
  %2328 = vmatpush1.msra.mxu0 %v791
  %2329 = vmatprep.subr.mxu0 %v796
  %2330 = vmatpush1.msra.mxu0 %v795
  %2331 = vmatprep.subr.mxu0 %v800
  %2332 = vmatpush1.msra.mxu0 %v799
  %2333 = vmatprep.subr.mxu0 %v804
  %2334 = vmatpush1.msra.mxu0 %v803
  %2335 = vmatprep.subr.mxu0 %v808
  %2336 = vmatpush1.msra.mxu0 %v807
  %2337 = vmatprep.subr.mxu0 %v812
  %2338 = vmatpush1.msra.mxu0 %v811
  %2339 = vmatprep.subr.mxu0 %v816
  %2340 = vmatpush1.msra.mxu0 %v815
  %2341 = vmatprep.subr.mxu0 %v820
  %2342 = vmatpush1.msra.mxu0 %v819
  %2343 = vmatprep.subr.mxu0 %v824
  %2344 = vmatpush1.msra.mxu0 %v823
  %2345 = vmatprep.subr.mxu0 %v828
  %2346 = vmatpush1.msra.mxu0 %v827
  %2347 = vmatprep.subr.mxu0 %v832
  %2348 = vmatpush1.msra.mxu0 %v831
  %2349 = vmatprep.subr.mxu0 0.0
  %2350 = vmatpush1.msra.mxu0 0.0
  %2351 = vmatprep.subr.mxu0 0.0
  %2352 = vmatpush1.msra.mxu0 0.0
  %2353 = vmatprep.subr.mxu0 0.0
  %2354 = vmatpush1.msra.mxu0 0.0
  %2355 = vmatprep.subr.mxu0 0.0
  %2356 = vmatpush1.msra.mxu0 0.0
  %2357 = vmatprep.subr.mxu0 0.0
  %2358 = vmatpush1.msra.mxu0 0.0
  %2359 = vmatprep.subr.mxu0 0.0
  %2360 = vmatpush1.msra.mxu0 0.0
  %2361 = vmatprep.subr.mxu0 0.0
  %2362 = vmatpush1.msra.mxu0 0.0
  %2363 = vmatprep.subr.mxu0 0.0
  %2364 = vmatpush1.msra.mxu0 0.0
  %2365 = vmatprep.subr.mxu0 0.0
  %2366 = vmatpush1.msra.mxu0 0.0
  %2367 = vmatprep.subr.mxu0 0.0
  %2368 = vmatpush1.msra.mxu0 0.0
  %2369 = vmatprep.subr.mxu0 0.0
  %2370 = vmatpush1.msra.mxu0 0.0
  %2371 = vmatprep.subr.mxu0 0.0
  %2372 = vmatpush1.msra.mxu0 0.0
  %2373 = vmatprep.subr.mxu0 0.0
  %2374 = vmatpush1.msra.mxu0 0.0
  %2375 = vmatprep.subr.mxu0 0.0
  %2376 = vmatpush1.msra.mxu0 0.0
  %2377 = vmatprep.subr.mxu0 0.0
  %2378 = vmatpush1.msra.mxu0 0.0
  %2379 = vmatprep.subr.mxu0 0.0
  %2380 = vmatpush1.msra.mxu0 0.0
  %2381 = vmatprep.mubr.f32.mxu0 0.0
  %2382 = vmatmul.mubr.f32.gmra.mrb[0].mxu0 %v2236
  %v2383 = vpop.f32.mrb[0].mxu0
  %v2384 = vadd.f32 0.0, %v2383
  %v2385 = vpop.f32.mrb[0].mxu0
  %v2386 = vadd.f32 0.0, %v2385
  %2387 = vdwg.mxu0
  %v2388 = vadd.f32 %v2242, %v2313
  %v2389 = vadd.f32 %v2243, %v2315
  %v2390 = vadd.f32 %v2244, %v2384
  %v2391 = vadd.f32 %v2245, %v2386
  %v2392 = vxor.u32 %v2388, 2147483648
  %v2393 = vmul.f32 %v2392, 1.442695
  %v2394 = vpow.pop %v2393
  %v2395 = vadd.f32 %v2394, 1.0
  %v2396 = vrcp.pop %v2395
  %v2397 = vmul.f32 1.0, %v2396
  %v2398 = vxor.u32 %v2389, 2147483648
  %v2399 = vmul.f32 %v2398, 1.442695
  %v2400 = vpow.pop %v2399
  %v2401 = vadd.f32 %v2400, 1.0
  %v2402 = vrcp.pop %v2401
  %v2403 = vmul.f32 1.0, %v2402
  %v2404 = vtanh.pop %v2390
  %v2405 = vxor.u32 %v2391, 2147483648
  %v2406 = vmul.f32 %v2405, 1.442695
  %v2407 = vpow.pop %v2406
  %v2408 = vadd.f32 %v2407, 1.0
  %v2409 = vrcp.pop %v2408
  %v2410 = vmul.f32 1.0, %v2409
  %v2411 = vmul.f32 %v2403, %v2237
  %v2412 = vmul.f32 %v2397, %v2404
  %v2413 = vadd.f32 %v2411, %v2412
  %v2414 = vtanh.pop %v2413
  %v2415 = vmul.f32 %v2410, %v2414
  %s2416 = scalar_lea.vmem %s2, 56
  %v2417 = vld [vmem:[%s2416] sm:$0xff]
  %vm2418 = vcmp.gt.f32.partialorder %v2417, 0.5
  %v2419 = vsel %vm2418, 1, 0
  %2420 = vset.pattern.permute.xlu0 0
  %2421 = vperm.xlu0 %2420, %v2419
  %v2422 = vpop.permute.xlu0 %2421
  %vm2423 = vcmp.eq.s32.totalorder %v2422, 1
  %v2424 = vsel %vm2423, %v2415, %v2236
  %v2425 = vsel %vm2423, %v2413, %v2237
  %v2426 = vsel %vm2423, %v2415, 0.0
  %s2427 = scalar_lea.vmem [#allocation4], 56
  %2428 = vst [vmem:[%s2427] sm:$0xff] %v2426
  %v2429 = vld [vmem:[#allocation4] sm:$0xff]
  %v2430 = vld [vmem:[#allocation4 + $0x8] sm:$0xff]
  %v2431 = vld [vmem:[#allocation4 + $0x10] sm:$0xff]
  %v2432 = vld [vmem:[#allocation4 + $0x18] sm:$0xff]
  %v2433 = vld [vmem:[#allocation4 + $0x20] sm:$0xff]
  %v2434 = vld [vmem:[#allocation4 + $0x28] sm:$0xff]
  %v2435 = vld [vmem:[#allocation4 + $0x30] sm:$0xff]
  %v2436 = vld [vmem:[#allocation4 + $0x38] sm:$0xff]
  %v2437 = vld [vmem:[%s6] sm:$0xff]
  %v2438 = vld [vmem:[%s6 + $0x8] sm:$0xff]
  %v2439 = vld [vmem:[%s6 + $0x10] sm:$0xff]
  %v2440 = vld [vmem:[%s6 + $0x18] sm:$0xff]
  %v2441 = vld [vmem:[%s6 + $0x20] sm:$0xff]
  %v2442 = vld [vmem:[%s6 + $0x28] sm:$0xff]
  %v2443 = vld [vmem:[%s6 + $0x30] sm:$0xff]
  %v2444 = vld [vmem:[%s6 + $0x38] sm:$0xff]
  %v2445 = vld [vmem:[%s6 + $0x40] sm:$0xff]
  %v2446 = vld [vmem:[%s6 + $0x48] sm:$0xff]
  %v2447 = vld [vmem:[%s6 + $0x50] sm:$0xff]
  %v2448 = vld [vmem:[%s6 + $0x58] sm:$0xff]
  %v2449 = vld [vmem:[%s6 + $0x60] sm:$0xff]
  %v2450 = vld [vmem:[%s6 + $0x68] sm:$0xff]
  %v2451 = vld [vmem:[%s6 + $0x70] sm:$0xff]
  %v2452 = vld [vmem:[%s6 + $0x78] sm:$0xff]
  %v2453 = vld [vmem:[%s7] sm:$0x1]
  %v2455 = vlaneseq
  %v2456 = vshrl.u32 %v2455, 7
  %v2457 = vsub.s32 0, %v2456
  %v2458 = vrot.slane %v2453, %v2457
  %2460 = vmatprep.subr.mxu0 0.0
  %2461 = vmatpush1.msra.mxu0 %v2437
  %2462 = vmatprep.subr.mxu0 0.0
  %2463 = vmatpush1.msra.mxu0 %v2438
  %2464 = vmatprep.subr.mxu0 0.0
  %2465 = vmatpush1.msra.mxu0 %v2439
  %2466 = vmatprep.subr.mxu0 0.0
  %2467 = vmatpush1.msra.mxu0 %v2440
  %2468 = vmatprep.subr.mxu0 0.0
  %2469 = vmatpush1.msra.mxu0 %v2441
  %2470 = vmatprep.subr.mxu0 0.0
  %2471 = vmatpush1.msra.mxu0 %v2442
  %2472 = vmatprep.subr.mxu0 0.0
  %2473 = vmatpush1.msra.mxu0 %v2443
  %2474 = vmatprep.subr.mxu0 0.0
  %2475 = vmatpush1.msra.mxu0 %v2444
  %2476 = vmatprep.subr.mxu0 0.0
  %2477 = vmatpush1.msra.mxu0 %v2445
  %2478 = vmatprep.subr.mxu0 0.0
  %2479 = vmatpush1.msra.mxu0 %v2446
  %2480 = vmatprep.subr.mxu0 0.0
  %2481 = vmatpush1.msra.mxu0 %v2447
  %2482 = vmatprep.subr.mxu0 0.0
  %2483 = vmatpush1.msra.mxu0 %v2448
  %2484 = vmatprep.subr.mxu0 0.0
  %2485 = vmatpush1.msra.mxu0 %v2449
  %2486 = vmatprep.subr.mxu0 0.0
  %2487 = vmatpush1.msra.mxu0 %v2450
  %2488 = vmatprep.subr.mxu0 0.0
  %2489 = vmatpush1.msra.mxu0 %v2451
  %2490 = vmatprep.subr.mxu0 0.0
  %2491 = vmatpush1.msra.mxu0 %v2452
  %2492 = vmatprep.subr.mxu0 0.0
  %2493 = vmatpush1.msra.mxu0 0.0
  %2494 = vmatprep.subr.mxu0 0.0
  %2495 = vmatpush1.msra.mxu0 0.0
  %2496 = vmatprep.subr.mxu0 0.0
  %2497 = vmatpush1.msra.mxu0 0.0
  %2498 = vmatprep.subr.mxu0 0.0
  %2499 = vmatpush1.msra.mxu0 0.0
  %2500 = vmatprep.subr.mxu0 0.0
  %2501 = vmatpush1.msra.mxu0 0.0
  %2502 = vmatprep.subr.mxu0 0.0
  %2503 = vmatpush1.msra.mxu0 0.0
  %2504 = vmatprep.subr.mxu0 0.0
  %2505 = vmatpush1.msra.mxu0 0.0
  %2506 = vmatprep.subr.mxu0 0.0
  %2507 = vmatpush1.msra.mxu0 0.0
  %2508 = vmatprep.subr.mxu0 0.0
  %2509 = vmatpush1.msra.mxu0 0.0
  %2510 = vmatprep.subr.mxu0 0.0
  %2511 = vmatpush1.msra.mxu0 0.0
  %2512 = vmatprep.subr.mxu0 0.0
  %2513 = vmatpush1.msra.mxu0 0.0
  %2514 = vmatprep.subr.mxu0 0.0
  %2515 = vmatpush1.msra.mxu0 0.0
  %2516 = vmatprep.subr.mxu0 0.0
  %2517 = vmatpush1.msra.mxu0 0.0
  %2518 = vmatprep.subr.mxu0 0.0
  %2519 = vmatpush1.msra.mxu0 0.0
  %2520 = vmatprep.subr.mxu0 0.0
  %2521 = vmatpush1.msra.mxu0 0.0
  %2522 = vmatprep.subr.mxu0 0.0
  %2523 = vmatpush1.msra.mxu0 0.0
  %2524 = vmatprep.mubr.f32.mxu0 0.0
  %2525 = vmatmul.mubr.f32.gmra.mrb[0].mxu0 %v2429
  %v2526 = vpop.f32.mrb[0].mxu0
  %v2527 = vadd.f32 %v2458, %v2526
  %v2528 = vpop.f32.mrb[0].mxu0
  %2529 = vmatprep.mubr.f32.mxu0 0.0
  %2530 = vmatmul.mubr.f32.gmra.mrb[0].mxu0 %v2430
  %v2531 = vpop.f32.mrb[0].mxu0
  %v2532 = vadd.f32 %v2458, %v2531
  %v2533 = vpop.f32.mrb[0].mxu0
  %2534 = vmatprep.mubr.f32.mxu0 0.0
  %2535 = vmatmul.mubr.f32.gmra.mrb[0].mxu0 %v2431
  %v2536 = vpop.f32.mrb[0].mxu0
  %v2537 = vadd.f32 %v2458, %v2536
  %v2538 = vpop.f32.mrb[0].mxu0
  %2539 = vmatprep.mubr.f32.mxu0 0.0
  %2540 = vmatmul.mubr.f32.gmra.mrb[0].mxu0 %v2432
  %v2541 = vpop.f32.mrb[0].mxu0
  %v2542 = vadd.f32 %v2458, %v2541
  %v2543 = vpop.f32.mrb[0].mxu0
  %2544 = vmatprep.mubr.f32.mxu0 0.0
  %2545 = vmatmul.mubr.f32.gmra.mrb[0].mxu0 %v2433
  %v2546 = vpop.f32.mrb[0].mxu0
  %v2547 = vadd.f32 %v2458, %v2546
  %v2548 = vpop.f32.mrb[0].mxu0
  %2549 = vmatprep.mubr.f32.mxu0 0.0
  %2550 = vmatmul.mubr.f32.gmra.mrb[0].mxu0 %v2434
  %v2551 = vpop.f32.mrb[0].mxu0
  %v2552 = vadd.f32 %v2458, %v2551
  %v2553 = vpop.f32.mrb[0].mxu0
  %2554 = vmatprep.mubr.f32.mxu0 0.0
  %2555 = vmatmul.mubr.f32.gmra.mrb[0].mxu0 %v2435
  %v2556 = vpop.f32.mrb[0].mxu0
  %v2557 = vadd.f32 %v2458, %v2556
  %v2558 = vpop.f32.mrb[0].mxu0
  %2559 = vmatprep.mubr.f32.mxu0 0.0
  %2560 = vmatmul.mubr.f32.gmra.mrb[0].mxu0 %v2436
  %v2561 = vpop.f32.mrb[0].mxu0
  %v2562 = vadd.f32 %v2458, %v2561
  %v2563 = vpop.f32.mrb[0].mxu0
  %2564 = vdwg.mxu0
  %2565 = vst [vmem:[#allocation5] sm:$0xff] %v2527
  %2566 = vst [vmem:[#allocation5 + $0x8] sm:$0xff] %v2532
  %2567 = vst [vmem:[#allocation5 + $0x10] sm:$0xff] %v2537
  %2568 = vst [vmem:[#allocation5 + $0x18] sm:$0xff] %v2542
  %2569 = vst [vmem:[#allocation5 + $0x20] sm:$0xff] %v2547
  %2570 = vst [vmem:[#allocation5 + $0x28] sm:$0xff] %v2552
  %2571 = vst [vmem:[#allocation5 + $0x30] sm:$0xff] %v2557
  %2572 = vst [vmem:[#allocation5 + $0x38] sm:$0xff] %v2562
  %v2573 = vld [vmem:[%s15] sm:$0xff]
  %v2574 = vld [vmem:[%s15 + $0x8] sm:$0xff]
  %v2575 = vld [vmem:[%s15 + $0x10] sm:$0xff]
  %v2576 = vld [vmem:[%s15 + $0x18] sm:$0xff]
  %v2577 = vld [vmem:[%s15 + $0x20] sm:$0xff]
  %v2578 = vld [vmem:[%s15 + $0x28] sm:$0xff]
  %v2579 = vld [vmem:[%s15 + $0x30] sm:$0xff]
  %v2580 = vld [vmem:[%s15 + $0x38] sm:$0xff]
  %v2581 = vld [vmem:[%s15 + $0x40] sm:$0xff]
  %v2582 = vld [vmem:[%s15 + $0x48] sm:$0xff]
  %v2583 = vld [vmem:[%s15 + $0x50] sm:$0xff]
  %v2584 = vld [vmem:[%s15 + $0x58] sm:$0xff]
  %v2585 = vld [vmem:[%s15 + $0x60] sm:$0xff]
  %v2586 = vld [vmem:[%s15 + $0x68] sm:$0xff]
  %v2587 = vld [vmem:[%s15 + $0x70] sm:$0xff]
  %v2588 = vld [vmem:[%s15 + $0x78] sm:$0xff]
  %2589 = vmatprep.subr.mxu0 0.0
  %2590 = vmatpush1.msra.mxu0 %v2573
  %2591 = vmatprep.subr.mxu0 0.0
  %2592 = vmatpush1.msra.mxu0 %v2574
  %2593 = vmatprep.subr.mxu0 0.0
  %2594 = vmatpush1.msra.mxu0 %v2575
  %2595 = vmatprep.subr.mxu0 0.0
  %2596 = vmatpush1.msra.mxu0 %v2576
  %2597 = vmatprep.subr.mxu0 0.0
  %2598 = vmatpush1.msra.mxu0 %v2577
  %2599 = vmatprep.subr.mxu0 0.0
  %2600 = vmatpush1.msra.mxu0 %v2578
  %2601 = vmatprep.subr.mxu0 0.0
  %2602 = vmatpush1.msra.mxu0 %v2579
  %2603 = vmatprep.subr.mxu0 0.0
  %2604 = vmatpush1.msra.mxu0 %v2580
  %2605 = vmatprep.subr.mxu0 0.0
  %2606 = vmatpush1.msra.mxu0 %v2581
  %2607 = vmatprep.subr.mxu0 0.0
  %2608 = vmatpush1.msra.mxu0 %v2582
  %2609 = vmatprep.subr.mxu0 0.0
  %2610 = vmatpush1.msra.mxu0 %v2583
  %2611 = vmatprep.subr.mxu0 0.0
  %2612 = vmatpush1.msra.mxu0 %v2584
  %2613 = vmatprep.subr.mxu0 0.0
  %2614 = vmatpush1.msra.mxu0 %v2585
  %2615 = vmatprep.subr.mxu0 0.0
  %2616 = vmatpush1.msra.mxu0 %v2586
  %2617 = vmatprep.subr.mxu0 0.0
  %2618 = vmatpush1.msra.mxu0 %v2587
  %2619 = vmatprep.subr.mxu0 0.0
  %2620 = vmatpush1.msra.mxu0 %v2588
  %2621 = vmatprep.subr.mxu0 0.0
  %2622 = vmatpush1.msra.mxu0 0.0
  %2623 = vmatprep.subr.mxu0 0.0
  %2624 = vmatpush1.msra.mxu0 0.0
  %2625 = vmatprep.subr.mxu0 0.0
  %2626 = vmatpush1.msra.mxu0 0.0
  %2627 = vmatprep.subr.mxu0 0.0
  %2628 = vmatpush1.msra.mxu0 0.0
  %2629 = vmatprep.subr.mxu0 0.0
  %2630 = vmatpush1.msra.mxu0 0.0
  %2631 = vmatprep.subr.mxu0 0.0
  %2632 = vmatpush1.msra.mxu0 0.0
  %2633 = vmatprep.subr.mxu0 0.0
  %2634 = vmatpush1.msra.mxu0 0.0
  %2635 = vmatprep.subr.mxu0 0.0
  %2636 = vmatpush1.msra.mxu0 0.0
  %2637 = vmatprep.subr.mxu0 0.0
  %2638 = vmatpush1.msra.mxu0 0.0
  %2639 = vmatprep.subr.mxu0 0.0
  %2640 = vmatpush1.msra.mxu0 0.0
  %2641 = vmatprep.subr.mxu0 0.0
  %2642 = vmatpush1.msra.mxu0 0.0
  %2643 = vmatprep.subr.mxu0 0.0
  %2644 = vmatpush1.msra.mxu0 0.0
  %2645 = vmatprep.subr.mxu0 0.0
  %2646 = vmatpush1.msra.mxu0 0.0
  %2647 = vmatprep.subr.mxu0 0.0
  %2648 = vmatpush1.msra.mxu0 0.0
  %2649 = vmatprep.subr.mxu0 0.0
  %2650 = vmatpush1.msra.mxu0 0.0
  %2651 = vmatprep.subr.mxu0 0.0
  %2652 = vmatpush1.msra.mxu0 0.0
  %2653 = vmatprep.mubr.f32.mxu0 0.0
  %2654 = vmatmul.mubr.f32.gmra.mrb[0].mxu0 %v2527
  %v2655 = vpop.f32.mrb[0].mxu0
  %v2656 = vadd.f32 0.0, %v2655
  %v2657 = vpop.f32.mrb[0].mxu0
  %2658 = vmatprep.mubr.f32.mxu0 0.0
  %2659 = vmatmul.mubr.f32.gmra.mrb[0].mxu0 %v2532
  %v2660 = vpop.f32.mrb[0].mxu0
  %v2661 = vadd.f32 0.0, %v2660
  %v2662 = vpop.f32.mrb[0].mxu0
  %2663 = vmatprep.mubr.f32.mxu0 0.0
  %2664 = vmatmul.mubr.f32.gmra.mrb[0].mxu0 %v2537
  %v2665 = vpop.f32.mrb[0].mxu0
  %v2666 = vadd.f32 0.0, %v2665
  %v2667 = vpop.f32.mrb[0].mxu0
  %2668 = vmatprep.mubr.f32.mxu0 0.0
  %2669 = vmatmul.mubr.f32.gmra.mrb[0].mxu0 %v2542
  %v2670 = vpop.f32.mrb[0].mxu0
  %v2671 = vadd.f32 0.0, %v2670
  %v2672 = vpop.f32.mrb[0].mxu0
  %2673 = vmatprep.mubr.f32.mxu0 0.0
  %2674 = vmatmul.mubr.f32.gmra.mrb[0].mxu0 %v2547
  %v2675 = vpop.f32.mrb[0].mxu0
  %v2676 = vadd.f32 0.0, %v2675
  %v2677 = vpop.f32.mrb[0].mxu0
  %2678 = vmatprep.mubr.f32.mxu0 0.0
  %2679 = vmatmul.mubr.f32.gmra.mrb[0].mxu0 %v2552
  %v2680 = vpop.f32.mrb[0].mxu0
  %v2681 = vadd.f32 0.0, %v2680
  %v2682 = vpop.f32.mrb[0].mxu0
  %2683 = vmatprep.mubr.f32.mxu0 0.0
  %2684 = vmatmul.mubr.f32.gmra.mrb[0].mxu0 %v2557
  %v2685 = vpop.f32.mrb[0].mxu0
  %v2686 = vadd.f32 0.0, %v2685
  %v2687 = vpop.f32.mrb[0].mxu0
  %2688 = vmatprep.mubr.f32.mxu0 0.0
  %2689 = vmatmul.mubr.f32.gmra.mrb[0].mxu0 %v2562
  %v2690 = vpop.f32.mrb[0].mxu0
  %v2691 = vadd.f32 0.0, %v2690
  %v2692 = vpop.f32.mrb[0].mxu0
  %2693 = vdwg.mxu0
  %2694 = vst [vmem:[#allocation6] sm:$0xff] %v2656
  %2695 = vst [vmem:[#allocation6 + $0x8] sm:$0xff] %v2661
  %2696 = vst [vmem:[#allocation6 + $0x10] sm:$0xff] %v2666
  %2697 = vst [vmem:[#allocation6 + $0x18] sm:$0xff] %v2671
  %2698 = vst [vmem:[#allocation6 + $0x20] sm:$0xff] %v2676
  %2699 = vst [vmem:[#allocation6 + $0x28] sm:$0xff] %v2681
  %2700 = vst [vmem:[#allocation6 + $0x30] sm:$0xff] %v2686
  %2701 = vst [vmem:[#allocation6 + $0x38] sm:$0xff] %v2691
  %v2702 = vld [vmem:[%s8] sm:$0xff]
  %v2703 = vld [vmem:[%s8 + $0x8] sm:$0xff]
  %v2704 = vld [vmem:[%s8 + $0x10] sm:$0xff]
  %v2705 = vld [vmem:[%s8 + $0x18] sm:$0xff]
  %v2706 = vld [vmem:[%s8 + $0x20] sm:$0xff]
  %v2707 = vld [vmem:[%s8 + $0x28] sm:$0xff]
  %v2708 = vld [vmem:[%s8 + $0x30] sm:$0xff]
  %v2709 = vld [vmem:[%s8 + $0x38] sm:$0xff]
  %v2710 = vld [vmem:[%s8 + $0x40] sm:$0xff]
  %v2711 = vld [vmem:[%s8 + $0x48] sm:$0xff]
  %v2712 = vld [vmem:[%s8 + $0x50] sm:$0xff]
  %v2713 = vld [vmem:[%s8 + $0x58] sm:$0xff]
  %v2714 = vld [vmem:[%s8 + $0x60] sm:$0xff]
  %v2715 = vld [vmem:[%s8 + $0x68] sm:$0xff]
  %v2716 = vld [vmem:[%s8 + $0x70] sm:$0xff]
  %v2717 = vld [vmem:[%s8 + $0x78] sm:$0xff]
  %v2718 = vld [vmem:[%s9] sm:$0x1]
  %v2720 = vlaneseq
  %v2721 = vshrl.u32 %v2720, 7
  %v2722 = vsub.s32 0, %v2721
  %v2723 = vrot.slane %v2718, %v2722
  %2725 = vmatprep.subr.mxu0 0.0
  %2726 = vmatpush1.msra.mxu0 %v2702
  %2727 = vmatprep.subr.mxu0 0.0
  %2728 = vmatpush1.msra.mxu0 %v2703
  %2729 = vmatprep.subr.mxu0 0.0
  %2730 = vmatpush1.msra.mxu0 %v2704
  %2731 = vmatprep.subr.mxu0 0.0
  %2732 = vmatpush1.msra.mxu0 %v2705
  %2733 = vmatprep.subr.mxu0 0.0
  %2734 = vmatpush1.msra.mxu0 %v2706
  %2735 = vmatprep.subr.mxu0 0.0
  %2736 = vmatpush1.msra.mxu0 %v2707
  %2737 = vmatprep.subr.mxu0 0.0
  %2738 = vmatpush1.msra.mxu0 %v2708
  %2739 = vmatprep.subr.mxu0 0.0
  %2740 = vmatpush1.msra.mxu0 %v2709
  %2741 = vmatprep.subr.mxu0 0.0
  %2742 = vmatpush1.msra.mxu0 %v2710
  %2743 = vmatprep.subr.mxu0 0.0
  %2744 = vmatpush1.msra.mxu0 %v2711
  %2745 = vmatprep.subr.mxu0 0.0
  %2746 = vmatpush1.msra.mxu0 %v2712
  %2747 = vmatprep.subr.mxu0 0.0
  %2748 = vmatpush1.msra.mxu0 %v2713
  %2749 = vmatprep.subr.mxu0 0.0
  %2750 = vmatpush1.msra.mxu0 %v2714
  %2751 = vmatprep.subr.mxu0 0.0
  %2752 = vmatpush1.msra.mxu0 %v2715
  %2753 = vmatprep.subr.mxu0 0.0
  %2754 = vmatpush1.msra.mxu0 %v2716
  %2755 = vmatprep.subr.mxu0 0.0
  %2756 = vmatpush1.msra.mxu0 %v2717
  %2757 = vmatprep.subr.mxu0 0.0
  %2758 = vmatpush1.msra.mxu0 0.0
  %2759 = vmatprep.subr.mxu0 0.0
  %2760 = vmatpush1.msra.mxu0 0.0
  %2761 = vmatprep.subr.mxu0 0.0
  %2762 = vmatpush1.msra.mxu0 0.0
  %2763 = vmatprep.subr.mxu0 0.0
  %2764 = vmatpush1.msra.mxu0 0.0
  %2765 = vmatprep.subr.mxu0 0.0
  %2766 = vmatpush1.msra.mxu0 0.0
  %2767 = vmatprep.subr.mxu0 0.0
  %2768 = vmatpush1.msra.mxu0 0.0
  %2769 = vmatprep.subr.mxu0 0.0
  %2770 = vmatpush1.msra.mxu0 0.0
  %2771 = vmatprep.subr.mxu0 0.0
  %2772 = vmatpush1.msra.mxu0 0.0
  %2773 = vmatprep.subr.mxu0 0.0
  %2774 = vmatpush1.msra.mxu0 0.0
  %2775 = vmatprep.subr.mxu0 0.0
  %2776 = vmatpush1.msra.mxu0 0.0
  %2777 = vmatprep.subr.mxu0 0.0
  %2778 = vmatpush1.msra.mxu0 0.0
  %2779 = vmatprep.subr.mxu0 0.0
  %2780 = vmatpush1.msra.mxu0 0.0
  %2781 = vmatprep.subr.mxu0 0.0
  %2782 = vmatpush1.msra.mxu0 0.0
  %2783 = vmatprep.subr.mxu0 0.0
  %2784 = vmatpush1.msra.mxu0 0.0
  %2785 = vmatprep.subr.mxu0 0.0
  %2786 = vmatpush1.msra.mxu0 0.0
  %2787 = vmatprep.subr.mxu0 0.0
  %2788 = vmatpush1.msra.mxu0 0.0
  %2789 = vmatprep.mubr.f32.mxu0 0.0
  %2790 = vmatmul.mubr.f32.gmra.mrb[0].mxu0 %v2424
  %v2791 = vpop.f32.mrb[0].mxu0
  %v2792 = vadd.f32 %v2723, %v2791
  %v2793 = vpop.f32.mrb[0].mxu0
  %2794 = vdwg.mxu0
  %v2795 = vld [vmem:[%s10] sm:$0xff]
  %v2796 = vld [vmem:[%s10 + $0x8] sm:$0xff]
  %v2797 = vld [vmem:[%s10 + $0x10] sm:$0xff]
  %v2798 = vld [vmem:[%s10 + $0x18] sm:$0xff]
  %v2799 = vld [vmem:[%s10 + $0x20] sm:$0xff]
  %v2800 = vld [vmem:[%s10 + $0x28] sm:$0xff]
  %v2801 = vld [vmem:[%s10 + $0x30] sm:$0xff]
  %v2802 = vld [vmem:[%s10 + $0x38] sm:$0xff]
  %v2803 = vld [vmem:[%s10 + $0x40] sm:$0xff]
  %v2804 = vld [vmem:[%s10 + $0x48] sm:$0xff]
  %v2805 = vld [vmem:[%s10 + $0x50] sm:$0xff]
  %v2806 = vld [vmem:[%s10 + $0x58] sm:$0xff]
  %v2807 = vld [vmem:[%s10 + $0x60] sm:$0xff]
  %v2808 = vld [vmem:[%s10 + $0x68] sm:$0xff]
  %v2809 = vld [vmem:[%s10 + $0x70] sm:$0xff]
  %v2810 = vld [vmem:[%s10 + $0x78] sm:$0xff]
  %v2811 = vld [vmem:[%s11] sm:$0x1]
  %v2813 = vlaneseq
  %v2814 = vshrl.u32 %v2813, 7
  %v2815 = vsub.s32 0, %v2814
  %v2816 = vrot.slane %v2811, %v2815
  %2818 = vmatprep.subr.mxu0 0.0
  %2819 = vmatpush1.msra.mxu0 %v2795
  %2820 = vmatprep.subr.mxu0 0.0
  %2821 = vmatpush1.msra.mxu0 %v2796
  %2822 = vmatprep.subr.mxu0 0.0
  %2823 = vmatpush1.msra.mxu0 %v2797
  %2824 = vmatprep.subr.mxu0 0.0
  %2825 = vmatpush1.msra.mxu0 %v2798
  %2826 = vmatprep.subr.mxu0 0.0
  %2827 = vmatpush1.msra.mxu0 %v2799
  %2828 = vmatprep.subr.mxu0 0.0
  %2829 = vmatpush1.msra.mxu0 %v2800
  %2830 = vmatprep.subr.mxu0 0.0
  %2831 = vmatpush1.msra.mxu0 %v2801
  %2832 = vmatprep.subr.mxu0 0.0
  %2833 = vmatpush1.msra.mxu0 %v2802
  %2834 = vmatprep.subr.mxu0 0.0
  %2835 = vmatpush1.msra.mxu0 %v2803
  %2836 = vmatprep.subr.mxu0 0.0
  %2837 = vmatpush1.msra.mxu0 %v2804
  %2838 = vmatprep.subr.mxu0 0.0
  %2839 = vmatpush1.msra.mxu0 %v2805
  %2840 = vmatprep.subr.mxu0 0.0
  %2841 = vmatpush1.msra.mxu0 %v2806
  %2842 = vmatprep.subr.mxu0 0.0
  %2843 = vmatpush1.msra.mxu0 %v2807
  %2844 = vmatprep.subr.mxu0 0.0
  %2845 = vmatpush1.msra.mxu0 %v2808
  %2846 = vmatprep.subr.mxu0 0.0
  %2847 = vmatpush1.msra.mxu0 %v2809
  %2848 = vmatprep.subr.mxu0 0.0
  %2849 = vmatpush1.msra.mxu0 %v2810
  %2850 = vmatprep.subr.mxu0 0.0
  %2851 = vmatpush1.msra.mxu0 0.0
  %2852 = vmatprep.subr.mxu0 0.0
  %2853 = vmatpush1.msra.mxu0 0.0
  %2854 = vmatprep.subr.mxu0 0.0
  %2855 = vmatpush1.msra.mxu0 0.0
  %2856 = vmatprep.subr.mxu0 0.0
  %2857 = vmatpush1.msra.mxu0 0.0
  %2858 = vmatprep.subr.mxu0 0.0
  %2859 = vmatpush1.msra.mxu0 0.0
  %2860 = vmatprep.subr.mxu0 0.0
  %2861 = vmatpush1.msra.mxu0 0.0
  %2862 = vmatprep.subr.mxu0 0.0
  %2863 = vmatpush1.msra.mxu0 0.0
  %2864 = vmatprep.subr.mxu0 0.0
  %2865 = vmatpush1.msra.mxu0 0.0
  %2866 = vmatprep.subr.mxu0 0.0
  %2867 = vmatpush1.msra.mxu0 0.0
  %2868 = vmatprep.subr.mxu0 0.0
  %2869 = vmatpush1.msra.mxu0 0.0
  %2870 = vmatprep.subr.mxu0 0.0
  %2871 = vmatpush1.msra.mxu0 0.0
  %2872 = vmatprep.subr.mxu0 0.0
  %2873 = vmatpush1.msra.mxu0 0.0
  %2874 = vmatprep.subr.mxu0 0.0
  %2875 = vmatpush1.msra.mxu0 0.0
  %2876 = vmatprep.subr.mxu0 0.0
  %2877 = vmatpush1.msra.mxu0 0.0
  %2878 = vmatprep.subr.mxu0 0.0
  %2879 = vmatpush1.msra.mxu0 0.0
  %2880 = vmatprep.subr.mxu0 0.0
  %2881 = vmatpush1.msra.mxu0 0.0
  %2882 = vmatprep.mubr.f32.mxu0 0.0
  %2883 = vmatmul.mubr.f32.gmra.mrb[0].mxu0 %v2425
  %v2884 = vpop.f32.mrb[0].mxu0
  %v2885 = vadd.f32 %v2816, %v2884
  %v2886 = vpop.f32.mrb[0].mxu0
  %2887 = vdwg.mxu0
  %v2888 = vld [vmem:[%s2] sm:$0xff]
  %v2889 = vld [vmem:[%s2 + $0x8] sm:$0xff]
  %v2890 = vld [vmem:[%s2 + $0x10] sm:$0xff]
  %v2891 = vld [vmem:[%s2 + $0x18] sm:$0xff]
  %v2892 = vld [vmem:[%s2 + $0x20] sm:$0xff]
  %v2893 = vld [vmem:[%s2 + $0x28] sm:$0xff]
  %v2894 = vld [vmem:[%s2 + $0x30] sm:$0xff]
  %v2895 = vld [vmem:[%s2 + $0x38] sm:$0xff]
  %v2896 = vsub.f32 %v2888, 1.0
  %v2897 = vsub.f32 %v2889, 1.0
  %v2898 = vsub.f32 %v2890, 1.0
  %v2899 = vsub.f32 %v2891, 1.0
  %v2900 = vsub.f32 %v2892, 1.0
  %v2901 = vsub.f32 %v2893, 1.0
  %v2902 = vsub.f32 %v2894, 1.0
  %v2903 = vsub.f32 %v2895, 1.0
  %v2904 = vmul.f32 %v2896, 1e+30
  %v2905 = vmul.f32 %v2897, 1e+30
  %v2906 = vmul.f32 %v2898, 1e+30
  %v2907 = vmul.f32 %v2899, 1e+30
  %v2908 = vmul.f32 %v2900, 1e+30
  %v2909 = vmul.f32 %v2901, 1e+30
  %v2910 = vmul.f32 %v2902, 1e+30
  %v2911 = vmul.f32 %v2903, 1e+30
  %v2912 = vld [vmem:[#allocation3] sm:$0xff]
  %v2913 = vld [vmem:[#allocation3 + $0x8] sm:$0xff]
  %v2914 = vld [vmem:[#allocation3 + $0x10] sm:$0xff]
  %v2915 = vld [vmem:[#allocation3 + $0x18] sm:$0xff]
  %2916 = vmatprep.subr.mxu0 %v834
  %2917 = vmatpush1.msra.mxu0 %v833
  %2918 = vmatprep.subr.mxu0 %v838
  %2919 = vmatpush1.msra.mxu0 %v837
  %2920 = vmatprep.subr.mxu0 %v842
  %2921 = vmatpush1.msra.mxu0 %v841
  %2922 = vmatprep.subr.mxu0 %v846
  %2923 = vmatpush1.msra.mxu0 %v845
  %2924 = vmatprep.subr.mxu0 %v850
  %2925 = vmatpush1.msra.mxu0 %v849
  %2926 = vmatprep.subr.mxu0 %v854
  %2927 = vmatpush1.msra.mxu0 %v853
  %2928 = vmatprep.subr.mxu0 %v858
  %2929 = vmatpush1.msra.mxu0 %v857
  %2930 = vmatprep.subr.mxu0 %v862
  %2931 = vmatpush1.msra.mxu0 %v861
  %2932 = vmatprep.subr.mxu0 %v866
  %2933 = vmatpush1.msra.mxu0 %v865
  %2934 = vmatprep.subr.mxu0 %v870
  %2935 = vmatpush1.msra.mxu0 %v869
  %2936 = vmatprep.subr.mxu0 %v874
  %2937 = vmatpush1.msra.mxu0 %v873
  %2938 = vmatprep.subr.mxu0 %v878
  %2939 = vmatpush1.msra.mxu0 %v877
  %2940 = vmatprep.subr.mxu0 %v882
  %2941 = vmatpush1.msra.mxu0 %v881
  %2942 = vmatprep.subr.mxu0 %v886
  %2943 = vmatpush1.msra.mxu0 %v885
  %2944 = vmatprep.subr.mxu0 %v890
  %2945 = vmatpush1.msra.mxu0 %v889
  %2946 = vmatprep.subr.mxu0 %v894
  %2947 = vmatpush1.msra.mxu0 %v893
  %2948 = vmatprep.subr.mxu0 0.0
  %2949 = vmatpush1.msra.mxu0 0.0
  %2950 = vmatprep.subr.mxu0 0.0
  %2951 = vmatpush1.msra.mxu0 0.0
  %2952 = vmatprep.subr.mxu0 0.0
  %2953 = vmatpush1.msra.mxu0 0.0
  %2954 = vmatprep.subr.mxu0 0.0
  %2955 = vmatpush1.msra.mxu0 0.0
  %2956 = vmatprep.subr.mxu0 0.0
  %2957 = vmatpush1.msra.mxu0 0.0
  %2958 = vmatprep.subr.mxu0 0.0
  %2959 = vmatpush1.msra.mxu0 0.0
  %2960 = vmatprep.subr.mxu0 0.0
  %2961 = vmatpush1.msra.mxu0 0.0
  %2962 = vmatprep.subr.mxu0 0.0
  %2963 = vmatpush1.msra.mxu0 0.0
  %2964 = vmatprep.subr.mxu0 0.0
  %2965 = vmatpush1.msra.mxu0 0.0
  %2966 = vmatprep.subr.mxu0 0.0
  %2967 = vmatpush1.msra.mxu0 0.0
  %2968 = vmatprep.subr.mxu0 0.0
  %2969 = vmatpush1.msra.mxu0 0.0
  %2970 = vmatprep.subr.mxu0 0.0
  %2971 = vmatpush1.msra.mxu0 0.0
  %2972 = vmatprep.subr.mxu0 0.0
  %2973 = vmatpush1.msra.mxu0 0.0
  %2974 = vmatprep.subr.mxu0 0.0
  %2975 = vmatpush1.msra.mxu0 0.0
  %2976 = vmatprep.subr.mxu0 0.0
  %2977 = vmatpush1.msra.mxu0 0.0
  %2978 = vmatprep.subr.mxu0 0.0
  %2979 = vmatpush1.msra.mxu0 0.0
  %2980 = vmatprep.mubr.f32.mxu0 0.0
  %2981 = vmatmul.mubr.f32.gmra.mrb[0].mxu0 %v2792
  %v2982 = vpop.f32.mrb[0].mxu0
  %v2983 = vadd.f32 0.0, %v2982
  %v2984 = vpop.f32.mrb[0].mxu0
  %v2985 = vadd.f32 0.0, %v2984
  %2986 = vdwg.mxu0
  %2987 = vmatprep.subr.mxu0 %v836
  %2988 = vmatpush1.msra.mxu0 %v835
  %2989 = vmatprep.subr.mxu0 %v840
  %2990 = vmatpush1.msra.mxu0 %v839
  %2991 = vmatprep.subr.mxu0 %v844
  %2992 = vmatpush1.msra.mxu0 %v843
  %2993 = vmatprep.subr.mxu0 %v848
  %2994 = vmatpush1.msra.mxu0 %v847
  %2995 = vmatprep.subr.mxu0 %v852
  %2996 = vmatpush1.msra.mxu0 %v851
  %2997 = vmatprep.subr.mxu0 %v856
  %2998 = vmatpush1.msra.mxu0 %v855
  %2999 = vmatprep.subr.mxu0 %v860
  %3000 = vmatpush1.msra.mxu0 %v859
  %3001 = vmatprep.subr.mxu0 %v864
  %3002 = vmatpush1.msra.mxu0 %v863
  %3003 = vmatprep.subr.mxu0 %v868
  %3004 = vmatpush1.msra.mxu0 %v867
  %3005 = vmatprep.subr.mxu0 %v872
  %3006 = vmatpush1.msra.mxu0 %v871
  %3007 = vmatprep.subr.mxu0 %v876
  %3008 = vmatpush1.msra.mxu0 %v875
  %3009 = vmatprep.subr.mxu0 %v880
  %3010 = vmatpush1.msra.mxu0 %v879
  %3011 = vmatprep.subr.mxu0 %v884
  %3012 = vmatpush1.msra.mxu0 %v883
  %3013 = vmatprep.subr.mxu0 %v888
  %3014 = vmatpush1.msra.mxu0 %v887
  %3015 = vmatprep.subr.mxu0 %v892
  %3016 = vmatpush1.msra.mxu0 %v891
  %3017 = vmatprep.subr.mxu0 %v896
  %3018 = vmatpush1.msra.mxu0 %v895
  %3019 = vmatprep.subr.mxu0 0.0
  %3020 = vmatpush1.msra.mxu0 0.0
  %3021 = vmatprep.subr.mxu0 0.0
  %3022 = vmatpush1.msra.mxu0 0.0
  %3023 = vmatprep.subr.mxu0 0.0
  %3024 = vmatpush1.msra.mxu0 0.0
  %3025 = vmatprep.subr.mxu0 0.0
  %3026 = vmatpush1.msra.mxu0 0.0
  %3027 = vmatprep.subr.mxu0 0.0
  %3028 = vmatpush1.msra.mxu0 0.0
  %3029 = vmatprep.subr.mxu0 0.0
  %3030 = vmatpush1.msra.mxu0 0.0
  %3031 = vmatprep.subr.mxu0 0.0
  %3032 = vmatpush1.msra.mxu0 0.0
  %3033 = vmatprep.subr.mxu0 0.0
  %3034 = vmatpush1.msra.mxu0 0.0
  %3035 = vmatprep.subr.mxu0 0.0
  %3036 = vmatpush1.msra.mxu0 0.0
  %3037 = vmatprep.subr.mxu0 0.0
  %3038 = vmatpush1.msra.mxu0 0.0
  %3039 = vmatprep.subr.mxu0 0.0
  %3040 = vmatpush1.msra.mxu0 0.0
  %3041 = vmatprep.subr.mxu0 0.0
  %3042 = vmatpush1.msra.mxu0 0.0
  %3043 = vmatprep.subr.mxu0 0.0
  %3044 = vmatpush1.msra.mxu0 0.0
  %3045 = vmatprep.subr.mxu0 0.0
  %3046 = vmatpush1.msra.mxu0 0.0
  %3047 = vmatprep.subr.mxu0 0.0
  %3048 = vmatpush1.msra.mxu0 0.0
  %3049 = vmatprep.subr.mxu0 0.0
  %3050 = vmatpush1.msra.mxu0 0.0
  %3051 = vmatprep.mubr.f32.mxu0 0.0
  %3052 = vmatmul.mubr.f32.gmra.mrb[0].mxu0 %v2792
  %v3053 = vpop.f32.mrb[0].mxu0
  %v3054 = vadd.f32 0.0, %v3053
  %v3055 = vpop.f32.mrb[0].mxu0
  %v3056 = vadd.f32 0.0, %v3055
  %3057 = vdwg.mxu0
  %v3058 = vadd.f32 %v2912, %v2983
  %v3059 = vadd.f32 %v2913, %v2985
  %v3060 = vadd.f32 %v2914, %v3054
  %v3061 = vadd.f32 %v2915, %v3056
  %v3062 = vxor.u32 %v3058, 2147483648
  %v3063 = vmul.f32 %v3062, 1.442695
  %v3064 = vpow.pop %v3063
  %v3065 = vadd.f32 %v3064, 1.0
  %v3066 = vrcp.pop %v3065
  %v3067 = vmul.f32 1.0, %v3066
  %v3068 = vxor.u32 %v3059, 2147483648
  %v3069 = vmul.f32 %v3068, 1.442695
  %v3070 = vpow.pop %v3069
  %v3071 = vadd.f32 %v3070, 1.0
  %v3072 = vrcp.pop %v3071
  %v3073 = vmul.f32 1.0, %v3072
  %v3074 = vtanh.pop %v3060
  %v3075 = vxor.u32 %v3061, 2147483648
  %v3076 = vmul.f32 %v3075, 1.442695
  %v3077 = vpow.pop %v3076
  %v3078 = vadd.f32 %v3077, 1.0
  %v3079 = vrcp.pop %v3078
  %v3080 = vmul.f32 1.0, %v3079
  %v3081 = vmul.f32 %v3073, %v2885
  %v3082 = vmul.f32 %v3067, %v3074
  %v3083 = vadd.f32 %v3081, %v3082
  %v3084 = vtanh.pop %v3083
  %v3085 = vmul.f32 %v3080, %v3084
  %v3086 = vld [vmem:[#allocation6] sm:$0xff]
  %v3087 = vld [vmem:[#allocation6 + $0x8] sm:$0xff]
  %v3088 = vld [vmem:[#allocation6 + $0x10] sm:$0xff]
  %v3089 = vld [vmem:[#allocation6 + $0x18] sm:$0xff]
  %v3090 = vld [vmem:[#allocation6 + $0x20] sm:$0xff]
  %v3091 = vld [vmem:[#allocation6 + $0x28] sm:$0xff]
  %v3092 = vld [vmem:[#allocation6 + $0x30] sm:$0xff]
  %v3093 = vld [vmem:[#allocation6 + $0x38] sm:$0xff]
  %v3094 = vmul.f32 %v3086, %v3085
  %v3095 = vmul.f32 %v3087, %v3085
  %v3096 = vmul.f32 %v3088, %v3085
  %v3097 = vmul.f32 %v3089, %v3085
  %v3098 = vmul.f32 %v3090, %v3085
  %v3099 = vmul.f32 %v3091, %v3085
  %v3100 = vmul.f32 %v3092, %v3085
  %v3101 = vmul.f32 %v3093, %v3085
  %3102 = vadd.xlane.f32.xlu0 %v3094
  %v3103 = vpop.xlane.xlu0 %3102
  %3104 = vadd.xlane.f32.xlu0 %v3095
  %v3105 = vpop.xlane.xlu0 %3104
  %3106 = vadd.xlane.f32.xlu0 %v3096
  %v3107 = vpop.xlane.xlu0 %3106
  %3108 = vadd.xlane.f32.xlu0 %v3097
  %v3109 = vpop.xlane.xlu0 %3108
  %3110 = vadd.xlane.f32.xlu0 %v3098
  %v3111 = vpop.xlane.xlu0 %3110
  %3112 = vadd.xlane.f32.xlu0 %v3099
  %v3113 = vpop.xlane.xlu0 %3112
  %3114 = vadd.xlane.f32.xlu0 %v3100
  %v3115 = vpop.xlane.xlu0 %3114
  %3116 = vadd.xlane.f32.xlu0 %v3101
  %v3117 = vpop.xlane.xlu0 %3116
  %v3118 = vadd.f32 %v3103, %v2904
  %v3119 = vadd.f32 %v3105, %v2905
  %v3120 = vadd.f32 %v3107, %v2906
  %v3121 = vadd.f32 %v3109, %v2907
  %v3122 = vadd.f32 %v3111, %v2908
  %v3123 = vadd.f32 %v3113, %v2909
  %v3124 = vadd.f32 %v3115, %v2910
  %v3125 = vadd.f32 %v3117, %v2911
  %vm3126 = vcmask 7168
  %v3127 = vsel %vm3126, %v3118, -inf
  %v3128 = vsel %vm3126, %v3119, -inf
  %v3129 = vsel %vm3126, %v3120, -inf
  %v3130 = vsel %vm3126, %v3121, -inf
  %v3131 = vsel %vm3126, %v3122, -inf
  %v3132 = vmax.f32 %v3127, %v3131
  %v3133 = vsel %vm3126, %v3123, -inf
  %v3134 = vmax.f32 %v3128, %v3133
  %v3135 = vsel %vm3126, %v3124, -inf
  %v3136 = vmax.f32 %v3129, %v3135
  %v3137 = vsel %vm3126, %v3125, -inf
  %v3138 = vmax.f32 %v3130, %v3137
  %v3139 = vmax.f32 %v3132, %v3134
  %v3140 = vmax.f32 %v3136, %v3138
  %v3141 = vmax.f32 %v3139, %v3140
  %v3142 = vsub.f32 %v3118, %v3141
  %v3143 = vsub.f32 %v3119, %v3141
  %v3144 = vsub.f32 %v3120, %v3141
  %v3145 = vsub.f32 %v3121, %v3141
  %v3146 = vsub.f32 %v3122, %v3141
  %v3147 = vsub.f32 %v3123, %v3141
  %v3148 = vsub.f32 %v3124, %v3141
  %v3149 = vsub.f32 %v3125, %v3141
  %v3150 = vmul.f32 %v3142, 1.442695
  %v3151 = vpow.pop %v3150
  %v3152 = vmul.f32 %v3143, 1.442695
  %v3153 = vpow.pop %v3152
  %v3154 = vmul.f32 %v3144, 1.442695
  %v3155 = vpow.pop %v3154
  %v3156 = vmul.f32 %v3145, 1.442695
  %v3157 = vpow.pop %v3156
  %v3158 = vmul.f32 %v3146, 1.442695
  %v3159 = vpow.pop %v3158
  %v3160 = vmul.f32 %v3147, 1.442695
  %v3161 = vpow.pop %v3160
  %v3162 = vmul.f32 %v3148, 1.442695
  %v3163 = vpow.pop %v3162
  %v3164 = vmul.f32 %v3149, 1.442695
  %v3165 = vpow.pop %v3164
  %v3166 = vsel %vm3126, %v3151, 0.0
  %v3167 = vsel %vm3126, %v3153, 0.0
  %v3168 = vadd.f32 %v3166, %v3167
  %v3169 = vsel %vm3126, %v3155, 0.0
  %v3170 = vadd.f32 %v3168, %v3169
  %v3171 = vsel %vm3126, %v3157, 0.0
  %v3172 = vadd.f32 %v3170, %v3171
  %v3173 = vsel %vm3126, %v3159, 0.0
  %v3174 = vadd.f32 %v3172, %v3173
  %v3175 = vsel %vm3126, %v3161, 0.0
  %v3176 = vadd.f32 %v3174, %v3175
  %v3177 = vsel %vm3126, %v3163, 0.0
  %v3178 = vadd.f32 %v3176, %v3177
  %v3179 = vsel %vm3126, %v3165, 0.0
  %v3180 = vadd.f32 %v3178, %v3179
  %v3181 = vrcp.pop %v3180
  %v3182 = vmul.f32 %v3151, %v3181
  %v3183 = vmul.f32 %v3153, %v3181
  %v3184 = vmul.f32 %v3155, %v3181
  %v3185 = vmul.f32 %v3157, %v3181
  %v3186 = vmul.f32 %v3159, %v3181
  %v3187 = vmul.f32 %v3161, %v3181
  %v3188 = vmul.f32 %v3163, %v3181
  %v3189 = vmul.f32 %v3165, %v3181
  %v3190 = vld [vmem:[#allocation5] sm:$0xff]
  %v3191 = vld [vmem:[#allocation5 + $0x8] sm:$0xff]
  %v3192 = vld [vmem:[#allocation5 + $0x10] sm:$0xff]
  %v3193 = vld [vmem:[#allocation5 + $0x18] sm:$0xff]
  %v3194 = vld [vmem:[#allocation5 + $0x20] sm:$0xff]
  %v3195 = vld [vmem:[#allocation5 + $0x28] sm:$0xff]
  %v3196 = vld [vmem:[#allocation5 + $0x30] sm:$0xff]
  %v3197 = vld [vmem:[#allocation5 + $0x38] sm:$0xff]
  %3199 = vset.pattern.permute.xlu0 0
  %3200 = vperm.xlu0 %3199, %v3182
  %v3201 = vpop.permute.xlu0 %3200
  %3204 = vset.pattern.permute.xlu0 0
  %3205 = vperm.xlu0 %3204, %v3183
  %v3206 = vpop.permute.xlu0 %3205
  %3209 = vset.pattern.permute.xlu0 0
  %3210 = vperm.xlu0 %3209, %v3184
  %v3211 = vpop.permute.xlu0 %3210
  %3214 = vset.pattern.permute.xlu0 0
  %3215 = vperm.xlu0 %3214, %v3185
  %v3216 = vpop.permute.xlu0 %3215
  %3219 = vset.pattern.permute.xlu0 0
  %3220 = vperm.xlu0 %3219, %v3186
  %v3221 = vpop.permute.xlu0 %3220
  %3224 = vset.pattern.permute.xlu0 0
  %3225 = vperm.xlu0 %3224, %v3187
  %v3226 = vpop.permute.xlu0 %3225
  %3229 = vset.pattern.permute.xlu0 0
  %3230 = vperm.xlu0 %3229, %v3188
  %v3231 = vpop.permute.xlu0 %3230
  %3234 = vset.pattern.permute.xlu0 0
  %3235 = vperm.xlu0 %3234, %v3189
  %v3236 = vpop.permute.xlu0 %3235
  %v3238 = vmul.f32 %v3201, %v3190
  %v3239 = vmul.f32 %v3206, %v3191
  %v3240 = vmul.f32 %v3211, %v3192
  %v3241 = vmul.f32 %v3216, %v3193
  %v3242 = vmul.f32 %v3221, %v3194
  %v3243 = vmul.f32 %v3226, %v3195
  %v3244 = vmul.f32 %v3231, %v3196
  %v3245 = vmul.f32 %v3236, %v3197
  %v3246 = vadd.f32 %v3238, %v3239
  %v3247 = vadd.f32 %v3246, %v3240
  %v3248 = vadd.f32 %v3247, %v3241
  %v3249 = vadd.f32 %v3248, %v3242
  %v3250 = vadd.f32 %v3249, %v3243
  %v3251 = vadd.f32 %v3250, %v3244
  %v3252 = vadd.f32 %v3251, %v3245
  %3253 = vmatprep.subr.mxu0 0.0
  %3254 = vmatpush1.msra.mxu0 %v913
  %3255 = vmatprep.subr.mxu0 0.0
  %3256 = vmatpush1.msra.mxu0 %v914
  %3257 = vmatprep.subr.mxu0 0.0
  %3258 = vmatpush1.msra.mxu0 %v915
  %3259 = vmatprep.subr.mxu0 0.0
  %3260 = vmatpush1.msra.mxu0 %v916
  %3261 = vmatprep.subr.mxu0 0.0
  %3262 = vmatpush1.msra.mxu0 %v917
  %3263 = vmatprep.subr.mxu0 0.0
  %3264 = vmatpush1.msra.mxu0 %v918
  %3265 = vmatprep.subr.mxu0 0.0
  %3266 = vmatpush1.msra.mxu0 %v919
  %3267 = vmatprep.subr.mxu0 0.0
  %3268 = vmatpush1.msra.mxu0 %v920
  %3269 = vmatprep.subr.mxu0 0.0
  %3270 = vmatpush1.msra.mxu0 %v921
  %3271 = vmatprep.subr.mxu0 0.0
  %3272 = vmatpush1.msra.mxu0 %v922
  %3273 = vmatprep.subr.mxu0 0.0
  %3274 = vmatpush1.msra.mxu0 %v923
  %3275 = vmatprep.subr.mxu0 0.0
  %3276 = vmatpush1.msra.mxu0 %v924
  %3277 = vmatprep.subr.mxu0 0.0
  %3278 = vmatpush1.msra.mxu0 %v925
  %3279 = vmatprep.subr.mxu0 0.0
  %3280 = vmatpush1.msra.mxu0 %v926
  %3281 = vmatprep.subr.mxu0 0.0
  %3282 = vmatpush1.msra.mxu0 %v927
  %3283 = vmatprep.subr.mxu0 0.0
  %3284 = vmatpush1.msra.mxu0 %v928
  %3285 = vmatprep.subr.mxu0 0.0
  %3286 = vmatpush1.msra.mxu0 0.0
  %3287 = vmatprep.subr.mxu0 0.0
  %3288 = vmatpush1.msra.mxu0 0.0
  %3289 = vmatprep.subr.mxu0 0.0
  %3290 = vmatpush1.msra.mxu0 0.0
  %3291 = vmatprep.subr.mxu0 0.0
  %3292 = vmatpush1.msra.mxu0 0.0
  %3293 = vmatprep.subr.mxu0 0.0
  %3294 = vmatpush1.msra.mxu0 0.0
  %3295 = vmatprep.subr.mxu0 0.0
  %3296 = vmatpush1.msra.mxu0 0.0
  %3297 = vmatprep.subr.mxu0 0.0
  %3298 = vmatpush1.msra.mxu0 0.0
  %3299 = vmatprep.subr.mxu0 0.0
  %3300 = vmatpush1.msra.mxu0 0.0
  %3301 = vmatprep.subr.mxu0 0.0
  %3302 = vmatpush1.msra.mxu0 0.0
  %3303 = vmatprep.subr.mxu0 0.0
  %3304 = vmatpush1.msra.mxu0 0.0
  %3305 = vmatprep.subr.mxu0 0.0
  %3306 = vmatpush1.msra.mxu0 0.0
  %3307 = vmatprep.subr.mxu0 0.0
  %3308 = vmatpush1.msra.mxu0 0.0
  %3309 = vmatprep.subr.mxu0 0.0
  %3310 = vmatpush1.msra.mxu0 0.0
  %3311 = vmatprep.subr.mxu0 0.0
  %3312 = vmatpush1.msra.mxu0 0.0
  %3313 = vmatprep.subr.mxu0 0.0
  %3314 = vmatpush1.msra.mxu0 0.0
  %3315 = vmatprep.subr.mxu0 0.0
  %3316 = vmatpush1.msra.mxu0 0.0
  %3317 = vmatprep.mubr.f32.mxu0 0.0
  %3318 = vmatmul.mubr.f32.gmra.mrb[0].mxu0 %v3085
  %v3319 = vpop.f32.mrb[0].mxu0
  %v3320 = vadd.f32 0.0, %v3319
  %v3321 = vpop.f32.mrb[0].mxu0
  %3322 = vdwg.mxu0
  %3323 = vmatprep.subr.mxu0 0.0
  %3324 = vmatpush1.msra.mxu0 %v897
  %3325 = vmatprep.subr.mxu0 0.0
  %3326 = vmatpush1.msra.mxu0 %v898
  %3327 = vmatprep.subr.mxu0 0.0
  %3328 = vmatpush1.msra.mxu0 %v899
  %3329 = vmatprep.subr.mxu0 0.0
  %3330 = vmatpush1.msra.mxu0 %v900
  %3331 = vmatprep.subr.mxu0 0.0
  %3332 = vmatpush1.msra.mxu0 %v901
  %3333 = vmatprep.subr.mxu0 0.0
  %3334 = vmatpush1.msra.mxu0 %v902
  %3335 = vmatprep.subr.mxu0 0.0
  %3336 = vmatpush1.msra.mxu0 %v903
  %3337 = vmatprep.subr.mxu0 0.0
  %3338 = vmatpush1.msra.mxu0 %v904
  %3339 = vmatprep.subr.mxu0 0.0
  %3340 = vmatpush1.msra.mxu0 %v905
  %3341 = vmatprep.subr.mxu0 0.0
  %3342 = vmatpush1.msra.mxu0 %v906
  %3343 = vmatprep.subr.mxu0 0.0
  %3344 = vmatpush1.msra.mxu0 %v907
  %3345 = vmatprep.subr.mxu0 0.0
  %3346 = vmatpush1.msra.mxu0 %v908
  %3347 = vmatprep.subr.mxu0 0.0
  %3348 = vmatpush1.msra.mxu0 %v909
  %3349 = vmatprep.subr.mxu0 0.0
  %3350 = vmatpush1.msra.mxu0 %v910
  %3351 = vmatprep.subr.mxu0 0.0
  %3352 = vmatpush1.msra.mxu0 %v911
  %3353 = vmatprep.subr.mxu0 0.0
  %3354 = vmatpush1.msra.mxu0 %v912
  %3355 = vmatprep.subr.mxu0 0.0
  %3356 = vmatpush1.msra.mxu0 0.0
  %3357 = vmatprep.subr.mxu0 0.0
  %3358 = vmatpush1.msra.mxu0 0.0
  %3359 = vmatprep.subr.mxu0 0.0
  %3360 = vmatpush1.msra.mxu0 0.0
  %3361 = vmatprep.subr.mxu0 0.0
  %3362 = vmatpush1.msra.mxu0 0.0
  %3363 = vmatprep.subr.mxu0 0.0
  %3364 = vmatpush1.msra.mxu0 0.0
  %3365 = vmatprep.subr.mxu0 0.0
  %3366 = vmatpush1.msra.mxu0 0.0
  %3367 = vmatprep.subr.mxu0 0.0
  %3368 = vmatpush1.msra.mxu0 0.0
  %3369 = vmatprep.subr.mxu0 0.0
  %3370 = vmatpush1.msra.mxu0 0.0
  %3371 = vmatprep.subr.mxu0 0.0
  %3372 = vmatpush1.msra.mxu0 0.0
  %3373 = vmatprep.subr.mxu0 0.0
  %3374 = vmatpush1.msra.mxu0 0.0
  %3375 = vmatprep.subr.mxu0 0.0
  %3376 = vmatpush1.msra.mxu0 0.0
  %3377 = vmatprep.subr.mxu0 0.0
  %3378 = vmatpush1.msra.mxu0 0.0
  %3379 = vmatprep.subr.mxu0 0.0
  %3380 = vmatpush1.msra.mxu0 0.0
  %3381 = vmatprep.subr.mxu0 0.0
  %3382 = vmatpush1.msra.mxu0 0.0
  %3383 = vmatprep.subr.mxu0 0.0
  %3384 = vmatpush1.msra.mxu0 0.0
  %3385 = vmatprep.subr.mxu0 0.0
  %3386 = vmatpush1.msra.mxu0 0.0
  %3387 = vmatprep.mubr.f32.mxu0 0.0
  %3388 = vmatmul.mubr.f32.gmra.mrb[0].mxu0 %v3252
  %v3389 = vpop.f32.mrb[0].mxu0
  %v3390 = vadd.f32 %v3320, %v3389
  %v3391 = vpop.f32.mrb[0].mxu0
  %3392 = vdwg.mxu0
  %v3393 = vtanh.pop %v3390
  %3394 = vst [vmem:[#allocation7] sm:$0xff] %v3393
  %s3395 = scalar_lea.vmem [#allocation3], 32
  %v3396 = vld [vmem:[%s3395] sm:$0xff]
  %v3397 = vld [vmem:[%s3395 + $0x8] sm:$0xff]
  %v3398 = vld [vmem:[%s3395 + $0x10] sm:$0xff]
  %v3399 = vld [vmem:[%s3395 + $0x18] sm:$0xff]
  %3400 = vmatprep.subr.mxu0 %v834
  %3401 = vmatpush1.msra.mxu0 %v833
  %3402 = vmatprep.subr.mxu0 %v838
  %3403 = vmatpush1.msra.mxu0 %v837
  %3404 = vmatprep.subr.mxu0 %v842
  %3405 = vmatpush1.msra.mxu0 %v841
  %3406 = vmatprep.subr.mxu0 %v846
  %3407 = vmatpush1.msra.mxu0 %v845
  %3408 = vmatprep.subr.mxu0 %v850
  %3409 = vmatpush1.msra.mxu0 %v849
  %3410 = vmatprep.subr.mxu0 %v854
  %3411 = vmatpush1.msra.mxu0 %v853
  %3412 = vmatprep.subr.mxu0 %v858
  %3413 = vmatpush1.msra.mxu0 %v857
  %3414 = vmatprep.subr.mxu0 %v862
  %3415 = vmatpush1.msra.mxu0 %v861
  %3416 = vmatprep.subr.mxu0 %v866
  %3417 = vmatpush1.msra.mxu0 %v865
  %3418 = vmatprep.subr.mxu0 %v870
  %3419 = vmatpush1.msra.mxu0 %v869
  %3420 = vmatprep.subr.mxu0 %v874
  %3421 = vmatpush1.msra.mxu0 %v873
  %3422 = vmatprep.subr.mxu0 %v878
  %3423 = vmatpush1.msra.mxu0 %v877
  %3424 = vmatprep.subr.mxu0 %v882
  %3425 = vmatpush1.msra.mxu0 %v881
  %3426 = vmatprep.subr.mxu0 %v886
  %3427 = vmatpush1.msra.mxu0 %v885
  %3428 = vmatprep.subr.mxu0 %v890
  %3429 = vmatpush1.msra.mxu0 %v889
  %3430 = vmatprep.subr.mxu0 %v894
  %3431 = vmatpush1.msra.mxu0 %v893
  %3432 = vmatprep.subr.mxu0 0.0
  %3433 = vmatpush1.msra.mxu0 0.0
  %3434 = vmatprep.subr.mxu0 0.0
  %3435 = vmatpush1.msra.mxu0 0.0
  %3436 = vmatprep.subr.mxu0 0.0
  %3437 = vmatpush1.msra.mxu0 0.0
  %3438 = vmatprep.subr.mxu0 0.0
  %3439 = vmatpush1.msra.mxu0 0.0
  %3440 = vmatprep.subr.mxu0 0.0
  %3441 = vmatpush1.msra.mxu0 0.0
  %3442 = vmatprep.subr.mxu0 0.0
  %3443 = vmatpush1.msra.mxu0 0.0
  %3444 = vmatprep.subr.mxu0 0.0
  %3445 = vmatpush1.msra.mxu0 0.0
  %3446 = vmatprep.subr.mxu0 0.0
  %3447 = vmatpush1.msra.mxu0 0.0
  %3448 = vmatprep.subr.mxu0 0.0
  %3449 = vmatpush1.msra.mxu0 0.0
  %3450 = vmatprep.subr.mxu0 0.0
  %3451 = vmatpush1.msra.mxu0 0.0
  %3452 = vmatprep.subr.mxu0 0.0
  %3453 = vmatpush1.msra.mxu0 0.0
  %3454 = vmatprep.subr.mxu0 0.0
  %3455 = vmatpush1.msra.mxu0 0.0
  %3456 = vmatprep.subr.mxu0 0.0
  %3457 = vmatpush1.msra.mxu0 0.0
  %3458 = vmatprep.subr.mxu0 0.0
  %3459 = vmatpush1.msra.mxu0 0.0
  %3460 = vmatprep.subr.mxu0 0.0
  %3461 = vmatpush1.msra.mxu0 0.0
  %3462 = vmatprep.subr.mxu0 0.0
  %3463 = vmatpush1.msra.mxu0 0.0
  %3464 = vmatprep.mubr.f32.mxu0 0.0
  %3465 = vmatmul.mubr.f32.gmra.mrb[0].mxu0 %v3393
  %v3466 = vpop.f32.mrb[0].mxu0
  %v3467 = vadd.f32 0.0, %v3466
  %v3468 = vpop.f32.mrb[0].mxu0
  %v3469 = vadd.f32 0.0, %v3468
  %3470 = vdwg.mxu0
  %3471 = vmatprep.subr.mxu0 %v836
  %3472 = vmatpush1.msra.mxu0 %v835
  %3473 = vmatprep.subr.mxu0 %v840
  %3474 = vmatpush1.msra.mxu0 %v839
  %3475 = vmatprep.subr.mxu0 %v844
  %3476 = vmatpush1.msra.mxu0 %v843
  %3477 = vmatprep.subr.mxu0 %v848
  %3478 = vmatpush1.msra.mxu0 %v847
  %3479 = vmatprep.subr.mxu0 %v852
  %3480 = vmatpush1.msra.mxu0 %v851
  %3481 = vmatprep.subr.mxu0 %v856
  %3482 = vmatpush1.msra.mxu0 %v855
  %3483 = vmatprep.subr.mxu0 %v860
  %3484 = vmatpush1.msra.mxu0 %v859
  %3485 = vmatprep.subr.mxu0 %v864
  %3486 = vmatpush1.msra.mxu0 %v863
  %3487 = vmatprep.subr.mxu0 %v868
  %3488 = vmatpush1.msra.mxu0 %v867
  %3489 = vmatprep.subr.mxu0 %v872
  %3490 = vmatpush1.msra.mxu0 %v871
  %3491 = vmatprep.subr.mxu0 %v876
  %3492 = vmatpush1.msra.mxu0 %v875
  %3493 = vmatprep.subr.mxu0 %v880
  %3494 = vmatpush1.msra.mxu0 %v879
  %3495 = vmatprep.subr.mxu0 %v884
  %3496 = vmatpush1.msra.mxu0 %v883
  %3497 = vmatprep.subr.mxu0 %v888
  %3498 = vmatpush1.msra.mxu0 %v887
  %3499 = vmatprep.subr.mxu0 %v892
  %3500 = vmatpush1.msra.mxu0 %v891
  %3501 = vmatprep.subr.mxu0 %v896
  %3502 = vmatpush1.msra.mxu0 %v895
  %3503 = vmatprep.subr.mxu0 0.0
  %3504 = vmatpush1.msra.mxu0 0.0
  %3505 = vmatprep.subr.mxu0 0.0
  %3506 = vmatpush1.msra.mxu0 0.0
  %3507 = vmatprep.subr.mxu0 0.0
  %3508 = vmatpush1.msra.mxu0 0.0
  %3509 = vmatprep.subr.mxu0 0.0
  %3510 = vmatpush1.msra.mxu0 0.0
  %3511 = vmatprep.subr.mxu0 0.0
  %3512 = vmatpush1.msra.mxu0 0.0
  %3513 = vmatprep.subr.mxu0 0.0
  %3514 = vmatpush1.msra.mxu0 0.0
  %3515 = vmatprep.subr.mxu0 0.0
  %3516 = vmatpush1.msra.mxu0 0.0
  %3517 = vmatprep.subr.mxu0 0.0
  %3518 = vmatpush1.msra.mxu0 0.0
  %3519 = vmatprep.subr.mxu0 0.0
  %3520 = vmatpush1.msra.mxu0 0.0
  %3521 = vmatprep.subr.mxu0 0.0
  %3522 = vmatpush1.msra.mxu0 0.0
  %3523 = vmatprep.subr.mxu0 0.0
  %3524 = vmatpush1.msra.mxu0 0.0
  %3525 = vmatprep.subr.mxu0 0.0
  %3526 = vmatpush1.msra.mxu0 0.0
  %3527 = vmatprep.subr.mxu0 0.0
  %3528 = vmatpush1.msra.mxu0 0.0
  %3529 = vmatprep.subr.mxu0 0.0
  %3530 = vmatpush1.msra.mxu0 0.0
  %3531 = vmatprep.subr.mxu0 0.0
  %3532 = vmatpush1.msra.mxu0 0.0
  %3533 = vmatprep.subr.mxu0 0.0
  %3534 = vmatpush1.msra.mxu0 0.0
  %3535 = vmatprep.mubr.f32.mxu0 0.0
  %3536 = vmatmul.mubr.f32.gmra.mrb[0].mxu0 %v3393
  %v3537 = vpop.f32.mrb[0].mxu0
  %v3538 = vadd.f32 0.0, %v3537
  %v3539 = vpop.f32.mrb[0].mxu0
  %v3540 = vadd.f32 0.0, %v3539
  %3541 = vdwg.mxu0
  %v3542 = vadd.f32 %v3396, %v3467
  %v3543 = vadd.f32 %v3397, %v3469
  %v3544 = vadd.f32 %v3398, %v3538
  %v3545 = vadd.f32 %v3399, %v3540
  %v3546 = vxor.u32 %v3542, 2147483648
  %v3547 = vmul.f32 %v3546, 1.442695
  %v3548 = vpow.pop %v3547
  %v3549 = vadd.f32 %v3548, 1.0
  %v3550 = vrcp.pop %v3549
  %v3551 = vmul.f32 1.0, %v3550
  %v3552 = vxor.u32 %v3543, 2147483648
  %v3553 = vmul.f32 %v3552, 1.442695
  %v3554 = vpow.pop %v3553
  %v3555 = vadd.f32 %v3554, 1.0
  %v3556 = vrcp.pop %v3555
  %v3557 = vmul.f32 1.0, %v3556
  %v3558 = vtanh.pop %v3544
  %v3559 = vxor.u32 %v3545, 2147483648
  %v3560 = vmul.f32 %v3559, 1.442695
  %v3561 = vpow.pop %v3560
  %v3562 = vadd.f32 %v3561, 1.0
  %v3563 = vrcp.pop %v3562
  %v3564 = vmul.f32 1.0, %v3563
  %v3565 = vmul.f32 %v3557, %v3083
  %v3566 = vmul.f32 %v3551, %v3558
  %v3567 = vadd.f32 %v3565, %v3566
  %v3568 = vtanh.pop %v3567
  %v3569 = vmul.f32 %v3564, %v3568
  %v3570 = vld [vmem:[#allocation6] sm:$0xff]
  %v3571 = vld [vmem:[#allocation6 + $0x8] sm:$0xff]
  %v3572 = vld [vmem:[#allocation6 + $0x10] sm:$0xff]
  %v3573 = vld [vmem:[#allocation6 + $0x18] sm:$0xff]
  %v3574 = vld [vmem:[#allocation6 + $0x20] sm:$0xff]
  %v3575 = vld [vmem:[#allocation6 + $0x28] sm:$0xff]
  %v3576 = vld [vmem:[#allocation6 + $0x30] sm:$0xff]
  %v3577 = vld [vmem:[#allocation6 + $0x38] sm:$0xff]
  %v3578 = vmul.f32 %v3570, %v3569
  %v3579 = vmul.f32 %v3571, %v3569
  %v3580 = vmul.f32 %v3572, %v3569
  %v3581 = vmul.f32 %v3573, %v3569
  %v3582 = vmul.f32 %v3574, %v3569
  %v3583 = vmul.f32 %v3575, %v3569
  %v3584 = vmul.f32 %v3576, %v3569
  %v3585 = vmul.f32 %v3577, %v3569
  %3586 = vadd.xlane.f32.xlu0 %v3578
  %v3587 = vpop.xlane.xlu0 %3586
  %3588 = vadd.xlane.f32.xlu0 %v3579
  %v3589 = vpop.xlane.xlu0 %3588
  %3590 = vadd.xlane.f32.xlu0 %v3580
  %v3591 = vpop.xlane.xlu0 %3590
  %3592 = vadd.xlane.f32.xlu0 %v3581
  %v3593 = vpop.xlane.xlu0 %3592
  %3594 = vadd.xlane.f32.xlu0 %v3582
  %v3595 = vpop.xlane.xlu0 %3594
  %3596 = vadd.xlane.f32.xlu0 %v3583
  %v3597 = vpop.xlane.xlu0 %3596
  %3598 = vadd.xlane.f32.xlu0 %v3584
  %v3599 = vpop.xlane.xlu0 %3598
  %3600 = vadd.xlane.f32.xlu0 %v3585
  %v3601 = vpop.xlane.xlu0 %3600
  %v3602 = vadd.f32 %v3587, %v2904
  %v3603 = vadd.f32 %v3589, %v2905
  %v3604 = vadd.f32 %v3591, %v2906
  %v3605 = vadd.f32 %v3593, %v2907
  %v3606 = vadd.f32 %v3595, %v2908
  %v3607 = vadd.f32 %v3597, %v2909
  %v3608 = vadd.f32 %v3599, %v2910
  %v3609 = vadd.f32 %v3601, %v2911
  %v3610 = vsel %vm3126, %v3602, -inf
  %v3611 = vsel %vm3126, %v3603, -inf
  %v3612 = vsel %vm3126, %v3604, -inf
  %v3613 = vsel %vm3126, %v3605, -inf
  %v3614 = vsel %vm3126, %v3606, -inf
  %v3615 = vmax.f32 %v3610, %v3614
  %v3616 = vsel %vm3126, %v3607, -inf
  %v3617 = vmax.f32 %v3611, %v3616
  %v3618 = vsel %vm3126, %v3608, -inf
  %v3619 = vmax.f32 %v3612, %v3618
  %v3620 = vsel %vm3126, %v3609, -inf
  %v3621 = vmax.f32 %v3613, %v3620
  %v3622 = vmax.f32 %v3615, %v3617
  %v3623 = vmax.f32 %v3619, %v3621
  %v3624 = vmax.f32 %v3622, %v3623
  %v3625 = vsub.f32 %v3602, %v3624
  %v3626 = vsub.f32 %v3603, %v3624
  %v3627 = vsub.f32 %v3604, %v3624
  %v3628 = vsub.f32 %v3605, %v3624
  %v3629 = vsub.f32 %v3606, %v3624
  %v3630 = vsub.f32 %v3607, %v3624
  %v3631 = vsub.f32 %v3608, %v3624
  %v3632 = vsub.f32 %v3609, %v3624
  %v3633 = vmul.f32 %v3625, 1.442695
  %v3634 = vpow.pop %v3633
  %v3635 = vmul.f32 %v3626, 1.442695
  %v3636 = vpow.pop %v3635
  %v3637 = vmul.f32 %v3627, 1.442695
  %v3638 = vpow.pop %v3637
  %v3639 = vmul.f32 %v3628, 1.442695
  %v3640 = vpow.pop %v3639
  %v3641 = vmul.f32 %v3629, 1.442695
  %v3642 = vpow.pop %v3641
  %v3643 = vmul.f32 %v3630, 1.442695
  %v3644 = vpow.pop %v3643
  %v3645 = vmul.f32 %v3631, 1.442695
  %v3646 = vpow.pop %v3645
  %v3647 = vmul.f32 %v3632, 1.442695
  %v3648 = vpow.pop %v3647
  %v3649 = vsel %vm3126, %v3634, 0.0
  %v3650 = vsel %vm3126, %v3636, 0.0
  %v3651 = vadd.f32 %v3649, %v3650
  %v3652 = vsel %vm3126, %v3638, 0.0
  %v3653 = vadd.f32 %v3651, %v3652
  %v3654 = vsel %vm3126, %v3640, 0.0
  %v3655 = vadd.f32 %v3653, %v3654
  %v3656 = vsel %vm3126, %v3642, 0.0
  %v3657 = vadd.f32 %v3655, %v3656
  %v3658 = vsel %vm3126, %v3644, 0.0
  %v3659 = vadd.f32 %v3657, %v3658
  %v3660 = vsel %vm3126, %v3646, 0.0
  %v3661 = vadd.f32 %v3659, %v3660
  %v3662 = vsel %vm3126, %v3648, 0.0
  %v3663 = vadd.f32 %v3661, %v3662
  %v3664 = vrcp.pop %v3663
  %v3665 = vmul.f32 %v3634, %v3664
  %v3666 = vmul.f32 %v3636, %v3664
  %v3667 = vmul.f32 %v3638, %v3664
  %v3668 = vmul.f32 %v3640, %v3664
  %v3669 = vmul.f32 %v3642, %v3664
  %v3670 = vmul.f32 %v3644, %v3664
  %v3671 = vmul.f32 %v3646, %v3664
  %v3672 = vmul.f32 %v3648, %v3664
  %v3673 = vld [vmem:[#allocation5] sm:$0xff]
  %v3674 = vld [vmem:[#allocation5 + $0x8] sm:$0xff]
  %v3675 = vld [vmem:[#allocation5 + $0x10] sm:$0xff]
  %v3676 = vld [vmem:[#allocation5 + $0x18] sm:$0xff]
  %v3677 = vld [vmem:[#allocation5 + $0x20] sm:$0xff]
  %v3678 = vld [vmem:[#allocation5 + $0x28] sm:$0xff]
  %v3679 = vld [vmem:[#allocation5 + $0x30] sm:$0xff]
  %v3680 = vld [vmem:[#allocation5 + $0x38] sm:$0xff]
  %3682 = vset.pattern.permute.xlu0 0
  %3683 = vperm.xlu0 %3682, %v3665
  %v3684 = vpop.permute.xlu0 %3683
  %3687 = vset.pattern.permute.xlu0 0
  %3688 = vperm.xlu0 %3687, %v3666
  %v3689 = vpop.permute.xlu0 %3688
  %3692 = vset.pattern.permute.xlu0 0
  %3693 = vperm.xlu0 %3692, %v3667
  %v3694 = vpop.permute.xlu0 %3693
  %3697 = vset.pattern.permute.xlu0 0
  %3698 = vperm.xlu0 %3697, %v3668
  %v3699 = vpop.permute.xlu0 %3698
  %3702 = vset.pattern.permute.xlu0 0
  %3703 = vperm.xlu0 %3702, %v3669
  %v3704 = vpop.permute.xlu0 %3703
  %3707 = vset.pattern.permute.xlu0 0
  %3708 = vperm.xlu0 %3707, %v3670
  %v3709 = vpop.permute.xlu0 %3708
  %3712 = vset.pattern.permute.xlu0 0
  %3713 = vperm.xlu0 %3712, %v3671
  %v3714 = vpop.permute.xlu0 %3713
  %3717 = vset.pattern.permute.xlu0 0
  %3718 = vperm.xlu0 %3717, %v3672
  %v3719 = vpop.permute.xlu0 %3718
  %v3721 = vmul.f32 %v3684, %v3673
  %v3722 = vmul.f32 %v3689, %v3674
  %v3723 = vmul.f32 %v3694, %v3675
  %v3724 = vmul.f32 %v3699, %v3676
  %v3725 = vmul.f32 %v3704, %v3677
  %v3726 = vmul.f32 %v3709, %v3678
  %v3727 = vmul.f32 %v3714, %v3679
  %v3728 = vmul.f32 %v3719, %v3680
  %v3729 = vadd.f32 %v3721, %v3722
  %v3730 = vadd.f32 %v3729, %v3723
  %v3731 = vadd.f32 %v3730, %v3724
  %v3732 = vadd.f32 %v3731, %v3725
  %v3733 = vadd.f32 %v3732, %v3726
  %v3734 = vadd.f32 %v3733, %v3727
  %v3735 = vadd.f32 %v3734, %v3728
  %3736 = vmatprep.subr.mxu0 0.0
  %3737 = vmatpush1.msra.mxu0 %v913
  %3738 = vmatprep.subr.mxu0 0.0
  %3739 = vmatpush1.msra.mxu0 %v914
  %3740 = vmatprep.subr.mxu0 0.0
  %3741 = vmatpush1.msra.mxu0 %v915
  %3742 = vmatprep.subr.mxu0 0.0
  %3743 = vmatpush1.msra.mxu0 %v916
  %3744 = vmatprep.subr.mxu0 0.0
  %3745 = vmatpush1.msra.mxu0 %v917
  %3746 = vmatprep.subr.mxu0 0.0
  %3747 = vmatpush1.msra.mxu0 %v918
  %3748 = vmatprep.subr.mxu0 0.0
  %3749 = vmatpush1.msra.mxu0 %v919
  %3750 = vmatprep.subr.mxu0 0.0
  %3751 = vmatpush1.msra.mxu0 %v920
  %3752 = vmatprep.subr.mxu0 0.0
  %3753 = vmatpush1.msra.mxu0 %v921
  %3754 = vmatprep.subr.mxu0 0.0
  %3755 = vmatpush1.msra.mxu0 %v922
  %3756 = vmatprep.subr.mxu0 0.0
  %3757 = vmatpush1.msra.mxu0 %v923
  %3758 = vmatprep.subr.mxu0 0.0
  %3759 = vmatpush1.msra.mxu0 %v924
  %3760 = vmatprep.subr.mxu0 0.0
  %3761 = vmatpush1.msra.mxu0 %v925
  %3762 = vmatprep.subr.mxu0 0.0
  %3763 = vmatpush1.msra.mxu0 %v926
  %3764 = vmatprep.subr.mxu0 0.0
  %3765 = vmatpush1.msra.mxu0 %v927
  %3766 = vmatprep.subr.mxu0 0.0
  %3767 = vmatpush1.msra.mxu0 %v928
  %3768 = vmatprep.subr.mxu0 0.0
  %3769 = vmatpush1.msra.mxu0 0.0
  %3770 = vmatprep.subr.mxu0 0.0
  %3771 = vmatpush1.msra.mxu0 0.0
  %3772 = vmatprep.subr.mxu0 0.0
  %3773 = vmatpush1.msra.mxu0 0.0
  %3774 = vmatprep.subr.mxu0 0.0
  %3775 = vmatpush1.msra.mxu0 0.0
  %3776 = vmatprep.subr.mxu0 0.0
  %3777 = vmatpush1.msra.mxu0 0.0
  %3778 = vmatprep.subr.mxu0 0.0
  %3779 = vmatpush1.msra.mxu0 0.0
  %3780 = vmatprep.subr.mxu0 0.0
  %3781 = vmatpush1.msra.mxu0 0.0
  %3782 = vmatprep.subr.mxu0 0.0
  %3783 = vmatpush1.msra.mxu0 0.0
  %3784 = vmatprep.subr.mxu0 0.0
  %3785 = vmatpush1.msra.mxu0 0.0
  %3786 = vmatprep.subr.mxu0 0.0
  %3787 = vmatpush1.msra.mxu0 0.0
  %3788 = vmatprep.subr.mxu0 0.0
  %3789 = vmatpush1.msra.mxu0 0.0
  %3790 = vmatprep.subr.mxu0 0.0
  %3791 = vmatpush1.msra.mxu0 0.0
  %3792 = vmatprep.subr.mxu0 0.0
  %3793 = vmatpush1.msra.mxu0 0.0
  %3794 = vmatprep.subr.mxu0 0.0
  %3795 = vmatpush1.msra.mxu0 0.0
  %3796 = vmatprep.subr.mxu0 0.0
  %3797 = vmatpush1.msra.mxu0 0.0
  %3798 = vmatprep.subr.mxu0 0.0
  %3799 = vmatpush1.msra.mxu0 0.0
  %3800 = vmatprep.mubr.f32.mxu0 0.0
  %3801 = vmatmul.mubr.f32.gmra.mrb[0].mxu0 %v3569
  %v3802 = vpop.f32.mrb[0].mxu0
  %v3803 = vadd.f32 0.0, %v3802
  %v3804 = vpop.f32.mrb[0].mxu0
  %3805 = vdwg.mxu0
  %3806 = vmatprep.subr.mxu0 0.0
  %3807 = vmatpush1.msra.mxu0 %v897
  %3808 = vmatprep.subr.mxu0 0.0
  %3809 = vmatpush1.msra.mxu0 %v898
  %3810 = vmatprep.subr.mxu0 0.0
  %3811 = vmatpush1.msra.mxu0 %v899
  %3812 = vmatprep.subr.mxu0 0.0
  %3813 = vmatpush1.msra.mxu0 %v900
  %3814 = vmatprep.subr.mxu0 0.0
  %3815 = vmatpush1.msra.mxu0 %v901
  %3816 = vmatprep.subr.mxu0 0.0
  %3817 = vmatpush1.msra.mxu0 %v902
  %3818 = vmatprep.subr.mxu0 0.0
  %3819 = vmatpush1.msra.mxu0 %v903
  %3820 = vmatprep.subr.mxu0 0.0
  %3821 = vmatpush1.msra.mxu0 %v904
  %3822 = vmatprep.subr.mxu0 0.0
  %3823 = vmatpush1.msra.mxu0 %v905
  %3824 = vmatprep.subr.mxu0 0.0
  %3825 = vmatpush1.msra.mxu0 %v906
  %3826 = vmatprep.subr.mxu0 0.0
  %3827 = vmatpush1.msra.mxu0 %v907
  %3828 = vmatprep.subr.mxu0 0.0
  %3829 = vmatpush1.msra.mxu0 %v908
  %3830 = vmatprep.subr.mxu0 0.0
  %3831 = vmatpush1.msra.mxu0 %v909
  %3832 = vmatprep.subr.mxu0 0.0
  %3833 = vmatpush1.msra.mxu0 %v910
  %3834 = vmatprep.subr.mxu0 0.0
  %3835 = vmatpush1.msra.mxu0 %v911
  %3836 = vmatprep.subr.mxu0 0.0
  %3837 = vmatpush1.msra.mxu0 %v912
  %3838 = vmatprep.subr.mxu0 0.0
  %3839 = vmatpush1.msra.mxu0 0.0
  %3840 = vmatprep.subr.mxu0 0.0
  %3841 = vmatpush1.msra.mxu0 0.0
  %3842 = vmatprep.subr.mxu0 0.0
  %3843 = vmatpush1.msra.mxu0 0.0
  %3844 = vmatprep.subr.mxu0 0.0
  %3845 = vmatpush1.msra.mxu0 0.0
  %3846 = vmatprep.subr.mxu0 0.0
  %3847 = vmatpush1.msra.mxu0 0.0
  %3848 = vmatprep.subr.mxu0 0.0
  %3849 = vmatpush1.msra.mxu0 0.0
  %3850 = vmatprep.subr.mxu0 0.0
  %3851 = vmatpush1.msra.mxu0 0.0
  %3852 = vmatprep.subr.mxu0 0.0
  %3853 = vmatpush1.msra.mxu0 0.0
  %3854 = vmatprep.subr.mxu0 0.0
  %3855 = vmatpush1.msra.mxu0 0.0
  %3856 = vmatprep.subr.mxu0 0.0
  %3857 = vmatpush1.msra.mxu0 0.0
  %3858 = vmatprep.subr.mxu0 0.0
  %3859 = vmatpush1.msra.mxu0 0.0
  %3860 = vmatprep.subr.mxu0 0.0
  %3861 = vmatpush1.msra.mxu0 0.0
  %3862 = vmatprep.subr.mxu0 0.0
  %3863 = vmatpush1.msra.mxu0 0.0
  %3864 = vmatprep.subr.mxu0 0.0
  %3865 = vmatpush1.msra.mxu0 0.0
  %3866 = vmatprep.subr.mxu0 0.0
  %3867 = vmatpush1.msra.mxu0 0.0
  %3868 = vmatprep.subr.mxu0 0.0
  %3869 = vmatpush1.msra.mxu0 0.0
  %3870 = vmatprep.mubr.f32.mxu0 0.0
  %3871 = vmatmul.mubr.f32.gmra.mrb[0].mxu0 %v3735
  %v3872 = vpop.f32.mrb[0].mxu0
  %v3873 = vadd.f32 %v3803, %v3872
  %v3874 = vpop.f32.mrb[0].mxu0
  %3875 = vdwg.mxu0
  %v3876 = vtanh.pop %v3873
  %s3877 = scalar_lea.vmem [#allocation7], 8
  %3878 = vst [vmem:[%s3877] sm:$0xff] %v3876
  %s3879 = scalar_lea.vmem [#allocation3], 64
  %v3880 = vld [vmem:[%s3879] sm:$0xff]
  %v3881 = vld [vmem:[%s3879 + $0x8] sm:$0xff]
  %v3882 = vld [vmem:[%s3879 + $0x10] sm:$0xff]
  %v3883 = vld [vmem:[%s3879 + $0x18] sm:$0xff]
  %3884 = vmatprep.subr.mxu0 %v834
  %3885 = vmatpush1.msra.mxu0 %v833
  %3886 = vmatprep.subr.mxu0 %v838
  %3887 = vmatpush1.msra.mxu0 %v837
  %3888 = vmatprep.subr.mxu0 %v842
  %3889 = vmatpush1.msra.mxu0 %v841
  %3890 = vmatprep.subr.mxu0 %v846
  %3891 = vmatpush1.msra.mxu0 %v845
  %3892 = vmatprep.subr.mxu0 %v850
  %3893 = vmatpush1.msra.mxu0 %v849
  %3894 = vmatprep.subr.mxu0 %v854
  %3895 = vmatpush1.msra.mxu0 %v853
  %3896 = vmatprep.subr.mxu0 %v858
  %3897 = vmatpush1.msra.mxu0 %v857
  %3898 = vmatprep.subr.mxu0 %v862
  %3899 = vmatpush1.msra.mxu0 %v861
  %3900 = vmatprep.subr.mxu0 %v866
  %3901 = vmatpush1.msra.mxu0 %v865
  %3902 = vmatprep.subr.mxu0 %v870
  %3903 = vmatpush1.msra.mxu0 %v869
  %3904 = vmatprep.subr.mxu0 %v874
  %3905 = vmatpush1.msra.mxu0 %v873
  %3906 = vmatprep.subr.mxu0 %v878
  %3907 = vmatpush1.msra.mxu0 %v877
  %3908 = vmatprep.subr.mxu0 %v882
  %3909 = vmatpush1.msra.mxu0 %v881
  %3910 = vmatprep.subr.mxu0 %v886
  %3911 = vmatpush1.msra.mxu0 %v885
  %3912 = vmatprep.subr.mxu0 %v890
  %3913 = vmatpush1.msra.mxu0 %v889
  %3914 = vmatprep.subr.mxu0 %v894
  %3915 = vmatpush1.msra.mxu0 %v893
  %3916 = vmatprep.subr.mxu0 0.0
  %3917 = vmatpush1.msra.mxu0 0.0
  %3918 = vmatprep.subr.mxu0 0.0
  %3919 = vmatpush1.msra.mxu0 0.0
  %3920 = vmatprep.subr.mxu0 0.0
  %3921 = vmatpush1.msra.mxu0 0.0
  %3922 = vmatprep.subr.mxu0 0.0
  %3923 = vmatpush1.msra.mxu0 0.0
  %3924 = vmatprep.subr.mxu0 0.0
  %3925 = vmatpush1.msra.mxu0 0.0
  %3926 = vmatprep.subr.mxu0 0.0
  %3927 = vmatpush1.msra.mxu0 0.0
  %3928 = vmatprep.subr.mxu0 0.0
  %3929 = vmatpush1.msra.mxu0 0.0
  %3930 = vmatprep.subr.mxu0 0.0
  %3931 = vmatpush1.msra.mxu0 0.0
  %3932 = vmatprep.subr.mxu0 0.0
  %3933 = vmatpush1.msra.mxu0 0.0
  %3934 = vmatprep.subr.mxu0 0.0
  %3935 = vmatpush1.msra.mxu0 0.0
  %3936 = vmatprep.subr.mxu0 0.0
  %3937 = vmatpush1.msra.mxu0 0.0
  %3938 = vmatprep.subr.mxu0 0.0
  %3939 = vmatpush1.msra.mxu0 0.0
  %3940 = vmatprep.subr.mxu0 0.0
  %3941 = vmatpush1.msra.mxu0 0.0
  %3942 = vmatprep.subr.mxu0 0.0
  %3943 = vmatpush1.msra.mxu0 0.0
  %3944 = vmatprep.subr.mxu0 0.0
  %3945 = vmatpush1.msra.mxu0 0.0
  %3946 = vmatprep.subr.mxu0 0.0
  %3947 = vmatpush1.msra.mxu0 0.0
  %3948 = vmatprep.mubr.f32.mxu0 0.0
  %3949 = vmatmul.mubr.f32.gmra.mrb[0].mxu0 %v3876
  %v3950 = vpop.f32.mrb[0].mxu0
  %v3951 = vadd.f32 0.0, %v3950
  %v3952 = vpop.f32.mrb[0].mxu0
  %v3953 = vadd.f32 0.0, %v3952
  %3954 = vdwg.mxu0
  %3955 = vmatprep.subr.mxu0 %v836
  %3956 = vmatpush1.msra.mxu0 %v835
  %3957 = vmatprep.subr.mxu0 %v840
  %3958 = vmatpush1.msra.mxu0 %v839
  %3959 = vmatprep.subr.mxu0 %v844
  %3960 = vmatpush1.msra.mxu0 %v843
  %3961 = vmatprep.subr.mxu0 %v848
  %3962 = vmatpush1.msra.mxu0 %v847
  %3963 = vmatprep.subr.mxu0 %v852
  %3964 = vmatpush1.msra.mxu0 %v851
  %3965 = vmatprep.subr.mxu0 %v856
  %3966 = vmatpush1.msra.mxu0 %v855
  %3967 = vmatprep.subr.mxu0 %v860
  %3968 = vmatpush1.msra.mxu0 %v859
  %3969 = vmatprep.subr.mxu0 %v864
  %3970 = vmatpush1.msra.mxu0 %v863
  %3971 = vmatprep.subr.mxu0 %v868
  %3972 = vmatpush1.msra.mxu0 %v867
  %3973 = vmatprep.subr.mxu0 %v872
  %3974 = vmatpush1.msra.mxu0 %v871
  %3975 = vmatprep.subr.mxu0 %v876
  %3976 = vmatpush1.msra.mxu0 %v875
  %3977 = vmatprep.subr.mxu0 %v880
  %3978 = vmatpush1.msra.mxu0 %v879
  %3979 = vmatprep.subr.mxu0 %v884
  %3980 = vmatpush1.msra.mxu0 %v883
  %3981 = vmatprep.subr.mxu0 %v888
  %3982 = vmatpush1.msra.mxu0 %v887
  %3983 = vmatprep.subr.mxu0 %v892
  %3984 = vmatpush1.msra.mxu0 %v891
  %3985 = vmatprep.subr.mxu0 %v896
  %3986 = vmatpush1.msra.mxu0 %v895
  %3987 = vmatprep.subr.mxu0 0.0
  %3988 = vmatpush1.msra.mxu0 0.0
  %3989 = vmatprep.subr.mxu0 0.0
  %3990 = vmatpush1.msra.mxu0 0.0
  %3991 = vmatprep.subr.mxu0 0.0
  %3992 = vmatpush1.msra.mxu0 0.0
  %3993 = vmatprep.subr.mxu0 0.0
  %3994 = vmatpush1.msra.mxu0 0.0
  %3995 = vmatprep.subr.mxu0 0.0
  %3996 = vmatpush1.msra.mxu0 0.0
  %3997 = vmatprep.subr.mxu0 0.0
  %3998 = vmatpush1.msra.mxu0 0.0
  %3999 = vmatprep.subr.mxu0 0.0
  %4000 = vmatpush1.msra.mxu0 0.0
  %4001 = vmatprep.subr.mxu0 0.0
  %4002 = vmatpush1.msra.mxu0 0.0
  %4003 = vmatprep.subr.mxu0 0.0
  %4004 = vmatpush1.msra.mxu0 0.0
  %4005 = vmatprep.subr.mxu0 0.0
  %4006 = vmatpush1.msra.mxu0 0.0
  %4007 = vmatprep.subr.mxu0 0.0
  %4008 = vmatpush1.msra.mxu0 0.0
  %4009 = vmatprep.subr.mxu0 0.0
  %4010 = vmatpush1.msra.mxu0 0.0
  %4011 = vmatprep.subr.mxu0 0.0
  %4012 = vmatpush1.msra.mxu0 0.0
  %4013 = vmatprep.subr.mxu0 0.0
  %4014 = vmatpush1.msra.mxu0 0.0
  %4015 = vmatprep.subr.mxu0 0.0
  %4016 = vmatpush1.msra.mxu0 0.0
  %4017 = vmatprep.subr.mxu0 0.0
  %4018 = vmatpush1.msra.mxu0 0.0
  %4019 = vmatprep.mubr.f32.mxu0 0.0
  %4020 = vmatmul.mubr.f32.gmra.mrb[0].mxu0 %v3876
  %v4021 = vpop.f32.mrb[0].mxu0
  %v4022 = vadd.f32 0.0, %v4021
  %v4023 = vpop.f32.mrb[0].mxu0
  %v4024 = vadd.f32 0.0, %v4023
  %4025 = vdwg.mxu0
  %v4026 = vadd.f32 %v3880, %v3951
  %v4027 = vadd.f32 %v3881, %v3953
  %v4028 = vadd.f32 %v3882, %v4022
  %v4029 = vadd.f32 %v3883, %v4024
  %v4030 = vxor.u32 %v4026, 2147483648
  %v4031 = vmul.f32 %v4030, 1.442695
  %v4032 = vpow.pop %v4031
  %v4033 = vadd.f32 %v4032, 1.0
  %v4034 = vrcp.pop %v4033
  %v4035 = vmul.f32 1.0, %v4034
  %v4036 = vxor.u32 %v4027, 2147483648
  %v4037 = vmul.f32 %v4036, 1.442695
  %v4038 = vpow.pop %v4037
  %v4039 = vadd.f32 %v4038, 1.0
  %v4040 = vrcp.pop %v4039
  %v4041 = vmul.f32 1.0, %v4040
  %v4042 = vtanh.pop %v4028
  %v4043 = vxor.u32 %v4029, 2147483648
  %v4044 = vmul.f32 %v4043, 1.442695
  %v4045 = vpow.pop %v4044
  %v4046 = vadd.f32 %v4045, 1.0
  %v4047 = vrcp.pop %v4046
  %v4048 = vmul.f32 1.0, %v4047
  %v4049 = vmul.f32 %v4041, %v3567
  %v4050 = vmul.f32 %v4035, %v4042
  %v4051 = vadd.f32 %v4049, %v4050
  %v4052 = vtanh.pop %v4051
  %v4053 = vmul.f32 %v4048, %v4052
  %v4054 = vld [vmem:[#allocation6] sm:$0xff]
  %v4055 = vld [vmem:[#allocation6 + $0x8] sm:$0xff]
  %v4056 = vld [vmem:[#allocation6 + $0x10] sm:$0xff]
  %v4057 = vld [vmem:[#allocation6 + $0x18] sm:$0xff]
  %v4058 = vld [vmem:[#allocation6 + $0x20] sm:$0xff]
  %v4059 = vld [vmem:[#allocation6 + $0x28] sm:$0xff]
  %v4060 = vld [vmem:[#allocation6 + $0x30] sm:$0xff]
  %v4061 = vld [vmem:[#allocation6 + $0x38] sm:$0xff]
  %v4062 = vmul.f32 %v4054, %v4053
  %v4063 = vmul.f32 %v4055, %v4053
  %v4064 = vmul.f32 %v4056, %v4053
  %v4065 = vmul.f32 %v4057, %v4053
  %v4066 = vmul.f32 %v4058, %v4053
  %v4067 = vmul.f32 %v4059, %v4053
  %v4068 = vmul.f32 %v4060, %v4053
  %v4069 = vmul.f32 %v4061, %v4053
  %4070 = vadd.xlane.f32.xlu0 %v4062
  %v4071 = vpop.xlane.xlu0 %4070
  %4072 = vadd.xlane.f32.xlu0 %v4063
  %v4073 = vpop.xlane.xlu0 %4072
  %4074 = vadd.xlane.f32.xlu0 %v4064
  %v4075 = vpop.xlane.xlu0 %4074
  %4076 = vadd.xlane.f32.xlu0 %v4065
  %v4077 = vpop.xlane.xlu0 %4076
  %4078 = vadd.xlane.f32.xlu0 %v4066
  %v4079 = vpop.xlane.xlu0 %4078
  %4080 = vadd.xlane.f32.xlu0 %v4067
  %v4081 = vpop.xlane.xlu0 %4080
  %4082 = vadd.xlane.f32.xlu0 %v4068
  %v4083 = vpop.xlane.xlu0 %4082
  %4084 = vadd.xlane.f32.xlu0 %v4069
  %v4085 = vpop.xlane.xlu0 %4084
  %v4086 = vadd.f32 %v4071, %v2904
  %v4087 = vadd.f32 %v4073, %v2905
  %v4088 = vadd.f32 %v4075, %v2906
  %v4089 = vadd.f32 %v4077, %v2907
  %v4090 = vadd.f32 %v4079, %v2908
  %v4091 = vadd.f32 %v4081, %v2909
  %v4092 = vadd.f32 %v4083, %v2910
  %v4093 = vadd.f32 %v4085, %v2911
  %v4094 = vsel %vm3126, %v4086, -inf
  %v4095 = vsel %vm3126, %v4087, -inf
  %v4096 = vsel %vm3126, %v4088, -inf
  %v4097 = vsel %vm3126, %v4089, -inf
  %v4098 = vsel %vm3126, %v4090, -inf
  %v4099 = vmax.f32 %v4094, %v4098
  %v4100 = vsel %vm3126, %v4091, -inf
  %v4101 = vmax.f32 %v4095, %v4100
  %v4102 = vsel %vm3126, %v4092, -inf
  %v4103 = vmax.f32 %v4096, %v4102
  %v4104 = vsel %vm3126, %v4093, -inf
  %v4105 = vmax.f32 %v4097, %v4104
  %v4106 = vmax.f32 %v4099, %v4101
  %v4107 = vmax.f32 %v4103, %v4105
  %v4108 = vmax.f32 %v4106, %v4107
  %v4109 = vsub.f32 %v4086, %v4108
  %v4110 = vsub.f32 %v4087, %v4108
  %v4111 = vsub.f32 %v4088, %v4108
  %v4112 = vsub.f32 %v4089, %v4108
  %v4113 = vsub.f32 %v4090, %v4108
  %v4114 = vsub.f32 %v4091, %v4108
  %v4115 = vsub.f32 %v4092, %v4108
  %v4116 = vsub.f32 %v4093, %v4108
  %v4117 = vmul.f32 %v4109, 1.442695
  %v4118 = vpow.pop %v4117
  %v4119 = vmul.f32 %v4110, 1.442695
  %v4120 = vpow.pop %v4119
  %v4121 = vmul.f32 %v4111, 1.442695
  %v4122 = vpow.pop %v4121
  %v4123 = vmul.f32 %v4112, 1.442695
  %v4124 = vpow.pop %v4123
  %v4125 = vmul.f32 %v4113, 1.442695
  %v4126 = vpow.pop %v4125
  %v4127 = vmul.f32 %v4114, 1.442695
  %v4128 = vpow.pop %v4127
  %v4129 = vmul.f32 %v4115, 1.442695
  %v4130 = vpow.pop %v4129
  %v4131 = vmul.f32 %v4116, 1.442695
  %v4132 = vpow.pop %v4131
  %v4133 = vsel %vm3126, %v4118, 0.0
  %v4134 = vsel %vm3126, %v4120, 0.0
  %v4135 = vadd.f32 %v4133, %v4134
  %v4136 = vsel %vm3126, %v4122, 0.0
  %v4137 = vadd.f32 %v4135, %v4136
  %v4138 = vsel %vm3126, %v4124, 0.0
  %v4139 = vadd.f32 %v4137, %v4138
  %v4140 = vsel %vm3126, %v4126, 0.0
  %v4141 = vadd.f32 %v4139, %v4140
  %v4142 = vsel %vm3126, %v4128, 0.0
  %v4143 = vadd.f32 %v4141, %v4142
  %v4144 = vsel %vm3126, %v4130, 0.0
  %v4145 = vadd.f32 %v4143, %v4144
  %v4146 = vsel %vm3126, %v4132, 0.0
  %v4147 = vadd.f32 %v4145, %v4146
  %v4148 = vrcp.pop %v4147
  %v4149 = vmul.f32 %v4118, %v4148
  %v4150 = vmul.f32 %v4120, %v4148
  %v4151 = vmul.f32 %v4122, %v4148
  %v4152 = vmul.f32 %v4124, %v4148
  %v4153 = vmul.f32 %v4126, %v4148
  %v4154 = vmul.f32 %v4128, %v4148
  %v4155 = vmul.f32 %v4130, %v4148
  %v4156 = vmul.f32 %v4132, %v4148
  %v4157 = vld [vmem:[#allocation5] sm:$0xff]
  %v4158 = vld [vmem:[#allocation5 + $0x8] sm:$0xff]
  %v4159 = vld [vmem:[#allocation5 + $0x10] sm:$0xff]
  %v4160 = vld [vmem:[#allocation5 + $0x18] sm:$0xff]
  %v4161 = vld [vmem:[#allocation5 + $0x20] sm:$0xff]
  %v4162 = vld [vmem:[#allocation5 + $0x28] sm:$0xff]
  %v4163 = vld [vmem:[#allocation5 + $0x30] sm:$0xff]
  %v4164 = vld [vmem:[#allocation5 + $0x38] sm:$0xff]
  %4166 = vset.pattern.permute.xlu0 0
  %4167 = vperm.xlu0 %4166, %v4149
  %v4168 = vpop.permute.xlu0 %4167
  %4171 = vset.pattern.permute.xlu0 0
  %4172 = vperm.xlu0 %4171, %v4150
  %v4173 = vpop.permute.xlu0 %4172
  %4176 = vset.pattern.permute.xlu0 0
  %4177 = vperm.xlu0 %4176, %v4151
  %v4178 = vpop.permute.xlu0 %4177
  %4181 = vset.pattern.permute.xlu0 0
  %4182 = vperm.xlu0 %4181, %v4152
  %v4183 = vpop.permute.xlu0 %4182
  %4186 = vset.pattern.permute.xlu0 0
  %4187 = vperm.xlu0 %4186, %v4153
  %v4188 = vpop.permute.xlu0 %4187
  %4191 = vset.pattern.permute.xlu0 0
  %4192 = vperm.xlu0 %4191, %v4154
  %v4193 = vpop.permute.xlu0 %4192
  %4196 = vset.pattern.permute.xlu0 0
  %4197 = vperm.xlu0 %4196, %v4155
  %v4198 = vpop.permute.xlu0 %4197
  %4201 = vset.pattern.permute.xlu0 0
  %4202 = vperm.xlu0 %4201, %v4156
  %v4203 = vpop.permute.xlu0 %4202
  %v4205 = vmul.f32 %v4168, %v4157
  %v4206 = vmul.f32 %v4173, %v4158
  %v4207 = vmul.f32 %v4178, %v4159
  %v4208 = vmul.f32 %v4183, %v4160
  %v4209 = vmul.f32 %v4188, %v4161
  %v4210 = vmul.f32 %v4193, %v4162
  %v4211 = vmul.f32 %v4198, %v4163
  %v4212 = vmul.f32 %v4203, %v4164
  %v4213 = vadd.f32 %v4205, %v4206
  %v4214 = vadd.f32 %v4213, %v4207
  %v4215 = vadd.f32 %v4214, %v4208
  %v4216 = vadd.f32 %v4215, %v4209
  %v4217 = vadd.f32 %v4216, %v4210
  %v4218 = vadd.f32 %v4217, %v4211
  %v4219 = vadd.f32 %v4218, %v4212
  %4220 = vmatprep.subr.mxu0 0.0
  %4221 = vmatpush1.msra.mxu0 %v913
  %4222 = vmatprep.subr.mxu0 0.0
  %4223 = vmatpush1.msra.mxu0 %v914
  %4224 = vmatprep.subr.mxu0 0.0
  %4225 = vmatpush1.msra.mxu0 %v915
  %4226 = vmatprep.subr.mxu0 0.0
  %4227 = vmatpush1.msra.mxu0 %v916
  %4228 = vmatprep.subr.mxu0 0.0
  %4229 = vmatpush1.msra.mxu0 %v917
  %4230 = vmatprep.subr.mxu0 0.0
  %4231 = vmatpush1.msra.mxu0 %v918
  %4232 = vmatprep.subr.mxu0 0.0
  %4233 = vmatpush1.msra.mxu0 %v919
  %4234 = vmatprep.subr.mxu0 0.0
  %4235 = vmatpush1.msra.mxu0 %v920
  %4236 = vmatprep.subr.mxu0 0.0
  %4237 = vmatpush1.msra.mxu0 %v921
  %4238 = vmatprep.subr.mxu0 0.0
  %4239 = vmatpush1.msra.mxu0 %v922
  %4240 = vmatprep.subr.mxu0 0.0
  %4241 = vmatpush1.msra.mxu0 %v923
  %4242 = vmatprep.subr.mxu0 0.0
  %4243 = vmatpush1.msra.mxu0 %v924
  %4244 = vmatprep.subr.mxu0 0.0
  %4245 = vmatpush1.msra.mxu0 %v925
  %4246 = vmatprep.subr.mxu0 0.0
  %4247 = vmatpush1.msra.mxu0 %v926
  %4248 = vmatprep.subr.mxu0 0.0
  %4249 = vmatpush1.msra.mxu0 %v927
  %4250 = vmatprep.subr.mxu0 0.0
  %4251 = vmatpush1.msra.mxu0 %v928
  %4252 = vmatprep.subr.mxu0 0.0
  %4253 = vmatpush1.msra.mxu0 0.0
  %4254 = vmatprep.subr.mxu0 0.0
  %4255 = vmatpush1.msra.mxu0 0.0
  %4256 = vmatprep.subr.mxu0 0.0
  %4257 = vmatpush1.msra.mxu0 0.0
  %4258 = vmatprep.subr.mxu0 0.0
  %4259 = vmatpush1.msra.mxu0 0.0
  %4260 = vmatprep.subr.mxu0 0.0
  %4261 = vmatpush1.msra.mxu0 0.0
  %4262 = vmatprep.subr.mxu0 0.0
  %4263 = vmatpush1.msra.mxu0 0.0
  %4264 = vmatprep.subr.mxu0 0.0
  %4265 = vmatpush1.msra.mxu0 0.0
  %4266 = vmatprep.subr.mxu0 0.0
  %4267 = vmatpush1.msra.mxu0 0.0
  %4268 = vmatprep.subr.mxu0 0.0
  %4269 = vmatpush1.msra.mxu0 0.0
  %4270 = vmatprep.subr.mxu0 0.0
  %4271 = vmatpush1.msra.mxu0 0.0
  %4272 = vmatprep.subr.mxu0 0.0
  %4273 = vmatpush1.msra.mxu0 0.0
  %4274 = vmatprep.subr.mxu0 0.0
  %4275 = vmatpush1.msra.mxu0 0.0
  %4276 = vmatprep.subr.mxu0 0.0
  %4277 = vmatpush1.msra.mxu0 0.0
  %4278 = vmatprep.subr.mxu0 0.0
  %4279 = vmatpush1.msra.mxu0 0.0
  %4280 = vmatprep.subr.mxu0 0.0
  %4281 = vmatpush1.msra.mxu0 0.0
  %4282 = vmatprep.subr.mxu0 0.0
  %4283 = vmatpush1.msra.mxu0 0.0
  %4284 = vmatprep.mubr.f32.mxu0 0.0
  %4285 = vmatmul.mubr.f32.gmra.mrb[0].mxu0 %v4053
  %v4286 = vpop.f32.mrb[0].mxu0
  %v4287 = vadd.f32 0.0, %v4286
  %v4288 = vpop.f32.mrb[0].mxu0
  %4289 = vdwg.mxu0
  %4290 = vmatprep.subr.mxu0 0.0
  %4291 = vmatpush1.msra.mxu0 %v897
  %4292 = vmatprep.subr.mxu0 0.0
  %4293 = vmatpush1.msra.mxu0 %v898
  %4294 = vmatprep.subr.mxu0 0.0
  %4295 = vmatpush1.msra.mxu0 %v899
  %4296 = vmatprep.subr.mxu0 0.0
  %4297 = vmatpush1.msra.mxu0 %v900
  %4298 = vmatprep.subr.mxu0 0.0
  %4299 = vmatpush1.msra.mxu0 %v901
  %4300 = vmatprep.subr.mxu0 0.0
  %4301 = vmatpush1.msra.mxu0 %v902
  %4302 = vmatprep.subr.mxu0 0.0
  %4303 = vmatpush1.msra.mxu0 %v903
  %4304 = vmatprep.subr.mxu0 0.0
  %4305 = vmatpush1.msra.mxu0 %v904
  %4306 = vmatprep.subr.mxu0 0.0
  %4307 = vmatpush1.msra.mxu0 %v905
  %4308 = vmatprep.subr.mxu0 0.0
  %4309 = vmatpush1.msra.mxu0 %v906
  %4310 = vmatprep.subr.mxu0 0.0
  %4311 = vmatpush1.msra.mxu0 %v907
  %4312 = vmatprep.subr.mxu0 0.0
  %4313 = vmatpush1.msra.mxu0 %v908
  %4314 = vmatprep.subr.mxu0 0.0
  %4315 = vmatpush1.msra.mxu0 %v909
  %4316 = vmatprep.subr.mxu0 0.0
  %4317 = vmatpush1.msra.mxu0 %v910
  %4318 = vmatprep.subr.mxu0 0.0
  %4319 = vmatpush1.msra.mxu0 %v911
  %4320 = vmatprep.subr.mxu0 0.0
  %4321 = vmatpush1.msra.mxu0 %v912
  %4322 = vmatprep.subr.mxu0 0.0
  %4323 = vmatpush1.msra.mxu0 0.0
  %4324 = vmatprep.subr.mxu0 0.0
  %4325 = vmatpush1.msra.mxu0 0.0
  %4326 = vmatprep.subr.mxu0 0.0
  %4327 = vmatpush1.msra.mxu0 0.0
  %4328 = vmatprep.subr.mxu0 0.0
  %4329 = vmatpush1.msra.mxu0 0.0
  %4330 = vmatprep.subr.mxu0 0.0
  %4331 = vmatpush1.msra.mxu0 0.0
  %4332 = vmatprep.subr.mxu0 0.0
  %4333 = vmatpush1.msra.mxu0 0.0
  %4334 = vmatprep.subr.mxu0 0.0
  %4335 = vmatpush1.msra.mxu0 0.0
  %4336 = vmatprep.subr.mxu0 0.0
  %4337 = vmatpush1.msra.mxu0 0.0
  %4338 = vmatprep.subr.mxu0 0.0
  %4339 = vmatpush1.msra.mxu0 0.0
  %4340 = vmatprep.subr.mxu0 0.0
  %4341 = vmatpush1.msra.mxu0 0.0
  %4342 = vmatprep.subr.mxu0 0.0
  %4343 = vmatpush1.msra.mxu0 0.0
  %4344 = vmatprep.subr.mxu0 0.0
  %4345 = vmatpush1.msra.mxu0 0.0
  %4346 = vmatprep.subr.mxu0 0.0
  %4347 = vmatpush1.msra.mxu0 0.0
  %4348 = vmatprep.subr.mxu0 0.0
  %4349 = vmatpush1.msra.mxu0 0.0
  %4350 = vmatprep.subr.mxu0 0.0
  %4351 = vmatpush1.msra.mxu0 0.0
  %4352 = vmatprep.subr.mxu0 0.0
  %4353 = vmatpush1.msra.mxu0 0.0
  %4354 = vmatprep.mubr.f32.mxu0 0.0
  %4355 = vmatmul.mubr.f32.gmra.mrb[0].mxu0 %v4219
  %v4356 = vpop.f32.mrb[0].mxu0
  %v4357 = vadd.f32 %v4287, %v4356
  %v4358 = vpop.f32.mrb[0].mxu0
  %4359 = vdwg.mxu0
  %v4360 = vtanh.pop %v4357
  %s4361 = scalar_lea.vmem [#allocation7], 16
  %4362 = vst [vmem:[%s4361] sm:$0xff] %v4360
  %s4363 = scalar_lea.vmem [#allocation3], 96
  %v4364 = vld [vmem:[%s4363] sm:$0xff]
  %v4365 = vld [vmem:[%s4363 + $0x8] sm:$0xff]
  %v4366 = vld [vmem:[%s4363 + $0x10] sm:$0xff]
  %v4367 = vld [vmem:[%s4363 + $0x18] sm:$0xff]
  %4368 = vmatprep.subr.mxu0 %v834
  %4369 = vmatpush1.msra.mxu0 %v833
  %4370 = vmatprep.subr.mxu0 %v838
  %4371 = vmatpush1.msra.mxu0 %v837
  %4372 = vmatprep.subr.mxu0 %v842
  %4373 = vmatpush1.msra.mxu0 %v841
  %4374 = vmatprep.subr.mxu0 %v846
  %4375 = vmatpush1.msra.mxu0 %v845
  %4376 = vmatprep.subr.mxu0 %v850
  %4377 = vmatpush1.msra.mxu0 %v849
  %4378 = vmatprep.subr.mxu0 %v854
  %4379 = vmatpush1.msra.mxu0 %v853
  %4380 = vmatprep.subr.mxu0 %v858
  %4381 = vmatpush1.msra.mxu0 %v857
  %4382 = vmatprep.subr.mxu0 %v862
  %4383 = vmatpush1.msra.mxu0 %v861
  %4384 = vmatprep.subr.mxu0 %v866
  %4385 = vmatpush1.msra.mxu0 %v865
  %4386 = vmatprep.subr.mxu0 %v870
  %4387 = vmatpush1.msra.mxu0 %v869
  %4388 = vmatprep.subr.mxu0 %v874
  %4389 = vmatpush1.msra.mxu0 %v873
  %4390 = vmatprep.subr.mxu0 %v878
  %4391 = vmatpush1.msra.mxu0 %v877
  %4392 = vmatprep.subr.mxu0 %v882
  %4393 = vmatpush1.msra.mxu0 %v881
  %4394 = vmatprep.subr.mxu0 %v886
  %4395 = vmatpush1.msra.mxu0 %v885
  %4396 = vmatprep.subr.mxu0 %v890
  %4397 = vmatpush1.msra.mxu0 %v889
  %4398 = vmatprep.subr.mxu0 %v894
  %4399 = vmatpush1.msra.mxu0 %v893
  %4400 = vmatprep.subr.mxu0 0.0
  %4401 = vmatpush1.msra.mxu0 0.0
  %4402 = vmatprep.subr.mxu0 0.0
  %4403 = vmatpush1.msra.mxu0 0.0
  %4404 = vmatprep.subr.mxu0 0.0
  %4405 = vmatpush1.msra.mxu0 0.0
  %4406 = vmatprep.subr.mxu0 0.0
  %4407 = vmatpush1.msra.mxu0 0.0
  %4408 = vmatprep.subr.mxu0 0.0
  %4409 = vmatpush1.msra.mxu0 0.0
  %4410 = vmatprep.subr.mxu0 0.0
  %4411 = vmatpush1.msra.mxu0 0.0
  %4412 = vmatprep.subr.mxu0 0.0
  %4413 = vmatpush1.msra.mxu0 0.0
  %4414 = vmatprep.subr.mxu0 0.0
  %4415 = vmatpush1.msra.mxu0 0.0
  %4416 = vmatprep.subr.mxu0 0.0
  %4417 = vmatpush1.msra.mxu0 0.0
  %4418 = vmatprep.subr.mxu0 0.0
  %4419 = vmatpush1.msra.mxu0 0.0
  %4420 = vmatprep.subr.mxu0 0.0
  %4421 = vmatpush1.msra.mxu0 0.0
  %4422 = vmatprep.subr.mxu0 0.0
  %4423 = vmatpush1.msra.mxu0 0.0
  %4424 = vmatprep.subr.mxu0 0.0
  %4425 = vmatpush1.msra.mxu0 0.0
  %4426 = vmatprep.subr.mxu0 0.0
  %4427 = vmatpush1.msra.mxu0 0.0
  %4428 = vmatprep.subr.mxu0 0.0
  %4429 = vmatpush1.msra.mxu0 0.0
  %4430 = vmatprep.subr.mxu0 0.0
  %4431 = vmatpush1.msra.mxu0 0.0
  %4432 = vmatprep.mubr.f32.mxu0 0.0
  %4433 = vmatmul.mubr.f32.gmra.mrb[0].mxu0 %v4360
  %v4434 = vpop.f32.mrb[0].mxu0
  %v4435 = vadd.f32 0.0, %v4434
  %v4436 = vpop.f32.mrb[0].mxu0
  %v4437 = vadd.f32 0.0, %v4436
  %4438 = vdwg.mxu0
  %4439 = vmatprep.subr.mxu0 %v836
  %4440 = vmatpush1.msra.mxu0 %v835
  %4441 = vmatprep.subr.mxu0 %v840
  %4442 = vmatpush1.msra.mxu0 %v839
  %4443 = vmatprep.subr.mxu0 %v844
  %4444 = vmatpush1.msra.mxu0 %v843
  %4445 = vmatprep.subr.mxu0 %v848
  %4446 = vmatpush1.msra.mxu0 %v847
  %4447 = vmatprep.subr.mxu0 %v852
  %4448 = vmatpush1.msra.mxu0 %v851
  %4449 = vmatprep.subr.mxu0 %v856
  %4450 = vmatpush1.msra.mxu0 %v855
  %4451 = vmatprep.subr.mxu0 %v860
  %4452 = vmatpush1.msra.mxu0 %v859
  %4453 = vmatprep.subr.mxu0 %v864
  %4454 = vmatpush1.msra.mxu0 %v863
  %4455 = vmatprep.subr.mxu0 %v868
  %4456 = vmatpush1.msra.mxu0 %v867
  %4457 = vmatprep.subr.mxu0 %v872
  %4458 = vmatpush1.msra.mxu0 %v871
  %4459 = vmatprep.subr.mxu0 %v876
  %4460 = vmatpush1.msra.mxu0 %v875
  %4461 = vmatprep.subr.mxu0 %v880
  %4462 = vmatpush1.msra.mxu0 %v879
  %4463 = vmatprep.subr.mxu0 %v884
  %4464 = vmatpush1.msra.mxu0 %v883
  %4465 = vmatprep.subr.mxu0 %v888
  %4466 = vmatpush1.msra.mxu0 %v887
  %4467 = vmatprep.subr.mxu0 %v892
  %4468 = vmatpush1.msra.mxu0 %v891
  %4469 = vmatprep.subr.mxu0 %v896
  %4470 = vmatpush1.msra.mxu0 %v895
  %4471 = vmatprep.subr.mxu0 0.0
  %4472 = vmatpush1.msra.mxu0 0.0
  %4473 = vmatprep.subr.mxu0 0.0
  %4474 = vmatpush1.msra.mxu0 0.0
  %4475 = vmatprep.subr.mxu0 0.0
  %4476 = vmatpush1.msra.mxu0 0.0
  %4477 = vmatprep.subr.mxu0 0.0
  %4478 = vmatpush1.msra.mxu0 0.0
  %4479 = vmatprep.subr.mxu0 0.0
  %4480 = vmatpush1.msra.mxu0 0.0
  %4481 = vmatprep.subr.mxu0 0.0
  %4482 = vmatpush1.msra.mxu0 0.0
  %4483 = vmatprep.subr.mxu0 0.0
  %4484 = vmatpush1.msra.mxu0 0.0
  %4485 = vmatprep.subr.mxu0 0.0
  %4486 = vmatpush1.msra.mxu0 0.0
  %4487 = vmatprep.subr.mxu0 0.0
  %4488 = vmatpush1.msra.mxu0 0.0
  %4489 = vmatprep.subr.mxu0 0.0
  %4490 = vmatpush1.msra.mxu0 0.0
  %4491 = vmatprep.subr.mxu0 0.0
  %4492 = vmatpush1.msra.mxu0 0.0
  %4493 = vmatprep.subr.mxu0 0.0
  %4494 = vmatpush1.msra.mxu0 0.0
  %4495 = vmatprep.subr.mxu0 0.0
  %4496 = vmatpush1.msra.mxu0 0.0
  %4497 = vmatprep.subr.mxu0 0.0
  %4498 = vmatpush1.msra.mxu0 0.0
  %4499 = vmatprep.subr.mxu0 0.0
  %4500 = vmatpush1.msra.mxu0 0.0
  %4501 = vmatprep.subr.mxu0 0.0
  %4502 = vmatpush1.msra.mxu0 0.0
  %4503 = vmatprep.mubr.f32.mxu0 0.0
  %4504 = vmatmul.mubr.f32.gmra.mrb[0].mxu0 %v4360
  %v4505 = vpop.f32.mrb[0].mxu0
  %v4506 = vadd.f32 0.0, %v4505
  %v4507 = vpop.f32.mrb[0].mxu0
  %v4508 = vadd.f32 0.0, %v4507
  %4509 = vdwg.mxu0
  %v4510 = vadd.f32 %v4364, %v4435
  %v4511 = vadd.f32 %v4365, %v4437
  %v4512 = vadd.f32 %v4366, %v4506
  %v4513 = vadd.f32 %v4367, %v4508
  %v4514 = vxor.u32 %v4510, 2147483648
  %v4515 = vmul.f32 %v4514, 1.442695
  %v4516 = vpow.pop %v4515
  %v4517 = vadd.f32 %v4516, 1.0
  %v4518 = vrcp.pop %v4517
  %v4519 = vmul.f32 1.0, %v4518
  %v4520 = vxor.u32 %v4511, 2147483648
  %v4521 = vmul.f32 %v4520, 1.442695
  %v4522 = vpow.pop %v4521
  %v4523 = vadd.f32 %v4522, 1.0
  %v4524 = vrcp.pop %v4523
  %v4525 = vmul.f32 1.0, %v4524
  %v4526 = vtanh.pop %v4512
  %v4527 = vxor.u32 %v4513, 2147483648
  %v4528 = vmul.f32 %v4527, 1.442695
  %v4529 = vpow.pop %v4528
  %v4530 = vadd.f32 %v4529, 1.0
  %v4531 = vrcp.pop %v4530
  %v4532 = vmul.f32 1.0, %v4531
  %v4533 = vmul.f32 %v4525, %v4051
  %v4534 = vmul.f32 %v4519, %v4526
  %v4535 = vadd.f32 %v4533, %v4534
  %v4536 = vtanh.pop %v4535
  %v4537 = vmul.f32 %v4532, %v4536
  %v4538 = vld [vmem:[#allocation6] sm:$0xff]
  %v4539 = vld [vmem:[#allocation6 + $0x8] sm:$0xff]
  %v4540 = vld [vmem:[#allocation6 + $0x10] sm:$0xff]
  %v4541 = vld [vmem:[#allocation6 + $0x18] sm:$0xff]
  %v4542 = vld [vmem:[#allocation6 + $0x20] sm:$0xff]
  %v4543 = vld [vmem:[#allocation6 + $0x28] sm:$0xff]
  %v4544 = vld [vmem:[#allocation6 + $0x30] sm:$0xff]
  %v4545 = vld [vmem:[#allocation6 + $0x38] sm:$0xff]
  %v4546 = vmul.f32 %v4538, %v4537
  %v4547 = vmul.f32 %v4539, %v4537
  %v4548 = vmul.f32 %v4540, %v4537
  %v4549 = vmul.f32 %v4541, %v4537
  %v4550 = vmul.f32 %v4542, %v4537
  %v4551 = vmul.f32 %v4543, %v4537
  %v4552 = vmul.f32 %v4544, %v4537
  %v4553 = vmul.f32 %v4545, %v4537
  %4554 = vadd.xlane.f32.xlu0 %v4546
  %v4555 = vpop.xlane.xlu0 %4554
  %4556 = vadd.xlane.f32.xlu0 %v4547
  %v4557 = vpop.xlane.xlu0 %4556
  %4558 = vadd.xlane.f32.xlu0 %v4548
  %v4559 = vpop.xlane.xlu0 %4558
  %4560 = vadd.xlane.f32.xlu0 %v4549
  %v4561 = vpop.xlane.xlu0 %4560
  %4562 = vadd.xlane.f32.xlu0 %v4550
  %v4563 = vpop.xlane.xlu0 %4562
  %4564 = vadd.xlane.f32.xlu0 %v4551
  %v4565 = vpop.xlane.xlu0 %4564
  %4566 = vadd.xlane.f32.xlu0 %v4552
  %v4567 = vpop.xlane.xlu0 %4566
  %4568 = vadd.xlane.f32.xlu0 %v4553
  %v4569 = vpop.xlane.xlu0 %4568
  %v4570 = vadd.f32 %v4555, %v2904
  %v4571 = vadd.f32 %v4557, %v2905
  %v4572 = vadd.f32 %v4559, %v2906
  %v4573 = vadd.f32 %v4561, %v2907
  %v4574 = vadd.f32 %v4563, %v2908
  %v4575 = vadd.f32 %v4565, %v2909
  %v4576 = vadd.f32 %v4567, %v2910
  %v4577 = vadd.f32 %v4569, %v2911
  %v4578 = vsel %vm3126, %v4570, -inf
  %v4579 = vsel %vm3126, %v4571, -inf
  %v4580 = vsel %vm3126, %v4572, -inf
  %v4581 = vsel %vm3126, %v4573, -inf
  %v4582 = vsel %vm3126, %v4574, -inf
  %v4583 = vmax.f32 %v4578, %v4582
  %v4584 = vsel %vm3126, %v4575, -inf
  %v4585 = vmax.f32 %v4579, %v4584
  %v4586 = vsel %vm3126, %v4576, -inf
  %v4587 = vmax.f32 %v4580, %v4586
  %v4588 = vsel %vm3126, %v4577, -inf
  %v4589 = vmax.f32 %v4581, %v4588
  %v4590 = vmax.f32 %v4583, %v4585
  %v4591 = vmax.f32 %v4587, %v4589
  %v4592 = vmax.f32 %v4590, %v4591
  %v4593 = vsub.f32 %v4570, %v4592
  %v4594 = vsub.f32 %v4571, %v4592
  %v4595 = vsub.f32 %v4572, %v4592
  %v4596 = vsub.f32 %v4573, %v4592
  %v4597 = vsub.f32 %v4574, %v4592
  %v4598 = vsub.f32 %v4575, %v4592
  %v4599 = vsub.f32 %v4576, %v4592
  %v4600 = vsub.f32 %v4577, %v4592
  %v4601 = vmul.f32 %v4593, 1.442695
  %v4602 = vpow.pop %v4601
  %v4603 = vmul.f32 %v4594, 1.442695
  %v4604 = vpow.pop %v4603
  %v4605 = vmul.f32 %v4595, 1.442695
  %v4606 = vpow.pop %v4605
  %v4607 = vmul.f32 %v4596, 1.442695
  %v4608 = vpow.pop %v4607
  %v4609 = vmul.f32 %v4597, 1.442695
  %v4610 = vpow.pop %v4609
  %v4611 = vmul.f32 %v4598, 1.442695
  %v4612 = vpow.pop %v4611
  %v4613 = vmul.f32 %v4599, 1.442695
  %v4614 = vpow.pop %v4613
  %v4615 = vmul.f32 %v4600, 1.442695
  %v4616 = vpow.pop %v4615
  %v4617 = vsel %vm3126, %v4602, 0.0
  %v4618 = vsel %vm3126, %v4604, 0.0
  %v4619 = vadd.f32 %v4617, %v4618
  %v4620 = vsel %vm3126, %v4606, 0.0
  %v4621 = vadd.f32 %v4619, %v4620
  %v4622 = vsel %vm3126, %v4608, 0.0
  %v4623 = vadd.f32 %v4621, %v4622
  %v4624 = vsel %vm3126, %v4610, 0.0
  %v4625 = vadd.f32 %v4623, %v4624
  %v4626 = vsel %vm3126, %v4612, 0.0
  %v4627 = vadd.f32 %v4625, %v4626
  %v4628 = vsel %vm3126, %v4614, 0.0
  %v4629 = vadd.f32 %v4627, %v4628
  %v4630 = vsel %vm3126, %v4616, 0.0
  %v4631 = vadd.f32 %v4629, %v4630
  %v4632 = vrcp.pop %v4631
  %v4633 = vmul.f32 %v4602, %v4632
  %v4634 = vmul.f32 %v4604, %v4632
  %v4635 = vmul.f32 %v4606, %v4632
  %v4636 = vmul.f32 %v4608, %v4632
  %v4637 = vmul.f32 %v4610, %v4632
  %v4638 = vmul.f32 %v4612, %v4632
  %v4639 = vmul.f32 %v4614, %v4632
  %v4640 = vmul.f32 %v4616, %v4632
  %v4641 = vld [vmem:[#allocation5] sm:$0xff]
  %v4642 = vld [vmem:[#allocation5 + $0x8] sm:$0xff]
  %v4643 = vld [vmem:[#allocation5 + $0x10] sm:$0xff]
  %v4644 = vld [vmem:[#allocation5 + $0x18] sm:$0xff]
  %v4645 = vld [vmem:[#allocation5 + $0x20] sm:$0xff]
  %v4646 = vld [vmem:[#allocation5 + $0x28] sm:$0xff]
  %v4647 = vld [vmem:[#allocation5 + $0x30] sm:$0xff]
  %v4648 = vld [vmem:[#allocation5 + $0x38] sm:$0xff]
  %4650 = vset.pattern.permute.xlu0 0
  %4651 = vperm.xlu0 %4650, %v4633
  %v4652 = vpop.permute.xlu0 %4651
  %4655 = vset.pattern.permute.xlu0 0
  %4656 = vperm.xlu0 %4655, %v4634
  %v4657 = vpop.permute.xlu0 %4656
  %4660 = vset.pattern.permute.xlu0 0
  %4661 = vperm.xlu0 %4660, %v4635
  %v4662 = vpop.permute.xlu0 %4661
  %4665 = vset.pattern.permute.xlu0 0
  %4666 = vperm.xlu0 %4665, %v4636
  %v4667 = vpop.permute.xlu0 %4666
  %4670 = vset.pattern.permute.xlu0 0
  %4671 = vperm.xlu0 %4670, %v4637
  %v4672 = vpop.permute.xlu0 %4671
  %4675 = vset.pattern.permute.xlu0 0
  %4676 = vperm.xlu0 %4675, %v4638
  %v4677 = vpop.permute.xlu0 %4676
  %4680 = vset.pattern.permute.xlu0 0
  %4681 = vperm.xlu0 %4680, %v4639
  %v4682 = vpop.permute.xlu0 %4681
  %4685 = vset.pattern.permute.xlu0 0
  %4686 = vperm.xlu0 %4685, %v4640
  %v4687 = vpop.permute.xlu0 %4686
  %v4689 = vmul.f32 %v4652, %v4641
  %v4690 = vmul.f32 %v4657, %v4642
  %v4691 = vmul.f32 %v4662, %v4643
  %v4692 = vmul.f32 %v4667, %v4644
  %v4693 = vmul.f32 %v4672, %v4645
  %v4694 = vmul.f32 %v4677, %v4646
  %v4695 = vmul.f32 %v4682, %v4647
  %v4696 = vmul.f32 %v4687, %v4648
  %v4697 = vadd.f32 %v4689, %v4690
  %v4698 = vadd.f32 %v4697, %v4691
  %v4699 = vadd.f32 %v4698, %v4692
  %v4700 = vadd.f32 %v4699, %v4693
  %v4701 = vadd.f32 %v4700, %v4694
  %v4702 = vadd.f32 %v4701, %v4695
  %v4703 = vadd.f32 %v4702, %v4696
  %4704 = vmatprep.subr.mxu0 0.0
  %4705 = vmatpush1.msra.mxu0 %v913
  %4706 = vmatprep.subr.mxu0 0.0
  %4707 = vmatpush1.msra.mxu0 %v914
  %4708 = vmatprep.subr.mxu0 0.0
  %4709 = vmatpush1.msra.mxu0 %v915
  %4710 = vmatprep.subr.mxu0 0.0
  %4711 = vmatpush1.msra.mxu0 %v916
  %4712 = vmatprep.subr.mxu0 0.0
  %4713 = vmatpush1.msra.mxu0 %v917
  %4714 = vmatprep.subr.mxu0 0.0
  %4715 = vmatpush1.msra.mxu0 %v918
  %4716 = vmatprep.subr.mxu0 0.0
  %4717 = vmatpush1.msra.mxu0 %v919
  %4718 = vmatprep.subr.mxu0 0.0
  %4719 = vmatpush1.msra.mxu0 %v920
  %4720 = vmatprep.subr.mxu0 0.0
  %4721 = vmatpush1.msra.mxu0 %v921
  %4722 = vmatprep.subr.mxu0 0.0
  %4723 = vmatpush1.msra.mxu0 %v922
  %4724 = vmatprep.subr.mxu0 0.0
  %4725 = vmatpush1.msra.mxu0 %v923
  %4726 = vmatprep.subr.mxu0 0.0
  %4727 = vmatpush1.msra.mxu0 %v924
  %4728 = vmatprep.subr.mxu0 0.0
  %4729 = vmatpush1.msra.mxu0 %v925
  %4730 = vmatprep.subr.mxu0 0.0
  %4731 = vmatpush1.msra.mxu0 %v926
  %4732 = vmatprep.subr.mxu0 0.0
  %4733 = vmatpush1.msra.mxu0 %v927
  %4734 = vmatprep.subr.mxu0 0.0
  %4735 = vmatpush1.msra.mxu0 %v928
  %4736 = vmatprep.subr.mxu0 0.0
  %4737 = vmatpush1.msra.mxu0 0.0
  %4738 = vmatprep.subr.mxu0 0.0
  %4739 = vmatpush1.msra.mxu0 0.0
  %4740 = vmatprep.subr.mxu0 0.0
  %4741 = vmatpush1.msra.mxu0 0.0
  %4742 = vmatprep.subr.mxu0 0.0
  %4743 = vmatpush1.msra.mxu0 0.0
  %4744 = vmatprep.subr.mxu0 0.0
  %4745 = vmatpush1.msra.mxu0 0.0
  %4746 = vmatprep.subr.mxu0 0.0
  %4747 = vmatpush1.msra.mxu0 0.0
  %4748 = vmatprep.subr.mxu0 0.0
  %4749 = vmatpush1.msra.mxu0 0.0
  %4750 = vmatprep.subr.mxu0 0.0
  %4751 = vmatpush1.msra.mxu0 0.0
  %4752 = vmatprep.subr.mxu0 0.0
  %4753 = vmatpush1.msra.mxu0 0.0
  %4754 = vmatprep.subr.mxu0 0.0
  %4755 = vmatpush1.msra.mxu0 0.0
  %4756 = vmatprep.subr.mxu0 0.0
  %4757 = vmatpush1.msra.mxu0 0.0
  %4758 = vmatprep.subr.mxu0 0.0
  %4759 = vmatpush1.msra.mxu0 0.0
  %4760 = vmatprep.subr.mxu0 0.0
  %4761 = vmatpush1.msra.mxu0 0.0
  %4762 = vmatprep.subr.mxu0 0.0
  %4763 = vmatpush1.msra.mxu0 0.0
  %4764 = vmatprep.subr.mxu0 0.0
  %4765 = vmatpush1.msra.mxu0 0.0
  %4766 = vmatprep.subr.mxu0 0.0
  %4767 = vmatpush1.msra.mxu0 0.0
  %4768 = vmatprep.mubr.f32.mxu0 0.0
  %4769 = vmatmul.mubr.f32.gmra.mrb[0].mxu0 %v4537
  %v4770 = vpop.f32.mrb[0].mxu0
  %v4771 = vadd.f32 0.0, %v4770
  %v4772 = vpop.f32.mrb[0].mxu0
  %4773 = vdwg.mxu0
  %4774 = vmatprep.subr.mxu0 0.0
  %4775 = vmatpush1.msra.mxu0 %v897
  %4776 = vmatprep.subr.mxu0 0.0
  %4777 = vmatpush1.msra.mxu0 %v898
  %4778 = vmatprep.subr.mxu0 0.0
  %4779 = vmatpush1.msra.mxu0 %v899
  %4780 = vmatprep.subr.mxu0 0.0
  %4781 = vmatpush1.msra.mxu0 %v900
  %4782 = vmatprep.subr.mxu0 0.0
  %4783 = vmatpush1.msra.mxu0 %v901
  %4784 = vmatprep.subr.mxu0 0.0
  %4785 = vmatpush1.msra.mxu0 %v902
  %4786 = vmatprep.subr.mxu0 0.0
  %4787 = vmatpush1.msra.mxu0 %v903
  %4788 = vmatprep.subr.mxu0 0.0
  %4789 = vmatpush1.msra.mxu0 %v904
  %4790 = vmatprep.subr.mxu0 0.0
  %4791 = vmatpush1.msra.mxu0 %v905
  %4792 = vmatprep.subr.mxu0 0.0
  %4793 = vmatpush1.msra.mxu0 %v906
  %4794 = vmatprep.subr.mxu0 0.0
  %4795 = vmatpush1.msra.mxu0 %v907
  %4796 = vmatprep.subr.mxu0 0.0
  %4797 = vmatpush1.msra.mxu0 %v908
  %4798 = vmatprep.subr.mxu0 0.0
  %4799 = vmatpush1.msra.mxu0 %v909
  %4800 = vmatprep.subr.mxu0 0.0
  %4801 = vmatpush1.msra.mxu0 %v910
  %4802 = vmatprep.subr.mxu0 0.0
  %4803 = vmatpush1.msra.mxu0 %v911
  %4804 = vmatprep.subr.mxu0 0.0
  %4805 = vmatpush1.msra.mxu0 %v912
  %4806 = vmatprep.subr.mxu0 0.0
  %4807 = vmatpush1.msra.mxu0 0.0
  %4808 = vmatprep.subr.mxu0 0.0
  %4809 = vmatpush1.msra.mxu0 0.0
  %4810 = vmatprep.subr.mxu0 0.0
  %4811 = vmatpush1.msra.mxu0 0.0
  %4812 = vmatprep.subr.mxu0 0.0
  %4813 = vmatpush1.msra.mxu0 0.0
  %4814 = vmatprep.subr.mxu0 0.0
  %4815 = vmatpush1.msra.mxu0 0.0
  %4816 = vmatprep.subr.mxu0 0.0
  %4817 = vmatpush1.msra.mxu0 0.0
  %4818 = vmatprep.subr.mxu0 0.0
  %4819 = vmatpush1.msra.mxu0 0.0
  %4820 = vmatprep.subr.mxu0 0.0
  %4821 = vmatpush1.msra.mxu0 0.0
  %4822 = vmatprep.subr.mxu0 0.0
  %4823 = vmatpush1.msra.mxu0 0.0
  %4824 = vmatprep.subr.mxu0 0.0
  %4825 = vmatpush1.msra.mxu0 0.0
  %4826 = vmatprep.subr.mxu0 0.0
  %4827 = vmatpush1.msra.mxu0 0.0
  %4828 = vmatprep.subr.mxu0 0.0
  %4829 = vmatpush1.msra.mxu0 0.0
  %4830 = vmatprep.subr.mxu0 0.0
  %4831 = vmatpush1.msra.mxu0 0.0
  %4832 = vmatprep.subr.mxu0 0.0
  %4833 = vmatpush1.msra.mxu0 0.0
  %4834 = vmatprep.subr.mxu0 0.0
  %4835 = vmatpush1.msra.mxu0 0.0
  %4836 = vmatprep.subr.mxu0 0.0
  %4837 = vmatpush1.msra.mxu0 0.0
  %4838 = vmatprep.mubr.f32.mxu0 0.0
  %4839 = vmatmul.mubr.f32.gmra.mrb[0].mxu0 %v4703
  %v4840 = vpop.f32.mrb[0].mxu0
  %v4841 = vadd.f32 %v4771, %v4840
  %v4842 = vpop.f32.mrb[0].mxu0
  %4843 = vdwg.mxu0
  %v4844 = vtanh.pop %v4841
  %s4845 = scalar_lea.vmem [#allocation7], 24
  %4846 = vst [vmem:[%s4845] sm:$0xff] %v4844
  %s4847 = scalar_lea.vmem [#allocation3], 128
  %v4848 = vld [vmem:[%s4847] sm:$0xff]
  %v4849 = vld [vmem:[%s4847 + $0x8] sm:$0xff]
  %v4850 = vld [vmem:[%s4847 + $0x10] sm:$0xff]
  %v4851 = vld [vmem:[%s4847 + $0x18] sm:$0xff]
  %4852 = vmatprep.subr.mxu0 %v834
  %4853 = vmatpush1.msra.mxu0 %v833
  %4854 = vmatprep.subr.mxu0 %v838
  %4855 = vmatpush1.msra.mxu0 %v837
  %4856 = vmatprep.subr.mxu0 %v842
  %4857 = vmatpush1.msra.mxu0 %v841
  %4858 = vmatprep.subr.mxu0 %v846
  %4859 = vmatpush1.msra.mxu0 %v845
  %4860 = vmatprep.subr.mxu0 %v850
  %4861 = vmatpush1.msra.mxu0 %v849
  %4862 = vmatprep.subr.mxu0 %v854
  %4863 = vmatpush1.msra.mxu0 %v853
  %4864 = vmatprep.subr.mxu0 %v858
  %4865 = vmatpush1.msra.mxu0 %v857
  %4866 = vmatprep.subr.mxu0 %v862
  %4867 = vmatpush1.msra.mxu0 %v861
  %4868 = vmatprep.subr.mxu0 %v866
  %4869 = vmatpush1.msra.mxu0 %v865
  %4870 = vmatprep.subr.mxu0 %v870
  %4871 = vmatpush1.msra.mxu0 %v869
  %4872 = vmatprep.subr.mxu0 %v874
  %4873 = vmatpush1.msra.mxu0 %v873
  %4874 = vmatprep.subr.mxu0 %v878
  %4875 = vmatpush1.msra.mxu0 %v877
  %4876 = vmatprep.subr.mxu0 %v882
  %4877 = vmatpush1.msra.mxu0 %v881
  %4878 = vmatprep.subr.mxu0 %v886
  %4879 = vmatpush1.msra.mxu0 %v885
  %4880 = vmatprep.subr.mxu0 %v890
  %4881 = vmatpush1.msra.mxu0 %v889
  %4882 = vmatprep.subr.mxu0 %v894
  %4883 = vmatpush1.msra.mxu0 %v893
  %4884 = vmatprep.subr.mxu0 0.0
  %4885 = vmatpush1.msra.mxu0 0.0
  %4886 = vmatprep.subr.mxu0 0.0
  %4887 = vmatpush1.msra.mxu0 0.0
  %4888 = vmatprep.subr.mxu0 0.0
  %4889 = vmatpush1.msra.mxu0 0.0
  %4890 = vmatprep.subr.mxu0 0.0
  %4891 = vmatpush1.msra.mxu0 0.0
  %4892 = vmatprep.subr.mxu0 0.0
  %4893 = vmatpush1.msra.mxu0 0.0
  %4894 = vmatprep.subr.mxu0 0.0
  %4895 = vmatpush1.msra.mxu0 0.0
  %4896 = vmatprep.subr.mxu0 0.0
  %4897 = vmatpush1.msra.mxu0 0.0
  %4898 = vmatprep.subr.mxu0 0.0
  %4899 = vmatpush1.msra.mxu0 0.0
  %4900 = vmatprep.subr.mxu0 0.0
  %4901 = vmatpush1.msra.mxu0 0.0
  %4902 = vmatprep.subr.mxu0 0.0
  %4903 = vmatpush1.msra.mxu0 0.0
  %4904 = vmatprep.subr.mxu0 0.0
  %4905 = vmatpush1.msra.mxu0 0.0
  %4906 = vmatprep.subr.mxu0 0.0
  %4907 = vmatpush1.msra.mxu0 0.0
  %4908 = vmatprep.subr.mxu0 0.0
  %4909 = vmatpush1.msra.mxu0 0.0
  %4910 = vmatprep.subr.mxu0 0.0
  %4911 = vmatpush1.msra.mxu0 0.0
  %4912 = vmatprep.subr.mxu0 0.0
  %4913 = vmatpush1.msra.mxu0 0.0
  %4914 = vmatprep.subr.mxu0 0.0
  %4915 = vmatpush1.msra.mxu0 0.0
  %4916 = vmatprep.mubr.f32.mxu0 0.0
  %4917 = vmatmul.mubr.f32.gmra.mrb[0].mxu0 %v4844
  %v4918 = vpop.f32.mrb[0].mxu0
  %v4919 = vadd.f32 0.0, %v4918
  %v4920 = vpop.f32.mrb[0].mxu0
  %v4921 = vadd.f32 0.0, %v4920
  %4922 = vdwg.mxu0
  %4923 = vmatprep.subr.mxu0 %v836
  %4924 = vmatpush1.msra.mxu0 %v835
  %4925 = vmatprep.subr.mxu0 %v840
  %4926 = vmatpush1.msra.mxu0 %v839
  %4927 = vmatprep.subr.mxu0 %v844
  %4928 = vmatpush1.msra.mxu0 %v843
  %4929 = vmatprep.subr.mxu0 %v848
  %4930 = vmatpush1.msra.mxu0 %v847
  %4931 = vmatprep.subr.mxu0 %v852
  %4932 = vmatpush1.msra.mxu0 %v851
  %4933 = vmatprep.subr.mxu0 %v856
  %4934 = vmatpush1.msra.mxu0 %v855
  %4935 = vmatprep.subr.mxu0 %v860
  %4936 = vmatpush1.msra.mxu0 %v859
  %4937 = vmatprep.subr.mxu0 %v864
  %4938 = vmatpush1.msra.mxu0 %v863
  %4939 = vmatprep.subr.mxu0 %v868
  %4940 = vmatpush1.msra.mxu0 %v867
  %4941 = vmatprep.subr.mxu0 %v872
  %4942 = vmatpush1.msra.mxu0 %v871
  %4943 = vmatprep.subr.mxu0 %v876
  %4944 = vmatpush1.msra.mxu0 %v875
  %4945 = vmatprep.subr.mxu0 %v880
  %4946 = vmatpush1.msra.mxu0 %v879
  %4947 = vmatprep.subr.mxu0 %v884
  %4948 = vmatpush1.msra.mxu0 %v883
  %4949 = vmatprep.subr.mxu0 %v888
  %4950 = vmatpush1.msra.mxu0 %v887
  %4951 = vmatprep.subr.mxu0 %v892
  %4952 = vmatpush1.msra.mxu0 %v891
  %4953 = vmatprep.subr.mxu0 %v896
  %4954 = vmatpush1.msra.mxu0 %v895
  %4955 = vmatprep.subr.mxu0 0.0
  %4956 = vmatpush1.msra.mxu0 0.0
  %4957 = vmatprep.subr.mxu0 0.0
  %4958 = vmatpush1.msra.mxu0 0.0
  %4959 = vmatprep.subr.mxu0 0.0
  %4960 = vmatpush1.msra.mxu0 0.0
  %4961 = vmatprep.subr.mxu0 0.0
  %4962 = vmatpush1.msra.mxu0 0.0
  %4963 = vmatprep.subr.mxu0 0.0
  %4964 = vmatpush1.msra.mxu0 0.0
  %4965 = vmatprep.subr.mxu0 0.0
  %4966 = vmatpush1.msra.mxu0 0.0
  %4967 = vmatprep.subr.mxu0 0.0
  %4968 = vmatpush1.msra.mxu0 0.0
  %4969 = vmatprep.subr.mxu0 0.0
  %4970 = vmatpush1.msra.mxu0 0.0
  %4971 = vmatprep.subr.mxu0 0.0
  %4972 = vmatpush1.msra.mxu0 0.0
  %4973 = vmatprep.subr.mxu0 0.0
  %4974 = vmatpush1.msra.mxu0 0.0
  %4975 = vmatprep.subr.mxu0 0.0
  %4976 = vmatpush1.msra.mxu0 0.0
  %4977 = vmatprep.subr.mxu0 0.0
  %4978 = vmatpush1.msra.mxu0 0.0
  %4979 = vmatprep.subr.mxu0 0.0
  %4980 = vmatpush1.msra.mxu0 0.0
  %4981 = vmatprep.subr.mxu0 0.0
  %4982 = vmatpush1.msra.mxu0 0.0
  %4983 = vmatprep.subr.mxu0 0.0
  %4984 = vmatpush1.msra.mxu0 0.0
  %4985 = vmatprep.subr.mxu0 0.0
  %4986 = vmatpush1.msra.mxu0 0.0
  %4987 = vmatprep.mubr.f32.mxu0 0.0
  %4988 = vmatmul.mubr.f32.gmra.mrb[0].mxu0 %v4844
  %v4989 = vpop.f32.mrb[0].mxu0
  %v4990 = vadd.f32 0.0, %v4989
  %v4991 = vpop.f32.mrb[0].mxu0
  %v4992 = vadd.f32 0.0, %v4991
  %4993 = vdwg.mxu0
  %v4994 = vadd.f32 %v4848, %v4919
  %v4995 = vadd.f32 %v4849, %v4921
  %v4996 = vadd.f32 %v4850, %v4990
  %v4997 = vadd.f32 %v4851, %v4992
  %v4998 = vxor.u32 %v4994, 2147483648
  %v4999 = vmul.f32 %v4998, 1.442695
  %v5000 = vpow.pop %v4999
  %v5001 = vadd.f32 %v5000, 1.0
  %v5002 = vrcp.pop %v5001
  %v5003 = vmul.f32 1.0, %v5002
  %v5004 = vxor.u32 %v4995, 2147483648
  %v5005 = vmul.f32 %v5004, 1.442695
  %v5006 = vpow.pop %v5005
  %v5007 = vadd.f32 %v5006, 1.0
  %v5008 = vrcp.pop %v5007
  %v5009 = vmul.f32 1.0, %v5008
  %v5010 = vtanh.pop %v4996
  %v5011 = vxor.u32 %v4997, 2147483648
  %v5012 = vmul.f32 %v5011, 1.442695
  %v5013 = vpow.pop %v5012
  %v5014 = vadd.f32 %v5013, 1.0
  %v5015 = vrcp.pop %v5014
  %v5016 = vmul.f32 1.0, %v5015
  %v5017 = vmul.f32 %v5009, %v4535
  %v5018 = vmul.f32 %v5003, %v5010
  %v5019 = vadd.f32 %v5017, %v5018
  %v5020 = vtanh.pop %v5019
  %v5021 = vmul.f32 %v5016, %v5020
  %v5022 = vld [vmem:[#allocation6] sm:$0xff]
  %v5023 = vld [vmem:[#allocation6 + $0x8] sm:$0xff]
  %v5024 = vld [vmem:[#allocation6 + $0x10] sm:$0xff]
  %v5025 = vld [vmem:[#allocation6 + $0x18] sm:$0xff]
  %v5026 = vld [vmem:[#allocation6 + $0x20] sm:$0xff]
  %v5027 = vld [vmem:[#allocation6 + $0x28] sm:$0xff]
  %v5028 = vld [vmem:[#allocation6 + $0x30] sm:$0xff]
  %v5029 = vld [vmem:[#allocation6 + $0x38] sm:$0xff]
  %v5030 = vmul.f32 %v5022, %v5021
  %v5031 = vmul.f32 %v5023, %v5021
  %v5032 = vmul.f32 %v5024, %v5021
  %v5033 = vmul.f32 %v5025, %v5021
  %v5034 = vmul.f32 %v5026, %v5021
  %v5035 = vmul.f32 %v5027, %v5021
  %v5036 = vmul.f32 %v5028, %v5021
  %v5037 = vmul.f32 %v5029, %v5021
  %5038 = vadd.xlane.f32.xlu0 %v5030
  %v5039 = vpop.xlane.xlu0 %5038
  %5040 = vadd.xlane.f32.xlu0 %v5031
  %v5041 = vpop.xlane.xlu0 %5040
  %5042 = vadd.xlane.f32.xlu0 %v5032
  %v5043 = vpop.xlane.xlu0 %5042
  %5044 = vadd.xlane.f32.xlu0 %v5033
  %v5045 = vpop.xlane.xlu0 %5044
  %5046 = vadd.xlane.f32.xlu0 %v5034
  %v5047 = vpop.xlane.xlu0 %5046
  %5048 = vadd.xlane.f32.xlu0 %v5035
  %v5049 = vpop.xlane.xlu0 %5048
  %5050 = vadd.xlane.f32.xlu0 %v5036
  %v5051 = vpop.xlane.xlu0 %5050
  %5052 = vadd.xlane.f32.xlu0 %v5037
  %v5053 = vpop.xlane.xlu0 %5052
  %v5054 = vadd.f32 %v5039, %v2904
  %v5055 = vadd.f32 %v5041, %v2905
  %v5056 = vadd.f32 %v5043, %v2906
  %v5057 = vadd.f32 %v5045, %v2907
  %v5058 = vadd.f32 %v5047, %v2908
  %v5059 = vadd.f32 %v5049, %v2909
  %v5060 = vadd.f32 %v5051, %v2910
  %v5061 = vadd.f32 %v5053, %v2911
  %v5062 = vsel %vm3126, %v5054, -inf
  %v5063 = vsel %vm3126, %v5055, -inf
  %v5064 = vsel %vm3126, %v5056, -inf
  %v5065 = vsel %vm3126, %v5057, -inf
  %v5066 = vsel %vm3126, %v5058, -inf
  %v5067 = vmax.f32 %v5062, %v5066
  %v5068 = vsel %vm3126, %v5059, -inf
  %v5069 = vmax.f32 %v5063, %v5068
  %v5070 = vsel %vm3126, %v5060, -inf
  %v5071 = vmax.f32 %v5064, %v5070
  %v5072 = vsel %vm3126, %v5061, -inf
  %v5073 = vmax.f32 %v5065, %v5072
  %v5074 = vmax.f32 %v5067, %v5069
  %v5075 = vmax.f32 %v5071, %v5073
  %v5076 = vmax.f32 %v5074, %v5075
  %v5077 = vsub.f32 %v5054, %v5076
  %v5078 = vsub.f32 %v5055, %v5076
  %v5079 = vsub.f32 %v5056, %v5076
  %v5080 = vsub.f32 %v5057, %v5076
  %v5081 = vsub.f32 %v5058, %v5076
  %v5082 = vsub.f32 %v5059, %v5076
  %v5083 = vsub.f32 %v5060, %v5076
  %v5084 = vsub.f32 %v5061, %v5076
  %v5085 = vmul.f32 %v5077, 1.442695
  %v5086 = vpow.pop %v5085
  %v5087 = vmul.f32 %v5078, 1.442695
  %v5088 = vpow.pop %v5087
  %v5089 = vmul.f32 %v5079, 1.442695
  %v5090 = vpow.pop %v5089
  %v5091 = vmul.f32 %v5080, 1.442695
  %v5092 = vpow.pop %v5091
  %v5093 = vmul.f32 %v5081, 1.442695
  %v5094 = vpow.pop %v5093
  %v5095 = vmul.f32 %v5082, 1.442695
  %v5096 = vpow.pop %v5095
  %v5097 = vmul.f32 %v5083, 1.442695
  %v5098 = vpow.pop %v5097
  %v5099 = vmul.f32 %v5084, 1.442695
  %v5100 = vpow.pop %v5099
  %v5101 = vsel %vm3126, %v5086, 0.0
  %v5102 = vsel %vm3126, %v5088, 0.0
  %v5103 = vadd.f32 %v5101, %v5102
  %v5104 = vsel %vm3126, %v5090, 0.0
  %v5105 = vadd.f32 %v5103, %v5104
  %v5106 = vsel %vm3126, %v5092, 0.0
  %v5107 = vadd.f32 %v5105, %v5106
  %v5108 = vsel %vm3126, %v5094, 0.0
  %v5109 = vadd.f32 %v5107, %v5108
  %v5110 = vsel %vm3126, %v5096, 0.0
  %v5111 = vadd.f32 %v5109, %v5110
  %v5112 = vsel %vm3126, %v5098, 0.0
  %v5113 = vadd.f32 %v5111, %v5112
  %v5114 = vsel %vm3126, %v5100, 0.0
  %v5115 = vadd.f32 %v5113, %v5114
  %v5116 = vrcp.pop %v5115
  %v5117 = vmul.f32 %v5086, %v5116
  %v5118 = vmul.f32 %v5088, %v5116
  %v5119 = vmul.f32 %v5090, %v5116
  %v5120 = vmul.f32 %v5092, %v5116
  %v5121 = vmul.f32 %v5094, %v5116
  %v5122 = vmul.f32 %v5096, %v5116
  %v5123 = vmul.f32 %v5098, %v5116
  %v5124 = vmul.f32 %v5100, %v5116
  %v5125 = vld [vmem:[#allocation5] sm:$0xff]
  %v5126 = vld [vmem:[#allocation5 + $0x8] sm:$0xff]
  %v5127 = vld [vmem:[#allocation5 + $0x10] sm:$0xff]
  %v5128 = vld [vmem:[#allocation5 + $0x18] sm:$0xff]
  %v5129 = vld [vmem:[#allocation5 + $0x20] sm:$0xff]
  %v5130 = vld [vmem:[#allocation5 + $0x28] sm:$0xff]
  %v5131 = vld [vmem:[#allocation5 + $0x30] sm:$0xff]
  %v5132 = vld [vmem:[#allocation5 + $0x38] sm:$0xff]
  %5134 = vset.pattern.permute.xlu0 0
  %5135 = vperm.xlu0 %5134, %v5117
  %v5136 = vpop.permute.xlu0 %5135
  %5139 = vset.pattern.permute.xlu0 0
  %5140 = vperm.xlu0 %5139, %v5118
  %v5141 = vpop.permute.xlu0 %5140
  %5144 = vset.pattern.permute.xlu0 0
  %5145 = vperm.xlu0 %5144, %v5119
  %v5146 = vpop.permute.xlu0 %5145
  %5149 = vset.pattern.permute.xlu0 0
  %5150 = vperm.xlu0 %5149, %v5120
  %v5151 = vpop.permute.xlu0 %5150
  %5154 = vset.pattern.permute.xlu0 0
  %5155 = vperm.xlu0 %5154, %v5121
  %v5156 = vpop.permute.xlu0 %5155
  %5159 = vset.pattern.permute.xlu0 0
  %5160 = vperm.xlu0 %5159, %v5122
  %v5161 = vpop.permute.xlu0 %5160
  %5164 = vset.pattern.permute.xlu0 0
  %5165 = vperm.xlu0 %5164, %v5123
  %v5166 = vpop.permute.xlu0 %5165
  %5169 = vset.pattern.permute.xlu0 0
  %5170 = vperm.xlu0 %5169, %v5124
  %v5171 = vpop.permute.xlu0 %5170
  %v5173 = vmul.f32 %v5136, %v5125
  %v5174 = vmul.f32 %v5141, %v5126
  %v5175 = vmul.f32 %v5146, %v5127
  %v5176 = vmul.f32 %v5151, %v5128
  %v5177 = vmul.f32 %v5156, %v5129
  %v5178 = vmul.f32 %v5161, %v5130
  %v5179 = vmul.f32 %v5166, %v5131
  %v5180 = vmul.f32 %v5171, %v5132
  %v5181 = vadd.f32 %v5173, %v5174
  %v5182 = vadd.f32 %v5181, %v5175
  %v5183 = vadd.f32 %v5182, %v5176
  %v5184 = vadd.f32 %v5183, %v5177
  %v5185 = vadd.f32 %v5184, %v5178
  %v5186 = vadd.f32 %v5185, %v5179
  %v5187 = vadd.f32 %v5186, %v5180
  %5188 = vmatprep.subr.mxu0 0.0
  %5189 = vmatpush1.msra.mxu0 %v913
  %5190 = vmatprep.subr.mxu0 0.0
  %5191 = vmatpush1.msra.mxu0 %v914
  %5192 = vmatprep.subr.mxu0 0.0
  %5193 = vmatpush1.msra.mxu0 %v915
  %5194 = vmatprep.subr.mxu0 0.0
  %5195 = vmatpush1.msra.mxu0 %v916
  %5196 = vmatprep.subr.mxu0 0.0
  %5197 = vmatpush1.msra.mxu0 %v917
  %5198 = vmatprep.subr.mxu0 0.0
  %5199 = vmatpush1.msra.mxu0 %v918
  %5200 = vmatprep.subr.mxu0 0.0
  %5201 = vmatpush1.msra.mxu0 %v919
  %5202 = vmatprep.subr.mxu0 0.0
  %5203 = vmatpush1.msra.mxu0 %v920
  %5204 = vmatprep.subr.mxu0 0.0
  %5205 = vmatpush1.msra.mxu0 %v921
  %5206 = vmatprep.subr.mxu0 0.0
  %5207 = vmatpush1.msra.mxu0 %v922
  %5208 = vmatprep.subr.mxu0 0.0
  %5209 = vmatpush1.msra.mxu0 %v923
  %5210 = vmatprep.subr.mxu0 0.0
  %5211 = vmatpush1.msra.mxu0 %v924
  %5212 = vmatprep.subr.mxu0 0.0
  %5213 = vmatpush1.msra.mxu0 %v925
  %5214 = vmatprep.subr.mxu0 0.0
  %5215 = vmatpush1.msra.mxu0 %v926
  %5216 = vmatprep.subr.mxu0 0.0
  %5217 = vmatpush1.msra.mxu0 %v927
  %5218 = vmatprep.subr.mxu0 0.0
  %5219 = vmatpush1.msra.mxu0 %v928
  %5220 = vmatprep.subr.mxu0 0.0
  %5221 = vmatpush1.msra.mxu0 0.0
  %5222 = vmatprep.subr.mxu0 0.0
  %5223 = vmatpush1.msra.mxu0 0.0
  %5224 = vmatprep.subr.mxu0 0.0
  %5225 = vmatpush1.msra.mxu0 0.0
  %5226 = vmatprep.subr.mxu0 0.0
  %5227 = vmatpush1.msra.mxu0 0.0
  %5228 = vmatprep.subr.mxu0 0.0
  %5229 = vmatpush1.msra.mxu0 0.0
  %5230 = vmatprep.subr.mxu0 0.0
  %5231 = vmatpush1.msra.mxu0 0.0
  %5232 = vmatprep.subr.mxu0 0.0
  %5233 = vmatpush1.msra.mxu0 0.0
  %5234 = vmatprep.subr.mxu0 0.0
  %5235 = vmatpush1.msra.mxu0 0.0
  %5236 = vmatprep.subr.mxu0 0.0
  %5237 = vmatpush1.msra.mxu0 0.0
  %5238 = vmatprep.subr.mxu0 0.0
  %5239 = vmatpush1.msra.mxu0 0.0
  %5240 = vmatprep.subr.mxu0 0.0
  %5241 = vmatpush1.msra.mxu0 0.0
  %5242 = vmatprep.subr.mxu0 0.0
  %5243 = vmatpush1.msra.mxu0 0.0
  %5244 = vmatprep.subr.mxu0 0.0
  %5245 = vmatpush1.msra.mxu0 0.0
  %5246 = vmatprep.subr.mxu0 0.0
  %5247 = vmatpush1.msra.mxu0 0.0
  %5248 = vmatprep.subr.mxu0 0.0
  %5249 = vmatpush1.msra.mxu0 0.0
  %5250 = vmatprep.subr.mxu0 0.0
  %5251 = vmatpush1.msra.mxu0 0.0
  %5252 = vmatprep.mubr.f32.mxu0 0.0
  %5253 = vmatmul.mubr.f32.gmra.mrb[0].mxu0 %v5021
  %v5254 = vpop.f32.mrb[0].mxu0
  %v5255 = vadd.f32 0.0, %v5254
  %v5256 = vpop.f32.mrb[0].mxu0
  %5257 = vdwg.mxu0
  %5258 = vmatprep.subr.mxu0 0.0
  %5259 = vmatpush1.msra.mxu0 %v897
  %5260 = vmatprep.subr.mxu0 0.0
  %5261 = vmatpush1.msra.mxu0 %v898
  %5262 = vmatprep.subr.mxu0 0.0
  %5263 = vmatpush1.msra.mxu0 %v899
  %5264 = vmatprep.subr.mxu0 0.0
  %5265 = vmatpush1.msra.mxu0 %v900
  %5266 = vmatprep.subr.mxu0 0.0
  %5267 = vmatpush1.msra.mxu0 %v901
  %5268 = vmatprep.subr.mxu0 0.0
  %5269 = vmatpush1.msra.mxu0 %v902
  %5270 = vmatprep.subr.mxu0 0.0
  %5271 = vmatpush1.msra.mxu0 %v903
  %5272 = vmatprep.subr.mxu0 0.0
  %5273 = vmatpush1.msra.mxu0 %v904
  %5274 = vmatprep.subr.mxu0 0.0
  %5275 = vmatpush1.msra.mxu0 %v905
  %5276 = vmatprep.subr.mxu0 0.0
  %5277 = vmatpush1.msra.mxu0 %v906
  %5278 = vmatprep.subr.mxu0 0.0
  %5279 = vmatpush1.msra.mxu0 %v907
  %5280 = vmatprep.subr.mxu0 0.0
  %5281 = vmatpush1.msra.mxu0 %v908
  %5282 = vmatprep.subr.mxu0 0.0
  %5283 = vmatpush1.msra.mxu0 %v909
  %5284 = vmatprep.subr.mxu0 0.0
  %5285 = vmatpush1.msra.mxu0 %v910
  %5286 = vmatprep.subr.mxu0 0.0
  %5287 = vmatpush1.msra.mxu0 %v911
  %5288 = vmatprep.subr.mxu0 0.0
  %5289 = vmatpush1.msra.mxu0 %v912
  %5290 = vmatprep.subr.mxu0 0.0
  %5291 = vmatpush1.msra.mxu0 0.0
  %5292 = vmatprep.subr.mxu0 0.0
  %5293 = vmatpush1.msra.mxu0 0.0
  %5294 = vmatprep.subr.mxu0 0.0
  %5295 = vmatpush1.msra.mxu0 0.0
  %5296 = vmatprep.subr.mxu0 0.0
  %5297 = vmatpush1.msra.mxu0 0.0
  %5298 = vmatprep.subr.mxu0 0.0
  %5299 = vmatpush1.msra.mxu0 0.0
  %5300 = vmatprep.subr.mxu0 0.0
  %5301 = vmatpush1.msra.mxu0 0.0
  %5302 = vmatprep.subr.mxu0 0.0
  %5303 = vmatpush1.msra.mxu0 0.0
  %5304 = vmatprep.subr.mxu0 0.0
  %5305 = vmatpush1.msra.mxu0 0.0
  %5306 = vmatprep.subr.mxu0 0.0
  %5307 = vmatpush1.msra.mxu0 0.0
  %5308 = vmatprep.subr.mxu0 0.0
  %5309 = vmatpush1.msra.mxu0 0.0
  %5310 = vmatprep.subr.mxu0 0.0
  %5311 = vmatpush1.msra.mxu0 0.0
  %5312 = vmatprep.subr.mxu0 0.0
  %5313 = vmatpush1.msra.mxu0 0.0
  %5314 = vmatprep.subr.mxu0 0.0
  %5315 = vmatpush1.msra.mxu0 0.0
  %5316 = vmatprep.subr.mxu0 0.0
  %5317 = vmatpush1.msra.mxu0 0.0
  %5318 = vmatprep.subr.mxu0 0.0
  %5319 = vmatpush1.msra.mxu0 0.0
  %5320 = vmatprep.subr.mxu0 0.0
  %5321 = vmatpush1.msra.mxu0 0.0
  %5322 = vmatprep.mubr.f32.mxu0 0.0
  %5323 = vmatmul.mubr.f32.gmra.mrb[0].mxu0 %v5187
  %v5324 = vpop.f32.mrb[0].mxu0
  %v5325 = vadd.f32 %v5255, %v5324
  %v5326 = vpop.f32.mrb[0].mxu0
  %5327 = vdwg.mxu0
  %v5328 = vtanh.pop %v5325
  %s5329 = scalar_lea.vmem [#allocation7], 32
  %5330 = vst [vmem:[%s5329] sm:$0xff] %v5328
  %s5331 = scalar_lea.vmem [#allocation3], 160
  %v5332 = vld [vmem:[%s5331] sm:$0xff]
  %v5333 = vld [vmem:[%s5331 + $0x8] sm:$0xff]
  %v5334 = vld [vmem:[%s5331 + $0x10] sm:$0xff]
  %v5335 = vld [vmem:[%s5331 + $0x18] sm:$0xff]
  %5336 = vmatprep.subr.mxu0 %v834
  %5337 = vmatpush1.msra.mxu0 %v833
  %5338 = vmatprep.subr.mxu0 %v838
  %5339 = vmatpush1.msra.mxu0 %v837
  %5340 = vmatprep.subr.mxu0 %v842
  %5341 = vmatpush1.msra.mxu0 %v841
  %5342 = vmatprep.subr.mxu0 %v846
  %5343 = vmatpush1.msra.mxu0 %v845
  %5344 = vmatprep.subr.mxu0 %v850
  %5345 = vmatpush1.msra.mxu0 %v849
  %5346 = vmatprep.subr.mxu0 %v854
  %5347 = vmatpush1.msra.mxu0 %v853
  %5348 = vmatprep.subr.mxu0 %v858
  %5349 = vmatpush1.msra.mxu0 %v857
  %5350 = vmatprep.subr.mxu0 %v862
  %5351 = vmatpush1.msra.mxu0 %v861
  %5352 = vmatprep.subr.mxu0 %v866
  %5353 = vmatpush1.msra.mxu0 %v865
  %5354 = vmatprep.subr.mxu0 %v870
  %5355 = vmatpush1.msra.mxu0 %v869
  %5356 = vmatprep.subr.mxu0 %v874
  %5357 = vmatpush1.msra.mxu0 %v873
  %5358 = vmatprep.subr.mxu0 %v878
  %5359 = vmatpush1.msra.mxu0 %v877
  %5360 = vmatprep.subr.mxu0 %v882
  %5361 = vmatpush1.msra.mxu0 %v881
  %5362 = vmatprep.subr.mxu0 %v886
  %5363 = vmatpush1.msra.mxu0 %v885
  %5364 = vmatprep.subr.mxu0 %v890
  %5365 = vmatpush1.msra.mxu0 %v889
  %5366 = vmatprep.subr.mxu0 %v894
  %5367 = vmatpush1.msra.mxu0 %v893
  %5368 = vmatprep.subr.mxu0 0.0
  %5369 = vmatpush1.msra.mxu0 0.0
  %5370 = vmatprep.subr.mxu0 0.0
  %5371 = vmatpush1.msra.mxu0 0.0
  %5372 = vmatprep.subr.mxu0 0.0
  %5373 = vmatpush1.msra.mxu0 0.0
  %5374 = vmatprep.subr.mxu0 0.0
  %5375 = vmatpush1.msra.mxu0 0.0
  %5376 = vmatprep.subr.mxu0 0.0
  %5377 = vmatpush1.msra.mxu0 0.0
  %5378 = vmatprep.subr.mxu0 0.0
  %5379 = vmatpush1.msra.mxu0 0.0
  %5380 = vmatprep.subr.mxu0 0.0
  %5381 = vmatpush1.msra.mxu0 0.0
  %5382 = vmatprep.subr.mxu0 0.0
  %5383 = vmatpush1.msra.mxu0 0.0
  %5384 = vmatprep.subr.mxu0 0.0
  %5385 = vmatpush1.msra.mxu0 0.0
  %5386 = vmatprep.subr.mxu0 0.0
  %5387 = vmatpush1.msra.mxu0 0.0
  %5388 = vmatprep.subr.mxu0 0.0
  %5389 = vmatpush1.msra.mxu0 0.0
  %5390 = vmatprep.subr.mxu0 0.0
  %5391 = vmatpush1.msra.mxu0 0.0
  %5392 = vmatprep.subr.mxu0 0.0
  %5393 = vmatpush1.msra.mxu0 0.0
  %5394 = vmatprep.subr.mxu0 0.0
  %5395 = vmatpush1.msra.mxu0 0.0
  %5396 = vmatprep.subr.mxu0 0.0
  %5397 = vmatpush1.msra.mxu0 0.0
  %5398 = vmatprep.subr.mxu0 0.0
  %5399 = vmatpush1.msra.mxu0 0.0
  %5400 = vmatprep.mubr.f32.mxu0 0.0
  %5401 = vmatmul.mubr.f32.gmra.mrb[0].mxu0 %v5328
  %v5402 = vpop.f32.mrb[0].mxu0
  %v5403 = vadd.f32 0.0, %v5402
  %v5404 = vpop.f32.mrb[0].mxu0
  %v5405 = vadd.f32 0.0, %v5404
  %5406 = vdwg.mxu0
  %5407 = vmatprep.subr.mxu0 %v836
  %5408 = vmatpush1.msra.mxu0 %v835
  %5409 = vmatprep.subr.mxu0 %v840
  %5410 = vmatpush1.msra.mxu0 %v839
  %5411 = vmatprep.subr.mxu0 %v844
  %5412 = vmatpush1.msra.mxu0 %v843
  %5413 = vmatprep.subr.mxu0 %v848
  %5414 = vmatpush1.msra.mxu0 %v847
  %5415 = vmatprep.subr.mxu0 %v852
  %5416 = vmatpush1.msra.mxu0 %v851
  %5417 = vmatprep.subr.mxu0 %v856
  %5418 = vmatpush1.msra.mxu0 %v855
  %5419 = vmatprep.subr.mxu0 %v860
  %5420 = vmatpush1.msra.mxu0 %v859
  %5421 = vmatprep.subr.mxu0 %v864
  %5422 = vmatpush1.msra.mxu0 %v863
  %5423 = vmatprep.subr.mxu0 %v868
  %5424 = vmatpush1.msra.mxu0 %v867
  %5425 = vmatprep.subr.mxu0 %v872
  %5426 = vmatpush1.msra.mxu0 %v871
  %5427 = vmatprep.subr.mxu0 %v876
  %5428 = vmatpush1.msra.mxu0 %v875
  %5429 = vmatprep.subr.mxu0 %v880
  %5430 = vmatpush1.msra.mxu0 %v879
  %5431 = vmatprep.subr.mxu0 %v884
  %5432 = vmatpush1.msra.mxu0 %v883
  %5433 = vmatprep.subr.mxu0 %v888
  %5434 = vmatpush1.msra.mxu0 %v887
  %5435 = vmatprep.subr.mxu0 %v892
  %5436 = vmatpush1.msra.mxu0 %v891
  %5437 = vmatprep.subr.mxu0 %v896
  %5438 = vmatpush1.msra.mxu0 %v895
  %5439 = vmatprep.subr.mxu0 0.0
  %5440 = vmatpush1.msra.mxu0 0.0
  %5441 = vmatprep.subr.mxu0 0.0
  %5442 = vmatpush1.msra.mxu0 0.0
  %5443 = vmatprep.subr.mxu0 0.0
  %5444 = vmatpush1.msra.mxu0 0.0
  %5445 = vmatprep.subr.mxu0 0.0
  %5446 = vmatpush1.msra.mxu0 0.0
  %5447 = vmatprep.subr.mxu0 0.0
  %5448 = vmatpush1.msra.mxu0 0.0
  %5449 = vmatprep.subr.mxu0 0.0
  %5450 = vmatpush1.msra.mxu0 0.0
  %5451 = vmatprep.subr.mxu0 0.0
  %5452 = vmatpush1.msra.mxu0 0.0
  %5453 = vmatprep.subr.mxu0 0.0
  %5454 = vmatpush1.msra.mxu0 0.0
  %5455 = vmatprep.subr.mxu0 0.0
  %5456 = vmatpush1.msra.mxu0 0.0
  %5457 = vmatprep.subr.mxu0 0.0
  %5458 = vmatpush1.msra.mxu0 0.0
  %5459 = vmatprep.subr.mxu0 0.0
  %5460 = vmatpush1.msra.mxu0 0.0
  %5461 = vmatprep.subr.mxu0 0.0
  %5462 = vmatpush1.msra.mxu0 0.0
  %5463 = vmatprep.subr.mxu0 0.0
  %5464 = vmatpush1.msra.mxu0 0.0
  %5465 = vmatprep.subr.mxu0 0.0
  %5466 = vmatpush1.msra.mxu0 0.0
  %5467 = vmatprep.subr.mxu0 0.0
  %5468 = vmatpush1.msra.mxu0 0.0
  %5469 = vmatprep.subr.mxu0 0.0
  %5470 = vmatpush1.msra.mxu0 0.0
  %5471 = vmatprep.mubr.f32.mxu0 0.0
  %5472 = vmatmul.mubr.f32.gmra.mrb[0].mxu0 %v5328
  %v5473 = vpop.f32.mrb[0].mxu0
  %v5474 = vadd.f32 0.0, %v5473
  %v5475 = vpop.f32.mrb[0].mxu0
  %v5476 = vadd.f32 0.0, %v5475
  %5477 = vdwg.mxu0
  %v5478 = vadd.f32 %v5332, %v5403
  %v5479 = vadd.f32 %v5333, %v5405
  %v5480 = vadd.f32 %v5334, %v5474
  %v5481 = vadd.f32 %v5335, %v5476
  %v5482 = vxor.u32 %v5478, 2147483648
  %v5483 = vmul.f32 %v5482, 1.442695
  %v5484 = vpow.pop %v5483
  %v5485 = vadd.f32 %v5484, 1.0
  %v5486 = vrcp.pop %v5485
  %v5487 = vmul.f32 1.0, %v5486
  %v5488 = vxor.u32 %v5479, 2147483648
  %v5489 = vmul.f32 %v5488, 1.442695
  %v5490 = vpow.pop %v5489
  %v5491 = vadd.f32 %v5490, 1.0
  %v5492 = vrcp.pop %v5491
  %v5493 = vmul.f32 1.0, %v5492
  %v5494 = vtanh.pop %v5480
  %v5495 = vxor.u32 %v5481, 2147483648
  %v5496 = vmul.f32 %v5495, 1.442695
  %v5497 = vpow.pop %v5496
  %v5498 = vadd.f32 %v5497, 1.0
  %v5499 = vrcp.pop %v5498
  %v5500 = vmul.f32 1.0, %v5499
  %v5501 = vmul.f32 %v5493, %v5019
  %v5502 = vmul.f32 %v5487, %v5494
  %v5503 = vadd.f32 %v5501, %v5502
  %v5504 = vtanh.pop %v5503
  %v5505 = vmul.f32 %v5500, %v5504
  %v5506 = vld [vmem:[#allocation6] sm:$0xff]
  %v5507 = vld [vmem:[#allocation6 + $0x8] sm:$0xff]
  %v5508 = vld [vmem:[#allocation6 + $0x10] sm:$0xff]
  %v5509 = vld [vmem:[#allocation6 + $0x18] sm:$0xff]
  %v5510 = vld [vmem:[#allocation6 + $0x20] sm:$0xff]
  %v5511 = vld [vmem:[#allocation6 + $0x28] sm:$0xff]
  %v5512 = vld [vmem:[#allocation6 + $0x30] sm:$0xff]
  %v5513 = vld [vmem:[#allocation6 + $0x38] sm:$0xff]
  %v5514 = vmul.f32 %v5506, %v5505
  %v5515 = vmul.f32 %v5507, %v5505
  %v5516 = vmul.f32 %v5508, %v5505
  %v5517 = vmul.f32 %v5509, %v5505
  %v5518 = vmul.f32 %v5510, %v5505
  %v5519 = vmul.f32 %v5511, %v5505
  %v5520 = vmul.f32 %v5512, %v5505
  %v5521 = vmul.f32 %v5513, %v5505
  %5522 = vadd.xlane.f32.xlu0 %v5514
  %v5523 = vpop.xlane.xlu0 %5522
  %5524 = vadd.xlane.f32.xlu0 %v5515
  %v5525 = vpop.xlane.xlu0 %5524
  %5526 = vadd.xlane.f32.xlu0 %v5516
  %v5527 = vpop.xlane.xlu0 %5526
  %5528 = vadd.xlane.f32.xlu0 %v5517
  %v5529 = vpop.xlane.xlu0 %5528
  %5530 = vadd.xlane.f32.xlu0 %v5518
  %v5531 = vpop.xlane.xlu0 %5530
  %5532 = vadd.xlane.f32.xlu0 %v5519
  %v5533 = vpop.xlane.xlu0 %5532
  %5534 = vadd.xlane.f32.xlu0 %v5520
  %v5535 = vpop.xlane.xlu0 %5534
  %5536 = vadd.xlane.f32.xlu0 %v5521
  %v5537 = vpop.xlane.xlu0 %5536
  %v5538 = vadd.f32 %v5523, %v2904
  %v5539 = vadd.f32 %v5525, %v2905
  %v5540 = vadd.f32 %v5527, %v2906
  %v5541 = vadd.f32 %v5529, %v2907
  %v5542 = vadd.f32 %v5531, %v2908
  %v5543 = vadd.f32 %v5533, %v2909
  %v5544 = vadd.f32 %v5535, %v2910
  %v5545 = vadd.f32 %v5537, %v2911
  %v5546 = vsel %vm3126, %v5538, -inf
  %v5547 = vsel %vm3126, %v5539, -inf
  %v5548 = vsel %vm3126, %v5540, -inf
  %v5549 = vsel %vm3126, %v5541, -inf
  %v5550 = vsel %vm3126, %v5542, -inf
  %v5551 = vmax.f32 %v5546, %v5550
  %v5552 = vsel %vm3126, %v5543, -inf
  %v5553 = vmax.f32 %v5547, %v5552
  %v5554 = vsel %vm3126, %v5544, -inf
  %v5555 = vmax.f32 %v5548, %v5554
  %v5556 = vsel %vm3126, %v5545, -inf
  %v5557 = vmax.f32 %v5549, %v5556
  %v5558 = vmax.f32 %v5551, %v5553
  %v5559 = vmax.f32 %v5555, %v5557
  %v5560 = vmax.f32 %v5558, %v5559
  %v5561 = vsub.f32 %v5538, %v5560
  %v5562 = vsub.f32 %v5539, %v5560
  %v5563 = vsub.f32 %v5540, %v5560
  %v5564 = vsub.f32 %v5541, %v5560
  %v5565 = vsub.f32 %v5542, %v5560
  %v5566 = vsub.f32 %v5543, %v5560
  %v5567 = vsub.f32 %v5544, %v5560
  %v5568 = vsub.f32 %v5545, %v5560
  %v5569 = vmul.f32 %v5561, 1.442695
  %v5570 = vpow.pop %v5569
  %v5571 = vmul.f32 %v5562, 1.442695
  %v5572 = vpow.pop %v5571
  %v5573 = vmul.f32 %v5563, 1.442695
  %v5574 = vpow.pop %v5573
  %v5575 = vmul.f32 %v5564, 1.442695
  %v5576 = vpow.pop %v5575
  %v5577 = vmul.f32 %v5565, 1.442695
  %v5578 = vpow.pop %v5577
  %v5579 = vmul.f32 %v5566, 1.442695
  %v5580 = vpow.pop %v5579
  %v5581 = vmul.f32 %v5567, 1.442695
  %v5582 = vpow.pop %v5581
  %v5583 = vmul.f32 %v5568, 1.442695
  %v5584 = vpow.pop %v5583
  %v5585 = vsel %vm3126, %v5570, 0.0
  %v5586 = vsel %vm3126, %v5572, 0.0
  %v5587 = vadd.f32 %v5585, %v5586
  %v5588 = vsel %vm3126, %v5574, 0.0
  %v5589 = vadd.f32 %v5587, %v5588
  %v5590 = vsel %vm3126, %v5576, 0.0
  %v5591 = vadd.f32 %v5589, %v5590
  %v5592 = vsel %vm3126, %v5578, 0.0
  %v5593 = vadd.f32 %v5591, %v5592
  %v5594 = vsel %vm3126, %v5580, 0.0
  %v5595 = vadd.f32 %v5593, %v5594
  %v5596 = vsel %vm3126, %v5582, 0.0
  %v5597 = vadd.f32 %v5595, %v5596
  %v5598 = vsel %vm3126, %v5584, 0.0
  %v5599 = vadd.f32 %v5597, %v5598
  %v5600 = vrcp.pop %v5599
  %v5601 = vmul.f32 %v5570, %v5600
  %v5602 = vmul.f32 %v5572, %v5600
  %v5603 = vmul.f32 %v5574, %v5600
  %v5604 = vmul.f32 %v5576, %v5600
  %v5605 = vmul.f32 %v5578, %v5600
  %v5606 = vmul.f32 %v5580, %v5600
  %v5607 = vmul.f32 %v5582, %v5600
  %v5608 = vmul.f32 %v5584, %v5600
  %v5609 = vld [vmem:[#allocation5] sm:$0xff]
  %v5610 = vld [vmem:[#allocation5 + $0x8] sm:$0xff]
  %v5611 = vld [vmem:[#allocation5 + $0x10] sm:$0xff]
  %v5612 = vld [vmem:[#allocation5 + $0x18] sm:$0xff]
  %v5613 = vld [vmem:[#allocation5 + $0x20] sm:$0xff]
  %v5614 = vld [vmem:[#allocation5 + $0x28] sm:$0xff]
  %v5615 = vld [vmem:[#allocation5 + $0x30] sm:$0xff]
  %v5616 = vld [vmem:[#allocation5 + $0x38] sm:$0xff]
  %5618 = vset.pattern.permute.xlu0 0
  %5619 = vperm.xlu0 %5618, %v5601
  %v5620 = vpop.permute.xlu0 %5619
  %5623 = vset.pattern.permute.xlu0 0
  %5624 = vperm.xlu0 %5623, %v5602
  %v5625 = vpop.permute.xlu0 %5624
  %5628 = vset.pattern.permute.xlu0 0
  %5629 = vperm.xlu0 %5628, %v5603
  %v5630 = vpop.permute.xlu0 %5629
  %5633 = vset.pattern.permute.xlu0 0
  %5634 = vperm.xlu0 %5633, %v5604
  %v5635 = vpop.permute.xlu0 %5634
  %5638 = vset.pattern.permute.xlu0 0
  %5639 = vperm.xlu0 %5638, %v5605
  %v5640 = vpop.permute.xlu0 %5639
  %5643 = vset.pattern.permute.xlu0 0
  %5644 = vperm.xlu0 %5643, %v5606
  %v5645 = vpop.permute.xlu0 %5644
  %5648 = vset.pattern.permute.xlu0 0
  %5649 = vperm.xlu0 %5648, %v5607
  %v5650 = vpop.permute.xlu0 %5649
  %5653 = vset.pattern.permute.xlu0 0
  %5654 = vperm.xlu0 %5653, %v5608
  %v5655 = vpop.permute.xlu0 %5654
  %v5657 = vmul.f32 %v5620, %v5609
  %v5658 = vmul.f32 %v5625, %v5610
  %v5659 = vmul.f32 %v5630, %v5611
  %v5660 = vmul.f32 %v5635, %v5612
  %v5661 = vmul.f32 %v5640, %v5613
  %v5662 = vmul.f32 %v5645, %v5614
  %v5663 = vmul.f32 %v5650, %v5615
  %v5664 = vmul.f32 %v5655, %v5616
  %v5665 = vadd.f32 %v5657, %v5658
  %v5666 = vadd.f32 %v5665, %v5659
  %v5667 = vadd.f32 %v5666, %v5660
  %v5668 = vadd.f32 %v5667, %v5661
  %v5669 = vadd.f32 %v5668, %v5662
  %v5670 = vadd.f32 %v5669, %v5663
  %v5671 = vadd.f32 %v5670, %v5664
  %5672 = vmatprep.subr.mxu0 0.0
  %5673 = vmatpush1.msra.mxu0 %v913
  %5674 = vmatprep.subr.mxu0 0.0
  %5675 = vmatpush1.msra.mxu0 %v914
  %5676 = vmatprep.subr.mxu0 0.0
  %5677 = vmatpush1.msra.mxu0 %v915
  %5678 = vmatprep.subr.mxu0 0.0
  %5679 = vmatpush1.msra.mxu0 %v916
  %5680 = vmatprep.subr.mxu0 0.0
  %5681 = vmatpush1.msra.mxu0 %v917
  %5682 = vmatprep.subr.mxu0 0.0
  %5683 = vmatpush1.msra.mxu0 %v918
  %5684 = vmatprep.subr.mxu0 0.0
  %5685 = vmatpush1.msra.mxu0 %v919
  %5686 = vmatprep.subr.mxu0 0.0
  %5687 = vmatpush1.msra.mxu0 %v920
  %5688 = vmatprep.subr.mxu0 0.0
  %5689 = vmatpush1.msra.mxu0 %v921
  %5690 = vmatprep.subr.mxu0 0.0
  %5691 = vmatpush1.msra.mxu0 %v922
  %5692 = vmatprep.subr.mxu0 0.0
  %5693 = vmatpush1.msra.mxu0 %v923
  %5694 = vmatprep.subr.mxu0 0.0
  %5695 = vmatpush1.msra.mxu0 %v924
  %5696 = vmatprep.subr.mxu0 0.0
  %5697 = vmatpush1.msra.mxu0 %v925
  %5698 = vmatprep.subr.mxu0 0.0
  %5699 = vmatpush1.msra.mxu0 %v926
  %5700 = vmatprep.subr.mxu0 0.0
  %5701 = vmatpush1.msra.mxu0 %v927
  %5702 = vmatprep.subr.mxu0 0.0
  %5703 = vmatpush1.msra.mxu0 %v928
  %5704 = vmatprep.subr.mxu0 0.0
  %5705 = vmatpush1.msra.mxu0 0.0
  %5706 = vmatprep.subr.mxu0 0.0
  %5707 = vmatpush1.msra.mxu0 0.0
  %5708 = vmatprep.subr.mxu0 0.0
  %5709 = vmatpush1.msra.mxu0 0.0
  %5710 = vmatprep.subr.mxu0 0.0
  %5711 = vmatpush1.msra.mxu0 0.0
  %5712 = vmatprep.subr.mxu0 0.0
  %5713 = vmatpush1.msra.mxu0 0.0
  %5714 = vmatprep.subr.mxu0 0.0
  %5715 = vmatpush1.msra.mxu0 0.0
  %5716 = vmatprep.subr.mxu0 0.0
  %5717 = vmatpush1.msra.mxu0 0.0
  %5718 = vmatprep.subr.mxu0 0.0
  %5719 = vmatpush1.msra.mxu0 0.0
  %5720 = vmatprep.subr.mxu0 0.0
  %5721 = vmatpush1.msra.mxu0 0.0
  %5722 = vmatprep.subr.mxu0 0.0
  %5723 = vmatpush1.msra.mxu0 0.0
  %5724 = vmatprep.subr.mxu0 0.0
  %5725 = vmatpush1.msra.mxu0 0.0
  %5726 = vmatprep.subr.mxu0 0.0
  %5727 = vmatpush1.msra.mxu0 0.0
  %5728 = vmatprep.subr.mxu0 0.0
  %5729 = vmatpush1.msra.mxu0 0.0
  %5730 = vmatprep.subr.mxu0 0.0
  %5731 = vmatpush1.msra.mxu0 0.0
  %5732 = vmatprep.subr.mxu0 0.0
  %5733 = vmatpush1.msra.mxu0 0.0
  %5734 = vmatprep.subr.mxu0 0.0
  %5735 = vmatpush1.msra.mxu0 0.0
  %5736 = vmatprep.mubr.f32.mxu0 0.0
  %5737 = vmatmul.mubr.f32.gmra.mrb[0].mxu0 %v5505
  %v5738 = vpop.f32.mrb[0].mxu0
  %v5739 = vadd.f32 0.0, %v5738
  %v5740 = vpop.f32.mrb[0].mxu0
  %5741 = vdwg.mxu0
  %5742 = vmatprep.subr.mxu0 0.0
  %5743 = vmatpush1.msra.mxu0 %v897
  %5744 = vmatprep.subr.mxu0 0.0
  %5745 = vmatpush1.msra.mxu0 %v898
  %5746 = vmatprep.subr.mxu0 0.0
  %5747 = vmatpush1.msra.mxu0 %v899
  %5748 = vmatprep.subr.mxu0 0.0
  %5749 = vmatpush1.msra.mxu0 %v900
  %5750 = vmatprep.subr.mxu0 0.0
  %5751 = vmatpush1.msra.mxu0 %v901
  %5752 = vmatprep.subr.mxu0 0.0
  %5753 = vmatpush1.msra.mxu0 %v902
  %5754 = vmatprep.subr.mxu0 0.0
  %5755 = vmatpush1.msra.mxu0 %v903
  %5756 = vmatprep.subr.mxu0 0.0
  %5757 = vmatpush1.msra.mxu0 %v904
  %5758 = vmatprep.subr.mxu0 0.0
  %5759 = vmatpush1.msra.mxu0 %v905
  %5760 = vmatprep.subr.mxu0 0.0
  %5761 = vmatpush1.msra.mxu0 %v906
  %5762 = vmatprep.subr.mxu0 0.0
  %5763 = vmatpush1.msra.mxu0 %v907
  %5764 = vmatprep.subr.mxu0 0.0
  %5765 = vmatpush1.msra.mxu0 %v908
  %5766 = vmatprep.subr.mxu0 0.0
  %5767 = vmatpush1.msra.mxu0 %v909
  %5768 = vmatprep.subr.mxu0 0.0
  %5769 = vmatpush1.msra.mxu0 %v910
  %5770 = vmatprep.subr.mxu0 0.0
  %5771 = vmatpush1.msra.mxu0 %v911
  %5772 = vmatprep.subr.mxu0 0.0
  %5773 = vmatpush1.msra.mxu0 %v912
  %5774 = vmatprep.subr.mxu0 0.0
  %5775 = vmatpush1.msra.mxu0 0.0
  %5776 = vmatprep.subr.mxu0 0.0
  %5777 = vmatpush1.msra.mxu0 0.0
  %5778 = vmatprep.subr.mxu0 0.0
  %5779 = vmatpush1.msra.mxu0 0.0
  %5780 = vmatprep.subr.mxu0 0.0
  %5781 = vmatpush1.msra.mxu0 0.0
  %5782 = vmatprep.subr.mxu0 0.0
  %5783 = vmatpush1.msra.mxu0 0.0
  %5784 = vmatprep.subr.mxu0 0.0
  %5785 = vmatpush1.msra.mxu0 0.0
  %5786 = vmatprep.subr.mxu0 0.0
  %5787 = vmatpush1.msra.mxu0 0.0
  %5788 = vmatprep.subr.mxu0 0.0
  %5789 = vmatpush1.msra.mxu0 0.0
  %5790 = vmatprep.subr.mxu0 0.0
  %5791 = vmatpush1.msra.mxu0 0.0
  %5792 = vmatprep.subr.mxu0 0.0
  %5793 = vmatpush1.msra.mxu0 0.0
  %5794 = vmatprep.subr.mxu0 0.0
  %5795 = vmatpush1.msra.mxu0 0.0
  %5796 = vmatprep.subr.mxu0 0.0
  %5797 = vmatpush1.msra.mxu0 0.0
  %5798 = vmatprep.subr.mxu0 0.0
  %5799 = vmatpush1.msra.mxu0 0.0
  %5800 = vmatprep.subr.mxu0 0.0
  %5801 = vmatpush1.msra.mxu0 0.0
  %5802 = vmatprep.subr.mxu0 0.0
  %5803 = vmatpush1.msra.mxu0 0.0
  %5804 = vmatprep.subr.mxu0 0.0
  %5805 = vmatpush1.msra.mxu0 0.0
  %5806 = vmatprep.mubr.f32.mxu0 0.0
  %5807 = vmatmul.mubr.f32.gmra.mrb[0].mxu0 %v5671
  %v5808 = vpop.f32.mrb[0].mxu0
  %v5809 = vadd.f32 %v5739, %v5808
  %v5810 = vpop.f32.mrb[0].mxu0
  %5811 = vdwg.mxu0
  %v5812 = vtanh.pop %v5809
  %s5813 = scalar_lea.vmem [#allocation7], 40
  %5814 = vst [vmem:[%s5813] sm:$0xff] %v5812
  %s5815 = scalar_lea.vmem [#allocation3], 192
  %v5816 = vld [vmem:[%s5815] sm:$0xff]
  %v5817 = vld [vmem:[%s5815 + $0x8] sm:$0xff]
  %v5818 = vld [vmem:[%s5815 + $0x10] sm:$0xff]
  %v5819 = vld [vmem:[%s5815 + $0x18] sm:$0xff]
  %5820 = vmatprep.subr.mxu0 %v834
  %5821 = vmatpush1.msra.mxu0 %v833
  %5822 = vmatprep.subr.mxu0 %v838
  %5823 = vmatpush1.msra.mxu0 %v837
  %5824 = vmatprep.subr.mxu0 %v842
  %5825 = vmatpush1.msra.mxu0 %v841
  %5826 = vmatprep.subr.mxu0 %v846
  %5827 = vmatpush1.msra.mxu0 %v845
  %5828 = vmatprep.subr.mxu0 %v850
  %5829 = vmatpush1.msra.mxu0 %v849
  %5830 = vmatprep.subr.mxu0 %v854
  %5831 = vmatpush1.msra.mxu0 %v853
  %5832 = vmatprep.subr.mxu0 %v858
  %5833 = vmatpush1.msra.mxu0 %v857
  %5834 = vmatprep.subr.mxu0 %v862
  %5835 = vmatpush1.msra.mxu0 %v861
  %5836 = vmatprep.subr.mxu0 %v866
  %5837 = vmatpush1.msra.mxu0 %v865
  %5838 = vmatprep.subr.mxu0 %v870
  %5839 = vmatpush1.msra.mxu0 %v869
  %5840 = vmatprep.subr.mxu0 %v874
  %5841 = vmatpush1.msra.mxu0 %v873
  %5842 = vmatprep.subr.mxu0 %v878
  %5843 = vmatpush1.msra.mxu0 %v877
  %5844 = vmatprep.subr.mxu0 %v882
  %5845 = vmatpush1.msra.mxu0 %v881
  %5846 = vmatprep.subr.mxu0 %v886
  %5847 = vmatpush1.msra.mxu0 %v885
  %5848 = vmatprep.subr.mxu0 %v890
  %5849 = vmatpush1.msra.mxu0 %v889
  %5850 = vmatprep.subr.mxu0 %v894
  %5851 = vmatpush1.msra.mxu0 %v893
  %5852 = vmatprep.subr.mxu0 0.0
  %5853 = vmatpush1.msra.mxu0 0.0
  %5854 = vmatprep.subr.mxu0 0.0
  %5855 = vmatpush1.msra.mxu0 0.0
  %5856 = vmatprep.subr.mxu0 0.0
  %5857 = vmatpush1.msra.mxu0 0.0
  %5858 = vmatprep.subr.mxu0 0.0
  %5859 = vmatpush1.msra.mxu0 0.0
  %5860 = vmatprep.subr.mxu0 0.0
  %5861 = vmatpush1.msra.mxu0 0.0
  %5862 = vmatprep.subr.mxu0 0.0
  %5863 = vmatpush1.msra.mxu0 0.0
  %5864 = vmatprep.subr.mxu0 0.0
  %5865 = vmatpush1.msra.mxu0 0.0
  %5866 = vmatprep.subr.mxu0 0.0
  %5867 = vmatpush1.msra.mxu0 0.0
  %5868 = vmatprep.subr.mxu0 0.0
  %5869 = vmatpush1.msra.mxu0 0.0
  %5870 = vmatprep.subr.mxu0 0.0
  %5871 = vmatpush1.msra.mxu0 0.0
  %5872 = vmatprep.subr.mxu0 0.0
  %5873 = vmatpush1.msra.mxu0 0.0
  %5874 = vmatprep.subr.mxu0 0.0
  %5875 = vmatpush1.msra.mxu0 0.0
  %5876 = vmatprep.subr.mxu0 0.0
  %5877 = vmatpush1.msra.mxu0 0.0
  %5878 = vmatprep.subr.mxu0 0.0
  %5879 = vmatpush1.msra.mxu0 0.0
  %5880 = vmatprep.subr.mxu0 0.0
  %5881 = vmatpush1.msra.mxu0 0.0
  %5882 = vmatprep.subr.mxu0 0.0
  %5883 = vmatpush1.msra.mxu0 0.0
  %5884 = vmatprep.mubr.f32.mxu0 0.0
  %5885 = vmatmul.mubr.f32.gmra.mrb[0].mxu0 %v5812
  %v5886 = vpop.f32.mrb[0].mxu0
  %v5887 = vadd.f32 0.0, %v5886
  %v5888 = vpop.f32.mrb[0].mxu0
  %v5889 = vadd.f32 0.0, %v5888
  %5890 = vdwg.mxu0
  %5891 = vmatprep.subr.mxu0 %v836
  %5892 = vmatpush1.msra.mxu0 %v835
  %5893 = vmatprep.subr.mxu0 %v840
  %5894 = vmatpush1.msra.mxu0 %v839
  %5895 = vmatprep.subr.mxu0 %v844
  %5896 = vmatpush1.msra.mxu0 %v843
  %5897 = vmatprep.subr.mxu0 %v848
  %5898 = vmatpush1.msra.mxu0 %v847
  %5899 = vmatprep.subr.mxu0 %v852
  %5900 = vmatpush1.msra.mxu0 %v851
  %5901 = vmatprep.subr.mxu0 %v856
  %5902 = vmatpush1.msra.mxu0 %v855
  %5903 = vmatprep.subr.mxu0 %v860
  %5904 = vmatpush1.msra.mxu0 %v859
  %5905 = vmatprep.subr.mxu0 %v864
  %5906 = vmatpush1.msra.mxu0 %v863
  %5907 = vmatprep.subr.mxu0 %v868
  %5908 = vmatpush1.msra.mxu0 %v867
  %5909 = vmatprep.subr.mxu0 %v872
  %5910 = vmatpush1.msra.mxu0 %v871
  %5911 = vmatprep.subr.mxu0 %v876
  %5912 = vmatpush1.msra.mxu0 %v875
  %5913 = vmatprep.subr.mxu0 %v880
  %5914 = vmatpush1.msra.mxu0 %v879
  %5915 = vmatprep.subr.mxu0 %v884
  %5916 = vmatpush1.msra.mxu0 %v883
  %5917 = vmatprep.subr.mxu0 %v888
  %5918 = vmatpush1.msra.mxu0 %v887
  %5919 = vmatprep.subr.mxu0 %v892
  %5920 = vmatpush1.msra.mxu0 %v891
  %5921 = vmatprep.subr.mxu0 %v896
  %5922 = vmatpush1.msra.mxu0 %v895
  %5923 = vmatprep.subr.mxu0 0.0
  %5924 = vmatpush1.msra.mxu0 0.0
  %5925 = vmatprep.subr.mxu0 0.0
  %5926 = vmatpush1.msra.mxu0 0.0
  %5927 = vmatprep.subr.mxu0 0.0
  %5928 = vmatpush1.msra.mxu0 0.0
  %5929 = vmatprep.subr.mxu0 0.0
  %5930 = vmatpush1.msra.mxu0 0.0
  %5931 = vmatprep.subr.mxu0 0.0
  %5932 = vmatpush1.msra.mxu0 0.0
  %5933 = vmatprep.subr.mxu0 0.0
  %5934 = vmatpush1.msra.mxu0 0.0
  %5935 = vmatprep.subr.mxu0 0.0
  %5936 = vmatpush1.msra.mxu0 0.0
  %5937 = vmatprep.subr.mxu0 0.0
  %5938 = vmatpush1.msra.mxu0 0.0
  %5939 = vmatprep.subr.mxu0 0.0
  %5940 = vmatpush1.msra.mxu0 0.0
  %5941 = vmatprep.subr.mxu0 0.0
  %5942 = vmatpush1.msra.mxu0 0.0
  %5943 = vmatprep.subr.mxu0 0.0
  %5944 = vmatpush1.msra.mxu0 0.0
  %5945 = vmatprep.subr.mxu0 0.0
  %5946 = vmatpush1.msra.mxu0 0.0
  %5947 = vmatprep.subr.mxu0 0.0
  %5948 = vmatpush1.msra.mxu0 0.0
  %5949 = vmatprep.subr.mxu0 0.0
  %5950 = vmatpush1.msra.mxu0 0.0
  %5951 = vmatprep.subr.mxu0 0.0
  %5952 = vmatpush1.msra.mxu0 0.0
  %5953 = vmatprep.subr.mxu0 0.0
  %5954 = vmatpush1.msra.mxu0 0.0
  %5955 = vmatprep.mubr.f32.mxu0 0.0
  %5956 = vmatmul.mubr.f32.gmra.mrb[0].mxu0 %v5812
  %v5957 = vpop.f32.mrb[0].mxu0
  %v5958 = vadd.f32 0.0, %v5957
  %v5959 = vpop.f32.mrb[0].mxu0
  %v5960 = vadd.f32 0.0, %v5959
  %5961 = vdwg.mxu0
  %v5962 = vadd.f32 %v5816, %v5887
  %v5963 = vadd.f32 %v5817, %v5889
  %v5964 = vadd.f32 %v5818, %v5958
  %v5965 = vadd.f32 %v5819, %v5960
  %v5966 = vxor.u32 %v5962, 2147483648
  %v5967 = vmul.f32 %v5966, 1.442695
  %v5968 = vpow.pop %v5967
  %v5969 = vadd.f32 %v5968, 1.0
  %v5970 = vrcp.pop %v5969
  %v5971 = vmul.f32 1.0, %v5970
  %v5972 = vxor.u32 %v5963, 2147483648
  %v5973 = vmul.f32 %v5972, 1.442695
  %v5974 = vpow.pop %v5973
  %v5975 = vadd.f32 %v5974, 1.0
  %v5976 = vrcp.pop %v5975
  %v5977 = vmul.f32 1.0, %v5976
  %v5978 = vtanh.pop %v5964
  %v5979 = vxor.u32 %v5965, 2147483648
  %v5980 = vmul.f32 %v5979, 1.442695
  %v5981 = vpow.pop %v5980
  %v5982 = vadd.f32 %v5981, 1.0
  %v5983 = vrcp.pop %v5982
  %v5984 = vmul.f32 1.0, %v5983
  %v5985 = vmul.f32 %v5977, %v5503
  %v5986 = vmul.f32 %v5971, %v5978
  %v5987 = vadd.f32 %v5985, %v5986
  %v5988 = vtanh.pop %v5987
  %v5989 = vmul.f32 %v5984, %v5988
  %v5990 = vld [vmem:[#allocation6] sm:$0xff]
  %v5991 = vld [vmem:[#allocation6 + $0x8] sm:$0xff]
  %v5992 = vld [vmem:[#allocation6 + $0x10] sm:$0xff]
  %v5993 = vld [vmem:[#allocation6 + $0x18] sm:$0xff]
  %v5994 = vld [vmem:[#allocation6 + $0x20] sm:$0xff]
  %v5995 = vld [vmem:[#allocation6 + $0x28] sm:$0xff]
  %v5996 = vld [vmem:[#allocation6 + $0x30] sm:$0xff]
  %v5997 = vld [vmem:[#allocation6 + $0x38] sm:$0xff]
  %v5998 = vmul.f32 %v5990, %v5989
  %v5999 = vmul.f32 %v5991, %v5989
  %v6000 = vmul.f32 %v5992, %v5989
  %v6001 = vmul.f32 %v5993, %v5989
  %v6002 = vmul.f32 %v5994, %v5989
  %v6003 = vmul.f32 %v5995, %v5989
  %v6004 = vmul.f32 %v5996, %v5989
  %v6005 = vmul.f32 %v5997, %v5989
  %6006 = vadd.xlane.f32.xlu0 %v5998
  %v6007 = vpop.xlane.xlu0 %6006
  %6008 = vadd.xlane.f32.xlu0 %v5999
  %v6009 = vpop.xlane.xlu0 %6008
  %6010 = vadd.xlane.f32.xlu0 %v6000
  %v6011 = vpop.xlane.xlu0 %6010
  %6012 = vadd.xlane.f32.xlu0 %v6001
  %v6013 = vpop.xlane.xlu0 %6012
  %6014 = vadd.xlane.f32.xlu0 %v6002
  %v6015 = vpop.xlane.xlu0 %6014
  %6016 = vadd.xlane.f32.xlu0 %v6003
  %v6017 = vpop.xlane.xlu0 %6016
  %6018 = vadd.xlane.f32.xlu0 %v6004
  %v6019 = vpop.xlane.xlu0 %6018
  %6020 = vadd.xlane.f32.xlu0 %v6005
  %v6021 = vpop.xlane.xlu0 %6020
  %v6022 = vadd.f32 %v6007, %v2904
  %v6023 = vadd.f32 %v6009, %v2905
  %v6024 = vadd.f32 %v6011, %v2906
  %v6025 = vadd.f32 %v6013, %v2907
  %v6026 = vadd.f32 %v6015, %v2908
  %v6027 = vadd.f32 %v6017, %v2909
  %v6028 = vadd.f32 %v6019, %v2910
  %v6029 = vadd.f32 %v6021, %v2911
  %v6030 = vsel %vm3126, %v6022, -inf
  %v6031 = vsel %vm3126, %v6023, -inf
  %v6032 = vsel %vm3126, %v6024, -inf
  %v6033 = vsel %vm3126, %v6025, -inf
  %v6034 = vsel %vm3126, %v6026, -inf
  %v6035 = vmax.f32 %v6030, %v6034
  %v6036 = vsel %vm3126, %v6027, -inf
  %v6037 = vmax.f32 %v6031, %v6036
  %v6038 = vsel %vm3126, %v6028, -inf
  %v6039 = vmax.f32 %v6032, %v6038
  %v6040 = vsel %vm3126, %v6029, -inf
  %v6041 = vmax.f32 %v6033, %v6040
  %v6042 = vmax.f32 %v6035, %v6037
  %v6043 = vmax.f32 %v6039, %v6041
  %v6044 = vmax.f32 %v6042, %v6043
  %v6045 = vsub.f32 %v6022, %v6044
  %v6046 = vsub.f32 %v6023, %v6044
  %v6047 = vsub.f32 %v6024, %v6044
  %v6048 = vsub.f32 %v6025, %v6044
  %v6049 = vsub.f32 %v6026, %v6044
  %v6050 = vsub.f32 %v6027, %v6044
  %v6051 = vsub.f32 %v6028, %v6044
  %v6052 = vsub.f32 %v6029, %v6044
  %v6053 = vmul.f32 %v6045, 1.442695
  %v6054 = vpow.pop %v6053
  %v6055 = vmul.f32 %v6046, 1.442695
  %v6056 = vpow.pop %v6055
  %v6057 = vmul.f32 %v6047, 1.442695
  %v6058 = vpow.pop %v6057
  %v6059 = vmul.f32 %v6048, 1.442695
  %v6060 = vpow.pop %v6059
  %v6061 = vmul.f32 %v6049, 1.442695
  %v6062 = vpow.pop %v6061
  %v6063 = vmul.f32 %v6050, 1.442695
  %v6064 = vpow.pop %v6063
  %v6065 = vmul.f32 %v6051, 1.442695
  %v6066 = vpow.pop %v6065
  %v6067 = vmul.f32 %v6052, 1.442695
  %v6068 = vpow.pop %v6067
  %v6069 = vsel %vm3126, %v6054, 0.0
  %v6070 = vsel %vm3126, %v6056, 0.0
  %v6071 = vadd.f32 %v6069, %v6070
  %v6072 = vsel %vm3126, %v6058, 0.0
  %v6073 = vadd.f32 %v6071, %v6072
  %v6074 = vsel %vm3126, %v6060, 0.0
  %v6075 = vadd.f32 %v6073, %v6074
  %v6076 = vsel %vm3126, %v6062, 0.0
  %v6077 = vadd.f32 %v6075, %v6076
  %v6078 = vsel %vm3126, %v6064, 0.0
  %v6079 = vadd.f32 %v6077, %v6078
  %v6080 = vsel %vm3126, %v6066, 0.0
  %v6081 = vadd.f32 %v6079, %v6080
  %v6082 = vsel %vm3126, %v6068, 0.0
  %v6083 = vadd.f32 %v6081, %v6082
  %v6084 = vrcp.pop %v6083
  %v6085 = vmul.f32 %v6054, %v6084
  %v6086 = vmul.f32 %v6056, %v6084
  %v6087 = vmul.f32 %v6058, %v6084
  %v6088 = vmul.f32 %v6060, %v6084
  %v6089 = vmul.f32 %v6062, %v6084
  %v6090 = vmul.f32 %v6064, %v6084
  %v6091 = vmul.f32 %v6066, %v6084
  %v6092 = vmul.f32 %v6068, %v6084
  %v6093 = vld [vmem:[#allocation5] sm:$0xff]
  %v6094 = vld [vmem:[#allocation5 + $0x8] sm:$0xff]
  %v6095 = vld [vmem:[#allocation5 + $0x10] sm:$0xff]
  %v6096 = vld [vmem:[#allocation5 + $0x18] sm:$0xff]
  %v6097 = vld [vmem:[#allocation5 + $0x20] sm:$0xff]
  %v6098 = vld [vmem:[#allocation5 + $0x28] sm:$0xff]
  %v6099 = vld [vmem:[#allocation5 + $0x30] sm:$0xff]
  %v6100 = vld [vmem:[#allocation5 + $0x38] sm:$0xff]
  %6102 = vset.pattern.permute.xlu0 0
  %6103 = vperm.xlu0 %6102, %v6085
  %v6104 = vpop.permute.xlu0 %6103
  %6107 = vset.pattern.permute.xlu0 0
  %6108 = vperm.xlu0 %6107, %v6086
  %v6109 = vpop.permute.xlu0 %6108
  %6112 = vset.pattern.permute.xlu0 0
  %6113 = vperm.xlu0 %6112, %v6087
  %v6114 = vpop.permute.xlu0 %6113
  %6117 = vset.pattern.permute.xlu0 0
  %6118 = vperm.xlu0 %6117, %v6088
  %v6119 = vpop.permute.xlu0 %6118
  %6122 = vset.pattern.permute.xlu0 0
  %6123 = vperm.xlu0 %6122, %v6089
  %v6124 = vpop.permute.xlu0 %6123
  %6127 = vset.pattern.permute.xlu0 0
  %6128 = vperm.xlu0 %6127, %v6090
  %v6129 = vpop.permute.xlu0 %6128
  %6132 = vset.pattern.permute.xlu0 0
  %6133 = vperm.xlu0 %6132, %v6091
  %v6134 = vpop.permute.xlu0 %6133
  %6137 = vset.pattern.permute.xlu0 0
  %6138 = vperm.xlu0 %6137, %v6092
  %v6139 = vpop.permute.xlu0 %6138
  %v6141 = vmul.f32 %v6104, %v6093
  %v6142 = vmul.f32 %v6109, %v6094
  %v6143 = vmul.f32 %v6114, %v6095
  %v6144 = vmul.f32 %v6119, %v6096
  %v6145 = vmul.f32 %v6124, %v6097
  %v6146 = vmul.f32 %v6129, %v6098
  %v6147 = vmul.f32 %v6134, %v6099
  %v6148 = vmul.f32 %v6139, %v6100
  %v6149 = vadd.f32 %v6141, %v6142
  %v6150 = vadd.f32 %v6149, %v6143
  %v6151 = vadd.f32 %v6150, %v6144
  %v6152 = vadd.f32 %v6151, %v6145
  %v6153 = vadd.f32 %v6152, %v6146
  %v6154 = vadd.f32 %v6153, %v6147
  %v6155 = vadd.f32 %v6154, %v6148
  %6156 = vmatprep.subr.mxu0 0.0
  %6157 = vmatpush1.msra.mxu0 %v913
  %6158 = vmatprep.subr.mxu0 0.0
  %6159 = vmatpush1.msra.mxu0 %v914
  %6160 = vmatprep.subr.mxu0 0.0
  %6161 = vmatpush1.msra.mxu0 %v915
  %6162 = vmatprep.subr.mxu0 0.0
  %6163 = vmatpush1.msra.mxu0 %v916
  %6164 = vmatprep.subr.mxu0 0.0
  %6165 = vmatpush1.msra.mxu0 %v917
  %6166 = vmatprep.subr.mxu0 0.0
  %6167 = vmatpush1.msra.mxu0 %v918
  %6168 = vmatprep.subr.mxu0 0.0
  %6169 = vmatpush1.msra.mxu0 %v919
  %6170 = vmatprep.subr.mxu0 0.0
  %6171 = vmatpush1.msra.mxu0 %v920
  %6172 = vmatprep.subr.mxu0 0.0
  %6173 = vmatpush1.msra.mxu0 %v921
  %6174 = vmatprep.subr.mxu0 0.0
  %6175 = vmatpush1.msra.mxu0 %v922
  %6176 = vmatprep.subr.mxu0 0.0
  %6177 = vmatpush1.msra.mxu0 %v923
  %6178 = vmatprep.subr.mxu0 0.0
  %6179 = vmatpush1.msra.mxu0 %v924
  %6180 = vmatprep.subr.mxu0 0.0
  %6181 = vmatpush1.msra.mxu0 %v925
  %6182 = vmatprep.subr.mxu0 0.0
  %6183 = vmatpush1.msra.mxu0 %v926
  %6184 = vmatprep.subr.mxu0 0.0
  %6185 = vmatpush1.msra.mxu0 %v927
  %6186 = vmatprep.subr.mxu0 0.0
  %6187 = vmatpush1.msra.mxu0 %v928
  %6188 = vmatprep.subr.mxu0 0.0
  %6189 = vmatpush1.msra.mxu0 0.0
  %6190 = vmatprep.subr.mxu0 0.0
  %6191 = vmatpush1.msra.mxu0 0.0
  %6192 = vmatprep.subr.mxu0 0.0
  %6193 = vmatpush1.msra.mxu0 0.0
  %6194 = vmatprep.subr.mxu0 0.0
  %6195 = vmatpush1.msra.mxu0 0.0
  %6196 = vmatprep.subr.mxu0 0.0
  %6197 = vmatpush1.msra.mxu0 0.0
  %6198 = vmatprep.subr.mxu0 0.0
  %6199 = vmatpush1.msra.mxu0 0.0
  %6200 = vmatprep.subr.mxu0 0.0
  %6201 = vmatpush1.msra.mxu0 0.0
  %6202 = vmatprep.subr.mxu0 0.0
  %6203 = vmatpush1.msra.mxu0 0.0
  %6204 = vmatprep.subr.mxu0 0.0
  %6205 = vmatpush1.msra.mxu0 0.0
  %6206 = vmatprep.subr.mxu0 0.0
  %6207 = vmatpush1.msra.mxu0 0.0
  %6208 = vmatprep.subr.mxu0 0.0
  %6209 = vmatpush1.msra.mxu0 0.0
  %6210 = vmatprep.subr.mxu0 0.0
  %6211 = vmatpush1.msra.mxu0 0.0
  %6212 = vmatprep.subr.mxu0 0.0
  %6213 = vmatpush1.msra.mxu0 0.0
  %6214 = vmatprep.subr.mxu0 0.0
  %6215 = vmatpush1.msra.mxu0 0.0
  %6216 = vmatprep.subr.mxu0 0.0
  %6217 = vmatpush1.msra.mxu0 0.0
  %6218 = vmatprep.subr.mxu0 0.0
  %6219 = vmatpush1.msra.mxu0 0.0
  %6220 = vmatprep.mubr.f32.mxu0 0.0
  %6221 = vmatmul.mubr.f32.gmra.mrb[0].mxu0 %v5989
  %v6222 = vpop.f32.mrb[0].mxu0
  %v6223 = vadd.f32 0.0, %v6222
  %v6224 = vpop.f32.mrb[0].mxu0
  %6225 = vdwg.mxu0
  %6226 = vmatprep.subr.mxu0 0.0
  %6227 = vmatpush1.msra.mxu0 %v897
  %6228 = vmatprep.subr.mxu0 0.0
  %6229 = vmatpush1.msra.mxu0 %v898
  %6230 = vmatprep.subr.mxu0 0.0
  %6231 = vmatpush1.msra.mxu0 %v899
  %6232 = vmatprep.subr.mxu0 0.0
  %6233 = vmatpush1.msra.mxu0 %v900
  %6234 = vmatprep.subr.mxu0 0.0
  %6235 = vmatpush1.msra.mxu0 %v901
  %6236 = vmatprep.subr.mxu0 0.0
  %6237 = vmatpush1.msra.mxu0 %v902
  %6238 = vmatprep.subr.mxu0 0.0
  %6239 = vmatpush1.msra.mxu0 %v903
  %6240 = vmatprep.subr.mxu0 0.0
  %6241 = vmatpush1.msra.mxu0 %v904
  %6242 = vmatprep.subr.mxu0 0.0
  %6243 = vmatpush1.msra.mxu0 %v905
  %6244 = vmatprep.subr.mxu0 0.0
  %6245 = vmatpush1.msra.mxu0 %v906
  %6246 = vmatprep.subr.mxu0 0.0
  %6247 = vmatpush1.msra.mxu0 %v907
  %6248 = vmatprep.subr.mxu0 0.0
  %6249 = vmatpush1.msra.mxu0 %v908
  %6250 = vmatprep.subr.mxu0 0.0
  %6251 = vmatpush1.msra.mxu0 %v909
  %6252 = vmatprep.subr.mxu0 0.0
  %6253 = vmatpush1.msra.mxu0 %v910
  %6254 = vmatprep.subr.mxu0 0.0
  %6255 = vmatpush1.msra.mxu0 %v911
  %6256 = vmatprep.subr.mxu0 0.0
  %6257 = vmatpush1.msra.mxu0 %v912
  %6258 = vmatprep.subr.mxu0 0.0
  %6259 = vmatpush1.msra.mxu0 0.0
  %6260 = vmatprep.subr.mxu0 0.0
  %6261 = vmatpush1.msra.mxu0 0.0
  %6262 = vmatprep.subr.mxu0 0.0
  %6263 = vmatpush1.msra.mxu0 0.0
  %6264 = vmatprep.subr.mxu0 0.0
  %6265 = vmatpush1.msra.mxu0 0.0
  %6266 = vmatprep.subr.mxu0 0.0
  %6267 = vmatpush1.msra.mxu0 0.0
  %6268 = vmatprep.subr.mxu0 0.0
  %6269 = vmatpush1.msra.mxu0 0.0
  %6270 = vmatprep.subr.mxu0 0.0
  %6271 = vmatpush1.msra.mxu0 0.0
  %6272 = vmatprep.subr.mxu0 0.0
  %6273 = vmatpush1.msra.mxu0 0.0
  %6274 = vmatprep.subr.mxu0 0.0
  %6275 = vmatpush1.msra.mxu0 0.0
  %6276 = vmatprep.subr.mxu0 0.0
  %6277 = vmatpush1.msra.mxu0 0.0
  %6278 = vmatprep.subr.mxu0 0.0
  %6279 = vmatpush1.msra.mxu0 0.0
  %6280 = vmatprep.subr.mxu0 0.0
  %6281 = vmatpush1.msra.mxu0 0.0
  %6282 = vmatprep.subr.mxu0 0.0
  %6283 = vmatpush1.msra.mxu0 0.0
  %6284 = vmatprep.subr.mxu0 0.0
  %6285 = vmatpush1.msra.mxu0 0.0
  %6286 = vmatprep.subr.mxu0 0.0
  %6287 = vmatpush1.msra.mxu0 0.0
  %6288 = vmatprep.subr.mxu0 0.0
  %6289 = vmatpush1.msra.mxu0 0.0
  %6290 = vmatprep.mubr.f32.mxu0 0.0
  %6291 = vmatmul.mubr.f32.gmra.mrb[0].mxu0 %v6155
  %v6292 = vpop.f32.mrb[0].mxu0
  %v6293 = vadd.f32 %v6223, %v6292
  %v6294 = vpop.f32.mrb[0].mxu0
  %6295 = vdwg.mxu0
  %v6296 = vtanh.pop %v6293
  %s6297 = scalar_lea.vmem [#allocation7], 48
  %6298 = vst [vmem:[%s6297] sm:$0xff] %v6296
  %s6299 = scalar_lea.vmem [#allocation3], 224
  %v6300 = vld [vmem:[%s6299] sm:$0xff]
  %v6301 = vld [vmem:[%s6299 + $0x8] sm:$0xff]
  %v6302 = vld [vmem:[%s6299 + $0x10] sm:$0xff]
  %v6303 = vld [vmem:[%s6299 + $0x18] sm:$0xff]
  %6304 = vmatprep.subr.mxu0 %v834
  %6305 = vmatpush1.msra.mxu0 %v833
  %6306 = vmatprep.subr.mxu0 %v838
  %6307 = vmatpush1.msra.mxu0 %v837
  %6308 = vmatprep.subr.mxu0 %v842
  %6309 = vmatpush1.msra.mxu0 %v841
  %6310 = vmatprep.subr.mxu0 %v846
  %6311 = vmatpush1.msra.mxu0 %v845
  %6312 = vmatprep.subr.mxu0 %v850
  %6313 = vmatpush1.msra.mxu0 %v849
  %6314 = vmatprep.subr.mxu0 %v854
  %6315 = vmatpush1.msra.mxu0 %v853
  %6316 = vmatprep.subr.mxu0 %v858
  %6317 = vmatpush1.msra.mxu0 %v857
  %6318 = vmatprep.subr.mxu0 %v862
  %6319 = vmatpush1.msra.mxu0 %v861
  %6320 = vmatprep.subr.mxu0 %v866
  %6321 = vmatpush1.msra.mxu0 %v865
  %6322 = vmatprep.subr.mxu0 %v870
  %6323 = vmatpush1.msra.mxu0 %v869
  %6324 = vmatprep.subr.mxu0 %v874
  %6325 = vmatpush1.msra.mxu0 %v873
  %6326 = vmatprep.subr.mxu0 %v878
  %6327 = vmatpush1.msra.mxu0 %v877
  %6328 = vmatprep.subr.mxu0 %v882
  %6329 = vmatpush1.msra.mxu0 %v881
  %6330 = vmatprep.subr.mxu0 %v886
  %6331 = vmatpush1.msra.mxu0 %v885
  %6332 = vmatprep.subr.mxu0 %v890
  %6333 = vmatpush1.msra.mxu0 %v889
  %6334 = vmatprep.subr.mxu0 %v894
  %6335 = vmatpush1.msra.mxu0 %v893
  %6336 = vmatprep.subr.mxu0 0.0
  %6337 = vmatpush1.msra.mxu0 0.0
  %6338 = vmatprep.subr.mxu0 0.0
  %6339 = vmatpush1.msra.mxu0 0.0
  %6340 = vmatprep.subr.mxu0 0.0
  %6341 = vmatpush1.msra.mxu0 0.0
  %6342 = vmatprep.subr.mxu0 0.0
  %6343 = vmatpush1.msra.mxu0 0.0
  %6344 = vmatprep.subr.mxu0 0.0
  %6345 = vmatpush1.msra.mxu0 0.0
  %6346 = vmatprep.subr.mxu0 0.0
  %6347 = vmatpush1.msra.mxu0 0.0
  %6348 = vmatprep.subr.mxu0 0.0
  %6349 = vmatpush1.msra.mxu0 0.0
  %6350 = vmatprep.subr.mxu0 0.0
  %6351 = vmatpush1.msra.mxu0 0.0
  %6352 = vmatprep.subr.mxu0 0.0
  %6353 = vmatpush1.msra.mxu0 0.0
  %6354 = vmatprep.subr.mxu0 0.0
  %6355 = vmatpush1.msra.mxu0 0.0
  %6356 = vmatprep.subr.mxu0 0.0
  %6357 = vmatpush1.msra.mxu0 0.0
  %6358 = vmatprep.subr.mxu0 0.0
  %6359 = vmatpush1.msra.mxu0 0.0
  %6360 = vmatprep.subr.mxu0 0.0
  %6361 = vmatpush1.msra.mxu0 0.0
  %6362 = vmatprep.subr.mxu0 0.0
  %6363 = vmatpush1.msra.mxu0 0.0
  %6364 = vmatprep.subr.mxu0 0.0
  %6365 = vmatpush1.msra.mxu0 0.0
  %6366 = vmatprep.subr.mxu0 0.0
  %6367 = vmatpush1.msra.mxu0 0.0
  %6368 = vmatprep.mubr.f32.mxu0 0.0
  %6369 = vmatmul.mubr.f32.gmra.mrb[0].mxu0 %v6296
  %v6370 = vpop.f32.mrb[0].mxu0
  %v6371 = vadd.f32 0.0, %v6370
  %v6372 = vpop.f32.mrb[0].mxu0
  %v6373 = vadd.f32 0.0, %v6372
  %6374 = vdwg.mxu0
  %6375 = vmatprep.subr.mxu0 %v836
  %6376 = vmatpush1.msra.mxu0 %v835
  %6377 = vmatprep.subr.mxu0 %v840
  %6378 = vmatpush1.msra.mxu0 %v839
  %6379 = vmatprep.subr.mxu0 %v844
  %6380 = vmatpush1.msra.mxu0 %v843
  %6381 = vmatprep.subr.mxu0 %v848
  %6382 = vmatpush1.msra.mxu0 %v847
  %6383 = vmatprep.subr.mxu0 %v852
  %6384 = vmatpush1.msra.mxu0 %v851
  %6385 = vmatprep.subr.mxu0 %v856
  %6386 = vmatpush1.msra.mxu0 %v855
  %6387 = vmatprep.subr.mxu0 %v860
  %6388 = vmatpush1.msra.mxu0 %v859
  %6389 = vmatprep.subr.mxu0 %v864
  %6390 = vmatpush1.msra.mxu0 %v863
  %6391 = vmatprep.subr.mxu0 %v868
  %6392 = vmatpush1.msra.mxu0 %v867
  %6393 = vmatprep.subr.mxu0 %v872
  %6394 = vmatpush1.msra.mxu0 %v871
  %6395 = vmatprep.subr.mxu0 %v876
  %6396 = vmatpush1.msra.mxu0 %v875
  %6397 = vmatprep.subr.mxu0 %v880
  %6398 = vmatpush1.msra.mxu0 %v879
  %6399 = vmatprep.subr.mxu0 %v884
  %6400 = vmatpush1.msra.mxu0 %v883
  %6401 = vmatprep.subr.mxu0 %v888
  %6402 = vmatpush1.msra.mxu0 %v887
  %6403 = vmatprep.subr.mxu0 %v892
  %6404 = vmatpush1.msra.mxu0 %v891
  %6405 = vmatprep.subr.mxu0 %v896
  %6406 = vmatpush1.msra.mxu0 %v895
  %6407 = vmatprep.subr.mxu0 0.0
  %6408 = vmatpush1.msra.mxu0 0.0
  %6409 = vmatprep.subr.mxu0 0.0
  %6410 = vmatpush1.msra.mxu0 0.0
  %6411 = vmatprep.subr.mxu0 0.0
  %6412 = vmatpush1.msra.mxu0 0.0
  %6413 = vmatprep.subr.mxu0 0.0
  %6414 = vmatpush1.msra.mxu0 0.0
  %6415 = vmatprep.subr.mxu0 0.0
  %6416 = vmatpush1.msra.mxu0 0.0
  %6417 = vmatprep.subr.mxu0 0.0
  %6418 = vmatpush1.msra.mxu0 0.0
  %6419 = vmatprep.subr.mxu0 0.0
  %6420 = vmatpush1.msra.mxu0 0.0
  %6421 = vmatprep.subr.mxu0 0.0
  %6422 = vmatpush1.msra.mxu0 0.0
  %6423 = vmatprep.subr.mxu0 0.0
  %6424 = vmatpush1.msra.mxu0 0.0
  %6425 = vmatprep.subr.mxu0 0.0
  %6426 = vmatpush1.msra.mxu0 0.0
  %6427 = vmatprep.subr.mxu0 0.0
  %6428 = vmatpush1.msra.mxu0 0.0
  %6429 = vmatprep.subr.mxu0 0.0
  %6430 = vmatpush1.msra.mxu0 0.0
  %6431 = vmatprep.subr.mxu0 0.0
  %6432 = vmatpush1.msra.mxu0 0.0
  %6433 = vmatprep.subr.mxu0 0.0
  %6434 = vmatpush1.msra.mxu0 0.0
  %6435 = vmatprep.subr.mxu0 0.0
  %6436 = vmatpush1.msra.mxu0 0.0
  %6437 = vmatprep.subr.mxu0 0.0
  %6438 = vmatpush1.msra.mxu0 0.0
  %6439 = vmatprep.mubr.f32.mxu0 0.0
  %6440 = vmatmul.mubr.f32.gmra.mrb[0].mxu0 %v6296
  %v6441 = vpop.f32.mrb[0].mxu0
  %v6442 = vadd.f32 0.0, %v6441
  %v6443 = vpop.f32.mrb[0].mxu0
  %v6444 = vadd.f32 0.0, %v6443
  %6445 = vdwg.mxu0
  %v6446 = vadd.f32 %v6300, %v6371
  %v6447 = vadd.f32 %v6301, %v6373
  %v6448 = vadd.f32 %v6302, %v6442
  %v6449 = vadd.f32 %v6303, %v6444
  %v6450 = vxor.u32 %v6446, 2147483648
  %v6451 = vmul.f32 %v6450, 1.442695
  %v6452 = vpow.pop %v6451
  %v6453 = vadd.f32 %v6452, 1.0
  %v6454 = vrcp.pop %v6453
  %v6455 = vmul.f32 1.0, %v6454
  %v6456 = vxor.u32 %v6447, 2147483648
  %v6457 = vmul.f32 %v6456, 1.442695
  %v6458 = vpow.pop %v6457
  %v6459 = vadd.f32 %v6458, 1.0
  %v6460 = vrcp.pop %v6459
  %v6461 = vmul.f32 1.0, %v6460
  %v6462 = vtanh.pop %v6448
  %v6463 = vxor.u32 %v6449, 2147483648
  %v6464 = vmul.f32 %v6463, 1.442695
  %v6465 = vpow.pop %v6464
  %v6466 = vadd.f32 %v6465, 1.0
  %v6467 = vrcp.pop %v6466
  %v6468 = vmul.f32 1.0, %v6467
  %v6469 = vmul.f32 %v6461, %v5987
  %v6470 = vmul.f32 %v6455, %v6462
  %v6471 = vadd.f32 %v6469, %v6470
  %v6472 = vtanh.pop %v6471
  %v6473 = vmul.f32 %v6468, %v6472
  %v6474 = vld [vmem:[#allocation6] sm:$0xff]
  %v6475 = vld [vmem:[#allocation6 + $0x8] sm:$0xff]
  %v6476 = vld [vmem:[#allocation6 + $0x10] sm:$0xff]
  %v6477 = vld [vmem:[#allocation6 + $0x18] sm:$0xff]
  %v6478 = vld [vmem:[#allocation6 + $0x20] sm:$0xff]
  %v6479 = vld [vmem:[#allocation6 + $0x28] sm:$0xff]
  %v6480 = vld [vmem:[#allocation6 + $0x30] sm:$0xff]
  %v6481 = vld [vmem:[#allocation6 + $0x38] sm:$0xff]
  %v6482 = vmul.f32 %v6474, %v6473
  %v6483 = vmul.f32 %v6475, %v6473
  %v6484 = vmul.f32 %v6476, %v6473
  %v6485 = vmul.f32 %v6477, %v6473
  %v6486 = vmul.f32 %v6478, %v6473
  %v6487 = vmul.f32 %v6479, %v6473
  %v6488 = vmul.f32 %v6480, %v6473
  %v6489 = vmul.f32 %v6481, %v6473
  %6490 = vadd.xlane.f32.xlu0 %v6482
  %v6491 = vpop.xlane.xlu0 %6490
  %6492 = vadd.xlane.f32.xlu0 %v6483
  %v6493 = vpop.xlane.xlu0 %6492
  %6494 = vadd.xlane.f32.xlu0 %v6484
  %v6495 = vpop.xlane.xlu0 %6494
  %6496 = vadd.xlane.f32.xlu0 %v6485
  %v6497 = vpop.xlane.xlu0 %6496
  %6498 = vadd.xlane.f32.xlu0 %v6486
  %v6499 = vpop.xlane.xlu0 %6498
  %6500 = vadd.xlane.f32.xlu0 %v6487
  %v6501 = vpop.xlane.xlu0 %6500
  %6502 = vadd.xlane.f32.xlu0 %v6488
  %v6503 = vpop.xlane.xlu0 %6502
  %6504 = vadd.xlane.f32.xlu0 %v6489
  %v6505 = vpop.xlane.xlu0 %6504
  %v6506 = vadd.f32 %v6491, %v2904
  %v6507 = vadd.f32 %v6493, %v2905
  %v6508 = vadd.f32 %v6495, %v2906
  %v6509 = vadd.f32 %v6497, %v2907
  %v6510 = vadd.f32 %v6499, %v2908
  %v6511 = vadd.f32 %v6501, %v2909
  %v6512 = vadd.f32 %v6503, %v2910
  %v6513 = vadd.f32 %v6505, %v2911
  %v6514 = vsel %vm3126, %v6506, -inf
  %v6515 = vsel %vm3126, %v6507, -inf
  %v6516 = vsel %vm3126, %v6508, -inf
  %v6517 = vsel %vm3126, %v6509, -inf
  %v6518 = vsel %vm3126, %v6510, -inf
  %v6519 = vmax.f32 %v6514, %v6518
  %v6520 = vsel %vm3126, %v6511, -inf
  %v6521 = vmax.f32 %v6515, %v6520
  %v6522 = vsel %vm3126, %v6512, -inf
  %v6523 = vmax.f32 %v6516, %v6522
  %v6524 = vsel %vm3126, %v6513, -inf
  %v6525 = vmax.f32 %v6517, %v6524
  %v6526 = vmax.f32 %v6519, %v6521
  %v6527 = vmax.f32 %v6523, %v6525
  %v6528 = vmax.f32 %v6526, %v6527
  %v6529 = vsub.f32 %v6506, %v6528
  %v6530 = vsub.f32 %v6507, %v6528
  %v6531 = vsub.f32 %v6508, %v6528
  %v6532 = vsub.f32 %v6509, %v6528
  %v6533 = vsub.f32 %v6510, %v6528
  %v6534 = vsub.f32 %v6511, %v6528
  %v6535 = vsub.f32 %v6512, %v6528
  %v6536 = vsub.f32 %v6513, %v6528
  %v6537 = vmul.f32 %v6529, 1.442695
  %v6538 = vpow.pop %v6537
  %v6539 = vmul.f32 %v6530, 1.442695
  %v6540 = vpow.pop %v6539
  %v6541 = vmul.f32 %v6531, 1.442695
  %v6542 = vpow.pop %v6541
  %v6543 = vmul.f32 %v6532, 1.442695
  %v6544 = vpow.pop %v6543
  %v6545 = vmul.f32 %v6533, 1.442695
  %v6546 = vpow.pop %v6545
  %v6547 = vmul.f32 %v6534, 1.442695
  %v6548 = vpow.pop %v6547
  %v6549 = vmul.f32 %v6535, 1.442695
  %v6550 = vpow.pop %v6549
  %v6551 = vmul.f32 %v6536, 1.442695
  %v6552 = vpow.pop %v6551
  %v6553 = vsel %vm3126, %v6538, 0.0
  %v6554 = vsel %vm3126, %v6540, 0.0
  %v6555 = vadd.f32 %v6553, %v6554
  %v6556 = vsel %vm3126, %v6542, 0.0
  %v6557 = vadd.f32 %v6555, %v6556
  %v6558 = vsel %vm3126, %v6544, 0.0
  %v6559 = vadd.f32 %v6557, %v6558
  %v6560 = vsel %vm3126, %v6546, 0.0
  %v6561 = vadd.f32 %v6559, %v6560
  %v6562 = vsel %vm3126, %v6548, 0.0
  %v6563 = vadd.f32 %v6561, %v6562
  %v6564 = vsel %vm3126, %v6550, 0.0
  %v6565 = vadd.f32 %v6563, %v6564
  %v6566 = vsel %vm3126, %v6552, 0.0
  %v6567 = vadd.f32 %v6565, %v6566
  %v6568 = vrcp.pop %v6567
  %v6569 = vmul.f32 %v6538, %v6568
  %v6570 = vmul.f32 %v6540, %v6568
  %v6571 = vmul.f32 %v6542, %v6568
  %v6572 = vmul.f32 %v6544, %v6568
  %v6573 = vmul.f32 %v6546, %v6568
  %v6574 = vmul.f32 %v6548, %v6568
  %v6575 = vmul.f32 %v6550, %v6568
  %v6576 = vmul.f32 %v6552, %v6568
  %v6577 = vld [vmem:[#allocation5] sm:$0xff]
  %v6578 = vld [vmem:[#allocation5 + $0x8] sm:$0xff]
  %v6579 = vld [vmem:[#allocation5 + $0x10] sm:$0xff]
  %v6580 = vld [vmem:[#allocation5 + $0x18] sm:$0xff]
  %v6581 = vld [vmem:[#allocation5 + $0x20] sm:$0xff]
  %v6582 = vld [vmem:[#allocation5 + $0x28] sm:$0xff]
  %v6583 = vld [vmem:[#allocation5 + $0x30] sm:$0xff]
  %v6584 = vld [vmem:[#allocation5 + $0x38] sm:$0xff]
  %6586 = vset.pattern.permute.xlu0 0
  %6587 = vperm.xlu0 %6586, %v6569
  %v6588 = vpop.permute.xlu0 %6587
  %6591 = vset.pattern.permute.xlu0 0
  %6592 = vperm.xlu0 %6591, %v6570
  %v6593 = vpop.permute.xlu0 %6592
  %6596 = vset.pattern.permute.xlu0 0
  %6597 = vperm.xlu0 %6596, %v6571
  %v6598 = vpop.permute.xlu0 %6597
  %6601 = vset.pattern.permute.xlu0 0
  %6602 = vperm.xlu0 %6601, %v6572
  %v6603 = vpop.permute.xlu0 %6602
  %6606 = vset.pattern.permute.xlu0 0
  %6607 = vperm.xlu0 %6606, %v6573
  %v6608 = vpop.permute.xlu0 %6607
  %6611 = vset.pattern.permute.xlu0 0
  %6612 = vperm.xlu0 %6611, %v6574
  %v6613 = vpop.permute.xlu0 %6612
  %6616 = vset.pattern.permute.xlu0 0
  %6617 = vperm.xlu0 %6616, %v6575
  %v6618 = vpop.permute.xlu0 %6617
  %6621 = vset.pattern.permute.xlu0 0
  %6622 = vperm.xlu0 %6621, %v6576
  %v6623 = vpop.permute.xlu0 %6622
  %v6625 = vmul.f32 %v6588, %v6577
  %v6626 = vmul.f32 %v6593, %v6578
  %v6627 = vmul.f32 %v6598, %v6579
  %v6628 = vmul.f32 %v6603, %v6580
  %v6629 = vmul.f32 %v6608, %v6581
  %v6630 = vmul.f32 %v6613, %v6582
  %v6631 = vmul.f32 %v6618, %v6583
  %v6632 = vmul.f32 %v6623, %v6584
  %v6633 = vadd.f32 %v6625, %v6626
  %v6634 = vadd.f32 %v6633, %v6627
  %v6635 = vadd.f32 %v6634, %v6628
  %v6636 = vadd.f32 %v6635, %v6629
  %v6637 = vadd.f32 %v6636, %v6630
  %v6638 = vadd.f32 %v6637, %v6631
  %v6639 = vadd.f32 %v6638, %v6632
  %6640 = vmatprep.subr.mxu0 0.0
  %6641 = vmatpush1.msra.mxu0 %v913
  %6642 = vmatprep.subr.mxu0 0.0
  %6643 = vmatpush1.msra.mxu0 %v914
  %6644 = vmatprep.subr.mxu0 0.0
  %6645 = vmatpush1.msra.mxu0 %v915
  %6646 = vmatprep.subr.mxu0 0.0
  %6647 = vmatpush1.msra.mxu0 %v916
  %6648 = vmatprep.subr.mxu0 0.0
  %6649 = vmatpush1.msra.mxu0 %v917
  %6650 = vmatprep.subr.mxu0 0.0
  %6651 = vmatpush1.msra.mxu0 %v918
  %6652 = vmatprep.subr.mxu0 0.0
  %6653 = vmatpush1.msra.mxu0 %v919
  %6654 = vmatprep.subr.mxu0 0.0
  %6655 = vmatpush1.msra.mxu0 %v920
  %6656 = vmatprep.subr.mxu0 0.0
  %6657 = vmatpush1.msra.mxu0 %v921
  %6658 = vmatprep.subr.mxu0 0.0
  %6659 = vmatpush1.msra.mxu0 %v922
  %6660 = vmatprep.subr.mxu0 0.0
  %6661 = vmatpush1.msra.mxu0 %v923
  %6662 = vmatprep.subr.mxu0 0.0
  %6663 = vmatpush1.msra.mxu0 %v924
  %6664 = vmatprep.subr.mxu0 0.0
  %6665 = vmatpush1.msra.mxu0 %v925
  %6666 = vmatprep.subr.mxu0 0.0
  %6667 = vmatpush1.msra.mxu0 %v926
  %6668 = vmatprep.subr.mxu0 0.0
  %6669 = vmatpush1.msra.mxu0 %v927
  %6670 = vmatprep.subr.mxu0 0.0
  %6671 = vmatpush1.msra.mxu0 %v928
  %6672 = vmatprep.subr.mxu0 0.0
  %6673 = vmatpush1.msra.mxu0 0.0
  %6674 = vmatprep.subr.mxu0 0.0
  %6675 = vmatpush1.msra.mxu0 0.0
  %6676 = vmatprep.subr.mxu0 0.0
  %6677 = vmatpush1.msra.mxu0 0.0
  %6678 = vmatprep.subr.mxu0 0.0
  %6679 = vmatpush1.msra.mxu0 0.0
  %6680 = vmatprep.subr.mxu0 0.0
  %6681 = vmatpush1.msra.mxu0 0.0
  %6682 = vmatprep.subr.mxu0 0.0
  %6683 = vmatpush1.msra.mxu0 0.0
  %6684 = vmatprep.subr.mxu0 0.0
  %6685 = vmatpush1.msra.mxu0 0.0
  %6686 = vmatprep.subr.mxu0 0.0
  %6687 = vmatpush1.msra.mxu0 0.0
  %6688 = vmatprep.subr.mxu0 0.0
  %6689 = vmatpush1.msra.mxu0 0.0
  %6690 = vmatprep.subr.mxu0 0.0
  %6691 = vmatpush1.msra.mxu0 0.0
  %6692 = vmatprep.subr.mxu0 0.0
  %6693 = vmatpush1.msra.mxu0 0.0
  %6694 = vmatprep.subr.mxu0 0.0
  %6695 = vmatpush1.msra.mxu0 0.0
  %6696 = vmatprep.subr.mxu0 0.0
  %6697 = vmatpush1.msra.mxu0 0.0
  %6698 = vmatprep.subr.mxu0 0.0
  %6699 = vmatpush1.msra.mxu0 0.0
  %6700 = vmatprep.subr.mxu0 0.0
  %6701 = vmatpush1.msra.mxu0 0.0
  %6702 = vmatprep.subr.mxu0 0.0
  %6703 = vmatpush1.msra.mxu0 0.0
  %6704 = vmatprep.mubr.f32.mxu0 0.0
  %6705 = vmatmul.mubr.f32.gmra.mrb[0].mxu0 %v6473
  %v6706 = vpop.f32.mrb[0].mxu0
  %v6707 = vadd.f32 0.0, %v6706
  %v6708 = vpop.f32.mrb[0].mxu0
  %6709 = vdwg.mxu0
  %6710 = vmatprep.subr.mxu0 0.0
  %6711 = vmatpush1.msra.mxu0 %v897
  %6712 = vmatprep.subr.mxu0 0.0
  %6713 = vmatpush1.msra.mxu0 %v898
  %6714 = vmatprep.subr.mxu0 0.0
  %6715 = vmatpush1.msra.mxu0 %v899
  %6716 = vmatprep.subr.mxu0 0.0
  %6717 = vmatpush1.msra.mxu0 %v900
  %6718 = vmatprep.subr.mxu0 0.0
  %6719 = vmatpush1.msra.mxu0 %v901
  %6720 = vmatprep.subr.mxu0 0.0
  %6721 = vmatpush1.msra.mxu0 %v902
  %6722 = vmatprep.subr.mxu0 0.0
  %6723 = vmatpush1.msra.mxu0 %v903
  %6724 = vmatprep.subr.mxu0 0.0
  %6725 = vmatpush1.msra.mxu0 %v904
  %6726 = vmatprep.subr.mxu0 0.0
  %6727 = vmatpush1.msra.mxu0 %v905
  %6728 = vmatprep.subr.mxu0 0.0
  %6729 = vmatpush1.msra.mxu0 %v906
  %6730 = vmatprep.subr.mxu0 0.0
  %6731 = vmatpush1.msra.mxu0 %v907
  %6732 = vmatprep.subr.mxu0 0.0
  %6733 = vmatpush1.msra.mxu0 %v908
  %6734 = vmatprep.subr.mxu0 0.0
  %6735 = vmatpush1.msra.mxu0 %v909
  %6736 = vmatprep.subr.mxu0 0.0
  %6737 = vmatpush1.msra.mxu0 %v910
  %6738 = vmatprep.subr.mxu0 0.0
  %6739 = vmatpush1.msra.mxu0 %v911
  %6740 = vmatprep.subr.mxu0 0.0
  %6741 = vmatpush1.msra.mxu0 %v912
  %6742 = vmatprep.subr.mxu0 0.0
  %6743 = vmatpush1.msra.mxu0 0.0
  %6744 = vmatprep.subr.mxu0 0.0
  %6745 = vmatpush1.msra.mxu0 0.0
  %6746 = vmatprep.subr.mxu0 0.0
  %6747 = vmatpush1.msra.mxu0 0.0
  %6748 = vmatprep.subr.mxu0 0.0
  %6749 = vmatpush1.msra.mxu0 0.0
  %6750 = vmatprep.subr.mxu0 0.0
  %6751 = vmatpush1.msra.mxu0 0.0
  %6752 = vmatprep.subr.mxu0 0.0
  %6753 = vmatpush1.msra.mxu0 0.0
  %6754 = vmatprep.subr.mxu0 0.0
  %6755 = vmatpush1.msra.mxu0 0.0
  %6756 = vmatprep.subr.mxu0 0.0
  %6757 = vmatpush1.msra.mxu0 0.0
  %6758 = vmatprep.subr.mxu0 0.0
  %6759 = vmatpush1.msra.mxu0 0.0
  %6760 = vmatprep.subr.mxu0 0.0
  %6761 = vmatpush1.msra.mxu0 0.0
  %6762 = vmatprep.subr.mxu0 0.0
  %6763 = vmatpush1.msra.mxu0 0.0
  %6764 = vmatprep.subr.mxu0 0.0
  %6765 = vmatpush1.msra.mxu0 0.0
  %6766 = vmatprep.subr.mxu0 0.0
  %6767 = vmatpush1.msra.mxu0 0.0
  %6768 = vmatprep.subr.mxu0 0.0
  %6769 = vmatpush1.msra.mxu0 0.0
  %6770 = vmatprep.subr.mxu0 0.0
  %6771 = vmatpush1.msra.mxu0 0.0
  %6772 = vmatprep.subr.mxu0 0.0
  %6773 = vmatpush1.msra.mxu0 0.0
  %6774 = vmatprep.mubr.f32.mxu0 0.0
  %6775 = vmatmul.mubr.f32.gmra.mrb[0].mxu0 %v6639
  %v6776 = vpop.f32.mrb[0].mxu0
  %v6777 = vadd.f32 %v6707, %v6776
  %v6778 = vpop.f32.mrb[0].mxu0
  %6779 = vdwg.mxu0
  %v6780 = vtanh.pop %v6777
  %s6781 = scalar_lea.vmem [#allocation7], 56
  %6782 = vst [vmem:[%s6781] sm:$0xff] %v6780
  %v6783 = vld [vmem:[#allocation7] sm:$0xff]
  %v6784 = vld [vmem:[#allocation7 + $0x8] sm:$0xff]
  %v6785 = vld [vmem:[#allocation7 + $0x10] sm:$0xff]
  %v6786 = vld [vmem:[#allocation7 + $0x18] sm:$0xff]
  %v6787 = vld [vmem:[#allocation7 + $0x20] sm:$0xff]
  %v6788 = vld [vmem:[#allocation7 + $0x28] sm:$0xff]
  %v6789 = vld [vmem:[#allocation7 + $0x30] sm:$0xff]
  %v6790 = vld [vmem:[#allocation7 + $0x38] sm:$0xff]
  %v6791 = vld [vmem:[%s18] sm:$0xff]
  %v6792 = vld [vmem:[%s18 + $0x8] sm:$0xff]
  %v6793 = vld [vmem:[%s18 + $0x10] sm:$0xff]
  %v6794 = vld [vmem:[%s18 + $0x18] sm:$0xff]
  %v6795 = vld [vmem:[%s18 + $0x20] sm:$0xff]
  %v6796 = vld [vmem:[%s18 + $0x28] sm:$0xff]
  %v6797 = vld [vmem:[%s18 + $0x30] sm:$0xff]
  %v6798 = vld [vmem:[%s18 + $0x38] sm:$0xff]
  %v6799 = vld [vmem:[%s18 + $0x40] sm:$0xff]
  %v6800 = vld [vmem:[%s18 + $0x48] sm:$0xff]
  %v6801 = vld [vmem:[%s18 + $0x50] sm:$0xff]
  %v6802 = vld [vmem:[%s18 + $0x58] sm:$0xff]
  %v6803 = vld [vmem:[%s18 + $0x60] sm:$0xff]
  %v6804 = vld [vmem:[%s18 + $0x68] sm:$0xff]
  %v6805 = vld [vmem:[%s18 + $0x70] sm:$0xff]
  %v6806 = vld [vmem:[%s18 + $0x78] sm:$0xff]
  %v6807 = vld [vmem:[%s19] sm:$0x1]
  %v6809 = vlaneseq
  %v6810 = vshrl.u32 %v6809, 7
  %v6811 = vsub.s32 0, %v6810
  %v6812 = vrot.slane %v6807, %v6811
  %6814 = vmatprep.subr.mxu0 0.0
  %6815 = vmatpush1.msra.mxu0 %v6791
  %6816 = vmatprep.subr.mxu0 0.0
  %6817 = vmatpush1.msra.mxu0 %v6792
  %6818 = vmatprep.subr.mxu0 0.0
  %6819 = vmatpush1.msra.mxu0 %v6793
  %6820 = vmatprep.subr.mxu0 0.0
  %6821 = vmatpush1.msra.mxu0 %v6794
  %6822 = vmatprep.subr.mxu0 0.0
  %6823 = vmatpush1.msra.mxu0 %v6795
  %6824 = vmatprep.subr.mxu0 0.0
  %6825 = vmatpush1.msra.mxu0 %v6796
  %6826 = vmatprep.subr.mxu0 0.0
  %6827 = vmatpush1.msra.mxu0 %v6797
  %6828 = vmatprep.subr.mxu0 0.0
  %6829 = vmatpush1.msra.mxu0 %v6798
  %6830 = vmatprep.subr.mxu0 0.0
  %6831 = vmatpush1.msra.mxu0 %v6799
  %6832 = vmatprep.subr.mxu0 0.0
  %6833 = vmatpush1.msra.mxu0 %v6800
  %6834 = vmatprep.subr.mxu0 0.0
  %6835 = vmatpush1.msra.mxu0 %v6801
  %6836 = vmatprep.subr.mxu0 0.0
  %6837 = vmatpush1.msra.mxu0 %v6802
  %6838 = vmatprep.subr.mxu0 0.0
  %6839 = vmatpush1.msra.mxu0 %v6803
  %6840 = vmatprep.subr.mxu0 0.0
  %6841 = vmatpush1.msra.mxu0 %v6804
  %6842 = vmatprep.subr.mxu0 0.0
  %6843 = vmatpush1.msra.mxu0 %v6805
  %6844 = vmatprep.subr.mxu0 0.0
  %6845 = vmatpush1.msra.mxu0 %v6806
  %6846 = vmatprep.subr.mxu0 0.0
  %6847 = vmatpush1.msra.mxu0 0.0
  %6848 = vmatprep.subr.mxu0 0.0
  %6849 = vmatpush1.msra.mxu0 0.0
  %6850 = vmatprep.subr.mxu0 0.0
  %6851 = vmatpush1.msra.mxu0 0.0
  %6852 = vmatprep.subr.mxu0 0.0
  %6853 = vmatpush1.msra.mxu0 0.0
  %6854 = vmatprep.subr.mxu0 0.0
  %6855 = vmatpush1.msra.mxu0 0.0
  %6856 = vmatprep.subr.mxu0 0.0
  %6857 = vmatpush1.msra.mxu0 0.0
  %6858 = vmatprep.subr.mxu0 0.0
  %6859 = vmatpush1.msra.mxu0 0.0
  %6860 = vmatprep.subr.mxu0 0.0
  %6861 = vmatpush1.msra.mxu0 0.0
  %6862 = vmatprep.subr.mxu0 0.0
  %6863 = vmatpush1.msra.mxu0 0.0
  %6864 = vmatprep.subr.mxu0 0.0
  %6865 = vmatpush1.msra.mxu0 0.0
  %6866 = vmatprep.subr.mxu0 0.0
  %6867 = vmatpush1.msra.mxu0 0.0
  %6868 = vmatprep.subr.mxu0 0.0
  %6869 = vmatpush1.msra.mxu0 0.0
  %6870 = vmatprep.subr.mxu0 0.0
  %6871 = vmatpush1.msra.mxu0 0.0
  %6872 = vmatprep.subr.mxu0 0.0
  %6873 = vmatpush1.msra.mxu0 0.0
  %6874 = vmatprep.subr.mxu0 0.0
  %6875 = vmatpush1.msra.mxu0 0.0
  %6876 = vmatprep.subr.mxu0 0.0
  %6877 = vmatpush1.msra.mxu0 0.0
  %6878 = vmatprep.mubr.f32.mxu0 0.0
  %6879 = vmatmul.mubr.f32.gmra.mrb[0].mxu0 %v6783
  %v6880 = vpop.f32.mrb[0].mxu0
  %v6881 = vadd.f32 %v6812, %v6880
  %v6882 = vpop.f32.mrb[0].mxu0
  %6883 = vmatprep.mubr.f32.mxu0 0.0
  %6884 = vmatmul.mubr.f32.gmra.mrb[0].mxu0 %v6784
  %v6885 = vpop.f32.mrb[0].mxu0
  %v6886 = vadd.f32 %v6812, %v6885
  %v6887 = vpop.f32.mrb[0].mxu0
  %6888 = vmatprep.mubr.f32.mxu0 0.0
  %6889 = vmatmul.mubr.f32.gmra.mrb[0].mxu0 %v6785
  %v6890 = vpop.f32.mrb[0].mxu0
  %v6891 = vadd.f32 %v6812, %v6890
  %v6892 = vpop.f32.mrb[0].mxu0
  %6893 = vmatprep.mubr.f32.mxu0 0.0
  %6894 = vmatmul.mubr.f32.gmra.mrb[0].mxu0 %v6786
  %v6895 = vpop.f32.mrb[0].mxu0
  %v6896 = vadd.f32 %v6812, %v6895
  %v6897 = vpop.f32.mrb[0].mxu0
  %6898 = vmatprep.mubr.f32.mxu0 0.0
  %6899 = vmatmul.mubr.f32.gmra.mrb[0].mxu0 %v6787
  %v6900 = vpop.f32.mrb[0].mxu0
  %v6901 = vadd.f32 %v6812, %v6900
  %v6902 = vpop.f32.mrb[0].mxu0
  %6903 = vmatprep.mubr.f32.mxu0 0.0
  %6904 = vmatmul.mubr.f32.gmra.mrb[0].mxu0 %v6788
  %v6905 = vpop.f32.mrb[0].mxu0
  %v6906 = vadd.f32 %v6812, %v6905
  %v6907 = vpop.f32.mrb[0].mxu0
  %6908 = vmatprep.mubr.f32.mxu0 0.0
  %6909 = vmatmul.mubr.f32.gmra.mrb[0].mxu0 %v6789
  %v6910 = vpop.f32.mrb[0].mxu0
  %v6911 = vadd.f32 %v6812, %v6910
  %v6912 = vpop.f32.mrb[0].mxu0
  %6913 = vmatprep.mubr.f32.mxu0 0.0
  %6914 = vmatmul.mubr.f32.gmra.mrb[0].mxu0 %v6790
  %v6915 = vpop.f32.mrb[0].mxu0
  %v6916 = vadd.f32 %v6812, %v6915
  %v6917 = vpop.f32.mrb[0].mxu0
  %6918 = vdwg.mxu0
  %6919 = vst [vmem:[%s20] sm:$0xff] %v6881
  %6920 = vst [vmem:[%s20 + $0x8] sm:$0xff] %v6886
  %6921 = vst [vmem:[%s20 + $0x10] sm:$0xff] %v6891
  %6922 = vst [vmem:[%s20 + $0x18] sm:$0xff] %v6896
  %6923 = vst [vmem:[%s20 + $0x20] sm:$0xff] %v6901
  %6924 = vst [vmem:[%s20 + $0x28] sm:$0xff] %v6906
  %6925 = vst [vmem:[%s20 + $0x30] sm:$0xff] %v6911
  %6926 = vst [vmem:[%s20 + $0x38] sm:$0xff] %v6916
  // Predicated region
  $region82: #{seqmodel_forward.1} parent=0 // pred_check
    _
  $region83: #{seqmodel_forward.1} parent=0 // pred_check_branch
    %6928 = sbr.rel (0) target = $region85
  $region84: #{seqmodel_forward.1} parent=0 // pred_region
    _
  $region85: #{seqmodel_forward.1} parent=0 // pred_fallthru
    _
  // Predicated region
  $region86: #{seqmodel_forward.1} parent=0 // pred_check
    _
  $region87: #{seqmodel_forward.1} parent=0 // pred_check_branch
    %6930 = sbr.rel (0) target = $region89
  $region88: #{seqmodel_forward.1} parent=0 // pred_region
    _
  $region89: #{seqmodel_forward.1} parent=0 // pred_fallthru
    _

</llo_original>
